<compile_context>
chip_gen: v7x
topology: tpu7x:2x2x1
jax: 0.10.0
libtpu: 0.0.40
codegen_flags: <defaults>
</compile_context>

<pallas_src>
import functools
import math

import numpy as np
import jax
import jax.numpy as jnp
from jax.experimental import pallas as pl
from jax.experimental.pallas import tpu as pltpu


# ----------------------------------------------------------------------------
# In-kernel math helpers (traced inline inside the Pallas body)
# ----------------------------------------------------------------------------
_SQRT_2_OVER_PI = 0.7978845608028654


def _gelu(y):
    # TODO(synk): PyTorch nn.GELU() defaults to exact erf; tanh approx here.
    return 0.5 * y * (1.0 + jnp.tanh(_SQRT_2_OVER_PI * (y + 0.044715 * y * y * y)))


def _silu(y):
    return y * (1.0 / (1.0 + jnp.exp(-y)))


def _layernorm(x, g, b, eps=1e-5):
    mu = jnp.mean(x, axis=-1, keepdims=True)
    xc = x - mu
    var = jnp.mean(xc * xc, axis=-1, keepdims=True)
    return xc * jax.lax.rsqrt(var + eps) * g + b


def _mm(a, w, b=None):
    """bf16 x bf16 matmul with f32 accumulation (+ optional f32 bias row)."""
    y = jnp.dot(a.astype(jnp.bfloat16), w.astype(jnp.bfloat16),
                preferred_element_type=jnp.float32)
    return y if b is None else y + b


def _rows_per_batch(c, n):
    """(B, D) -> (B*n, D): batch-row b repeated n times (token broadcast)."""
    bsz, dim = c.shape
    return jnp.concatenate(
        [jnp.broadcast_to(c[b:b + 1, :], (n, dim)) for b in range(bsz)], axis=0)


# ----------------------------------------------------------------------------
# The single fused MicroDiT kernel
# ----------------------------------------------------------------------------
def _microdit_kernel(
        # runtime activations / tables
        patches_ref, pos_ref, tfreq_ref, cap_ref,
        # patch embed
        pe_w_ref, pe_b_ref,
        # timestep embedder MLP
        tw1_ref, tb1_ref, tw2_ref, tb2_ref,
        # caption embed MLP
        cw1_ref, cb1_ref, cw2_ref, cb2_ref,
        # nn.MultiheadAttention (single key/value token -> v-proj + out-proj)
        av_w_ref, av_b_ref, ao_w_ref, ao_b_ref,
        # mlp
        mw1_ref, mb1_ref, mw2_ref, mb2_ref,
        # pool_mlp
        qw1_ref, qb1_ref, qw2_ref, qb2_ref,
        # linear
        lw_ref, lb_ref,
        # PatchMixer encoder layers (stacked over L; per-head q/k/v weights)
        wq_ref, wk_ref, wv_ref, bq_ref, bk_ref, bv_ref,
        wo_ref, bo_ref, ln1g_ref, ln1b_ref,
        w1_ref, b1_ref, w2_ref, b2_ref, ln2g_ref, ln2b_ref,
        # output head
        ow1_ref, ob1_ref, ow2_ref, ob2_ref,
        # output
        o_ref):
    L, H, D, Dh = wq_ref.shape
    B = tfreq_ref.shape[0]
    BN = patches_ref.shape[0]
    N = BN // B
    scale = 1.0 / math.sqrt(Dh)

    # ---------------- conditioning path ----------------
    t_emb = _mm(_silu(_mm(tfreq_ref[...], tw1_ref[...], tb1_ref[...])),
                tw2_ref[...], tb2_ref[...])                              # (B, D)
    c_emb = _mm(_gelu(_mm(cap_ref[...], cw1_ref[...], cb1_ref[...])),
                cw2_ref[...], cb2_ref[...])                              # (B, D)
    # mha(t_emb[:,None], c_emb[:,None], c_emb[:,None]): one key/value token
    # -> softmax == 1 exactly -> out = out_proj(v_proj(c_emb)).
    mha_out = _mm(_mm(c_emb, av_w_ref[...], av_b_ref[...]),
                  ao_w_ref[...], ao_b_ref[...])
    mlp_out = _mm(_gelu(_mm(mha_out, mw1_ref[...], mb1_ref[...])),
                  mw2_ref[...], mb2_ref[...])
    # pool_mlp: AdaptiveAvgPool1d(1) over a length-1 axis is the identity.
    pool_out = _mm(_gelu(_mm(mlp_out, qw1_ref[...], qb1_ref[...])),
                   qw2_ref[...], qb2_ref[...]) + t_emb
    cond_signal = _mm(mlp_out, lw_ref[...], lb_ref[...])
    cond1 = cond_signal + pool_out        # added before the PatchMixer
    cond2 = mlp_out + pool_out            # added after the PatchMixer

    # ---------------- patch embed + pos embed + cond1 ----------------
    x = _mm(patches_ref[...], pe_w_ref[...], pe_b_ref[...])              # (BN, D)
    x = x + pos_ref[...] + _rows_per_batch(cond1, N)

    # ---------------- PatchMixer: L post-norm TransformerEncoderLayers -------
    for l in range(L):
        head_out = [[None] * H for _ in range(B)]
        for h in range(H):
            # Per-head projections from pre-split weights (no lane slicing).
            qh = _mm(x, wq_ref[l, h, :, :], bq_ref[l, h, :, :])          # (BN, Dh)
            kh = _mm(x, wk_ref[l, h, :, :], bk_ref[l, h, :, :])
            vh = _mm(x, wv_ref[l, h, :, :], bv_ref[l, h, :, :])
            for b in range(B):
                q_b = qh[b * N:(b + 1) * N, :] * scale
                k_b = kh[b * N:(b + 1) * N, :]
                v_b = vh[b * N:(b + 1) * N, :]
                s = jax.lax.dot_general(
                    q_b.astype(jnp.bfloat16), k_b.astype(jnp.bfloat16),
                    (((1,), (1,)), ((), ())),
                    preferred_element_type=jnp.float32)                  # (N, N)
                s = s - jnp.max(s, axis=-1, keepdims=True)
                probs = jnp.exp(s)
                probs = probs / jnp.sum(probs, axis=-1, keepdims=True)   # exact
                head_out[b][h] = jnp.dot(probs.astype(jnp.bfloat16),
                                         v_b.astype(jnp.bfloat16),
                                         preferred_element_type=jnp.float32)
        # Assemble all heads / batches and apply ONE out-projection matmul.
        attn = jnp.concatenate(
            [jnp.concatenate(head_out[b], axis=-1) for b in range(B)], axis=0)
        sa = _mm(attn, wo_ref[l, :, :], bo_ref[l, :, :])                 # (BN, D)
        h1 = _layernorm(x + sa, ln1g_ref[l, :, :], ln1b_ref[l, :, :])
        f = jnp.maximum(_mm(h1, w1_ref[l, :, :], b1_ref[l, :, :]), 0.0)  # ReLU FFN
        f = _mm(f, w2_ref[l, :, :], b2_ref[l, :, :])
        x = _layernorm(h1 + f, ln2g_ref[l, :, :], ln2b_ref[l, :, :])

    # mask is None in this run -> no patch removal.
    # TODO(synk): TransformerBackbone not defined in reference -> pass-through.

    # ---------------- cond2 add + output head ----------------
    x = x + _rows_per_batch(cond2, N)
    hh = _gelu(_mm(x, ow1_ref[...], ob1_ref[...]))
    o_ref[...] = _mm(hh, ow2_ref[...], ob2_ref[...])                     # (BN, P)


# ----------------------------------------------------------------------------
# Host-side glue: sinusoidal tables (cached), timestep embedding
# ----------------------------------------------------------------------------
@functools.lru_cache(maxsize=None)
def _pos_embed_cached(embed_dim, grid_h, grid_w):
    def sincos_1d(dim, pos):
        omega = np.arange(dim // 2, dtype=np.float64) / (dim / 2.0)
        omega = 1.0 / (10000.0 ** omega)
        out = pos.reshape(-1)[:, None] * omega[None]
        return np.concatenate([np.sin(out), np.cos(out)], axis=1)
    gh = np.arange(grid_h, dtype=np.float64)
    gw = np.arange(grid_w, dtype=np.float64)
    mw, mh = np.meshgrid(gw, gh)
    emb_h = sincos_1d(embed_dim // 2, mh)
    emb_w = sincos_1d(embed_dim // 2, mw)
    return np.concatenate([emb_h, emb_w], axis=1).astype(np.float32)     # (N, D)


def timestep_embedding(t, dim, max_period=10000.0):
    half = dim // 2
    freqs = jnp.exp(-math.log(max_period) *
                    jnp.arange(half, dtype=jnp.float32) / half)
    args = t.astype(jnp.float32)[:, None] * freqs[None]
    return jnp.concatenate([jnp.cos(args), jnp.sin(args)], axis=-1)


# ----------------------------------------------------------------------------
# Parameter init (deterministic, matching the PyTorch init scheme)
# ----------------------------------------------------------------------------
def _xavier(key, fan_in, fan_out):
    bound = math.sqrt(6.0 / (fan_in + fan_out))
    return jax.random.uniform(key, (fan_in, fan_out), jnp.float32, -bound, bound)


def _zeros_row(n):
    return jnp.zeros((1, n), jnp.float32)


def init_params(cfg, seed=1234):
    D = cfg["embed_dim"]
    C = cfg["in_channels"]
    ph, pw = cfg["patch_size"]
    cap = cfg["caption_embed_dim"]
    H = cfg["num_heads"]
    L = cfg["patch_mixer_layers"]
    FF = 2048                      # nn.TransformerEncoderLayer default
    Dh = D // H
    Pdim = C * ph * pw
    bf16 = jnp.bfloat16

    keys = iter(jax.random.split(jax.random.PRNGKey(seed), 128))
    p = {}

    # PatchEmbed (conv with kernel==stride==patch => patchify + linear).
    p["pe_w"] = _xavier(next(keys), Pdim, D).astype(bf16)
    p["pe_b"] = _zeros_row(D)

    # TimestepEmbedder MLP (std=0.02 normal init, per the reference).
    p["t_w1"] = (0.02 * jax.random.normal(next(keys), (256, D), jnp.float32)).astype(bf16)
    p["t_b1"] = _zeros_row(D)
    p["t_w2"] = (0.02 * jax.random.normal(next(keys), (D, D), jnp.float32)).astype(bf16)
    p["t_b2"] = _zeros_row(D)

    # caption_embed
    p["cap_w1"] = _xavier(next(keys), cap, D).astype(bf16); p["cap_b1"] = _zeros_row(D)
    p["cap_w2"] = _xavier(next(keys), D, D).astype(bf16);   p["cap_b2"] = _zeros_row(D)

    # nn.MultiheadAttention: xavier over the (3D, D) in_proj; with a length-1
    # key/value only the v slice (+ out-proj) affects the output.
    bound = math.sqrt(6.0 / (D + 3 * D))
    w_in = jax.random.uniform(next(keys), (D, 3 * D), jnp.float32, -bound, bound)
    p["mha_wv"] = w_in[:, 2 * D:].astype(bf16); p["mha_bv"] = _zeros_row(D)
    p["mha_wo"] = _xavier(next(keys), D, D).astype(bf16); p["mha_bo"] = _zeros_row(D)

    # mlp / pool_mlp / linear
    p["mlp_w1"] = _xavier(next(keys), D, D).astype(bf16); p["mlp_b1"] = _zeros_row(D)
    p["mlp_w2"] = _xavier(next(keys), D, D).astype(bf16); p["mlp_b2"] = _zeros_row(D)
    p["pool_w1"] = _xavier(next(keys), D, D).astype(bf16); p["pool_b1"] = _zeros_row(D)
    p["pool_w2"] = _xavier(next(keys), D, D).astype(bf16); p["pool_b2"] = _zeros_row(D)
    p["lin_w"] = _xavier(next(keys), D, D).astype(bf16); p["lin_b"] = _zeros_row(D)

    # PatchMixer: L x nn.TransformerEncoderLayer (post-norm, ReLU, FF=2048),
    # q/k/v weights pre-split per head so the kernel never lane-slices.
    wq_l, wk_l, wv_l, wo_l, w1_l, w2_l = [], [], [], [], [], []

    def per_head(m):               # (D, D) -> (H, D, Dh)
        return m.reshape(D, H, Dh).transpose(1, 0, 2)

    for _ in range(L):
        wqkv = jax.random.uniform(next(keys), (D, 3 * D), jnp.float32, -bound, bound)
        wq_l.append(per_head(wqkv[:, 0:D]))
        wk_l.append(per_head(wqkv[:, D:2 * D]))
        wv_l.append(per_head(wqkv[:, 2 * D:3 * D]))
        wo_l.append(_xavier(next(keys), D, D))
        w1_l.append(_xavier(next(keys), D, FF))
        w2_l.append(_xavier(next(keys), FF, D))

    p["enc_wq"] = jnp.stack(wq_l).astype(bf16)             # (L, H, D, Dh)
    p["enc_wk"] = jnp.stack(wk_l).astype(bf16)
    p["enc_wv"] = jnp.stack(wv_l).astype(bf16)
    p["enc_bq"] = jnp.zeros((L, H, 1, Dh), jnp.float32)
    p["enc_bk"] = jnp.zeros((L, H, 1, Dh), jnp.float32)
    p["enc_bv"] = jnp.zeros((L, H, 1, Dh), jnp.float32)
    p["enc_wo"] = jnp.stack(wo_l).astype(bf16)              # (L, D, D)
    p["enc_bo"] = jnp.zeros((L, 1, D), jnp.float32)
    p["enc_ln1g"] = jnp.ones((L, 1, D), jnp.float32)
    p["enc_ln1b"] = jnp.zeros((L, 1, D), jnp.float32)
    p["enc_w1"] = jnp.stack(w1_l).astype(bf16)              # (L, D, FF)
    p["enc_b1"] = jnp.zeros((L, 1, FF), jnp.float32)
    p["enc_w2"] = jnp.stack(w2_l).astype(bf16)              # (L, FF, D)
    p["enc_b2"] = jnp.zeros((L, 1, D), jnp.float32)
    p["enc_ln2g"] = jnp.ones((L, 1, D), jnp.float32)
    p["enc_ln2b"] = jnp.zeros((L, 1, D), jnp.float32)

    # output head; final Linear is zero-initialized per the reference module.
    p["out_w1"] = _xavier(next(keys), D, D).astype(bf16); p["out_b1"] = _zeros_row(D)
    p["out_w2"] = jnp.zeros((D, Pdim), bf16);             p["out_b2"] = _zeros_row(Pdim)
    return p


# ----------------------------------------------------------------------------
# Full forward pass: 1 fused Pallas kernel + patchify/unpatchify glue
# ----------------------------------------------------------------------------
def microdit_forward(params, x, t, caption_embeddings, cfg):
    B, C, H, W = x.shape
    ph, pw = cfg["patch_size"]
    D = cfg["embed_dim"]
    nh = cfg["num_heads"]
    Hp, Wp = H // ph, W // pw
    N = Hp * Wp
    BN = B * N
    Pdim = C * ph * pw

    # Patchify (JAX glue): packs each patch as (C, ph, pw).
    patches = x.reshape(B, C, Hp, ph, Wp, pw).transpose(0, 2, 4, 1, 3, 5)
    patches = patches.reshape(BN, Pdim).astype(jnp.float32)

    # Static pos-embed table, computed once on host and cached (hoisted).
    pos = _pos_embed_cached(D, Hp, Wp)                              # np (N, D)
    pos_bn = jnp.asarray(np.tile(pos, (B, 1)), jnp.float32)         # (BN, D)
    t_freq = timestep_embedding(t, 256)                             # (B, 256)
    cap = caption_embeddings.astype(jnp.float32)

    p = params
    args = [
        patches, pos_bn, t_freq, cap,
        p["pe_w"], p["pe_b"],
        p["t_w1"], p["t_b1"], p["t_w2"], p["t_b2"],
        p["cap_w1"], p["cap_b1"], p["cap_w2"], p["cap_b2"],
        p["mha_wv"], p["mha_bv"], p["mha_wo"], p["mha_bo"],
        p["mlp_w1"], p["mlp_b1"], p["mlp_w2"], p["mlp_b2"],
        p["pool_w1"], p["pool_b1"], p["pool_w2"], p["pool_b2"],
        p["lin_w"], p["lin_b"],
        p["enc_wq"], p["enc_wk"], p["enc_wv"],
        p["enc_bq"], p["enc_bk"], p["enc_bv"],
        p["enc_wo"], p["enc_bo"], p["enc_ln1g"], p["enc_ln1b"],
        p["enc_w1"], p["enc_b1"], p["enc_w2"], p["enc_b2"],
        p["enc_ln2g"], p["enc_ln2b"],
        p["out_w1"], p["out_b1"], p["out_w2"], p["out_b2"],
    ]

    # Advisory cost estimate + explicit VMEM cap (review feedback).
    FF = p["enc_w1"].shape[-1]
    L = p["enc_w1"].shape[0]
    flops = (2 * BN * Pdim * D
             + 2 * B * (256 * D + 10 * D * D)
             + L * (2 * BN * 4 * D * D
                    + 2 * B * nh * N * N * (D // nh) * 2
                    + 2 * BN * 2 * D * FF)
             + 2 * BN * (D * D + D * Pdim))
    transcendentals = L * B * nh * N * N + 8 * BN * D + 8 * B * D
    bytes_accessed = sum(int(np.prod(a.shape)) * a.dtype.itemsize for a in args)
    bytes_accessed += BN * Pdim * 4

    out = pl.pallas_call(
        _microdit_kernel,
        out_shape=jax.ShapeDtypeStruct((BN, Pdim), jnp.float32),
        compiler_params=pltpu.CompilerParams(vmem_limit_bytes=32 * 1024 * 1024),
        cost_estimate=pl.CostEstimate(flops=flops,
                                      transcendentals=transcendentals,
                                      bytes_accessed=bytes_accessed),
    )(*args)

    # unpatchify (DiT convention): (BN, ph*pw*C) -> (B, C, H, W)
    img = out.reshape(B, Hp, Wp, ph, pw, C).transpose(0, 5, 1, 3, 2, 4)
    return img.reshape(B, C, H, W)


# ----------------------------------------------------------------------------
if __name__ == "__main__":
    cfg = dict(in_channels=4, patch_size=(4, 4), embed_dim=32, num_heads=4,
               caption_embed_dim=32, patch_mixer_layers=2,
               # backbone config (TransformerBackbone undefined in reference):
               num_layers=4, mlp_dim=64, num_experts=4, active_experts=2)

    key = jax.random.PRNGKey(0)
    kx, kt, kc = jax.random.split(key, 3)
    B, C, Himg, Wimg = 2, 4, 16, 16
    x = jax.random.normal(kx, (B, C, Himg, Wimg), jnp.float32)
    t = jax.random.uniform(kt, (B,), jnp.float32)
    caption = jax.random.normal(kc, (B, cfg["caption_embed_dim"]), jnp.float32)

    params = init_params(cfg)
    out = microdit_forward(params, x, t, caption, cfg)
    out = jax.block_until_ready(out)
    assert out.shape == (B, C, Himg, Wimg), out.shape
    assert bool(jnp.all(jnp.isfinite(out)))
    print("KERNEL_OK")
</pallas_src>

<mosaic_0001>
module attributes {stable_mosaic.version = 11 : i64} {
  func.func @_microdit_kernel(%arg0: memref<32x64xf32, #tpu.memory_space<vmem>>, %arg1: memref<32x32xf32, #tpu.memory_space<vmem>>, %arg2: memref<2x256xf32, #tpu.memory_space<vmem>>, %arg3: memref<2x32xf32, #tpu.memory_space<vmem>>, %arg4: memref<64x32xbf16, #tpu.memory_space<vmem>>, %arg5: memref<1x32xf32, #tpu.memory_space<vmem>>, %arg6: memref<256x32xbf16, #tpu.memory_space<vmem>>, %arg7: memref<1x32xf32, #tpu.memory_space<vmem>>, %arg8: memref<32x32xbf16, #tpu.memory_space<vmem>>, %arg9: memref<1x32xf32, #tpu.memory_space<vmem>>, %arg10: memref<32x32xbf16, #tpu.memory_space<vmem>>, %arg11: memref<1x32xf32, #tpu.memory_space<vmem>>, %arg12: memref<32x32xbf16, #tpu.memory_space<vmem>>, %arg13: memref<1x32xf32, #tpu.memory_space<vmem>>, %arg14: memref<32x32xbf16, #tpu.memory_space<vmem>>, %arg15: memref<1x32xf32, #tpu.memory_space<vmem>>, %arg16: memref<32x32xbf16, #tpu.memory_space<vmem>>, %arg17: memref<1x32xf32, #tpu.memory_space<vmem>>, %arg18: memref<32x32xbf16, #tpu.memory_space<vmem>>, %arg19: memref<1x32xf32, #tpu.memory_space<vmem>>, %arg20: memref<32x32xbf16, #tpu.memory_space<vmem>>, %arg21: memref<1x32xf32, #tpu.memory_space<vmem>>, %arg22: memref<32x32xbf16, #tpu.memory_space<vmem>>, %arg23: memref<1x32xf32, #tpu.memory_space<vmem>>, %arg24: memref<32x32xbf16, #tpu.memory_space<vmem>>, %arg25: memref<1x32xf32, #tpu.memory_space<vmem>>, %arg26: memref<32x32xbf16, #tpu.memory_space<vmem>>, %arg27: memref<1x32xf32, #tpu.memory_space<vmem>>, %arg28: memref<2x4x32x8xbf16, #tpu.memory_space<vmem>>, %arg29: memref<2x4x32x8xbf16, #tpu.memory_space<vmem>>, %arg30: memref<2x4x32x8xbf16, #tpu.memory_space<vmem>>, %arg31: memref<2x4x1x8xf32, #tpu.memory_space<vmem>>, %arg32: memref<2x4x1x8xf32, #tpu.memory_space<vmem>>, %arg33: memref<2x4x1x8xf32, #tpu.memory_space<vmem>>, %arg34: memref<2x32x32xbf16, #tpu.memory_space<vmem>>, %arg35: memref<2x1x32xf32, #tpu.memory_space<vmem>>, %arg36: memref<2x1x32xf32, #tpu.memory_space<vmem>>, %arg37: memref<2x1x32xf32, #tpu.memory_space<vmem>>, %arg38: memref<2x32x2048xbf16, #tpu.memory_space<vmem>>, %arg39: memref<2x1x2048xf32, #tpu.memory_space<vmem>>, %arg40: memref<2x2048x32xbf16, #tpu.memory_space<vmem>>, %arg41: memref<2x1x32xf32, #tpu.memory_space<vmem>>, %arg42: memref<2x1x32xf32, #tpu.memory_space<vmem>>, %arg43: memref<2x1x32xf32, #tpu.memory_space<vmem>>, %arg44: memref<32x32xbf16, #tpu.memory_space<vmem>>, %arg45: memref<1x32xf32, #tpu.memory_space<vmem>>, %arg46: memref<32x64xbf16, #tpu.memory_space<vmem>>, %arg47: memref<1x64xf32, #tpu.memory_space<vmem>>, %arg48: memref<32x64xf32, #tpu.memory_space<vmem>>) attributes {dimension_semantics = [], scalar_prefetch = 0 : i64, scratch_operands = 0 : i64, tpu.core_type = #tpu.core_type<tc>} {
    %c0 = arith.constant 0 : index
    %c0_0 = arith.constant 0 : index
    %0 = vector.load %arg2[%c0, %c0_0] : memref<2x256xf32, #tpu.memory_space<vmem>>, vector<2x256xf32>
    %c0_1 = arith.constant 0 : index
    %c0_2 = arith.constant 0 : index
    %1 = vector.load %arg6[%c0_1, %c0_2] : memref<256x32xbf16, #tpu.memory_space<vmem>>, vector<256x32xbf16>
    %c0_3 = arith.constant 0 : index
    %c0_4 = arith.constant 0 : index
    %2 = vector.load %arg7[%c0_3, %c0_4] : memref<1x32xf32, #tpu.memory_space<vmem>>, vector<1x32xf32>
    %3 = arith.truncf %0 : vector<2x256xf32> to vector<2x256xbf16>
    %cst = arith.constant dense<0.000000e+00> : vector<2x32xf32>
    %4 = tpu.matmul %3, %1, %cst {dimension_numbers = #tpu.dot_dimension_numbers<[1], [0], [0], [1], [0, 0, 1, 1], [], []>} : vector<2x256xbf16>, vector<256x32xbf16>, vector<2x32xf32> -> vector<2x32xf32>
    %5 = vector.broadcast %2 : vector<1x32xf32> to vector<2x32xf32>
    %6 = arith.addf %4, %5 : vector<2x32xf32>
    %cst_5 = arith.constant 0.000000e+00 : f32
    %7 = vector.broadcast %cst_5 : f32 to vector<2x32xf32>
    %8 = arith.subf %7, %6 : vector<2x32xf32>
    %9 = math.exp %8 : vector<2x32xf32>
    %cst_6 = arith.constant 1.000000e+00 : f32
    %10 = vector.broadcast %cst_6 : f32 to vector<2x32xf32>
    %11 = arith.addf %10, %9 : vector<2x32xf32>
    %cst_7 = arith.constant 1.000000e+00 : f32
    %12 = vector.broadcast %cst_7 : f32 to vector<2x32xf32>
    %13 = arith.divf %12, %11 : vector<2x32xf32>
    %14 = arith.mulf %6, %13 : vector<2x32xf32>
    %c0_8 = arith.constant 0 : index
    %c0_9 = arith.constant 0 : index
    %15 = vector.load %arg8[%c0_8, %c0_9] : memref<32x32xbf16, #tpu.memory_space<vmem>>, vector<32x32xbf16>
    %c0_10 = arith.constant 0 : index
    %c0_11 = arith.constant 0 : index
    %16 = vector.load %arg9[%c0_10, %c0_11] : memref<1x32xf32, #tpu.memory_space<vmem>>, vector<1x32xf32>
    %17 = arith.truncf %14 : vector<2x32xf32> to vector<2x32xbf16>
    %cst_12 = arith.constant dense<0.000000e+00> : vector<2x32xf32>
    %18 = tpu.matmul %17, %15, %cst_12 {dimension_numbers = #tpu.dot_dimension_numbers<[1], [0], [0], [1], [0, 0, 1, 1], [], []>} : vector<2x32xbf16>, vector<32x32xbf16>, vector<2x32xf32> -> vector<2x32xf32>
    %19 = vector.broadcast %16 : vector<1x32xf32> to vector<2x32xf32>
    %20 = arith.addf %18, %19 : vector<2x32xf32>
    %c0_13 = arith.constant 0 : index
    %c0_14 = arith.constant 0 : index
    %21 = vector.load %arg3[%c0_13, %c0_14] : memref<2x32xf32, #tpu.memory_space<vmem>>, vector<2x32xf32>
    %c0_15 = arith.constant 0 : index
    %c0_16 = arith.constant 0 : index
    %22 = vector.load %arg10[%c0_15, %c0_16] : memref<32x32xbf16, #tpu.memory_space<vmem>>, vector<32x32xbf16>
    %c0_17 = arith.constant 0 : index
    %c0_18 = arith.constant 0 : index
    %23 = vector.load %arg11[%c0_17, %c0_18] : memref<1x32xf32, #tpu.memory_space<vmem>>, vector<1x32xf32>
    %24 = arith.truncf %21 : vector<2x32xf32> to vector<2x32xbf16>
    %cst_19 = arith.constant dense<0.000000e+00> : vector<2x32xf32>
    %25 = tpu.matmul %24, %22, %cst_19 {dimension_numbers = #tpu.dot_dimension_numbers<[1], [0], [0], [1], [0, 0, 1, 1], [], []>} : vector<2x32xbf16>, vector<32x32xbf16>, vector<2x32xf32> -> vector<2x32xf32>
    %26 = vector.broadcast %23 : vector<1x32xf32> to vector<2x32xf32>
    %27 = arith.addf %25, %26 : vector<2x32xf32>
    %cst_20 = arith.constant 5.000000e-01 : f32
    %28 = vector.broadcast %cst_20 : f32 to vector<2x32xf32>
    %29 = arith.mulf %28, %27 : vector<2x32xf32>
    %cst_21 = arith.constant 4.471500e-02 : f32
    %30 = vector.broadcast %cst_21 : f32 to vector<2x32xf32>
    %31 = arith.mulf %30, %27 : vector<2x32xf32>
    %32 = arith.mulf %31, %27 : vector<2x32xf32>
    %33 = arith.mulf %32, %27 : vector<2x32xf32>
    %34 = arith.addf %27, %33 : vector<2x32xf32>
    %cst_22 = arith.constant 0.797884583 : f32
    %35 = vector.broadcast %cst_22 : f32 to vector<2x32xf32>
    %36 = arith.mulf %35, %34 : vector<2x32xf32>
    %37 = math.tanh %36 : vector<2x32xf32>
    %cst_23 = arith.constant 1.000000e+00 : f32
    %38 = vector.broadcast %cst_23 : f32 to vector<2x32xf32>
    %39 = arith.addf %38, %37 : vector<2x32xf32>
    %40 = arith.mulf %29, %39 : vector<2x32xf32>
    %c0_24 = arith.constant 0 : index
    %c0_25 = arith.constant 0 : index
    %41 = vector.load %arg12[%c0_24, %c0_25] : memref<32x32xbf16, #tpu.memory_space<vmem>>, vector<32x32xbf16>
    %c0_26 = arith.constant 0 : index
    %c0_27 = arith.constant 0 : index
    %42 = vector.load %arg13[%c0_26, %c0_27] : memref<1x32xf32, #tpu.memory_space<vmem>>, vector<1x32xf32>
    %43 = arith.truncf %40 : vector<2x32xf32> to vector<2x32xbf16>
    %cst_28 = arith.constant dense<0.000000e+00> : vector<2x32xf32>
    %44 = tpu.matmul %43, %41, %cst_28 {dimension_numbers = #tpu.dot_dimension_numbers<[1], [0], [0], [1], [0, 0, 1, 1], [], []>} : vector<2x32xbf16>, vector<32x32xbf16>, vector<2x32xf32> -> vector<2x32xf32>
    %45 = vector.broadcast %42 : vector<1x32xf32> to vector<2x32xf32>
    %46 = arith.addf %44, %45 : vector<2x32xf32>
    %c0_29 = arith.constant 0 : index
    %c0_30 = arith.constant 0 : index
    %47 = vector.load %arg14[%c0_29, %c0_30] : memref<32x32xbf16, #tpu.memory_space<vmem>>, vector<32x32xbf16>
    %c0_31 = arith.constant 0 : index
    %c0_32 = arith.constant 0 : index
    %48 = vector.load %arg15[%c0_31, %c0_32] : memref<1x32xf32, #tpu.memory_space<vmem>>, vector<1x32xf32>
    %49 = arith.truncf %46 : vector<2x32xf32> to vector<2x32xbf16>
    %cst_33 = arith.constant dense<0.000000e+00> : vector<2x32xf32>
    %50 = tpu.matmul %49, %47, %cst_33 {dimension_numbers = #tpu.dot_dimension_numbers<[1], [0], [0], [1], [0, 0, 1, 1], [], []>} : vector<2x32xbf16>, vector<32x32xbf16>, vector<2x32xf32> -> vector<2x32xf32>
    %51 = vector.broadcast %48 : vector<1x32xf32> to vector<2x32xf32>
    %52 = arith.addf %50, %51 : vector<2x32xf32>
    %c0_34 = arith.constant 0 : index
    %c0_35 = arith.constant 0 : index
    %53 = vector.load %arg16[%c0_34, %c0_35] : memref<32x32xbf16, #tpu.memory_space<vmem>>, vector<32x32xbf16>
    %c0_36 = arith.constant 0 : index
    %c0_37 = arith.constant 0 : index
    %54 = vector.load %arg17[%c0_36, %c0_37] : memref<1x32xf32, #tpu.memory_space<vmem>>, vector<1x32xf32>
    %55 = arith.truncf %52 : vector<2x32xf32> to vector<2x32xbf16>
    %cst_38 = arith.constant dense<0.000000e+00> : vector<2x32xf32>
    %56 = tpu.matmul %55, %53, %cst_38 {dimension_numbers = #tpu.dot_dimension_numbers<[1], [0], [0], [1], [0, 0, 1, 1], [], []>} : vector<2x32xbf16>, vector<32x32xbf16>, vector<2x32xf32> -> vector<2x32xf32>
    %57 = vector.broadcast %54 : vector<1x32xf32> to vector<2x32xf32>
    %58 = arith.addf %56, %57 : vector<2x32xf32>
    %c0_39 = arith.constant 0 : index
    %c0_40 = arith.constant 0 : index
    %59 = vector.load %arg18[%c0_39, %c0_40] : memref<32x32xbf16, #tpu.memory_space<vmem>>, vector<32x32xbf16>
    %c0_41 = arith.constant 0 : index
    %c0_42 = arith.constant 0 : index
    %60 = vector.load %arg19[%c0_41, %c0_42] : memref<1x32xf32, #tpu.memory_space<vmem>>, vector<1x32xf32>
    %61 = arith.truncf %58 : vector<2x32xf32> to vector<2x32xbf16>
    %cst_43 = arith.constant dense<0.000000e+00> : vector<2x32xf32>
    %62 = tpu.matmul %61, %59, %cst_43 {dimension_numbers = #tpu.dot_dimension_numbers<[1], [0], [0], [1], [0, 0, 1, 1], [], []>} : vector<2x32xbf16>, vector<32x32xbf16>, vector<2x32xf32> -> vector<2x32xf32>
    %63 = vector.broadcast %60 : vector<1x32xf32> to vector<2x32xf32>
    %64 = arith.addf %62, %63 : vector<2x32xf32>
    %cst_44 = arith.constant 5.000000e-01 : f32
    %65 = vector.broadcast %cst_44 : f32 to vector<2x32xf32>
    %66 = arith.mulf %65, %64 : vector<2x32xf32>
    %cst_45 = arith.constant 4.471500e-02 : f32
    %67 = vector.broadcast %cst_45 : f32 to vector<2x32xf32>
    %68 = arith.mulf %67, %64 : vector<2x32xf32>
    %69 = arith.mulf %68, %64 : vector<2x32xf32>
    %70 = arith.mulf %69, %64 : vector<2x32xf32>
    %71 = arith.addf %64, %70 : vector<2x32xf32>
    %cst_46 = arith.constant 0.797884583 : f32
    %72 = vector.broadcast %cst_46 : f32 to vector<2x32xf32>
    %73 = arith.mulf %72, %71 : vector<2x32xf32>
    %74 = math.tanh %73 : vector<2x32xf32>
    %cst_47 = arith.constant 1.000000e+00 : f32
    %75 = vector.broadcast %cst_47 : f32 to vector<2x32xf32>
    %76 = arith.addf %75, %74 : vector<2x32xf32>
    %77 = arith.mulf %66, %76 : vector<2x32xf32>
    %c0_48 = arith.constant 0 : index
    %c0_49 = arith.constant 0 : index
    %78 = vector.load %arg20[%c0_48, %c0_49] : memref<32x32xbf16, #tpu.memory_space<vmem>>, vector<32x32xbf16>
    %c0_50 = arith.constant 0 : index
    %c0_51 = arith.constant 0 : index
    %79 = vector.load %arg21[%c0_50, %c0_51] : memref<1x32xf32, #tpu.memory_space<vmem>>, vector<1x32xf32>
    %80 = arith.truncf %77 : vector<2x32xf32> to vector<2x32xbf16>
    %cst_52 = arith.constant dense<0.000000e+00> : vector<2x32xf32>
    %81 = tpu.matmul %80, %78, %cst_52 {dimension_numbers = #tpu.dot_dimension_numbers<[1], [0], [0], [1], [0, 0, 1, 1], [], []>} : vector<2x32xbf16>, vector<32x32xbf16>, vector<2x32xf32> -> vector<2x32xf32>
    %82 = vector.broadcast %79 : vector<1x32xf32> to vector<2x32xf32>
    %83 = arith.addf %81, %82 : vector<2x32xf32>
    %c0_53 = arith.constant 0 : index
    %c0_54 = arith.constant 0 : index
    %84 = vector.load %arg22[%c0_53, %c0_54] : memref<32x32xbf16, #tpu.memory_space<vmem>>, vector<32x32xbf16>
    %c0_55 = arith.constant 0 : index
    %c0_56 = arith.constant 0 : index
    %85 = vector.load %arg23[%c0_55, %c0_56] : memref<1x32xf32, #tpu.memory_space<vmem>>, vector<1x32xf32>
    %86 = arith.truncf %83 : vector<2x32xf32> to vector<2x32xbf16>
    %cst_57 = arith.constant dense<0.000000e+00> : vector<2x32xf32>
    %87 = tpu.matmul %86, %84, %cst_57 {dimension_numbers = #tpu.dot_dimension_numbers<[1], [0], [0], [1], [0, 0, 1, 1], [], []>} : vector<2x32xbf16>, vector<32x32xbf16>, vector<2x32xf32> -> vector<2x32xf32>
    %88 = vector.broadcast %85 : vector<1x32xf32> to vector<2x32xf32>
    %89 = arith.addf %87, %88 : vector<2x32xf32>
    %cst_58 = arith.constant 5.000000e-01 : f32
    %90 = vector.broadcast %cst_58 : f32 to vector<2x32xf32>
    %91 = arith.mulf %90, %89 : vector<2x32xf32>
    %cst_59 = arith.constant 4.471500e-02 : f32
    %92 = vector.broadcast %cst_59 : f32 to vector<2x32xf32>
    %93 = arith.mulf %92, %89 : vector<2x32xf32>
    %94 = arith.mulf %93, %89 : vector<2x32xf32>
    %95 = arith.mulf %94, %89 : vector<2x32xf32>
    %96 = arith.addf %89, %95 : vector<2x32xf32>
    %cst_60 = arith.constant 0.797884583 : f32
    %97 = vector.broadcast %cst_60 : f32 to vector<2x32xf32>
    %98 = arith.mulf %97, %96 : vector<2x32xf32>
    %99 = math.tanh %98 : vector<2x32xf32>
    %cst_61 = arith.constant 1.000000e+00 : f32
    %100 = vector.broadcast %cst_61 : f32 to vector<2x32xf32>
    %101 = arith.addf %100, %99 : vector<2x32xf32>
    %102 = arith.mulf %91, %101 : vector<2x32xf32>
    %c0_62 = arith.constant 0 : index
    %c0_63 = arith.constant 0 : index
    %103 = vector.load %arg24[%c0_62, %c0_63] : memref<32x32xbf16, #tpu.memory_space<vmem>>, vector<32x32xbf16>
    %c0_64 = arith.constant 0 : index
    %c0_65 = arith.constant 0 : index
    %104 = vector.load %arg25[%c0_64, %c0_65] : memref<1x32xf32, #tpu.memory_space<vmem>>, vector<1x32xf32>
    %105 = arith.truncf %102 : vector<2x32xf32> to vector<2x32xbf16>
    %cst_66 = arith.constant dense<0.000000e+00> : vector<2x32xf32>
    %106 = tpu.matmul %105, %103, %cst_66 {dimension_numbers = #tpu.dot_dimension_numbers<[1], [0], [0], [1], [0, 0, 1, 1], [], []>} : vector<2x32xbf16>, vector<32x32xbf16>, vector<2x32xf32> -> vector<2x32xf32>
    %107 = vector.broadcast %104 : vector<1x32xf32> to vector<2x32xf32>
    %108 = arith.addf %106, %107 : vector<2x32xf32>
    %109 = arith.addf %108, %20 : vector<2x32xf32>
    %c0_67 = arith.constant 0 : index
    %c0_68 = arith.constant 0 : index
    %110 = vector.load %arg26[%c0_67, %c0_68] : memref<32x32xbf16, #tpu.memory_space<vmem>>, vector<32x32xbf16>
    %c0_69 = arith.constant 0 : index
    %c0_70 = arith.constant 0 : index
    %111 = vector.load %arg27[%c0_69, %c0_70] : memref<1x32xf32, #tpu.memory_space<vmem>>, vector<1x32xf32>
    %112 = arith.truncf %83 : vector<2x32xf32> to vector<2x32xbf16>
    %cst_71 = arith.constant dense<0.000000e+00> : vector<2x32xf32>
    %113 = tpu.matmul %112, %110, %cst_71 {dimension_numbers = #tpu.dot_dimension_numbers<[1], [0], [0], [1], [0, 0, 1, 1], [], []>} : vector<2x32xbf16>, vector<32x32xbf16>, vector<2x32xf32> -> vector<2x32xf32>
    %114 = vector.broadcast %111 : vector<1x32xf32> to vector<2x32xf32>
    %115 = arith.addf %113, %114 : vector<2x32xf32>
    %116 = arith.addf %115, %109 : vector<2x32xf32>
    %117 = arith.addf %83, %109 : vector<2x32xf32>
    %c0_72 = arith.constant 0 : index
    %c0_73 = arith.constant 0 : index
    %118 = vector.load %arg0[%c0_72, %c0_73] : memref<32x64xf32, #tpu.memory_space<vmem>>, vector<32x64xf32>
    %c0_74 = arith.constant 0 : index
    %c0_75 = arith.constant 0 : index
    %119 = vector.load %arg4[%c0_74, %c0_75] : memref<64x32xbf16, #tpu.memory_space<vmem>>, vector<64x32xbf16>
    %c0_76 = arith.constant 0 : index
    %c0_77 = arith.constant 0 : index
    %120 = vector.load %arg5[%c0_76, %c0_77] : memref<1x32xf32, #tpu.memory_space<vmem>>, vector<1x32xf32>
    %121 = arith.truncf %118 : vector<32x64xf32> to vector<32x64xbf16>
    %cst_78 = arith.constant dense<0.000000e+00> : vector<32x32xf32>
    %122 = tpu.matmul %121, %119, %cst_78 {dimension_numbers = #tpu.dot_dimension_numbers<[1], [0], [0], [1], [0, 0, 1, 1], [], []>} : vector<32x64xbf16>, vector<64x32xbf16>, vector<32x32xf32> -> vector<32x32xf32>
    %123 = vector.broadcast %120 : vector<1x32xf32> to vector<32x32xf32>
    %124 = arith.addf %122, %123 : vector<32x32xf32>
    %c0_79 = arith.constant 0 : index
    %c0_80 = arith.constant 0 : index
    %125 = vector.load %arg1[%c0_79, %c0_80] : memref<32x32xf32, #tpu.memory_space<vmem>>, vector<32x32xf32>
    %126 = arith.addf %124, %125 : vector<32x32xf32>
    %127 = vector.extract_strided_slice %116 {offsets = [0, 0], sizes = [1, 32], strides = [1, 1]} : vector<2x32xf32> to vector<1x32xf32>
    %128 = vector.shape_cast %127 : vector<1x32xf32> to vector<1x32xf32>
    %129 = vector.broadcast %128 : vector<1x32xf32> to vector<16x32xf32>
    %130 = vector.extract_strided_slice %116 {offsets = [1, 0], sizes = [1, 32], strides = [1, 1]} : vector<2x32xf32> to vector<1x32xf32>
    %131 = vector.shape_cast %130 : vector<1x32xf32> to vector<1x32xf32>
    %132 = vector.broadcast %131 : vector<1x32xf32> to vector<16x32xf32>
    %133 = tpu.concatenate %129, %132 in 0 : vector<16x32xf32>, vector<16x32xf32> -> vector<32x32xf32>
    %134 = arith.addf %126, %133 : vector<32x32xf32>
    %c0_81 = arith.constant 0 : index
    %c0_82 = arith.constant 0 : index
    %c0_83 = arith.constant 0 : index
    %c0_84 = arith.constant 0 : index
    %135 = vector.load %arg28[%c0_81, %c0_82, %c0_83, %c0_84] : memref<2x4x32x8xbf16, #tpu.memory_space<vmem>>, vector<1x1x32x8xbf16>
    %136 = vector.shape_cast %135 : vector<1x1x32x8xbf16> to vector<32x8xbf16>
    %c0_85 = arith.constant 0 : index
    %c0_86 = arith.constant 0 : index
    %c0_87 = arith.constant 0 : index
    %c0_88 = arith.constant 0 : index
    %137 = vector.load %arg31[%c0_85, %c0_86, %c0_87, %c0_88] : memref<2x4x1x8xf32, #tpu.memory_space<vmem>>, vector<1x1x1x8xf32>
    %138 = vector.shape_cast %137 : vector<1x1x1x8xf32> to vector<1x8xf32>
    %139 = arith.truncf %134 : vector<32x32xf32> to vector<32x32xbf16>
    %cst_89 = arith.constant dense<0.000000e+00> : vector<32x8xf32>
    %140 = tpu.matmul %139, %136, %cst_89 {dimension_numbers = #tpu.dot_dimension_numbers<[1], [0], [0], [1], [0, 0, 1, 1], [], []>} : vector<32x32xbf16>, vector<32x8xbf16>, vector<32x8xf32> -> vector<32x8xf32>
    %141 = vector.broadcast %138 : vector<1x8xf32> to vector<32x8xf32>
    %142 = arith.addf %140, %141 : vector<32x8xf32>
    %c0_90 = arith.constant 0 : index
    %c0_91 = arith.constant 0 : index
    %c0_92 = arith.constant 0 : index
    %c0_93 = arith.constant 0 : index
    %143 = vector.load %arg29[%c0_90, %c0_91, %c0_92, %c0_93] : memref<2x4x32x8xbf16, #tpu.memory_space<vmem>>, vector<1x1x32x8xbf16>
    %144 = vector.shape_cast %143 : vector<1x1x32x8xbf16> to vector<32x8xbf16>
    %c0_94 = arith.constant 0 : index
    %c0_95 = arith.constant 0 : index
    %c0_96 = arith.constant 0 : index
    %c0_97 = arith.constant 0 : index
    %145 = vector.load %arg32[%c0_94, %c0_95, %c0_96, %c0_97] : memref<2x4x1x8xf32, #tpu.memory_space<vmem>>, vector<1x1x1x8xf32>
    %146 = vector.shape_cast %145 : vector<1x1x1x8xf32> to vector<1x8xf32>
    %147 = arith.truncf %134 : vector<32x32xf32> to vector<32x32xbf16>
    %cst_98 = arith.constant dense<0.000000e+00> : vector<32x8xf32>
    %148 = tpu.matmul %147, %144, %cst_98 {dimension_numbers = #tpu.dot_dimension_numbers<[1], [0], [0], [1], [0, 0, 1, 1], [], []>} : vector<32x32xbf16>, vector<32x8xbf16>, vector<32x8xf32> -> vector<32x8xf32>
    %149 = vector.broadcast %146 : vector<1x8xf32> to vector<32x8xf32>
    %150 = arith.addf %148, %149 : vector<32x8xf32>
    %c0_99 = arith.constant 0 : index
    %c0_100 = arith.constant 0 : index
    %c0_101 = arith.constant 0 : index
    %c0_102 = arith.constant 0 : index
    %151 = vector.load %arg30[%c0_99, %c0_100, %c0_101, %c0_102] : memref<2x4x32x8xbf16, #tpu.memory_space<vmem>>, vector<1x1x32x8xbf16>
    %152 = vector.shape_cast %151 : vector<1x1x32x8xbf16> to vector<32x8xbf16>
    %c0_103 = arith.constant 0 : index
    %c0_104 = arith.constant 0 : index
    %c0_105 = arith.constant 0 : index
    %c0_106 = arith.constant 0 : index
    %153 = vector.load %arg33[%c0_103, %c0_104, %c0_105, %c0_106] : memref<2x4x1x8xf32, #tpu.memory_space<vmem>>, vector<1x1x1x8xf32>
    %154 = vector.shape_cast %153 : vector<1x1x1x8xf32> to vector<1x8xf32>
    %155 = arith.truncf %134 : vector<32x32xf32> to vector<32x32xbf16>
    %cst_107 = arith.constant dense<0.000000e+00> : vector<32x8xf32>
    %156 = tpu.matmul %155, %152, %cst_107 {dimension_numbers = #tpu.dot_dimension_numbers<[1], [0], [0], [1], [0, 0, 1, 1], [], []>} : vector<32x32xbf16>, vector<32x8xbf16>, vector<32x8xf32> -> vector<32x8xf32>
    %157 = vector.broadcast %154 : vector<1x8xf32> to vector<32x8xf32>
    %158 = arith.addf %156, %157 : vector<32x8xf32>
    %159 = vector.extract_strided_slice %142 {offsets = [0, 0], sizes = [16, 8], strides = [1, 1]} : vector<32x8xf32> to vector<16x8xf32>
    %cst_108 = arith.constant 0.353553385 : f32
    %160 = vector.broadcast %cst_108 : f32 to vector<16x8xf32>
    %161 = arith.mulf %159, %160 : vector<16x8xf32>
    %162 = vector.extract_strided_slice %150 {offsets = [0, 0], sizes = [16, 8], strides = [1, 1]} : vector<32x8xf32> to vector<16x8xf32>
    %163 = vector.extract_strided_slice %158 {offsets = [0, 0], sizes = [16, 8], strides = [1, 1]} : vector<32x8xf32> to vector<16x8xf32>
    %164 = arith.truncf %161 : vector<16x8xf32> to vector<16x8xbf16>
    %165 = arith.truncf %162 : vector<16x8xf32> to vector<16x8xbf16>
    %cst_109 = arith.constant dense<0.000000e+00> : vector<16x16xf32>
    %166 = tpu.matmul %164, %165, %cst_109 {dimension_numbers = #tpu.dot_dimension_numbers<[1], [1], [0], [0], [0, 0, 1, 0], [], []>} : vector<16x8xbf16>, vector<16x8xbf16>, vector<16x16xf32> -> vector<16x16xf32>
    %cst_110 = arith.constant dense<0xFF800000> : vector<16xf32>
    %167 = vector.multi_reduction <maximumf>, %166, %cst_110 [1] : vector<16x16xf32> to vector<16xf32>
    %168 = vector.shape_cast %167 : vector<16xf32> to vector<16x1xf32>
    %169 = vector.broadcast %168 : vector<16x1xf32> to vector<16x16xf32>
    %170 = arith.subf %166, %169 : vector<16x16xf32>
    %171 = math.exp %170 : vector<16x16xf32>
    %cst_111 = arith.constant dense<0.000000e+00> : vector<16xf32>
    %172 = vector.multi_reduction <add>, %171, %cst_111 [1] : vector<16x16xf32> to vector<16xf32>
    %173 = vector.shape_cast %172 : vector<16xf32> to vector<16x1xf32>
    %174 = vector.broadcast %173 : vector<16x1xf32> to vector<16x16xf32>
    %175 = arith.divf %171, %174 : vector<16x16xf32>
    %176 = arith.truncf %175 : vector<16x16xf32> to vector<16x16xbf16>
    %177 = arith.truncf %163 : vector<16x8xf32> to vector<16x8xbf16>
    %cst_112 = arith.constant dense<0.000000e+00> : vector<16x8xf32>
    %178 = tpu.matmul %176, %177, %cst_112 {dimension_numbers = #tpu.dot_dimension_numbers<[1], [0], [0], [1], [0, 0, 1, 1], [], []>} : vector<16x16xbf16>, vector<16x8xbf16>, vector<16x8xf32> -> vector<16x8xf32>
    %179 = vector.extract_strided_slice %142 {offsets = [16, 0], sizes = [16, 8], strides = [1, 1]} : vector<32x8xf32> to vector<16x8xf32>
    %cst_113 = arith.constant 0.353553385 : f32
    %180 = vector.broadcast %cst_113 : f32 to vector<16x8xf32>
    %181 = arith.mulf %179, %180 : vector<16x8xf32>
    %182 = vector.extract_strided_slice %150 {offsets = [16, 0], sizes = [16, 8], strides = [1, 1]} : vector<32x8xf32> to vector<16x8xf32>
    %183 = vector.extract_strided_slice %158 {offsets = [16, 0], sizes = [16, 8], strides = [1, 1]} : vector<32x8xf32> to vector<16x8xf32>
    %184 = arith.truncf %181 : vector<16x8xf32> to vector<16x8xbf16>
    %185 = arith.truncf %182 : vector<16x8xf32> to vector<16x8xbf16>
    %cst_114 = arith.constant dense<0.000000e+00> : vector<16x16xf32>
    %186 = tpu.matmul %184, %185, %cst_114 {dimension_numbers = #tpu.dot_dimension_numbers<[1], [1], [0], [0], [0, 0, 1, 0], [], []>} : vector<16x8xbf16>, vector<16x8xbf16>, vector<16x16xf32> -> vector<16x16xf32>
    %cst_115 = arith.constant dense<0xFF800000> : vector<16xf32>
    %187 = vector.multi_reduction <maximumf>, %186, %cst_115 [1] : vector<16x16xf32> to vector<16xf32>
    %188 = vector.shape_cast %187 : vector<16xf32> to vector<16x1xf32>
    %189 = vector.broadcast %188 : vector<16x1xf32> to vector<16x16xf32>
    %190 = arith.subf %186, %189 : vector<16x16xf32>
    %191 = math.exp %190 : vector<16x16xf32>
    %cst_116 = arith.constant dense<0.000000e+00> : vector<16xf32>
    %192 = vector.multi_reduction <add>, %191, %cst_116 [1] : vector<16x16xf32> to vector<16xf32>
    %193 = vector.shape_cast %192 : vector<16xf32> to vector<16x1xf32>
    %194 = vector.broadcast %193 : vector<16x1xf32> to vector<16x16xf32>
    %195 = arith.divf %191, %194 : vector<16x16xf32>
    %196 = arith.truncf %195 : vector<16x16xf32> to vector<16x16xbf16>
    %197 = arith.truncf %183 : vector<16x8xf32> to vector<16x8xbf16>
    %cst_117 = arith.constant dense<0.000000e+00> : vector<16x8xf32>
    %198 = tpu.matmul %196, %197, %cst_117 {dimension_numbers = #tpu.dot_dimension_numbers<[1], [0], [0], [1], [0, 0, 1, 1], [], []>} : vector<16x16xbf16>, vector<16x8xbf16>, vector<16x8xf32> -> vector<16x8xf32>
    %c0_118 = arith.constant 0 : index
    %c1 = arith.constant 1 : index
    %c0_119 = arith.constant 0 : index
    %c0_120 = arith.constant 0 : index
    %199 = vector.load %arg28[%c0_118, %c1, %c0_119, %c0_120] : memref<2x4x32x8xbf16, #tpu.memory_space<vmem>>, vector<1x1x32x8xbf16>
    %200 = vector.shape_cast %199 : vector<1x1x32x8xbf16> to vector<32x8xbf16>
    %c0_121 = arith.constant 0 : index
    %c1_122 = arith.constant 1 : index
    %c0_123 = arith.constant 0 : index
    %c0_124 = arith.constant 0 : index
    %201 = vector.load %arg31[%c0_121, %c1_122, %c0_123, %c0_124] : memref<2x4x1x8xf32, #tpu.memory_space<vmem>>, vector<1x1x1x8xf32>
    %202 = vector.shape_cast %201 : vector<1x1x1x8xf32> to vector<1x8xf32>
    %203 = arith.truncf %134 : vector<32x32xf32> to vector<32x32xbf16>
    %cst_125 = arith.constant dense<0.000000e+00> : vector<32x8xf32>
    %204 = tpu.matmul %203, %200, %cst_125 {dimension_numbers = #tpu.dot_dimension_numbers<[1], [0], [0], [1], [0, 0, 1, 1], [], []>} : vector<32x32xbf16>, vector<32x8xbf16>, vector<32x8xf32> -> vector<32x8xf32>
    %205 = vector.broadcast %202 : vector<1x8xf32> to vector<32x8xf32>
    %206 = arith.addf %204, %205 : vector<32x8xf32>
    %c0_126 = arith.constant 0 : index
    %c1_127 = arith.constant 1 : index
    %c0_128 = arith.constant 0 : index
    %c0_129 = arith.constant 0 : index
    %207 = vector.load %arg29[%c0_126, %c1_127, %c0_128, %c0_129] : memref<2x4x32x8xbf16, #tpu.memory_space<vmem>>, vector<1x1x32x8xbf16>
    %208 = vector.shape_cast %207 : vector<1x1x32x8xbf16> to vector<32x8xbf16>
    %c0_130 = arith.constant 0 : index
    %c1_131 = arith.constant 1 : index
    %c0_132 = arith.constant 0 : index
    %c0_133 = arith.constant 0 : index
    %209 = vector.load %arg32[%c0_130, %c1_131, %c0_132, %c0_133] : memref<2x4x1x8xf32, #tpu.memory_space<vmem>>, vector<1x1x1x8xf32>
    %210 = vector.shape_cast %209 : vector<1x1x1x8xf32> to vector<1x8xf32>
    %211 = arith.truncf %134 : vector<32x32xf32> to vector<32x32xbf16>
    %cst_134 = arith.constant dense<0.000000e+00> : vector<32x8xf32>
    %212 = tpu.matmul %211, %208, %cst_134 {dimension_numbers = #tpu.dot_dimension_numbers<[1], [0], [0], [1], [0, 0, 1, 1], [], []>} : vector<32x32xbf16>, vector<32x8xbf16>, vector<32x8xf32> -> vector<32x8xf32>
    %213 = vector.broadcast %210 : vector<1x8xf32> to vector<32x8xf32>
    %214 = arith.addf %212, %213 : vector<32x8xf32>
    %c0_135 = arith.constant 0 : index
    %c1_136 = arith.constant 1 : index
    %c0_137 = arith.constant 0 : index
    %c0_138 = arith.constant 0 : index
    %215 = vector.load %arg30[%c0_135, %c1_136, %c0_137, %c0_138] : memref<2x4x32x8xbf16, #tpu.memory_space<vmem>>, vector<1x1x32x8xbf16>
    %216 = vector.shape_cast %215 : vector<1x1x32x8xbf16> to vector<32x8xbf16>
    %c0_139 = arith.constant 0 : index
    %c1_140 = arith.constant 1 : index
    %c0_141 = arith.constant 0 : index
    %c0_142 = arith.constant 0 : index
    %217 = vector.load %arg33[%c0_139, %c1_140, %c0_141, %c0_142] : memref<2x4x1x8xf32, #tpu.memory_space<vmem>>, vector<1x1x1x8xf32>
    %218 = vector.shape_cast %217 : vector<1x1x1x8xf32> to vector<1x8xf32>
    %219 = arith.truncf %134 : vector<32x32xf32> to vector<32x32xbf16>
    %cst_143 = arith.constant dense<0.000000e+00> : vector<32x8xf32>
    %220 = tpu.matmul %219, %216, %cst_143 {dimension_numbers = #tpu.dot_dimension_numbers<[1], [0], [0], [1], [0, 0, 1, 1], [], []>} : vector<32x32xbf16>, vector<32x8xbf16>, vector<32x8xf32> -> vector<32x8xf32>
    %221 = vector.broadcast %218 : vector<1x8xf32> to vector<32x8xf32>
    %222 = arith.addf %220, %221 : vector<32x8xf32>
    %223 = vector.extract_strided_slice %206 {offsets = [0, 0], sizes = [16, 8], strides = [1, 1]} : vector<32x8xf32> to vector<16x8xf32>
    %cst_144 = arith.constant 0.353553385 : f32
    %224 = vector.broadcast %cst_144 : f32 to vector<16x8xf32>
    %225 = arith.mulf %223, %224 : vector<16x8xf32>
    %226 = vector.extract_strided_slice %214 {offsets = [0, 0], sizes = [16, 8], strides = [1, 1]} : vector<32x8xf32> to vector<16x8xf32>
    %227 = vector.extract_strided_slice %222 {offsets = [0, 0], sizes = [16, 8], strides = [1, 1]} : vector<32x8xf32> to vector<16x8xf32>
    %228 = arith.truncf %225 : vector<16x8xf32> to vector<16x8xbf16>
    %229 = arith.truncf %226 : vector<16x8xf32> to vector<16x8xbf16>
    %cst_145 = arith.constant dense<0.000000e+00> : vector<16x16xf32>
    %230 = tpu.matmul %228, %229, %cst_145 {dimension_numbers = #tpu.dot_dimension_numbers<[1], [1], [0], [0], [0, 0, 1, 0], [], []>} : vector<16x8xbf16>, vector<16x8xbf16>, vector<16x16xf32> -> vector<16x16xf32>
    %cst_146 = arith.constant dense<0xFF800000> : vector<16xf32>
    %231 = vector.multi_reduction <maximumf>, %230, %cst_146 [1] : vector<16x16xf32> to vector<16xf32>
    %232 = vector.shape_cast %231 : vector<16xf32> to vector<16x1xf32>
    %233 = vector.broadcast %232 : vector<16x1xf32> to vector<16x16xf32>
    %234 = arith.subf %230, %233 : vector<16x16xf32>
    %235 = math.exp %234 : vector<16x16xf32>
    %cst_147 = arith.constant dense<0.000000e+00> : vector<16xf32>
    %236 = vector.multi_reduction <add>, %235, %cst_147 [1] : vector<16x16xf32> to vector<16xf32>
    %237 = vector.shape_cast %236 : vector<16xf32> to vector<16x1xf32>
    %238 = vector.broadcast %237 : vector<16x1xf32> to vector<16x16xf32>
    %239 = arith.divf %235, %238 : vector<16x16xf32>
    %240 = arith.truncf %239 : vector<16x16xf32> to vector<16x16xbf16>
    %241 = arith.truncf %227 : vector<16x8xf32> to vector<16x8xbf16>
    %cst_148 = arith.constant dense<0.000000e+00> : vector<16x8xf32>
    %242 = tpu.matmul %240, %241, %cst_148 {dimension_numbers = #tpu.dot_dimension_numbers<[1], [0], [0], [1], [0, 0, 1, 1], [], []>} : vector<16x16xbf16>, vector<16x8xbf16>, vector<16x8xf32> -> vector<16x8xf32>
    %243 = vector.extract_strided_slice %206 {offsets = [16, 0], sizes = [16, 8], strides = [1, 1]} : vector<32x8xf32> to vector<16x8xf32>
    %cst_149 = arith.constant 0.353553385 : f32
    %244 = vector.broadcast %cst_149 : f32 to vector<16x8xf32>
    %245 = arith.mulf %243, %244 : vector<16x8xf32>
    %246 = vector.extract_strided_slice %214 {offsets = [16, 0], sizes = [16, 8], strides = [1, 1]} : vector<32x8xf32> to vector<16x8xf32>
    %247 = vector.extract_strided_slice %222 {offsets = [16, 0], sizes = [16, 8], strides = [1, 1]} : vector<32x8xf32> to vector<16x8xf32>
    %248 = arith.truncf %245 : vector<16x8xf32> to vector<16x8xbf16>
    %249 = arith.truncf %246 : vector<16x8xf32> to vector<16x8xbf16>
    %cst_150 = arith.constant dense<0.000000e+00> : vector<16x16xf32>
    %250 = tpu.matmul %248, %249, %cst_150 {dimension_numbers = #tpu.dot_dimension_numbers<[1], [1], [0], [0], [0, 0, 1, 0], [], []>} : vector<16x8xbf16>, vector<16x8xbf16>, vector<16x16xf32> -> vector<16x16xf32>
    %cst_151 = arith.constant dense<0xFF800000> : vector<16xf32>
    %251 = vector.multi_reduction <maximumf>, %250, %cst_151 [1] : vector<16x16xf32> to vector<16xf32>
    %252 = vector.shape_cast %251 : vector<16xf32> to vector<16x1xf32>
    %253 = vector.broadcast %252 : vector<16x1xf32> to vector<16x16xf32>
    %254 = arith.subf %250, %253 : vector<16x16xf32>
    %255 = math.exp %254 : vector<16x16xf32>
    %cst_152 = arith.constant dense<0.000000e+00> : vector<16xf32>
    %256 = vector.multi_reduction <add>, %255, %cst_152 [1] : vector<16x16xf32> to vector<16xf32>
    %257 = vector.shape_cast %256 : vector<16xf32> to vector<16x1xf32>
    %258 = vector.broadcast %257 : vector<16x1xf32> to vector<16x16xf32>
    %259 = arith.divf %255, %258 : vector<16x16xf32>
    %260 = arith.truncf %259 : vector<16x16xf32> to vector<16x16xbf16>
    %261 = arith.truncf %247 : vector<16x8xf32> to vector<16x8xbf16>
    %cst_153 = arith.constant dense<0.000000e+00> : vector<16x8xf32>
    %262 = tpu.matmul %260, %261, %cst_153 {dimension_numbers = #tpu.dot_dimension_numbers<[1], [0], [0], [1], [0, 0, 1, 1], [], []>} : vector<16x16xbf16>, vector<16x8xbf16>, vector<16x8xf32> -> vector<16x8xf32>
    %c0_154 = arith.constant 0 : index
    %c2 = arith.constant 2 : index
    %c0_155 = arith.constant 0 : index
    %c0_156 = arith.constant 0 : index
    %263 = vector.load %arg28[%c0_154, %c2, %c0_155, %c0_156] : memref<2x4x32x8xbf16, #tpu.memory_space<vmem>>, vector<1x1x32x8xbf16>
    %264 = vector.shape_cast %263 : vector<1x1x32x8xbf16> to vector<32x8xbf16>
    %c0_157 = arith.constant 0 : index
    %c2_158 = arith.constant 2 : index
    %c0_159 = arith.constant 0 : index
    %c0_160 = arith.constant 0 : index
    %265 = vector.load %arg31[%c0_157, %c2_158, %c0_159, %c0_160] : memref<2x4x1x8xf32, #tpu.memory_space<vmem>>, vector<1x1x1x8xf32>
    %266 = vector.shape_cast %265 : vector<1x1x1x8xf32> to vector<1x8xf32>
    %267 = arith.truncf %134 : vector<32x32xf32> to vector<32x32xbf16>
    %cst_161 = arith.constant dense<0.000000e+00> : vector<32x8xf32>
    %268 = tpu.matmul %267, %264, %cst_161 {dimension_numbers = #tpu.dot_dimension_numbers<[1], [0], [0], [1], [0, 0, 1, 1], [], []>} : vector<32x32xbf16>, vector<32x8xbf16>, vector<32x8xf32> -> vector<32x8xf32>
    %269 = vector.broadcast %266 : vector<1x8xf32> to vector<32x8xf32>
    %270 = arith.addf %268, %269 : vector<32x8xf32>
    %c0_162 = arith.constant 0 : index
    %c2_163 = arith.constant 2 : index
    %c0_164 = arith.constant 0 : index
    %c0_165 = arith.constant 0 : index
    %271 = vector.load %arg29[%c0_162, %c2_163, %c0_164, %c0_165] : memref<2x4x32x8xbf16, #tpu.memory_space<vmem>>, vector<1x1x32x8xbf16>
    %272 = vector.shape_cast %271 : vector<1x1x32x8xbf16> to vector<32x8xbf16>
    %c0_166 = arith.constant 0 : index
    %c2_167 = arith.constant 2 : index
    %c0_168 = arith.constant 0 : index
    %c0_169 = arith.constant 0 : index
    %273 = vector.load %arg32[%c0_166, %c2_167, %c0_168, %c0_169] : memref<2x4x1x8xf32, #tpu.memory_space<vmem>>, vector<1x1x1x8xf32>
    %274 = vector.shape_cast %273 : vector<1x1x1x8xf32> to vector<1x8xf32>
    %275 = arith.truncf %134 : vector<32x32xf32> to vector<32x32xbf16>
    %cst_170 = arith.constant dense<0.000000e+00> : vector<32x8xf32>
    %276 = tpu.matmul %275, %272, %cst_170 {dimension_numbers = #tpu.dot_dimension_numbers<[1], [0], [0], [1], [0, 0, 1, 1], [], []>} : vector<32x32xbf16>, vector<32x8xbf16>, vector<32x8xf32> -> vector<32x8xf32>
    %277 = vector.broadcast %274 : vector<1x8xf32> to vector<32x8xf32>
    %278 = arith.addf %276, %277 : vector<32x8xf32>
    %c0_171 = arith.constant 0 : index
    %c2_172 = arith.constant 2 : index
    %c0_173 = arith.constant 0 : index
    %c0_174 = arith.constant 0 : index
    %279 = vector.load %arg30[%c0_171, %c2_172, %c0_173, %c0_174] : memref<2x4x32x8xbf16, #tpu.memory_space<vmem>>, vector<1x1x32x8xbf16>
    %280 = vector.shape_cast %279 : vector<1x1x32x8xbf16> to vector<32x8xbf16>
    %c0_175 = arith.constant 0 : index
    %c2_176 = arith.constant 2 : index
    %c0_177 = arith.constant 0 : index
    %c0_178 = arith.constant 0 : index
    %281 = vector.load %arg33[%c0_175, %c2_176, %c0_177, %c0_178] : memref<2x4x1x8xf32, #tpu.memory_space<vmem>>, vector<1x1x1x8xf32>
    %282 = vector.shape_cast %281 : vector<1x1x1x8xf32> to vector<1x8xf32>
    %283 = arith.truncf %134 : vector<32x32xf32> to vector<32x32xbf16>
    %cst_179 = arith.constant dense<0.000000e+00> : vector<32x8xf32>
    %284 = tpu.matmul %283, %280, %cst_179 {dimension_numbers = #tpu.dot_dimension_numbers<[1], [0], [0], [1], [0, 0, 1, 1], [], []>} : vector<32x32xbf16>, vector<32x8xbf16>, vector<32x8xf32> -> vector<32x8xf32>
    %285 = vector.broadcast %282 : vector<1x8xf32> to vector<32x8xf32>
    %286 = arith.addf %284, %285 : vector<32x8xf32>
    %287 = vector.extract_strided_slice %270 {offsets = [0, 0], sizes = [16, 8], strides = [1, 1]} : vector<32x8xf32> to vector<16x8xf32>
    %cst_180 = arith.constant 0.353553385 : f32
    %288 = vector.broadcast %cst_180 : f32 to vector<16x8xf32>
    %289 = arith.mulf %287, %288 : vector<16x8xf32>
    %290 = vector.extract_strided_slice %278 {offsets = [0, 0], sizes = [16, 8], strides = [1, 1]} : vector<32x8xf32> to vector<16x8xf32>
    %291 = vector.extract_strided_slice %286 {offsets = [0, 0], sizes = [16, 8], strides = [1, 1]} : vector<32x8xf32> to vector<16x8xf32>
    %292 = arith.truncf %289 : vector<16x8xf32> to vector<16x8xbf16>
    %293 = arith.truncf %290 : vector<16x8xf32> to vector<16x8xbf16>
    %cst_181 = arith.constant dense<0.000000e+00> : vector<16x16xf32>
    %294 = tpu.matmul %292, %293, %cst_181 {dimension_numbers = #tpu.dot_dimension_numbers<[1], [1], [0], [0], [0, 0, 1, 0], [], []>} : vector<16x8xbf16>, vector<16x8xbf16>, vector<16x16xf32> -> vector<16x16xf32>
    %cst_182 = arith.constant dense<0xFF800000> : vector<16xf32>
    %295 = vector.multi_reduction <maximumf>, %294, %cst_182 [1] : vector<16x16xf32> to vector<16xf32>
    %296 = vector.shape_cast %295 : vector<16xf32> to vector<16x1xf32>
    %297 = vector.broadcast %296 : vector<16x1xf32> to vector<16x16xf32>
    %298 = arith.subf %294, %297 : vector<16x16xf32>
    %299 = math.exp %298 : vector<16x16xf32>
    %cst_183 = arith.constant dense<0.000000e+00> : vector<16xf32>
    %300 = vector.multi_reduction <add>, %299, %cst_183 [1] : vector<16x16xf32> to vector<16xf32>
    %301 = vector.shape_cast %300 : vector<16xf32> to vector<16x1xf32>
    %302 = vector.broadcast %301 : vector<16x1xf32> to vector<16x16xf32>
    %303 = arith.divf %299, %302 : vector<16x16xf32>
    %304 = arith.truncf %303 : vector<16x16xf32> to vector<16x16xbf16>
    %305 = arith.truncf %291 : vector<16x8xf32> to vector<16x8xbf16>
    %cst_184 = arith.constant dense<0.000000e+00> : vector<16x8xf32>
    %306 = tpu.matmul %304, %305, %cst_184 {dimension_numbers = #tpu.dot_dimension_numbers<[1], [0], [0], [1], [0, 0, 1, 1], [], []>} : vector<16x16xbf16>, vector<16x8xbf16>, vector<16x8xf32> -> vector<16x8xf32>
    %307 = vector.extract_strided_slice %270 {offsets = [16, 0], sizes = [16, 8], strides = [1, 1]} : vector<32x8xf32> to vector<16x8xf32>
    %cst_185 = arith.constant 0.353553385 : f32
    %308 = vector.broadcast %cst_185 : f32 to vector<16x8xf32>
    %309 = arith.mulf %307, %308 : vector<16x8xf32>
    %310 = vector.extract_strided_slice %278 {offsets = [16, 0], sizes = [16, 8], strides = [1, 1]} : vector<32x8xf32> to vector<16x8xf32>
    %311 = vector.extract_strided_slice %286 {offsets = [16, 0], sizes = [16, 8], strides = [1, 1]} : vector<32x8xf32> to vector<16x8xf32>
    %312 = arith.truncf %309 : vector<16x8xf32> to vector<16x8xbf16>
    %313 = arith.truncf %310 : vector<16x8xf32> to vector<16x8xbf16>
    %cst_186 = arith.constant dense<0.000000e+00> : vector<16x16xf32>
    %314 = tpu.matmul %312, %313, %cst_186 {dimension_numbers = #tpu.dot_dimension_numbers<[1], [1], [0], [0], [0, 0, 1, 0], [], []>} : vector<16x8xbf16>, vector<16x8xbf16>, vector<16x16xf32> -> vector<16x16xf32>
    %cst_187 = arith.constant dense<0xFF800000> : vector<16xf32>
    %315 = vector.multi_reduction <maximumf>, %314, %cst_187 [1] : vector<16x16xf32> to vector<16xf32>
    %316 = vector.shape_cast %315 : vector<16xf32> to vector<16x1xf32>
    %317 = vector.broadcast %316 : vector<16x1xf32> to vector<16x16xf32>
    %318 = arith.subf %314, %317 : vector<16x16xf32>
    %319 = math.exp %318 : vector<16x16xf32>
    %cst_188 = arith.constant dense<0.000000e+00> : vector<16xf32>
    %320 = vector.multi_reduction <add>, %319, %cst_188 [1] : vector<16x16xf32> to vector<16xf32>
    %321 = vector.shape_cast %320 : vector<16xf32> to vector<16x1xf32>
    %322 = vector.broadcast %321 : vector<16x1xf32> to vector<16x16xf32>
    %323 = arith.divf %319, %322 : vector<16x16xf32>
    %324 = arith.truncf %323 : vector<16x16xf32> to vector<16x16xbf16>
    %325 = arith.truncf %311 : vector<16x8xf32> to vector<16x8xbf16>
    %cst_189 = arith.constant dense<0.000000e+00> : vector<16x8xf32>
    %326 = tpu.matmul %324, %325, %cst_189 {dimension_numbers = #tpu.dot_dimension_numbers<[1], [0], [0], [1], [0, 0, 1, 1], [], []>} : vector<16x16xbf16>, vector<16x8xbf16>, vector<16x8xf32> -> vector<16x8xf32>
    %c0_190 = arith.constant 0 : index
    %c3 = arith.constant 3 : index
    %c0_191 = arith.constant 0 : index
    %c0_192 = arith.constant 0 : index
    %327 = vector.load %arg28[%c0_190, %c3, %c0_191, %c0_192] : memref<2x4x32x8xbf16, #tpu.memory_space<vmem>>, vector<1x1x32x8xbf16>
    %328 = vector.shape_cast %327 : vector<1x1x32x8xbf16> to vector<32x8xbf16>
    %c0_193 = arith.constant 0 : index
    %c3_194 = arith.constant 3 : index
    %c0_195 = arith.constant 0 : index
    %c0_196 = arith.constant 0 : index
    %329 = vector.load %arg31[%c0_193, %c3_194, %c0_195, %c0_196] : memref<2x4x1x8xf32, #tpu.memory_space<vmem>>, vector<1x1x1x8xf32>
    %330 = vector.shape_cast %329 : vector<1x1x1x8xf32> to vector<1x8xf32>
    %331 = arith.truncf %134 : vector<32x32xf32> to vector<32x32xbf16>
    %cst_197 = arith.constant dense<0.000000e+00> : vector<32x8xf32>
    %332 = tpu.matmul %331, %328, %cst_197 {dimension_numbers = #tpu.dot_dimension_numbers<[1], [0], [0], [1], [0, 0, 1, 1], [], []>} : vector<32x32xbf16>, vector<32x8xbf16>, vector<32x8xf32> -> vector<32x8xf32>
    %333 = vector.broadcast %330 : vector<1x8xf32> to vector<32x8xf32>
    %334 = arith.addf %332, %333 : vector<32x8xf32>
    %c0_198 = arith.constant 0 : index
    %c3_199 = arith.constant 3 : index
    %c0_200 = arith.constant 0 : index
    %c0_201 = arith.constant 0 : index
    %335 = vector.load %arg29[%c0_198, %c3_199, %c0_200, %c0_201] : memref<2x4x32x8xbf16, #tpu.memory_space<vmem>>, vector<1x1x32x8xbf16>
    %336 = vector.shape_cast %335 : vector<1x1x32x8xbf16> to vector<32x8xbf16>
    %c0_202 = arith.constant 0 : index
    %c3_203 = arith.constant 3 : index
    %c0_204 = arith.constant 0 : index
    %c0_205 = arith.constant 0 : index
    %337 = vector.load %arg32[%c0_202, %c3_203, %c0_204, %c0_205] : memref<2x4x1x8xf32, #tpu.memory_space<vmem>>, vector<1x1x1x8xf32>
    %338 = vector.shape_cast %337 : vector<1x1x1x8xf32> to vector<1x8xf32>
    %339 = arith.truncf %134 : vector<32x32xf32> to vector<32x32xbf16>
    %cst_206 = arith.constant dense<0.000000e+00> : vector<32x8xf32>
    %340 = tpu.matmul %339, %336, %cst_206 {dimension_numbers = #tpu.dot_dimension_numbers<[1], [0], [0], [1], [0, 0, 1, 1], [], []>} : vector<32x32xbf16>, vector<32x8xbf16>, vector<32x8xf32> -> vector<32x8xf32>
    %341 = vector.broadcast %338 : vector<1x8xf32> to vector<32x8xf32>
    %342 = arith.addf %340, %341 : vector<32x8xf32>
    %c0_207 = arith.constant 0 : index
    %c3_208 = arith.constant 3 : index
    %c0_209 = arith.constant 0 : index
    %c0_210 = arith.constant 0 : index
    %343 = vector.load %arg30[%c0_207, %c3_208, %c0_209, %c0_210] : memref<2x4x32x8xbf16, #tpu.memory_space<vmem>>, vector<1x1x32x8xbf16>
    %344 = vector.shape_cast %343 : vector<1x1x32x8xbf16> to vector<32x8xbf16>
    %c0_211 = arith.constant 0 : index
    %c3_212 = arith.constant 3 : index
    %c0_213 = arith.constant 0 : index
    %c0_214 = arith.constant 0 : index
    %345 = vector.load %arg33[%c0_211, %c3_212, %c0_213, %c0_214] : memref<2x4x1x8xf32, #tpu.memory_space<vmem>>, vector<1x1x1x8xf32>
    %346 = vector.shape_cast %345 : vector<1x1x1x8xf32> to vector<1x8xf32>
    %347 = arith.truncf %134 : vector<32x32xf32> to vector<32x32xbf16>
    %cst_215 = arith.constant dense<0.000000e+00> : vector<32x8xf32>
    %348 = tpu.matmul %347, %344, %cst_215 {dimension_numbers = #tpu.dot_dimension_numbers<[1], [0], [0], [1], [0, 0, 1, 1], [], []>} : vector<32x32xbf16>, vector<32x8xbf16>, vector<32x8xf32> -> vector<32x8xf32>
    %349 = vector.broadcast %346 : vector<1x8xf32> to vector<32x8xf32>
    %350 = arith.addf %348, %349 : vector<32x8xf32>
    %351 = vector.extract_strided_slice %334 {offsets = [0, 0], sizes = [16, 8], strides = [1, 1]} : vector<32x8xf32> to vector<16x8xf32>
    %cst_216 = arith.constant 0.353553385 : f32
    %352 = vector.broadcast %cst_216 : f32 to vector<16x8xf32>
    %353 = arith.mulf %351, %352 : vector<16x8xf32>
    %354 = vector.extract_strided_slice %342 {offsets = [0, 0], sizes = [16, 8], strides = [1, 1]} : vector<32x8xf32> to vector<16x8xf32>
    %355 = vector.extract_strided_slice %350 {offsets = [0, 0], sizes = [16, 8], strides = [1, 1]} : vector<32x8xf32> to vector<16x8xf32>
    %356 = arith.truncf %353 : vector<16x8xf32> to vector<16x8xbf16>
    %357 = arith.truncf %354 : vector<16x8xf32> to vector<16x8xbf16>
    %cst_217 = arith.constant dense<0.000000e+00> : vector<16x16xf32>
    %358 = tpu.matmul %356, %357, %cst_217 {dimension_numbers = #tpu.dot_dimension_numbers<[1], [1], [0], [0], [0, 0, 1, 0], [], []>} : vector<16x8xbf16>, vector<16x8xbf16>, vector<16x16xf32> -> vector<16x16xf32>
    %cst_218 = arith.constant dense<0xFF800000> : vector<16xf32>
    %359 = vector.multi_reduction <maximumf>, %358, %cst_218 [1] : vector<16x16xf32> to vector<16xf32>
    %360 = vector.shape_cast %359 : vector<16xf32> to vector<16x1xf32>
    %361 = vector.broadcast %360 : vector<16x1xf32> to vector<16x16xf32>
    %362 = arith.subf %358, %361 : vector<16x16xf32>
    %363 = math.exp %362 : vector<16x16xf32>
    %cst_219 = arith.constant dense<0.000000e+00> : vector<16xf32>
    %364 = vector.multi_reduction <add>, %363, %cst_219 [1] : vector<16x16xf32> to vector<16xf32>
    %365 = vector.shape_cast %364 : vector<16xf32> to vector<16x1xf32>
    %366 = vector.broadcast %365 : vector<16x1xf32> to vector<16x16xf32>
    %367 = arith.divf %363, %366 : vector<16x16xf32>
    %368 = arith.truncf %367 : vector<16x16xf32> to vector<16x16xbf16>
    %369 = arith.truncf %355 : vector<16x8xf32> to vector<16x8xbf16>
    %cst_220 = arith.constant dense<0.000000e+00> : vector<16x8xf32>
    %370 = tpu.matmul %368, %369, %cst_220 {dimension_numbers = #tpu.dot_dimension_numbers<[1], [0], [0], [1], [0, 0, 1, 1], [], []>} : vector<16x16xbf16>, vector<16x8xbf16>, vector<16x8xf32> -> vector<16x8xf32>
    %371 = vector.extract_strided_slice %334 {offsets = [16, 0], sizes = [16, 8], strides = [1, 1]} : vector<32x8xf32> to vector<16x8xf32>
    %cst_221 = arith.constant 0.353553385 : f32
    %372 = vector.broadcast %cst_221 : f32 to vector<16x8xf32>
    %373 = arith.mulf %371, %372 : vector<16x8xf32>
    %374 = vector.extract_strided_slice %342 {offsets = [16, 0], sizes = [16, 8], strides = [1, 1]} : vector<32x8xf32> to vector<16x8xf32>
    %375 = vector.extract_strided_slice %350 {offsets = [16, 0], sizes = [16, 8], strides = [1, 1]} : vector<32x8xf32> to vector<16x8xf32>
    %376 = arith.truncf %373 : vector<16x8xf32> to vector<16x8xbf16>
    %377 = arith.truncf %374 : vector<16x8xf32> to vector<16x8xbf16>
    %cst_222 = arith.constant dense<0.000000e+00> : vector<16x16xf32>
    %378 = tpu.matmul %376, %377, %cst_222 {dimension_numbers = #tpu.dot_dimension_numbers<[1], [1], [0], [0], [0, 0, 1, 0], [], []>} : vector<16x8xbf16>, vector<16x8xbf16>, vector<16x16xf32> -> vector<16x16xf32>
    %cst_223 = arith.constant dense<0xFF800000> : vector<16xf32>
    %379 = vector.multi_reduction <maximumf>, %378, %cst_223 [1] : vector<16x16xf32> to vector<16xf32>
    %380 = vector.shape_cast %379 : vector<16xf32> to vector<16x1xf32>
    %381 = vector.broadcast %380 : vector<16x1xf32> to vector<16x16xf32>
    %382 = arith.subf %378, %381 : vector<16x16xf32>
    %383 = math.exp %382 : vector<16x16xf32>
    %cst_224 = arith.constant dense<0.000000e+00> : vector<16xf32>
    %384 = vector.multi_reduction <add>, %383, %cst_224 [1] : vector<16x16xf32> to vector<16xf32>
    %385 = vector.shape_cast %384 : vector<16xf32> to vector<16x1xf32>
    %386 = vector.broadcast %385 : vector<16x1xf32> to vector<16x16xf32>
    %387 = arith.divf %383, %386 : vector<16x16xf32>
    %388 = arith.truncf %387 : vector<16x16xf32> to vector<16x16xbf16>
    %389 = arith.truncf %375 : vector<16x8xf32> to vector<16x8xbf16>
    %cst_225 = arith.constant dense<0.000000e+00> : vector<16x8xf32>
    %390 = tpu.matmul %388, %389, %cst_225 {dimension_numbers = #tpu.dot_dimension_numbers<[1], [0], [0], [1], [0, 0, 1, 1], [], []>} : vector<16x16xbf16>, vector<16x8xbf16>, vector<16x8xf32> -> vector<16x8xf32>
    %391 = tpu.concatenate %178, %242, %306, %370 in 1 : vector<16x8xf32>, vector<16x8xf32>, vector<16x8xf32>, vector<16x8xf32> -> vector<16x32xf32>
    %392 = tpu.concatenate %198, %262, %326, %390 in 1 : vector<16x8xf32>, vector<16x8xf32>, vector<16x8xf32>, vector<16x8xf32> -> vector<16x32xf32>
    %393 = tpu.concatenate %391, %392 in 0 : vector<16x32xf32>, vector<16x32xf32> -> vector<32x32xf32>
    %c0_226 = arith.constant 0 : index
    %c0_227 = arith.constant 0 : index
    %c0_228 = arith.constant 0 : index
    %394 = vector.load %arg34[%c0_226, %c0_227, %c0_228] : memref<2x32x32xbf16, #tpu.memory_space<vmem>>, vector<1x32x32xbf16>
    %395 = vector.shape_cast %394 : vector<1x32x32xbf16> to vector<32x32xbf16>
    %c0_229 = arith.constant 0 : index
    %c0_230 = arith.constant 0 : index
    %c0_231 = arith.constant 0 : index
    %396 = vector.load %arg35[%c0_229, %c0_230, %c0_231] : memref<2x1x32xf32, #tpu.memory_space<vmem>>, vector<1x1x32xf32>
    %397 = vector.shape_cast %396 : vector<1x1x32xf32> to vector<1x32xf32>
    %398 = arith.truncf %393 : vector<32x32xf32> to vector<32x32xbf16>
    %cst_232 = arith.constant dense<0.000000e+00> : vector<32x32xf32>
    %399 = tpu.matmul %398, %395, %cst_232 {dimension_numbers = #tpu.dot_dimension_numbers<[1], [0], [0], [1], [0, 0, 1, 1], [], []>} : vector<32x32xbf16>, vector<32x32xbf16>, vector<32x32xf32> -> vector<32x32xf32>
    %400 = vector.broadcast %397 : vector<1x32xf32> to vector<32x32xf32>
    %401 = arith.addf %399, %400 : vector<32x32xf32>
    %402 = arith.addf %134, %401 : vector<32x32xf32>
    %c0_233 = arith.constant 0 : index
    %c0_234 = arith.constant 0 : index
    %c0_235 = arith.constant 0 : index
    %403 = vector.load %arg36[%c0_233, %c0_234, %c0_235] : memref<2x1x32xf32, #tpu.memory_space<vmem>>, vector<1x1x32xf32>
    %404 = vector.shape_cast %403 : vector<1x1x32xf32> to vector<1x32xf32>
    %c0_236 = arith.constant 0 : index
    %c0_237 = arith.constant 0 : index
    %c0_238 = arith.constant 0 : index
    %405 = vector.load %arg37[%c0_236, %c0_237, %c0_238] : memref<2x1x32xf32, #tpu.memory_space<vmem>>, vector<1x1x32xf32>
    %406 = vector.shape_cast %405 : vector<1x1x32xf32> to vector<1x32xf32>
    %cst_239 = arith.constant dense<0.000000e+00> : vector<32xf32>
    %407 = vector.multi_reduction <add>, %402, %cst_239 [1] : vector<32x32xf32> to vector<32xf32>
    %408 = vector.shape_cast %407 : vector<32xf32> to vector<32x1xf32>
    %cst_240 = arith.constant 3.200000e+01 : f32
    %409 = vector.broadcast %cst_240 : f32 to vector<32x1xf32>
    %410 = arith.divf %408, %409 : vector<32x1xf32>
    %411 = vector.broadcast %410 : vector<32x1xf32> to vector<32x32xf32>
    %412 = arith.subf %402, %411 : vector<32x32xf32>
    %413 = arith.mulf %412, %412 : vector<32x32xf32>
    %cst_241 = arith.constant dense<0.000000e+00> : vector<32xf32>
    %414 = vector.multi_reduction <add>, %413, %cst_241 [1] : vector<32x32xf32> to vector<32xf32>
    %415 = vector.shape_cast %414 : vector<32xf32> to vector<32x1xf32>
    %cst_242 = arith.constant 3.200000e+01 : f32
    %416 = vector.broadcast %cst_242 : f32 to vector<32x1xf32>
    %417 = arith.divf %415, %416 : vector<32x1xf32>
    %cst_243 = arith.constant 9.99999974E-6 : f32
    %418 = vector.broadcast %cst_243 : f32 to vector<32x1xf32>
    %419 = arith.addf %417, %418 : vector<32x1xf32>
    %420 = math.rsqrt %419 : vector<32x1xf32>
    %421 = vector.broadcast %420 : vector<32x1xf32> to vector<32x32xf32>
    %422 = arith.mulf %412, %421 : vector<32x32xf32>
    %423 = vector.broadcast %404 : vector<1x32xf32> to vector<32x32xf32>
    %424 = arith.mulf %422, %423 : vector<32x32xf32>
    %425 = vector.broadcast %406 : vector<1x32xf32> to vector<32x32xf32>
    %426 = arith.addf %424, %425 : vector<32x32xf32>
    %c0_244 = arith.constant 0 : index
    %c0_245 = arith.constant 0 : index
    %c0_246 = arith.constant 0 : index
    %427 = vector.load %arg38[%c0_244, %c0_245, %c0_246] : memref<2x32x2048xbf16, #tpu.memory_space<vmem>>, vector<1x32x2048xbf16>
    %428 = vector.shape_cast %427 : vector<1x32x2048xbf16> to vector<32x2048xbf16>
    %c0_247 = arith.constant 0 : index
    %c0_248 = arith.constant 0 : index
    %c0_249 = arith.constant 0 : index
    %429 = vector.load %arg39[%c0_247, %c0_248, %c0_249] : memref<2x1x2048xf32, #tpu.memory_space<vmem>>, vector<1x1x2048xf32>
    %430 = vector.shape_cast %429 : vector<1x1x2048xf32> to vector<1x2048xf32>
    %431 = arith.truncf %426 : vector<32x32xf32> to vector<32x32xbf16>
    %cst_250 = arith.constant dense<0.000000e+00> : vector<32x2048xf32>
    %432 = tpu.matmul %431, %428, %cst_250 {dimension_numbers = #tpu.dot_dimension_numbers<[1], [0], [0], [1], [0, 0, 1, 1], [], []>} : vector<32x32xbf16>, vector<32x2048xbf16>, vector<32x2048xf32> -> vector<32x2048xf32>
    %433 = vector.broadcast %430 : vector<1x2048xf32> to vector<32x2048xf32>
    %434 = arith.addf %432, %433 : vector<32x2048xf32>
    %cst_251 = arith.constant 0.000000e+00 : f32
    %435 = vector.broadcast %cst_251 : f32 to vector<32x2048xf32>
    %436 = arith.maximumf %434, %435 : vector<32x2048xf32>
    %c0_252 = arith.constant 0 : index
    %c0_253 = arith.constant 0 : index
    %c0_254 = arith.constant 0 : index
    %437 = vector.load %arg40[%c0_252, %c0_253, %c0_254] : memref<2x2048x32xbf16, #tpu.memory_space<vmem>>, vector<1x2048x32xbf16>
    %438 = vector.shape_cast %437 : vector<1x2048x32xbf16> to vector<2048x32xbf16>
    %c0_255 = arith.constant 0 : index
    %c0_256 = arith.constant 0 : index
    %c0_257 = arith.constant 0 : index
    %439 = vector.load %arg41[%c0_255, %c0_256, %c0_257] : memref<2x1x32xf32, #tpu.memory_space<vmem>>, vector<1x1x32xf32>
    %440 = vector.shape_cast %439 : vector<1x1x32xf32> to vector<1x32xf32>
    %441 = arith.truncf %436 : vector<32x2048xf32> to vector<32x2048xbf16>
    %cst_258 = arith.constant dense<0.000000e+00> : vector<32x32xf32>
    %442 = tpu.matmul %441, %438, %cst_258 {dimension_numbers = #tpu.dot_dimension_numbers<[1], [0], [0], [1], [0, 0, 1, 1], [], []>} : vector<32x2048xbf16>, vector<2048x32xbf16>, vector<32x32xf32> -> vector<32x32xf32>
    %443 = vector.broadcast %440 : vector<1x32xf32> to vector<32x32xf32>
    %444 = arith.addf %442, %443 : vector<32x32xf32>
    %445 = arith.addf %426, %444 : vector<32x32xf32>
    %c0_259 = arith.constant 0 : index
    %c0_260 = arith.constant 0 : index
    %c0_261 = arith.constant 0 : index
    %446 = vector.load %arg42[%c0_259, %c0_260, %c0_261] : memref<2x1x32xf32, #tpu.memory_space<vmem>>, vector<1x1x32xf32>
    %447 = vector.shape_cast %446 : vector<1x1x32xf32> to vector<1x32xf32>
    %c0_262 = arith.constant 0 : index
    %c0_263 = arith.constant 0 : index
    %c0_264 = arith.constant 0 : index
    %448 = vector.load %arg43[%c0_262, %c0_263, %c0_264] : memref<2x1x32xf32, #tpu.memory_space<vmem>>, vector<1x1x32xf32>
    %449 = vector.shape_cast %448 : vector<1x1x32xf32> to vector<1x32xf32>
    %cst_265 = arith.constant dense<0.000000e+00> : vector<32xf32>
    %450 = vector.multi_reduction <add>, %445, %cst_265 [1] : vector<32x32xf32> to vector<32xf32>
    %451 = vector.shape_cast %450 : vector<32xf32> to vector<32x1xf32>
    %cst_266 = arith.constant 3.200000e+01 : f32
    %452 = vector.broadcast %cst_266 : f32 to vector<32x1xf32>
    %453 = arith.divf %451, %452 : vector<32x1xf32>
    %454 = vector.broadcast %453 : vector<32x1xf32> to vector<32x32xf32>
    %455 = arith.subf %445, %454 : vector<32x32xf32>
    %456 = arith.mulf %455, %455 : vector<32x32xf32>
    %cst_267 = arith.constant dense<0.000000e+00> : vector<32xf32>
    %457 = vector.multi_reduction <add>, %456, %cst_267 [1] : vector<32x32xf32> to vector<32xf32>
    %458 = vector.shape_cast %457 : vector<32xf32> to vector<32x1xf32>
    %cst_268 = arith.constant 3.200000e+01 : f32
    %459 = vector.broadcast %cst_268 : f32 to vector<32x1xf32>
    %460 = arith.divf %458, %459 : vector<32x1xf32>
    %cst_269 = arith.constant 9.99999974E-6 : f32
    %461 = vector.broadcast %cst_269 : f32 to vector<32x1xf32>
    %462 = arith.addf %460, %461 : vector<32x1xf32>
    %463 = math.rsqrt %462 : vector<32x1xf32>
    %464 = vector.broadcast %463 : vector<32x1xf32> to vector<32x32xf32>
    %465 = arith.mulf %455, %464 : vector<32x32xf32>
    %466 = vector.broadcast %447 : vector<1x32xf32> to vector<32x32xf32>
    %467 = arith.mulf %465, %466 : vector<32x32xf32>
    %468 = vector.broadcast %449 : vector<1x32xf32> to vector<32x32xf32>
    %469 = arith.addf %467, %468 : vector<32x32xf32>
    %c1_270 = arith.constant 1 : index
    %c0_271 = arith.constant 0 : index
    %c0_272 = arith.constant 0 : index
    %c0_273 = arith.constant 0 : index
    %470 = vector.load %arg28[%c1_270, %c0_271, %c0_272, %c0_273] : memref<2x4x32x8xbf16, #tpu.memory_space<vmem>>, vector<1x1x32x8xbf16>
    %471 = vector.shape_cast %470 : vector<1x1x32x8xbf16> to vector<32x8xbf16>
    %c1_274 = arith.constant 1 : index
    %c0_275 = arith.constant 0 : index
    %c0_276 = arith.constant 0 : index
    %c0_277 = arith.constant 0 : index
    %472 = vector.load %arg31[%c1_274, %c0_275, %c0_276, %c0_277] : memref<2x4x1x8xf32, #tpu.memory_space<vmem>>, vector<1x1x1x8xf32>
    %473 = vector.shape_cast %472 : vector<1x1x1x8xf32> to vector<1x8xf32>
    %474 = arith.truncf %469 : vector<32x32xf32> to vector<32x32xbf16>
    %cst_278 = arith.constant dense<0.000000e+00> : vector<32x8xf32>
    %475 = tpu.matmul %474, %471, %cst_278 {dimension_numbers = #tpu.dot_dimension_numbers<[1], [0], [0], [1], [0, 0, 1, 1], [], []>} : vector<32x32xbf16>, vector<32x8xbf16>, vector<32x8xf32> -> vector<32x8xf32>
    %476 = vector.broadcast %473 : vector<1x8xf32> to vector<32x8xf32>
    %477 = arith.addf %475, %476 : vector<32x8xf32>
    %c1_279 = arith.constant 1 : index
    %c0_280 = arith.constant 0 : index
    %c0_281 = arith.constant 0 : index
    %c0_282 = arith.constant 0 : index
    %478 = vector.load %arg29[%c1_279, %c0_280, %c0_281, %c0_282] : memref<2x4x32x8xbf16, #tpu.memory_space<vmem>>, vector<1x1x32x8xbf16>
    %479 = vector.shape_cast %478 : vector<1x1x32x8xbf16> to vector<32x8xbf16>
    %c1_283 = arith.constant 1 : index
    %c0_284 = arith.constant 0 : index
    %c0_285 = arith.constant 0 : index
    %c0_286 = arith.constant 0 : index
    %480 = vector.load %arg32[%c1_283, %c0_284, %c0_285, %c0_286] : memref<2x4x1x8xf32, #tpu.memory_space<vmem>>, vector<1x1x1x8xf32>
    %481 = vector.shape_cast %480 : vector<1x1x1x8xf32> to vector<1x8xf32>
    %482 = arith.truncf %469 : vector<32x32xf32> to vector<32x32xbf16>
    %cst_287 = arith.constant dense<0.000000e+00> : vector<32x8xf32>
    %483 = tpu.matmul %482, %479, %cst_287 {dimension_numbers = #tpu.dot_dimension_numbers<[1], [0], [0], [1], [0, 0, 1, 1], [], []>} : vector<32x32xbf16>, vector<32x8xbf16>, vector<32x8xf32> -> vector<32x8xf32>
    %484 = vector.broadcast %481 : vector<1x8xf32> to vector<32x8xf32>
    %485 = arith.addf %483, %484 : vector<32x8xf32>
    %c1_288 = arith.constant 1 : index
    %c0_289 = arith.constant 0 : index
    %c0_290 = arith.constant 0 : index
    %c0_291 = arith.constant 0 : index
    %486 = vector.load %arg30[%c1_288, %c0_289, %c0_290, %c0_291] : memref<2x4x32x8xbf16, #tpu.memory_space<vmem>>, vector<1x1x32x8xbf16>
    %487 = vector.shape_cast %486 : vector<1x1x32x8xbf16> to vector<32x8xbf16>
    %c1_292 = arith.constant 1 : index
    %c0_293 = arith.constant 0 : index
    %c0_294 = arith.constant 0 : index
    %c0_295 = arith.constant 0 : index
    %488 = vector.load %arg33[%c1_292, %c0_293, %c0_294, %c0_295] : memref<2x4x1x8xf32, #tpu.memory_space<vmem>>, vector<1x1x1x8xf32>
    %489 = vector.shape_cast %488 : vector<1x1x1x8xf32> to vector<1x8xf32>
    %490 = arith.truncf %469 : vector<32x32xf32> to vector<32x32xbf16>
    %cst_296 = arith.constant dense<0.000000e+00> : vector<32x8xf32>
    %491 = tpu.matmul %490, %487, %cst_296 {dimension_numbers = #tpu.dot_dimension_numbers<[1], [0], [0], [1], [0, 0, 1, 1], [], []>} : vector<32x32xbf16>, vector<32x8xbf16>, vector<32x8xf32> -> vector<32x8xf32>
    %492 = vector.broadcast %489 : vector<1x8xf32> to vector<32x8xf32>
    %493 = arith.addf %491, %492 : vector<32x8xf32>
    %494 = vector.extract_strided_slice %477 {offsets = [0, 0], sizes = [16, 8], strides = [1, 1]} : vector<32x8xf32> to vector<16x8xf32>
    %cst_297 = arith.constant 0.353553385 : f32
    %495 = vector.broadcast %cst_297 : f32 to vector<16x8xf32>
    %496 = arith.mulf %494, %495 : vector<16x8xf32>
    %497 = vector.extract_strided_slice %485 {offsets = [0, 0], sizes = [16, 8], strides = [1, 1]} : vector<32x8xf32> to vector<16x8xf32>
    %498 = vector.extract_strided_slice %493 {offsets = [0, 0], sizes = [16, 8], strides = [1, 1]} : vector<32x8xf32> to vector<16x8xf32>
    %499 = arith.truncf %496 : vector<16x8xf32> to vector<16x8xbf16>
    %500 = arith.truncf %497 : vector<16x8xf32> to vector<16x8xbf16>
    %cst_298 = arith.constant dense<0.000000e+00> : vector<16x16xf32>
    %501 = tpu.matmul %499, %500, %cst_298 {dimension_numbers = #tpu.dot_dimension_numbers<[1], [1], [0], [0], [0, 0, 1, 0], [], []>} : vector<16x8xbf16>, vector<16x8xbf16>, vector<16x16xf32> -> vector<16x16xf32>
    %cst_299 = arith.constant dense<0xFF800000> : vector<16xf32>
    %502 = vector.multi_reduction <maximumf>, %501, %cst_299 [1] : vector<16x16xf32> to vector<16xf32>
    %503 = vector.shape_cast %502 : vector<16xf32> to vector<16x1xf32>
    %504 = vector.broadcast %503 : vector<16x1xf32> to vector<16x16xf32>
    %505 = arith.subf %501, %504 : vector<16x16xf32>
    %506 = math.exp %505 : vector<16x16xf32>
    %cst_300 = arith.constant dense<0.000000e+00> : vector<16xf32>
    %507 = vector.multi_reduction <add>, %506, %cst_300 [1] : vector<16x16xf32> to vector<16xf32>
    %508 = vector.shape_cast %507 : vector<16xf32> to vector<16x1xf32>
    %509 = vector.broadcast %508 : vector<16x1xf32> to vector<16x16xf32>
    %510 = arith.divf %506, %509 : vector<16x16xf32>
    %511 = arith.truncf %510 : vector<16x16xf32> to vector<16x16xbf16>
    %512 = arith.truncf %498 : vector<16x8xf32> to vector<16x8xbf16>
    %cst_301 = arith.constant dense<0.000000e+00> : vector<16x8xf32>
    %513 = tpu.matmul %511, %512, %cst_301 {dimension_numbers = #tpu.dot_dimension_numbers<[1], [0], [0], [1], [0, 0, 1, 1], [], []>} : vector<16x16xbf16>, vector<16x8xbf16>, vector<16x8xf32> -> vector<16x8xf32>
    %514 = vector.extract_strided_slice %477 {offsets = [16, 0], sizes = [16, 8], strides = [1, 1]} : vector<32x8xf32> to vector<16x8xf32>
    %cst_302 = arith.constant 0.353553385 : f32
    %515 = vector.broadcast %cst_302 : f32 to vector<16x8xf32>
    %516 = arith.mulf %514, %515 : vector<16x8xf32>
    %517 = vector.extract_strided_slice %485 {offsets = [16, 0], sizes = [16, 8], strides = [1, 1]} : vector<32x8xf32> to vector<16x8xf32>
    %518 = vector.extract_strided_slice %493 {offsets = [16, 0], sizes = [16, 8], strides = [1, 1]} : vector<32x8xf32> to vector<16x8xf32>
    %519 = arith.truncf %516 : vector<16x8xf32> to vector<16x8xbf16>
    %520 = arith.truncf %517 : vector<16x8xf32> to vector<16x8xbf16>
    %cst_303 = arith.constant dense<0.000000e+00> : vector<16x16xf32>
    %521 = tpu.matmul %519, %520, %cst_303 {dimension_numbers = #tpu.dot_dimension_numbers<[1], [1], [0], [0], [0, 0, 1, 0], [], []>} : vector<16x8xbf16>, vector<16x8xbf16>, vector<16x16xf32> -> vector<16x16xf32>
    %cst_304 = arith.constant dense<0xFF800000> : vector<16xf32>
    %522 = vector.multi_reduction <maximumf>, %521, %cst_304 [1] : vector<16x16xf32> to vector<16xf32>
    %523 = vector.shape_cast %522 : vector<16xf32> to vector<16x1xf32>
    %524 = vector.broadcast %523 : vector<16x1xf32> to vector<16x16xf32>
    %525 = arith.subf %521, %524 : vector<16x16xf32>
    %526 = math.exp %525 : vector<16x16xf32>
    %cst_305 = arith.constant dense<0.000000e+00> : vector<16xf32>
    %527 = vector.multi_reduction <add>, %526, %cst_305 [1] : vector<16x16xf32> to vector<16xf32>
    %528 = vector.shape_cast %527 : vector<16xf32> to vector<16x1xf32>
    %529 = vector.broadcast %528 : vector<16x1xf32> to vector<16x16xf32>
    %530 = arith.divf %526, %529 : vector<16x16xf32>
    %531 = arith.truncf %530 : vector<16x16xf32> to vector<16x16xbf16>
    %532 = arith.truncf %518 : vector<16x8xf32> to vector<16x8xbf16>
    %cst_306 = arith.constant dense<0.000000e+00> : vector<16x8xf32>
    %533 = tpu.matmul %531, %532, %cst_306 {dimension_numbers = #tpu.dot_dimension_numbers<[1], [0], [0], [1], [0, 0, 1, 1], [], []>} : vector<16x16xbf16>, vector<16x8xbf16>, vector<16x8xf32> -> vector<16x8xf32>
    %c1_307 = arith.constant 1 : index
    %c1_308 = arith.constant 1 : index
    %c0_309 = arith.constant 0 : index
    %c0_310 = arith.constant 0 : index
    %534 = vector.load %arg28[%c1_307, %c1_308, %c0_309, %c0_310] : memref<2x4x32x8xbf16, #tpu.memory_space<vmem>>, vector<1x1x32x8xbf16>
    %535 = vector.shape_cast %534 : vector<1x1x32x8xbf16> to vector<32x8xbf16>
    %c1_311 = arith.constant 1 : index
    %c1_312 = arith.constant 1 : index
    %c0_313 = arith.constant 0 : index
    %c0_314 = arith.constant 0 : index
    %536 = vector.load %arg31[%c1_311, %c1_312, %c0_313, %c0_314] : memref<2x4x1x8xf32, #tpu.memory_space<vmem>>, vector<1x1x1x8xf32>
    %537 = vector.shape_cast %536 : vector<1x1x1x8xf32> to vector<1x8xf32>
    %538 = arith.truncf %469 : vector<32x32xf32> to vector<32x32xbf16>
    %cst_315 = arith.constant dense<0.000000e+00> : vector<32x8xf32>
    %539 = tpu.matmul %538, %535, %cst_315 {dimension_numbers = #tpu.dot_dimension_numbers<[1], [0], [0], [1], [0, 0, 1, 1], [], []>} : vector<32x32xbf16>, vector<32x8xbf16>, vector<32x8xf32> -> vector<32x8xf32>
    %540 = vector.broadcast %537 : vector<1x8xf32> to vector<32x8xf32>
    %541 = arith.addf %539, %540 : vector<32x8xf32>
    %c1_316 = arith.constant 1 : index
    %c1_317 = arith.constant 1 : index
    %c0_318 = arith.constant 0 : index
    %c0_319 = arith.constant 0 : index
    %542 = vector.load %arg29[%c1_316, %c1_317, %c0_318, %c0_319] : memref<2x4x32x8xbf16, #tpu.memory_space<vmem>>, vector<1x1x32x8xbf16>
    %543 = vector.shape_cast %542 : vector<1x1x32x8xbf16> to vector<32x8xbf16>
    %c1_320 = arith.constant 1 : index
    %c1_321 = arith.constant 1 : index
    %c0_322 = arith.constant 0 : index
    %c0_323 = arith.constant 0 : index
    %544 = vector.load %arg32[%c1_320, %c1_321, %c0_322, %c0_323] : memref<2x4x1x8xf32, #tpu.memory_space<vmem>>, vector<1x1x1x8xf32>
    %545 = vector.shape_cast %544 : vector<1x1x1x8xf32> to vector<1x8xf32>
    %546 = arith.truncf %469 : vector<32x32xf32> to vector<32x32xbf16>
    %cst_324 = arith.constant dense<0.000000e+00> : vector<32x8xf32>
    %547 = tpu.matmul %546, %543, %cst_324 {dimension_numbers = #tpu.dot_dimension_numbers<[1], [0], [0], [1], [0, 0, 1, 1], [], []>} : vector<32x32xbf16>, vector<32x8xbf16>, vector<32x8xf32> -> vector<32x8xf32>
    %548 = vector.broadcast %545 : vector<1x8xf32> to vector<32x8xf32>
    %549 = arith.addf %547, %548 : vector<32x8xf32>
    %c1_325 = arith.constant 1 : index
    %c1_326 = arith.constant 1 : index
    %c0_327 = arith.constant 0 : index
    %c0_328 = arith.constant 0 : index
    %550 = vector.load %arg30[%c1_325, %c1_326, %c0_327, %c0_328] : memref<2x4x32x8xbf16, #tpu.memory_space<vmem>>, vector<1x1x32x8xbf16>
    %551 = vector.shape_cast %550 : vector<1x1x32x8xbf16> to vector<32x8xbf16>
    %c1_329 = arith.constant 1 : index
    %c1_330 = arith.constant 1 : index
    %c0_331 = arith.constant 0 : index
    %c0_332 = arith.constant 0 : index
    %552 = vector.load %arg33[%c1_329, %c1_330, %c0_331, %c0_332] : memref<2x4x1x8xf32, #tpu.memory_space<vmem>>, vector<1x1x1x8xf32>
    %553 = vector.shape_cast %552 : vector<1x1x1x8xf32> to vector<1x8xf32>
    %554 = arith.truncf %469 : vector<32x32xf32> to vector<32x32xbf16>
    %cst_333 = arith.constant dense<0.000000e+00> : vector<32x8xf32>
    %555 = tpu.matmul %554, %551, %cst_333 {dimension_numbers = #tpu.dot_dimension_numbers<[1], [0], [0], [1], [0, 0, 1, 1], [], []>} : vector<32x32xbf16>, vector<32x8xbf16>, vector<32x8xf32> -> vector<32x8xf32>
    %556 = vector.broadcast %553 : vector<1x8xf32> to vector<32x8xf32>
    %557 = arith.addf %555, %556 : vector<32x8xf32>
    %558 = vector.extract_strided_slice %541 {offsets = [0, 0], sizes = [16, 8], strides = [1, 1]} : vector<32x8xf32> to vector<16x8xf32>
    %cst_334 = arith.constant 0.353553385 : f32
    %559 = vector.broadcast %cst_334 : f32 to vector<16x8xf32>
    %560 = arith.mulf %558, %559 : vector<16x8xf32>
    %561 = vector.extract_strided_slice %549 {offsets = [0, 0], sizes = [16, 8], strides = [1, 1]} : vector<32x8xf32> to vector<16x8xf32>
    %562 = vector.extract_strided_slice %557 {offsets = [0, 0], sizes = [16, 8], strides = [1, 1]} : vector<32x8xf32> to vector<16x8xf32>
    %563 = arith.truncf %560 : vector<16x8xf32> to vector<16x8xbf16>
    %564 = arith.truncf %561 : vector<16x8xf32> to vector<16x8xbf16>
    %cst_335 = arith.constant dense<0.000000e+00> : vector<16x16xf32>
    %565 = tpu.matmul %563, %564, %cst_335 {dimension_numbers = #tpu.dot_dimension_numbers<[1], [1], [0], [0], [0, 0, 1, 0], [], []>} : vector<16x8xbf16>, vector<16x8xbf16>, vector<16x16xf32> -> vector<16x16xf32>
    %cst_336 = arith.constant dense<0xFF800000> : vector<16xf32>
    %566 = vector.multi_reduction <maximumf>, %565, %cst_336 [1] : vector<16x16xf32> to vector<16xf32>
    %567 = vector.shape_cast %566 : vector<16xf32> to vector<16x1xf32>
    %568 = vector.broadcast %567 : vector<16x1xf32> to vector<16x16xf32>
    %569 = arith.subf %565, %568 : vector<16x16xf32>
    %570 = math.exp %569 : vector<16x16xf32>
    %cst_337 = arith.constant dense<0.000000e+00> : vector<16xf32>
    %571 = vector.multi_reduction <add>, %570, %cst_337 [1] : vector<16x16xf32> to vector<16xf32>
    %572 = vector.shape_cast %571 : vector<16xf32> to vector<16x1xf32>
    %573 = vector.broadcast %572 : vector<16x1xf32> to vector<16x16xf32>
    %574 = arith.divf %570, %573 : vector<16x16xf32>
    %575 = arith.truncf %574 : vector<16x16xf32> to vector<16x16xbf16>
    %576 = arith.truncf %562 : vector<16x8xf32> to vector<16x8xbf16>
    %cst_338 = arith.constant dense<0.000000e+00> : vector<16x8xf32>
    %577 = tpu.matmul %575, %576, %cst_338 {dimension_numbers = #tpu.dot_dimension_numbers<[1], [0], [0], [1], [0, 0, 1, 1], [], []>} : vector<16x16xbf16>, vector<16x8xbf16>, vector<16x8xf32> -> vector<16x8xf32>
    %578 = vector.extract_strided_slice %541 {offsets = [16, 0], sizes = [16, 8], strides = [1, 1]} : vector<32x8xf32> to vector<16x8xf32>
    %cst_339 = arith.constant 0.353553385 : f32
    %579 = vector.broadcast %cst_339 : f32 to vector<16x8xf32>
    %580 = arith.mulf %578, %579 : vector<16x8xf32>
    %581 = vector.extract_strided_slice %549 {offsets = [16, 0], sizes = [16, 8], strides = [1, 1]} : vector<32x8xf32> to vector<16x8xf32>
    %582 = vector.extract_strided_slice %557 {offsets = [16, 0], sizes = [16, 8], strides = [1, 1]} : vector<32x8xf32> to vector<16x8xf32>
    %583 = arith.truncf %580 : vector<16x8xf32> to vector<16x8xbf16>
    %584 = arith.truncf %581 : vector<16x8xf32> to vector<16x8xbf16>
    %cst_340 = arith.constant dense<0.000000e+00> : vector<16x16xf32>
    %585 = tpu.matmul %583, %584, %cst_340 {dimension_numbers = #tpu.dot_dimension_numbers<[1], [1], [0], [0], [0, 0, 1, 0], [], []>} : vector<16x8xbf16>, vector<16x8xbf16>, vector<16x16xf32> -> vector<16x16xf32>
    %cst_341 = arith.constant dense<0xFF800000> : vector<16xf32>
    %586 = vector.multi_reduction <maximumf>, %585, %cst_341 [1] : vector<16x16xf32> to vector<16xf32>
    %587 = vector.shape_cast %586 : vector<16xf32> to vector<16x1xf32>
    %588 = vector.broadcast %587 : vector<16x1xf32> to vector<16x16xf32>
    %589 = arith.subf %585, %588 : vector<16x16xf32>
    %590 = math.exp %589 : vector<16x16xf32>
    %cst_342 = arith.constant dense<0.000000e+00> : vector<16xf32>
    %591 = vector.multi_reduction <add>, %590, %cst_342 [1] : vector<16x16xf32> to vector<16xf32>
    %592 = vector.shape_cast %591 : vector<16xf32> to vector<16x1xf32>
    %593 = vector.broadcast %592 : vector<16x1xf32> to vector<16x16xf32>
    %594 = arith.divf %590, %593 : vector<16x16xf32>
    %595 = arith.truncf %594 : vector<16x16xf32> to vector<16x16xbf16>
    %596 = arith.truncf %582 : vector<16x8xf32> to vector<16x8xbf16>
    %cst_343 = arith.constant dense<0.000000e+00> : vector<16x8xf32>
    %597 = tpu.matmul %595, %596, %cst_343 {dimension_numbers = #tpu.dot_dimension_numbers<[1], [0], [0], [1], [0, 0, 1, 1], [], []>} : vector<16x16xbf16>, vector<16x8xbf16>, vector<16x8xf32> -> vector<16x8xf32>
    %c1_344 = arith.constant 1 : index
    %c2_345 = arith.constant 2 : index
    %c0_346 = arith.constant 0 : index
    %c0_347 = arith.constant 0 : index
    %598 = vector.load %arg28[%c1_344, %c2_345, %c0_346, %c0_347] : memref<2x4x32x8xbf16, #tpu.memory_space<vmem>>, vector<1x1x32x8xbf16>
    %599 = vector.shape_cast %598 : vector<1x1x32x8xbf16> to vector<32x8xbf16>
    %c1_348 = arith.constant 1 : index
    %c2_349 = arith.constant 2 : index
    %c0_350 = arith.constant 0 : index
    %c0_351 = arith.constant 0 : index
    %600 = vector.load %arg31[%c1_348, %c2_349, %c0_350, %c0_351] : memref<2x4x1x8xf32, #tpu.memory_space<vmem>>, vector<1x1x1x8xf32>
    %601 = vector.shape_cast %600 : vector<1x1x1x8xf32> to vector<1x8xf32>
    %602 = arith.truncf %469 : vector<32x32xf32> to vector<32x32xbf16>
    %cst_352 = arith.constant dense<0.000000e+00> : vector<32x8xf32>
    %603 = tpu.matmul %602, %599, %cst_352 {dimension_numbers = #tpu.dot_dimension_numbers<[1], [0], [0], [1], [0, 0, 1, 1], [], []>} : vector<32x32xbf16>, vector<32x8xbf16>, vector<32x8xf32> -> vector<32x8xf32>
    %604 = vector.broadcast %601 : vector<1x8xf32> to vector<32x8xf32>
    %605 = arith.addf %603, %604 : vector<32x8xf32>
    %c1_353 = arith.constant 1 : index
    %c2_354 = arith.constant 2 : index
    %c0_355 = arith.constant 0 : index
    %c0_356 = arith.constant 0 : index
    %606 = vector.load %arg29[%c1_353, %c2_354, %c0_355, %c0_356] : memref<2x4x32x8xbf16, #tpu.memory_space<vmem>>, vector<1x1x32x8xbf16>
    %607 = vector.shape_cast %606 : vector<1x1x32x8xbf16> to vector<32x8xbf16>
    %c1_357 = arith.constant 1 : index
    %c2_358 = arith.constant 2 : index
    %c0_359 = arith.constant 0 : index
    %c0_360 = arith.constant 0 : index
    %608 = vector.load %arg32[%c1_357, %c2_358, %c0_359, %c0_360] : memref<2x4x1x8xf32, #tpu.memory_space<vmem>>, vector<1x1x1x8xf32>
    %609 = vector.shape_cast %608 : vector<1x1x1x8xf32> to vector<1x8xf32>
    %610 = arith.truncf %469 : vector<32x32xf32> to vector<32x32xbf16>
    %cst_361 = arith.constant dense<0.000000e+00> : vector<32x8xf32>
    %611 = tpu.matmul %610, %607, %cst_361 {dimension_numbers = #tpu.dot_dimension_numbers<[1], [0], [0], [1], [0, 0, 1, 1], [], []>} : vector<32x32xbf16>, vector<32x8xbf16>, vector<32x8xf32> -> vector<32x8xf32>
    %612 = vector.broadcast %609 : vector<1x8xf32> to vector<32x8xf32>
    %613 = arith.addf %611, %612 : vector<32x8xf32>
    %c1_362 = arith.constant 1 : index
    %c2_363 = arith.constant 2 : index
    %c0_364 = arith.constant 0 : index
    %c0_365 = arith.constant 0 : index
    %614 = vector.load %arg30[%c1_362, %c2_363, %c0_364, %c0_365] : memref<2x4x32x8xbf16, #tpu.memory_space<vmem>>, vector<1x1x32x8xbf16>
    %615 = vector.shape_cast %614 : vector<1x1x32x8xbf16> to vector<32x8xbf16>
    %c1_366 = arith.constant 1 : index
    %c2_367 = arith.constant 2 : index
    %c0_368 = arith.constant 0 : index
    %c0_369 = arith.constant 0 : index
    %616 = vector.load %arg33[%c1_366, %c2_367, %c0_368, %c0_369] : memref<2x4x1x8xf32, #tpu.memory_space<vmem>>, vector<1x1x1x8xf32>
    %617 = vector.shape_cast %616 : vector<1x1x1x8xf32> to vector<1x8xf32>
    %618 = arith.truncf %469 : vector<32x32xf32> to vector<32x32xbf16>
    %cst_370 = arith.constant dense<0.000000e+00> : vector<32x8xf32>
    %619 = tpu.matmul %618, %615, %cst_370 {dimension_numbers = #tpu.dot_dimension_numbers<[1], [0], [0], [1], [0, 0, 1, 1], [], []>} : vector<32x32xbf16>, vector<32x8xbf16>, vector<32x8xf32> -> vector<32x8xf32>
    %620 = vector.broadcast %617 : vector<1x8xf32> to vector<32x8xf32>
    %621 = arith.addf %619, %620 : vector<32x8xf32>
    %622 = vector.extract_strided_slice %605 {offsets = [0, 0], sizes = [16, 8], strides = [1, 1]} : vector<32x8xf32> to vector<16x8xf32>
    %cst_371 = arith.constant 0.353553385 : f32
    %623 = vector.broadcast %cst_371 : f32 to vector<16x8xf32>
    %624 = arith.mulf %622, %623 : vector<16x8xf32>
    %625 = vector.extract_strided_slice %613 {offsets = [0, 0], sizes = [16, 8], strides = [1, 1]} : vector<32x8xf32> to vector<16x8xf32>
    %626 = vector.extract_strided_slice %621 {offsets = [0, 0], sizes = [16, 8], strides = [1, 1]} : vector<32x8xf32> to vector<16x8xf32>
    %627 = arith.truncf %624 : vector<16x8xf32> to vector<16x8xbf16>
    %628 = arith.truncf %625 : vector<16x8xf32> to vector<16x8xbf16>
    %cst_372 = arith.constant dense<0.000000e+00> : vector<16x16xf32>
    %629 = tpu.matmul %627, %628, %cst_372 {dimension_numbers = #tpu.dot_dimension_numbers<[1], [1], [0], [0], [0, 0, 1, 0], [], []>} : vector<16x8xbf16>, vector<16x8xbf16>, vector<16x16xf32> -> vector<16x16xf32>
    %cst_373 = arith.constant dense<0xFF800000> : vector<16xf32>
    %630 = vector.multi_reduction <maximumf>, %629, %cst_373 [1] : vector<16x16xf32> to vector<16xf32>
    %631 = vector.shape_cast %630 : vector<16xf32> to vector<16x1xf32>
    %632 = vector.broadcast %631 : vector<16x1xf32> to vector<16x16xf32>
    %633 = arith.subf %629, %632 : vector<16x16xf32>
    %634 = math.exp %633 : vector<16x16xf32>
    %cst_374 = arith.constant dense<0.000000e+00> : vector<16xf32>
    %635 = vector.multi_reduction <add>, %634, %cst_374 [1] : vector<16x16xf32> to vector<16xf32>
    %636 = vector.shape_cast %635 : vector<16xf32> to vector<16x1xf32>
    %637 = vector.broadcast %636 : vector<16x1xf32> to vector<16x16xf32>
    %638 = arith.divf %634, %637 : vector<16x16xf32>
    %639 = arith.truncf %638 : vector<16x16xf32> to vector<16x16xbf16>
    %640 = arith.truncf %626 : vector<16x8xf32> to vector<16x8xbf16>
    %cst_375 = arith.constant dense<0.000000e+00> : vector<16x8xf32>
    %641 = tpu.matmul %639, %640, %cst_375 {dimension_numbers = #tpu.dot_dimension_numbers<[1], [0], [0], [1], [0, 0, 1, 1], [], []>} : vector<16x16xbf16>, vector<16x8xbf16>, vector<16x8xf32> -> vector<16x8xf32>
    %642 = vector.extract_strided_slice %605 {offsets = [16, 0], sizes = [16, 8], strides = [1, 1]} : vector<32x8xf32> to vector<16x8xf32>
    %cst_376 = arith.constant 0.353553385 : f32
    %643 = vector.broadcast %cst_376 : f32 to vector<16x8xf32>
    %644 = arith.mulf %642, %643 : vector<16x8xf32>
    %645 = vector.extract_strided_slice %613 {offsets = [16, 0], sizes = [16, 8], strides = [1, 1]} : vector<32x8xf32> to vector<16x8xf32>
    %646 = vector.extract_strided_slice %621 {offsets = [16, 0], sizes = [16, 8], strides = [1, 1]} : vector<32x8xf32> to vector<16x8xf32>
    %647 = arith.truncf %644 : vector<16x8xf32> to vector<16x8xbf16>
    %648 = arith.truncf %645 : vector<16x8xf32> to vector<16x8xbf16>
    %cst_377 = arith.constant dense<0.000000e+00> : vector<16x16xf32>
    %649 = tpu.matmul %647, %648, %cst_377 {dimension_numbers = #tpu.dot_dimension_numbers<[1], [1], [0], [0], [0, 0, 1, 0], [], []>} : vector<16x8xbf16>, vector<16x8xbf16>, vector<16x16xf32> -> vector<16x16xf32>
    %cst_378 = arith.constant dense<0xFF800000> : vector<16xf32>
    %650 = vector.multi_reduction <maximumf>, %649, %cst_378 [1] : vector<16x16xf32> to vector<16xf32>
    %651 = vector.shape_cast %650 : vector<16xf32> to vector<16x1xf32>
    %652 = vector.broadcast %651 : vector<16x1xf32> to vector<16x16xf32>
    %653 = arith.subf %649, %652 : vector<16x16xf32>
    %654 = math.exp %653 : vector<16x16xf32>
    %cst_379 = arith.constant dense<0.000000e+00> : vector<16xf32>
    %655 = vector.multi_reduction <add>, %654, %cst_379 [1] : vector<16x16xf32> to vector<16xf32>
    %656 = vector.shape_cast %655 : vector<16xf32> to vector<16x1xf32>
    %657 = vector.broadcast %656 : vector<16x1xf32> to vector<16x16xf32>
    %658 = arith.divf %654, %657 : vector<16x16xf32>
    %659 = arith.truncf %658 : vector<16x16xf32> to vector<16x16xbf16>
    %660 = arith.truncf %646 : vector<16x8xf32> to vector<16x8xbf16>
    %cst_380 = arith.constant dense<0.000000e+00> : vector<16x8xf32>
    %661 = tpu.matmul %659, %660, %cst_380 {dimension_numbers = #tpu.dot_dimension_numbers<[1], [0], [0], [1], [0, 0, 1, 1], [], []>} : vector<16x16xbf16>, vector<16x8xbf16>, vector<16x8xf32> -> vector<16x8xf32>
    %c1_381 = arith.constant 1 : index
    %c3_382 = arith.constant 3 : index
    %c0_383 = arith.constant 0 : index
    %c0_384 = arith.constant 0 : index
    %662 = vector.load %arg28[%c1_381, %c3_382, %c0_383, %c0_384] : memref<2x4x32x8xbf16, #tpu.memory_space<vmem>>, vector<1x1x32x8xbf16>
    %663 = vector.shape_cast %662 : vector<1x1x32x8xbf16> to vector<32x8xbf16>
    %c1_385 = arith.constant 1 : index
    %c3_386 = arith.constant 3 : index
    %c0_387 = arith.constant 0 : index
    %c0_388 = arith.constant 0 : index
    %664 = vector.load %arg31[%c1_385, %c3_386, %c0_387, %c0_388] : memref<2x4x1x8xf32, #tpu.memory_space<vmem>>, vector<1x1x1x8xf32>
    %665 = vector.shape_cast %664 : vector<1x1x1x8xf32> to vector<1x8xf32>
    %666 = arith.truncf %469 : vector<32x32xf32> to vector<32x32xbf16>
    %cst_389 = arith.constant dense<0.000000e+00> : vector<32x8xf32>
    %667 = tpu.matmul %666, %663, %cst_389 {dimension_numbers = #tpu.dot_dimension_numbers<[1], [0], [0], [1], [0, 0, 1, 1], [], []>} : vector<32x32xbf16>, vector<32x8xbf16>, vector<32x8xf32> -> vector<32x8xf32>
    %668 = vector.broadcast %665 : vector<1x8xf32> to vector<32x8xf32>
    %669 = arith.addf %667, %668 : vector<32x8xf32>
    %c1_390 = arith.constant 1 : index
    %c3_391 = arith.constant 3 : index
    %c0_392 = arith.constant 0 : index
    %c0_393 = arith.constant 0 : index
    %670 = vector.load %arg29[%c1_390, %c3_391, %c0_392, %c0_393] : memref<2x4x32x8xbf16, #tpu.memory_space<vmem>>, vector<1x1x32x8xbf16>
    %671 = vector.shape_cast %670 : vector<1x1x32x8xbf16> to vector<32x8xbf16>
    %c1_394 = arith.constant 1 : index
    %c3_395 = arith.constant 3 : index
    %c0_396 = arith.constant 0 : index
    %c0_397 = arith.constant 0 : index
    %672 = vector.load %arg32[%c1_394, %c3_395, %c0_396, %c0_397] : memref<2x4x1x8xf32, #tpu.memory_space<vmem>>, vector<1x1x1x8xf32>
    %673 = vector.shape_cast %672 : vector<1x1x1x8xf32> to vector<1x8xf32>
    %674 = arith.truncf %469 : vector<32x32xf32> to vector<32x32xbf16>
    %cst_398 = arith.constant dense<0.000000e+00> : vector<32x8xf32>
    %675 = tpu.matmul %674, %671, %cst_398 {dimension_numbers = #tpu.dot_dimension_numbers<[1], [0], [0], [1], [0, 0, 1, 1], [], []>} : vector<32x32xbf16>, vector<32x8xbf16>, vector<32x8xf32> -> vector<32x8xf32>
    %676 = vector.broadcast %673 : vector<1x8xf32> to vector<32x8xf32>
    %677 = arith.addf %675, %676 : vector<32x8xf32>
    %c1_399 = arith.constant 1 : index
    %c3_400 = arith.constant 3 : index
    %c0_401 = arith.constant 0 : index
    %c0_402 = arith.constant 0 : index
    %678 = vector.load %arg30[%c1_399, %c3_400, %c0_401, %c0_402] : memref<2x4x32x8xbf16, #tpu.memory_space<vmem>>, vector<1x1x32x8xbf16>
    %679 = vector.shape_cast %678 : vector<1x1x32x8xbf16> to vector<32x8xbf16>
    %c1_403 = arith.constant 1 : index
    %c3_404 = arith.constant 3 : index
    %c0_405 = arith.constant 0 : index
    %c0_406 = arith.constant 0 : index
    %680 = vector.load %arg33[%c1_403, %c3_404, %c0_405, %c0_406] : memref<2x4x1x8xf32, #tpu.memory_space<vmem>>, vector<1x1x1x8xf32>
    %681 = vector.shape_cast %680 : vector<1x1x1x8xf32> to vector<1x8xf32>
    %682 = arith.truncf %469 : vector<32x32xf32> to vector<32x32xbf16>
    %cst_407 = arith.constant dense<0.000000e+00> : vector<32x8xf32>
    %683 = tpu.matmul %682, %679, %cst_407 {dimension_numbers = #tpu.dot_dimension_numbers<[1], [0], [0], [1], [0, 0, 1, 1], [], []>} : vector<32x32xbf16>, vector<32x8xbf16>, vector<32x8xf32> -> vector<32x8xf32>
    %684 = vector.broadcast %681 : vector<1x8xf32> to vector<32x8xf32>
    %685 = arith.addf %683, %684 : vector<32x8xf32>
    %686 = vector.extract_strided_slice %669 {offsets = [0, 0], sizes = [16, 8], strides = [1, 1]} : vector<32x8xf32> to vector<16x8xf32>
    %cst_408 = arith.constant 0.353553385 : f32
    %687 = vector.broadcast %cst_408 : f32 to vector<16x8xf32>
    %688 = arith.mulf %686, %687 : vector<16x8xf32>
    %689 = vector.extract_strided_slice %677 {offsets = [0, 0], sizes = [16, 8], strides = [1, 1]} : vector<32x8xf32> to vector<16x8xf32>
    %690 = vector.extract_strided_slice %685 {offsets = [0, 0], sizes = [16, 8], strides = [1, 1]} : vector<32x8xf32> to vector<16x8xf32>
    %691 = arith.truncf %688 : vector<16x8xf32> to vector<16x8xbf16>
    %692 = arith.truncf %689 : vector<16x8xf32> to vector<16x8xbf16>
    %cst_409 = arith.constant dense<0.000000e+00> : vector<16x16xf32>
    %693 = tpu.matmul %691, %692, %cst_409 {dimension_numbers = #tpu.dot_dimension_numbers<[1], [1], [0], [0], [0, 0, 1, 0], [], []>} : vector<16x8xbf16>, vector<16x8xbf16>, vector<16x16xf32> -> vector<16x16xf32>
    %cst_410 = arith.constant dense<0xFF800000> : vector<16xf32>
    %694 = vector.multi_reduction <maximumf>, %693, %cst_410 [1] : vector<16x16xf32> to vector<16xf32>
    %695 = vector.shape_cast %694 : vector<16xf32> to vector<16x1xf32>
    %696 = vector.broadcast %695 : vector<16x1xf32> to vector<16x16xf32>
    %697 = arith.subf %693, %696 : vector<16x16xf32>
    %698 = math.exp %697 : vector<16x16xf32>
    %cst_411 = arith.constant dense<0.000000e+00> : vector<16xf32>
    %699 = vector.multi_reduction <add>, %698, %cst_411 [1] : vector<16x16xf32> to vector<16xf32>
    %700 = vector.shape_cast %699 : vector<16xf32> to vector<16x1xf32>
    %701 = vector.broadcast %700 : vector<16x1xf32> to vector<16x16xf32>
    %702 = arith.divf %698, %701 : vector<16x16xf32>
    %703 = arith.truncf %702 : vector<16x16xf32> to vector<16x16xbf16>
    %704 = arith.truncf %690 : vector<16x8xf32> to vector<16x8xbf16>
    %cst_412 = arith.constant dense<0.000000e+00> : vector<16x8xf32>
    %705 = tpu.matmul %703, %704, %cst_412 {dimension_numbers = #tpu.dot_dimension_numbers<[1], [0], [0], [1], [0, 0, 1, 1], [], []>} : vector<16x16xbf16>, vector<16x8xbf16>, vector<16x8xf32> -> vector<16x8xf32>
    %706 = vector.extract_strided_slice %669 {offsets = [16, 0], sizes = [16, 8], strides = [1, 1]} : vector<32x8xf32> to vector<16x8xf32>
    %cst_413 = arith.constant 0.353553385 : f32
    %707 = vector.broadcast %cst_413 : f32 to vector<16x8xf32>
    %708 = arith.mulf %706, %707 : vector<16x8xf32>
    %709 = vector.extract_strided_slice %677 {offsets = [16, 0], sizes = [16, 8], strides = [1, 1]} : vector<32x8xf32> to vector<16x8xf32>
    %710 = vector.extract_strided_slice %685 {offsets = [16, 0], sizes = [16, 8], strides = [1, 1]} : vector<32x8xf32> to vector<16x8xf32>
    %711 = arith.truncf %708 : vector<16x8xf32> to vector<16x8xbf16>
    %712 = arith.truncf %709 : vector<16x8xf32> to vector<16x8xbf16>
    %cst_414 = arith.constant dense<0.000000e+00> : vector<16x16xf32>
    %713 = tpu.matmul %711, %712, %cst_414 {dimension_numbers = #tpu.dot_dimension_numbers<[1], [1], [0], [0], [0, 0, 1, 0], [], []>} : vector<16x8xbf16>, vector<16x8xbf16>, vector<16x16xf32> -> vector<16x16xf32>
    %cst_415 = arith.constant dense<0xFF800000> : vector<16xf32>
    %714 = vector.multi_reduction <maximumf>, %713, %cst_415 [1] : vector<16x16xf32> to vector<16xf32>
    %715 = vector.shape_cast %714 : vector<16xf32> to vector<16x1xf32>
    %716 = vector.broadcast %715 : vector<16x1xf32> to vector<16x16xf32>
    %717 = arith.subf %713, %716 : vector<16x16xf32>
    %718 = math.exp %717 : vector<16x16xf32>
    %cst_416 = arith.constant dense<0.000000e+00> : vector<16xf32>
    %719 = vector.multi_reduction <add>, %718, %cst_416 [1] : vector<16x16xf32> to vector<16xf32>
    %720 = vector.shape_cast %719 : vector<16xf32> to vector<16x1xf32>
    %721 = vector.broadcast %720 : vector<16x1xf32> to vector<16x16xf32>
    %722 = arith.divf %718, %721 : vector<16x16xf32>
    %723 = arith.truncf %722 : vector<16x16xf32> to vector<16x16xbf16>
    %724 = arith.truncf %710 : vector<16x8xf32> to vector<16x8xbf16>
    %cst_417 = arith.constant dense<0.000000e+00> : vector<16x8xf32>
    %725 = tpu.matmul %723, %724, %cst_417 {dimension_numbers = #tpu.dot_dimension_numbers<[1], [0], [0], [1], [0, 0, 1, 1], [], []>} : vector<16x16xbf16>, vector<16x8xbf16>, vector<16x8xf32> -> vector<16x8xf32>
    %726 = tpu.concatenate %513, %577, %641, %705 in 1 : vector<16x8xf32>, vector<16x8xf32>, vector<16x8xf32>, vector<16x8xf32> -> vector<16x32xf32>
    %727 = tpu.concatenate %533, %597, %661, %725 in 1 : vector<16x8xf32>, vector<16x8xf32>, vector<16x8xf32>, vector<16x8xf32> -> vector<16x32xf32>
    %728 = tpu.concatenate %726, %727 in 0 : vector<16x32xf32>, vector<16x32xf32> -> vector<32x32xf32>
    %c1_418 = arith.constant 1 : index
    %c0_419 = arith.constant 0 : index
    %c0_420 = arith.constant 0 : index
    %729 = vector.load %arg34[%c1_418, %c0_419, %c0_420] : memref<2x32x32xbf16, #tpu.memory_space<vmem>>, vector<1x32x32xbf16>
    %730 = vector.shape_cast %729 : vector<1x32x32xbf16> to vector<32x32xbf16>
    %c1_421 = arith.constant 1 : index
    %c0_422 = arith.constant 0 : index
    %c0_423 = arith.constant 0 : index
    %731 = vector.load %arg35[%c1_421, %c0_422, %c0_423] : memref<2x1x32xf32, #tpu.memory_space<vmem>>, vector<1x1x32xf32>
    %732 = vector.shape_cast %731 : vector<1x1x32xf32> to vector<1x32xf32>
    %733 = arith.truncf %728 : vector<32x32xf32> to vector<32x32xbf16>
    %cst_424 = arith.constant dense<0.000000e+00> : vector<32x32xf32>
    %734 = tpu.matmul %733, %730, %cst_424 {dimension_numbers = #tpu.dot_dimension_numbers<[1], [0], [0], [1], [0, 0, 1, 1], [], []>} : vector<32x32xbf16>, vector<32x32xbf16>, vector<32x32xf32> -> vector<32x32xf32>
    %735 = vector.broadcast %732 : vector<1x32xf32> to vector<32x32xf32>
    %736 = arith.addf %734, %735 : vector<32x32xf32>
    %737 = arith.addf %469, %736 : vector<32x32xf32>
    %c1_425 = arith.constant 1 : index
    %c0_426 = arith.constant 0 : index
    %c0_427 = arith.constant 0 : index
    %738 = vector.load %arg36[%c1_425, %c0_426, %c0_427] : memref<2x1x32xf32, #tpu.memory_space<vmem>>, vector<1x1x32xf32>
    %739 = vector.shape_cast %738 : vector<1x1x32xf32> to vector<1x32xf32>
    %c1_428 = arith.constant 1 : index
    %c0_429 = arith.constant 0 : index
    %c0_430 = arith.constant 0 : index
    %740 = vector.load %arg37[%c1_428, %c0_429, %c0_430] : memref<2x1x32xf32, #tpu.memory_space<vmem>>, vector<1x1x32xf32>
    %741 = vector.shape_cast %740 : vector<1x1x32xf32> to vector<1x32xf32>
    %cst_431 = arith.constant dense<0.000000e+00> : vector<32xf32>
    %742 = vector.multi_reduction <add>, %737, %cst_431 [1] : vector<32x32xf32> to vector<32xf32>
    %743 = vector.shape_cast %742 : vector<32xf32> to vector<32x1xf32>
    %cst_432 = arith.constant 3.200000e+01 : f32
    %744 = vector.broadcast %cst_432 : f32 to vector<32x1xf32>
    %745 = arith.divf %743, %744 : vector<32x1xf32>
    %746 = vector.broadcast %745 : vector<32x1xf32> to vector<32x32xf32>
    %747 = arith.subf %737, %746 : vector<32x32xf32>
    %748 = arith.mulf %747, %747 : vector<32x32xf32>
    %cst_433 = arith.constant dense<0.000000e+00> : vector<32xf32>
    %749 = vector.multi_reduction <add>, %748, %cst_433 [1] : vector<32x32xf32> to vector<32xf32>
    %750 = vector.shape_cast %749 : vector<32xf32> to vector<32x1xf32>
    %cst_434 = arith.constant 3.200000e+01 : f32
    %751 = vector.broadcast %cst_434 : f32 to vector<32x1xf32>
    %752 = arith.divf %750, %751 : vector<32x1xf32>
    %cst_435 = arith.constant 9.99999974E-6 : f32
    %753 = vector.broadcast %cst_435 : f32 to vector<32x1xf32>
    %754 = arith.addf %752, %753 : vector<32x1xf32>
    %755 = math.rsqrt %754 : vector<32x1xf32>
    %756 = vector.broadcast %755 : vector<32x1xf32> to vector<32x32xf32>
    %757 = arith.mulf %747, %756 : vector<32x32xf32>
    %758 = vector.broadcast %739 : vector<1x32xf32> to vector<32x32xf32>
    %759 = arith.mulf %757, %758 : vector<32x32xf32>
    %760 = vector.broadcast %741 : vector<1x32xf32> to vector<32x32xf32>
    %761 = arith.addf %759, %760 : vector<32x32xf32>
    %c1_436 = arith.constant 1 : index
    %c0_437 = arith.constant 0 : index
    %c0_438 = arith.constant 0 : index
    %762 = vector.load %arg38[%c1_436, %c0_437, %c0_438] : memref<2x32x2048xbf16, #tpu.memory_space<vmem>>, vector<1x32x2048xbf16>
    %763 = vector.shape_cast %762 : vector<1x32x2048xbf16> to vector<32x2048xbf16>
    %c1_439 = arith.constant 1 : index
    %c0_440 = arith.constant 0 : index
    %c0_441 = arith.constant 0 : index
    %764 = vector.load %arg39[%c1_439, %c0_440, %c0_441] : memref<2x1x2048xf32, #tpu.memory_space<vmem>>, vector<1x1x2048xf32>
    %765 = vector.shape_cast %764 : vector<1x1x2048xf32> to vector<1x2048xf32>
    %766 = arith.truncf %761 : vector<32x32xf32> to vector<32x32xbf16>
    %cst_442 = arith.constant dense<0.000000e+00> : vector<32x2048xf32>
    %767 = tpu.matmul %766, %763, %cst_442 {dimension_numbers = #tpu.dot_dimension_numbers<[1], [0], [0], [1], [0, 0, 1, 1], [], []>} : vector<32x32xbf16>, vector<32x2048xbf16>, vector<32x2048xf32> -> vector<32x2048xf32>
    %768 = vector.broadcast %765 : vector<1x2048xf32> to vector<32x2048xf32>
    %769 = arith.addf %767, %768 : vector<32x2048xf32>
    %cst_443 = arith.constant 0.000000e+00 : f32
    %770 = vector.broadcast %cst_443 : f32 to vector<32x2048xf32>
    %771 = arith.maximumf %769, %770 : vector<32x2048xf32>
    %c1_444 = arith.constant 1 : index
    %c0_445 = arith.constant 0 : index
    %c0_446 = arith.constant 0 : index
    %772 = vector.load %arg40[%c1_444, %c0_445, %c0_446] : memref<2x2048x32xbf16, #tpu.memory_space<vmem>>, vector<1x2048x32xbf16>
    %773 = vector.shape_cast %772 : vector<1x2048x32xbf16> to vector<2048x32xbf16>
    %c1_447 = arith.constant 1 : index
    %c0_448 = arith.constant 0 : index
    %c0_449 = arith.constant 0 : index
    %774 = vector.load %arg41[%c1_447, %c0_448, %c0_449] : memref<2x1x32xf32, #tpu.memory_space<vmem>>, vector<1x1x32xf32>
    %775 = vector.shape_cast %774 : vector<1x1x32xf32> to vector<1x32xf32>
    %776 = arith.truncf %771 : vector<32x2048xf32> to vector<32x2048xbf16>
    %cst_450 = arith.constant dense<0.000000e+00> : vector<32x32xf32>
    %777 = tpu.matmul %776, %773, %cst_450 {dimension_numbers = #tpu.dot_dimension_numbers<[1], [0], [0], [1], [0, 0, 1, 1], [], []>} : vector<32x2048xbf16>, vector<2048x32xbf16>, vector<32x32xf32> -> vector<32x32xf32>
    %778 = vector.broadcast %775 : vector<1x32xf32> to vector<32x32xf32>
    %779 = arith.addf %777, %778 : vector<32x32xf32>
    %780 = arith.addf %761, %779 : vector<32x32xf32>
    %c1_451 = arith.constant 1 : index
    %c0_452 = arith.constant 0 : index
    %c0_453 = arith.constant 0 : index
    %781 = vector.load %arg42[%c1_451, %c0_452, %c0_453] : memref<2x1x32xf32, #tpu.memory_space<vmem>>, vector<1x1x32xf32>
    %782 = vector.shape_cast %781 : vector<1x1x32xf32> to vector<1x32xf32>
    %c1_454 = arith.constant 1 : index
    %c0_455 = arith.constant 0 : index
    %c0_456 = arith.constant 0 : index
    %783 = vector.load %arg43[%c1_454, %c0_455, %c0_456] : memref<2x1x32xf32, #tpu.memory_space<vmem>>, vector<1x1x32xf32>
    %784 = vector.shape_cast %783 : vector<1x1x32xf32> to vector<1x32xf32>
    %cst_457 = arith.constant dense<0.000000e+00> : vector<32xf32>
    %785 = vector.multi_reduction <add>, %780, %cst_457 [1] : vector<32x32xf32> to vector<32xf32>
    %786 = vector.shape_cast %785 : vector<32xf32> to vector<32x1xf32>
    %cst_458 = arith.constant 3.200000e+01 : f32
    %787 = vector.broadcast %cst_458 : f32 to vector<32x1xf32>
    %788 = arith.divf %786, %787 : vector<32x1xf32>
    %789 = vector.broadcast %788 : vector<32x1xf32> to vector<32x32xf32>
    %790 = arith.subf %780, %789 : vector<32x32xf32>
    %791 = arith.mulf %790, %790 : vector<32x32xf32>
    %cst_459 = arith.constant dense<0.000000e+00> : vector<32xf32>
    %792 = vector.multi_reduction <add>, %791, %cst_459 [1] : vector<32x32xf32> to vector<32xf32>
    %793 = vector.shape_cast %792 : vector<32xf32> to vector<32x1xf32>
    %cst_460 = arith.constant 3.200000e+01 : f32
    %794 = vector.broadcast %cst_460 : f32 to vector<32x1xf32>
    %795 = arith.divf %793, %794 : vector<32x1xf32>
    %cst_461 = arith.constant 9.99999974E-6 : f32
    %796 = vector.broadcast %cst_461 : f32 to vector<32x1xf32>
    %797 = arith.addf %795, %796 : vector<32x1xf32>
    %798 = math.rsqrt %797 : vector<32x1xf32>
    %799 = vector.broadcast %798 : vector<32x1xf32> to vector<32x32xf32>
    %800 = arith.mulf %790, %799 : vector<32x32xf32>
    %801 = vector.broadcast %782 : vector<1x32xf32> to vector<32x32xf32>
    %802 = arith.mulf %800, %801 : vector<32x32xf32>
    %803 = vector.broadcast %784 : vector<1x32xf32> to vector<32x32xf32>
    %804 = arith.addf %802, %803 : vector<32x32xf32>
    %805 = vector.extract_strided_slice %117 {offsets = [0, 0], sizes = [1, 32], strides = [1, 1]} : vector<2x32xf32> to vector<1x32xf32>
    %806 = vector.shape_cast %805 : vector<1x32xf32> to vector<1x32xf32>
    %807 = vector.broadcast %806 : vector<1x32xf32> to vector<16x32xf32>
    %808 = vector.extract_strided_slice %117 {offsets = [1, 0], sizes = [1, 32], strides = [1, 1]} : vector<2x32xf32> to vector<1x32xf32>
    %809 = vector.shape_cast %808 : vector<1x32xf32> to vector<1x32xf32>
    %810 = vector.broadcast %809 : vector<1x32xf32> to vector<16x32xf32>
    %811 = tpu.concatenate %807, %810 in 0 : vector<16x32xf32>, vector<16x32xf32> -> vector<32x32xf32>
    %812 = arith.addf %804, %811 : vector<32x32xf32>
    %c0_462 = arith.constant 0 : index
    %c0_463 = arith.constant 0 : index
    %813 = vector.load %arg44[%c0_462, %c0_463] : memref<32x32xbf16, #tpu.memory_space<vmem>>, vector<32x32xbf16>
    %c0_464 = arith.constant 0 : index
    %c0_465 = arith.constant 0 : index
    %814 = vector.load %arg45[%c0_464, %c0_465] : memref<1x32xf32, #tpu.memory_space<vmem>>, vector<1x32xf32>
    %815 = arith.truncf %812 : vector<32x32xf32> to vector<32x32xbf16>
    %cst_466 = arith.constant dense<0.000000e+00> : vector<32x32xf32>
    %816 = tpu.matmul %815, %813, %cst_466 {dimension_numbers = #tpu.dot_dimension_numbers<[1], [0], [0], [1], [0, 0, 1, 1], [], []>} : vector<32x32xbf16>, vector<32x32xbf16>, vector<32x32xf32> -> vector<32x32xf32>
    %817 = vector.broadcast %814 : vector<1x32xf32> to vector<32x32xf32>
    %818 = arith.addf %816, %817 : vector<32x32xf32>
    %cst_467 = arith.constant 5.000000e-01 : f32
    %819 = vector.broadcast %cst_467 : f32 to vector<32x32xf32>
    %820 = arith.mulf %819, %818 : vector<32x32xf32>
    %cst_468 = arith.constant 4.471500e-02 : f32
    %821 = vector.broadcast %cst_468 : f32 to vector<32x32xf32>
    %822 = arith.mulf %821, %818 : vector<32x32xf32>
    %823 = arith.mulf %822, %818 : vector<32x32xf32>
    %824 = arith.mulf %823, %818 : vector<32x32xf32>
    %825 = arith.addf %818, %824 : vector<32x32xf32>
    %cst_469 = arith.constant 0.797884583 : f32
    %826 = vector.broadcast %cst_469 : f32 to vector<32x32xf32>
    %827 = arith.mulf %826, %825 : vector<32x32xf32>
    %828 = math.tanh %827 : vector<32x32xf32>
    %cst_470 = arith.constant 1.000000e+00 : f32
    %829 = vector.broadcast %cst_470 : f32 to vector<32x32xf32>
    %830 = arith.addf %829, %828 : vector<32x32xf32>
    %831 = arith.mulf %820, %830 : vector<32x32xf32>
    %c0_471 = arith.constant 0 : index
    %c0_472 = arith.constant 0 : index
    %832 = vector.load %arg46[%c0_471, %c0_472] : memref<32x64xbf16, #tpu.memory_space<vmem>>, vector<32x64xbf16>
    %c0_473 = arith.constant 0 : index
    %c0_474 = arith.constant 0 : index
    %833 = vector.load %arg47[%c0_473, %c0_474] : memref<1x64xf32, #tpu.memory_space<vmem>>, vector<1x64xf32>
    %834 = arith.truncf %831 : vector<32x32xf32> to vector<32x32xbf16>
    %cst_475 = arith.constant dense<0.000000e+00> : vector<32x64xf32>
    %835 = tpu.matmul %834, %832, %cst_475 {dimension_numbers = #tpu.dot_dimension_numbers<[1], [0], [0], [1], [0, 0, 1, 1], [], []>} : vector<32x32xbf16>, vector<32x64xbf16>, vector<32x64xf32> -> vector<32x64xf32>
    %836 = vector.broadcast %833 : vector<1x64xf32> to vector<32x64xf32>
    %837 = arith.addf %835, %836 : vector<32x64xf32>
    %c0_476 = arith.constant 0 : index
    %c0_477 = arith.constant 0 : index
    %838 = vector.load %arg48[%c0_476, %c0_477] : memref<32x64xf32, #tpu.memory_space<vmem>>, vector<32x64xf32>
    tpu.vector_store %arg48[%c0_476, %c0_477], %837 {strides = array<i32>} : memref<32x64xf32, #tpu.memory_space<vmem>>, vector<32x64xf32>,
    return
  }
}

</mosaic_0001>

<llo_original>
// kernel: tpu_custom_call.1
$region0: #{tpu_custom_call.1}
  #allocation0 [shape = 'u32[]', space=smem, size = 0x4, offset = 0x4, fixed_abs, tag = 'smem constant byte address 0x4 - core index']
  #allocation1 [shape = 'u32[144,128]{1,0:T(1,128)}', space=vmem, size = 0x12000, scoped, tag = 'internal scratch']
  %s0 = inlined_call_operand.smem [shape: u32[49], index: -1, kind: input, shape index: {}]
  %s1 = sld [smem:[%s0]]
  %s2 = scalar_lea.smem %s0, 1
  %s3 = sld [smem:[%s2]]
  %s4 = scalar_lea.smem %s0, 2
  %s5 = sld [smem:[%s4]]
  %s6 = scalar_lea.smem %s0, 3
  %s7 = sld [smem:[%s6]]
  %s8 = scalar_lea.smem %s0, 4
  %s9 = sld [smem:[%s8]]
  %s10 = scalar_lea.smem %s0, 5
  %s11 = sld [smem:[%s10]]
  %s12 = scalar_lea.smem %s0, 6
  %s13 = sld [smem:[%s12]]
  %s14 = scalar_lea.smem %s0, 7
  %s15 = sld [smem:[%s14]]
  %s16 = scalar_lea.smem %s0, 8
  %s17 = sld [smem:[%s16]]
  %s18 = scalar_lea.smem %s0, 9
  %s19 = sld [smem:[%s18]]
  %s20 = scalar_lea.smem %s0, 10
  %s21 = sld [smem:[%s20]]
  %s22 = scalar_lea.smem %s0, 11
  %s23 = sld [smem:[%s22]]
  %s24 = scalar_lea.smem %s0, 12
  %s25 = sld [smem:[%s24]]
  %s26 = scalar_lea.smem %s0, 13
  %s27 = sld [smem:[%s26]]
  %s28 = scalar_lea.smem %s0, 14
  %s29 = sld [smem:[%s28]]
  %s30 = scalar_lea.smem %s0, 15
  %s31 = sld [smem:[%s30]]
  %s32 = scalar_lea.smem %s0, 16
  %s33 = sld [smem:[%s32]]
  %s34 = scalar_lea.smem %s0, 17
  %s35 = sld [smem:[%s34]]
  %s36 = scalar_lea.smem %s0, 18
  %s37 = sld [smem:[%s36]]
  %s38 = scalar_lea.smem %s0, 19
  %s39 = sld [smem:[%s38]]
  %s40 = scalar_lea.smem %s0, 20
  %s41 = sld [smem:[%s40]]
  %s42 = scalar_lea.smem %s0, 21
  %s43 = sld [smem:[%s42]]
  %s44 = scalar_lea.smem %s0, 22
  %s45 = sld [smem:[%s44]]
  %s46 = scalar_lea.smem %s0, 23
  %s47 = sld [smem:[%s46]]
  %s48 = scalar_lea.smem %s0, 24
  %s49 = sld [smem:[%s48]]
  %s50 = scalar_lea.smem %s0, 25
  %s51 = sld [smem:[%s50]]
  %s52 = scalar_lea.smem %s0, 26
  %s53 = sld [smem:[%s52]]
  %s54 = scalar_lea.smem %s0, 27
  %s55 = sld [smem:[%s54]]
  %s56 = scalar_lea.smem %s0, 28
  %s57 = sld [smem:[%s56]]
  %s58 = scalar_lea.smem %s0, 29
  %s59 = sld [smem:[%s58]]
  %s60 = scalar_lea.smem %s0, 30
  %s61 = sld [smem:[%s60]]
  %s62 = scalar_lea.smem %s0, 31
  %s63 = sld [smem:[%s62]]
  %s64 = scalar_lea.smem %s0, 32
  %s65 = sld [smem:[%s64]]
  %s66 = scalar_lea.smem %s0, 33
  %s67 = sld [smem:[%s66]]
  %s68 = scalar_lea.smem %s0, 34
  %s69 = sld [smem:[%s68]]
  %s70 = scalar_lea.smem %s0, 35
  %s71 = sld [smem:[%s70]]
  %s72 = scalar_lea.smem %s0, 36
  %s73 = sld [smem:[%s72]]
  %s74 = scalar_lea.smem %s0, 37
  %s75 = sld [smem:[%s74]]
  %s76 = scalar_lea.smem %s0, 38
  %s77 = sld [smem:[%s76]]
  %s78 = scalar_lea.smem %s0, 39
  %s79 = sld [smem:[%s78]]
  %s80 = scalar_lea.smem %s0, 40
  %s81 = sld [smem:[%s80]]
  %s82 = scalar_lea.smem %s0, 41
  %s83 = sld [smem:[%s82]]
  %s84 = scalar_lea.smem %s0, 42
  %s85 = sld [smem:[%s84]]
  %s86 = scalar_lea.smem %s0, 43
  %s87 = sld [smem:[%s86]]
  %s88 = scalar_lea.smem %s0, 44
  %s89 = sld [smem:[%s88]]
  %s90 = scalar_lea.smem %s0, 45
  %s91 = sld [smem:[%s90]]
  %s92 = scalar_lea.smem %s0, 46
  %s93 = sld [smem:[%s92]]
  %s94 = scalar_lea.smem %s0, 47
  %s95 = sld [smem:[%s94]]
  %s96 = scalar_lea.smem %s0, 48
  %s97 = sld [smem:[%s96]]
  %s98 = sld [smem:[#allocation0]]
  $region218: #{tpu_custom_call.1} parent=0
    _
  %s100 = ssub.s32 1, %s98
  %s101 = scalar_select 0, %s100, %s98
  $region1: #{tpu_custom_call.1} parent=0
    #allocation2 [shape = 'u8[512]{0}', space=vmem, size = 0x400, scoped, tag = 'input window, operand 25, single buffered']
    #allocation3 [shape = 's32[1]{0}', space=sflag, size = 0x4, scoped, tag = 'scoped memory for tpu_custom_call.1']
    #allocation4 [shape = 's32[1]{0}', space=sflag, size = 0x4, scoped, tag = 'scoped memory for tpu_custom_call.1']
    #allocation5 [shape = 'u8[512]{0}', space=vmem, size = 0x400, scoped, tag = 'input window, operand 27, single buffered']
    #allocation6 [shape = 's32[1]{0}', space=sflag, size = 0x4, scoped, tag = 'scoped memory for tpu_custom_call.1']
    #allocation7 [shape = 'u8[512]{0}', space=vmem, size = 0x400, scoped, tag = 'input window, operand 45, single buffered']
    #allocation8 [shape = 'u8[512]{0}', space=vmem, size = 0x400, scoped, tag = 'input window, operand 47, single buffered']
    #allocation9 [shape = 's32[1]{0}', space=sflag, size = 0x4, scoped, tag = 'scoped memory for tpu_custom_call.1']
    #allocation10 [shape = 'u8[16384]{0}', space=vmem, size = 0x4000, scoped, tag = 'output window, operand 0, single buffered']
    %102 = vsyncpa [#allocation3], 0
    %103 = vsyncpa [#allocation6], 0
    %104 = vsyncpa [#allocation9], 0
    %105 = vsyncpa [#allocation4], 0
    // Predicated region
    $region2: #{tpu_custom_call.1} parent=1 // pred_check
      _
    $region3: #{tpu_custom_call.1} parent=1 // pred_check_branch
      %107 = sbr.rel (0) target = $region5
    $region4: #{tpu_custom_call.1} parent=1 // pred_region
      _
    $region5: #{tpu_custom_call.1} parent=1 // pred_fallthru
      _
    // Predicated region
    $region6: #{tpu_custom_call.1} parent=1 // pred_check
      _
    $region7: #{tpu_custom_call.1} parent=1 // pred_check_branch
      %109 = sbr.rel (0) target = $region9
    $region8: #{tpu_custom_call.1} parent=1 // pred_region
      _
    $region9: #{tpu_custom_call.1} parent=1 // pred_fallthru
      _
    // Predicated region
    $region10: #{tpu_custom_call.1} parent=1 // pred_check
      _
    $region11: #{tpu_custom_call.1} parent=1 // pred_check_branch
      %111 = sbr.rel (0) target = $region13
    $region12: #{tpu_custom_call.1} parent=1 // pred_region
      _
    $region13: #{tpu_custom_call.1} parent=1 // pred_fallthru
      _
    // Predicated region
    $region14: #{tpu_custom_call.1} parent=1 // pred_check
      _
    $region15: #{tpu_custom_call.1} parent=1 // pred_check_branch
      %113 = sbr.rel (0) target = $region17
    $region16: #{tpu_custom_call.1} parent=1 // pred_region
      _
    $region17: #{tpu_custom_call.1} parent=1 // pred_fallthru
      _
    // Predicated region
    $region18: #{tpu_custom_call.1} parent=1 // pred_check
      _
    $region19: #{tpu_custom_call.1} parent=1 // pred_check_branch
      %115 = sbr.rel (0) target = $region21
    $region20: #{tpu_custom_call.1} parent=1 // pred_region
      _
    $region21: #{tpu_custom_call.1} parent=1 // pred_fallthru
      _
    // Predicated region
    $region22: #{tpu_custom_call.1} parent=1 // pred_check
      _
    $region23: #{tpu_custom_call.1} parent=1 // pred_check_branch
      %117 = sbr.rel (0) target = $region25
    $region24: #{tpu_custom_call.1} parent=1 // pred_region
      _
    $region25: #{tpu_custom_call.1} parent=1 // pred_fallthru
      _
    // Predicated region
    $region26: #{tpu_custom_call.1} parent=1 // pred_check
      _
    $region27: #{tpu_custom_call.1} parent=1 // pred_check_branch
      %119 = sbr.rel (0) target = $region29
    $region28: #{tpu_custom_call.1} parent=1 // pred_region
      _
    $region29: #{tpu_custom_call.1} parent=1 // pred_fallthru
      _
    // Predicated region
    $region30: #{tpu_custom_call.1} parent=1 // pred_check
      _
    $region31: #{tpu_custom_call.1} parent=1 // pred_check_branch
      %121 = sbr.rel (0) target = $region33
    $region32: #{tpu_custom_call.1} parent=1 // pred_region
      _
    $region33: #{tpu_custom_call.1} parent=1 // pred_fallthru
      _
    // Predicated region
    $region34: #{tpu_custom_call.1} parent=1 // pred_check
      _
    $region35: #{tpu_custom_call.1} parent=1 // pred_check_branch
      %123 = sbr.rel (0) target = $region37
    $region36: #{tpu_custom_call.1} parent=1 // pred_region
      _
    $region37: #{tpu_custom_call.1} parent=1 // pred_fallthru
      _
    // Predicated region
    $region38: #{tpu_custom_call.1} parent=1 // pred_check
      _
    $region39: #{tpu_custom_call.1} parent=1 // pred_check_branch
      %125 = sbr.rel (0) target = $region41
    $region40: #{tpu_custom_call.1} parent=1 // pred_region
      _
    $region41: #{tpu_custom_call.1} parent=1 // pred_fallthru
      _
    // Predicated region
    $region42: #{tpu_custom_call.1} parent=1 // pred_check
      _
    $region43: #{tpu_custom_call.1} parent=1 // pred_check_branch
      %127 = sbr.rel (0) target = $region45
    $region44: #{tpu_custom_call.1} parent=1 // pred_region
      _
    $region45: #{tpu_custom_call.1} parent=1 // pred_fallthru
      _
    // Predicated region
    $region46: #{tpu_custom_call.1} parent=1 // pred_check
      _
    $region47: #{tpu_custom_call.1} parent=1 // pred_check_branch
      %129 = sbr.rel (0) target = $region49
    $region48: #{tpu_custom_call.1} parent=1 // pred_region
      _
    $region49: #{tpu_custom_call.1} parent=1 // pred_fallthru
      _
    // Predicated region
    $region50: #{tpu_custom_call.1} parent=1 // pred_check
      _
    $region51: #{tpu_custom_call.1} parent=1 // pred_check_branch
      %131 = sbr.rel (0) target = $region53
    $region52: #{tpu_custom_call.1} parent=1 // pred_region
      _
    $region53: #{tpu_custom_call.1} parent=1 // pred_fallthru
      _
    // Predicated region
    $region54: #{tpu_custom_call.1} parent=1 // pred_check
      _
    $region55: #{tpu_custom_call.1} parent=1 // pred_check_branch
      %133 = sbr.rel (0) target = $region57
    $region56: #{tpu_custom_call.1} parent=1 // pred_region
      _
    $region57: #{tpu_custom_call.1} parent=1 // pred_fallthru
      _
    // Predicated region
    $region58: #{tpu_custom_call.1} parent=1 // pred_check
      _
    $region59: #{tpu_custom_call.1} parent=1 // pred_check_branch
      %135 = sbr.rel (0) target = $region61
    $region60: #{tpu_custom_call.1} parent=1 // pred_region
      _
    $region61: #{tpu_custom_call.1} parent=1 // pred_fallthru
      _
    // Predicated region
    $region62: #{tpu_custom_call.1} parent=1 // pred_check
      _
    $region63: #{tpu_custom_call.1} parent=1 // pred_check_branch
      %137 = sbr.rel (0) target = $region65
    $region64: #{tpu_custom_call.1} parent=1 // pred_region
      _
    $region65: #{tpu_custom_call.1} parent=1 // pred_fallthru
      _
    // Predicated region
    $region66: #{tpu_custom_call.1} parent=1 // pred_check
      _
    $region67: #{tpu_custom_call.1} parent=1 // pred_check_branch
      %139 = sbr.rel (0) target = $region69
    $region68: #{tpu_custom_call.1} parent=1 // pred_region
      _
    $region69: #{tpu_custom_call.1} parent=1 // pred_fallthru
      _
    // Predicated region
    $region70: #{tpu_custom_call.1} parent=1 // pred_check
      _
    $region71: #{tpu_custom_call.1} parent=1 // pred_check_branch
      %141 = sbr.rel (0) target = $region73
    $region72: #{tpu_custom_call.1} parent=1 // pred_region
      _
    $region73: #{tpu_custom_call.1} parent=1 // pred_fallthru
      _
    // Predicated region
    $region74: #{tpu_custom_call.1} parent=1 // pred_check
      _
    $region75: #{tpu_custom_call.1} parent=1 // pred_check_branch
      %143 = sbr.rel (0) target = $region77
    $region76: #{tpu_custom_call.1} parent=1 // pred_region
      _
    $region77: #{tpu_custom_call.1} parent=1 // pred_fallthru
      _
    // Predicated region
    $region78: #{tpu_custom_call.1} parent=1 // pred_check
      _
    $region79: #{tpu_custom_call.1} parent=1 // pred_check_branch
      %145 = sbr.rel (0) target = $region81
    $region80: #{tpu_custom_call.1} parent=1 // pred_region
      _
    $region81: #{tpu_custom_call.1} parent=1 // pred_fallthru
      _
    // Predicated region
    $region82: #{tpu_custom_call.1} parent=1 // pred_check
      _
    $region83: #{tpu_custom_call.1} parent=1 // pred_check_branch
      %147 = sbr.rel (0) target = $region85
    $region84: #{tpu_custom_call.1} parent=1 // pred_region
      _
    $region85: #{tpu_custom_call.1} parent=1 // pred_fallthru
      _
    // Predicated region
    $region86: #{tpu_custom_call.1} parent=1 // pred_check
      _
    $region87: #{tpu_custom_call.1} parent=1 // pred_check_branch
      %149 = sbr.rel (0) target = $region89
    $region88: #{tpu_custom_call.1} parent=1 // pred_region
      _
    $region89: #{tpu_custom_call.1} parent=1 // pred_fallthru
      _
    // Predicated region
    $region90: #{tpu_custom_call.1} parent=1 // pred_check
      _
    $region91: #{tpu_custom_call.1} parent=1 // pred_check_branch
      %151 = sbr.rel (0) target = $region93
    $region92: #{tpu_custom_call.1} parent=1 // pred_region
      _
    $region93: #{tpu_custom_call.1} parent=1 // pred_fallthru
      _
    // Predicated region
    $region94: #{tpu_custom_call.1} parent=1 // pred_check
      _
    $region95: #{tpu_custom_call.1} parent=1 // pred_check_branch
      %153 = sbr.rel (0) target = $region97
    $region96: #{tpu_custom_call.1} parent=1 // pred_region
      _
    $region97: #{tpu_custom_call.1} parent=1 // pred_fallthru
      _
    // Predicated region
    $region98: #{tpu_custom_call.1} parent=1 // pred_check
      _
    $region99: #{tpu_custom_call.1} parent=1 // pred_check_branch
      %155 = sbr.rel (0) target = $region101
    $region100: #{tpu_custom_call.1} parent=1 // pred_region
      _
    $region101: #{tpu_custom_call.1} parent=1 // pred_fallthru
      _
    // Predicated region
    $region102: #{tpu_custom_call.1} parent=1 // pred_check
      _
    $region103: #{tpu_custom_call.1} parent=1 // pred_check_branch
      %157 = sbr.rel (0) target = $region105
    $region104: #{tpu_custom_call.1} parent=1 // pred_region
      %s159 = ssub.s32 16, 16
      %160 = vsyncadd [#allocation3], %s159
      %s162 = sshll.u32 [#allocation2], 4
      %s163 = int_to_ptr.vmem [resolvable:$true] %s162
      %165 = dma.hbm_to_vmem [thread:$0]  %s51, 16, %s163, [#allocation3]
    $region105: #{tpu_custom_call.1} parent=1 // pred_fallthru
      _
    // Predicated region
    $region106: #{tpu_custom_call.1} parent=1 // pred_check
      _
    $region107: #{tpu_custom_call.1} parent=1 // pred_check_branch
      %167 = sbr.rel (0) target = $region109
    $region108: #{tpu_custom_call.1} parent=1 // pred_region
      _
    $region109: #{tpu_custom_call.1} parent=1 // pred_fallthru
      _
    // Predicated region
    $region110: #{tpu_custom_call.1} parent=1 // pred_check
      _
    $region111: #{tpu_custom_call.1} parent=1 // pred_check_branch
      %169 = sbr.rel (0) target = $region113
    $region112: #{tpu_custom_call.1} parent=1 // pred_region
      %s171 = ssub.s32 16, 16
      %172 = vsyncadd [#allocation6], %s171
      %s174 = sshll.u32 [#allocation5], 4
      %s175 = int_to_ptr.vmem [resolvable:$true] %s174
      %177 = dma.hbm_to_vmem [thread:$0]  %s55, 16, %s175, [#allocation6]
    $region113: #{tpu_custom_call.1} parent=1 // pred_fallthru
      _
    // Predicated region
    $region114: #{tpu_custom_call.1} parent=1 // pred_check
      _
    $region115: #{tpu_custom_call.1} parent=1 // pred_check_branch
      %179 = sbr.rel (0) target = $region117
    $region116: #{tpu_custom_call.1} parent=1 // pred_region
      _
    $region117: #{tpu_custom_call.1} parent=1 // pred_fallthru
      _
    // Predicated region
    $region118: #{tpu_custom_call.1} parent=1 // pred_check
      _
    $region119: #{tpu_custom_call.1} parent=1 // pred_check_branch
      %181 = sbr.rel (0) target = $region121
    $region120: #{tpu_custom_call.1} parent=1 // pred_region
      _
    $region121: #{tpu_custom_call.1} parent=1 // pred_fallthru
      _
    // Predicated region
    $region122: #{tpu_custom_call.1} parent=1 // pred_check
      _
    $region123: #{tpu_custom_call.1} parent=1 // pred_check_branch
      %183 = sbr.rel (0) target = $region125
    $region124: #{tpu_custom_call.1} parent=1 // pred_region
      _
    $region125: #{tpu_custom_call.1} parent=1 // pred_fallthru
      _
    // Predicated region
    $region126: #{tpu_custom_call.1} parent=1 // pred_check
      _
    $region127: #{tpu_custom_call.1} parent=1 // pred_check_branch
      %185 = sbr.rel (0) target = $region129
    $region128: #{tpu_custom_call.1} parent=1 // pred_region
      _
    $region129: #{tpu_custom_call.1} parent=1 // pred_fallthru
      _
    // Predicated region
    $region130: #{tpu_custom_call.1} parent=1 // pred_check
      _
    $region131: #{tpu_custom_call.1} parent=1 // pred_check_branch
      %187 = sbr.rel (0) target = $region133
    $region132: #{tpu_custom_call.1} parent=1 // pred_region
      _
    $region133: #{tpu_custom_call.1} parent=1 // pred_fallthru
      _
    // Predicated region
    $region134: #{tpu_custom_call.1} parent=1 // pred_check
      _
    $region135: #{tpu_custom_call.1} parent=1 // pred_check_branch
      %189 = sbr.rel (0) target = $region137
    $region136: #{tpu_custom_call.1} parent=1 // pred_region
      _
    $region137: #{tpu_custom_call.1} parent=1 // pred_fallthru
      _
    // Predicated region
    $region138: #{tpu_custom_call.1} parent=1 // pred_check
      _
    $region139: #{tpu_custom_call.1} parent=1 // pred_check_branch
      %191 = sbr.rel (0) target = $region141
    $region140: #{tpu_custom_call.1} parent=1 // pred_region
      _
    $region141: #{tpu_custom_call.1} parent=1 // pred_fallthru
      _
    // Predicated region
    $region142: #{tpu_custom_call.1} parent=1 // pred_check
      _
    $region143: #{tpu_custom_call.1} parent=1 // pred_check_branch
      %193 = sbr.rel (0) target = $region145
    $region144: #{tpu_custom_call.1} parent=1 // pred_region
      _
    $region145: #{tpu_custom_call.1} parent=1 // pred_fallthru
      _
    // Predicated region
    $region146: #{tpu_custom_call.1} parent=1 // pred_check
      _
    $region147: #{tpu_custom_call.1} parent=1 // pred_check_branch
      %195 = sbr.rel (0) target = $region149
    $region148: #{tpu_custom_call.1} parent=1 // pred_region
      _
    $region149: #{tpu_custom_call.1} parent=1 // pred_fallthru
      _
    // Predicated region
    $region150: #{tpu_custom_call.1} parent=1 // pred_check
      _
    $region151: #{tpu_custom_call.1} parent=1 // pred_check_branch
      %197 = sbr.rel (0) target = $region153
    $region152: #{tpu_custom_call.1} parent=1 // pred_region
      _
    $region153: #{tpu_custom_call.1} parent=1 // pred_fallthru
      _
    // Predicated region
    $region154: #{tpu_custom_call.1} parent=1 // pred_check
      _
    $region155: #{tpu_custom_call.1} parent=1 // pred_check_branch
      %199 = sbr.rel (0) target = $region157
    $region156: #{tpu_custom_call.1} parent=1 // pred_region
      _
    $region157: #{tpu_custom_call.1} parent=1 // pred_fallthru
      _
    // Predicated region
    $region158: #{tpu_custom_call.1} parent=1 // pred_check
      _
    $region159: #{tpu_custom_call.1} parent=1 // pred_check_branch
      %201 = sbr.rel (0) target = $region161
    $region160: #{tpu_custom_call.1} parent=1 // pred_region
      _
    $region161: #{tpu_custom_call.1} parent=1 // pred_fallthru
      _
    // Predicated region
    $region162: #{tpu_custom_call.1} parent=1 // pred_check
      _
    $region163: #{tpu_custom_call.1} parent=1 // pred_check_branch
      %203 = sbr.rel (0) target = $region165
    $region164: #{tpu_custom_call.1} parent=1 // pred_region
      _
    $region165: #{tpu_custom_call.1} parent=1 // pred_fallthru
      _
    // Predicated region
    $region166: #{tpu_custom_call.1} parent=1 // pred_check
      _
    $region167: #{tpu_custom_call.1} parent=1 // pred_check_branch
      %205 = sbr.rel (0) target = $region169
    $region168: #{tpu_custom_call.1} parent=1 // pred_region
      _
    $region169: #{tpu_custom_call.1} parent=1 // pred_fallthru
      _
    // Predicated region
    $region170: #{tpu_custom_call.1} parent=1 // pred_check
      _
    $region171: #{tpu_custom_call.1} parent=1 // pred_check_branch
      %207 = sbr.rel (0) target = $region173
    $region172: #{tpu_custom_call.1} parent=1 // pred_region
      _
    $region173: #{tpu_custom_call.1} parent=1 // pred_fallthru
      _
    // Predicated region
    $region174: #{tpu_custom_call.1} parent=1 // pred_check
      _
    $region175: #{tpu_custom_call.1} parent=1 // pred_check_branch
      %209 = sbr.rel (0) target = $region177
    $region176: #{tpu_custom_call.1} parent=1 // pred_region
      _
    $region177: #{tpu_custom_call.1} parent=1 // pred_fallthru
      _
    // Predicated region
    $region178: #{tpu_custom_call.1} parent=1 // pred_check
      _
    $region179: #{tpu_custom_call.1} parent=1 // pred_check_branch
      %211 = sbr.rel (0) target = $region181
    $region180: #{tpu_custom_call.1} parent=1 // pred_region
      _
    $region181: #{tpu_custom_call.1} parent=1 // pred_fallthru
      _
    // Predicated region
    $region182: #{tpu_custom_call.1} parent=1 // pred_check
      _
    $region183: #{tpu_custom_call.1} parent=1 // pred_check_branch
      %213 = sbr.rel (0) target = $region185
    $region184: #{tpu_custom_call.1} parent=1 // pred_region
      %s215 = ssub.s32 16, 16
      %216 = vsyncadd [#allocation6], %s215
      %s218 = sshll.u32 [#allocation7], 4
      %s219 = int_to_ptr.vmem [resolvable:$true] %s218
      %221 = dma.hbm_to_vmem [thread:$0]  %s91, 16, %s219, [#allocation6]
    $region185: #{tpu_custom_call.1} parent=1 // pred_fallthru
      _
    // Predicated region
    $region186: #{tpu_custom_call.1} parent=1 // pred_check
      _
    $region187: #{tpu_custom_call.1} parent=1 // pred_check_branch
      %223 = sbr.rel (0) target = $region189
    $region188: #{tpu_custom_call.1} parent=1 // pred_region
      _
    $region189: #{tpu_custom_call.1} parent=1 // pred_fallthru
      _
    // Predicated region
    $region190: #{tpu_custom_call.1} parent=1 // pred_check
      _
    $region191: #{tpu_custom_call.1} parent=1 // pred_check_branch
      %225 = sbr.rel (0) target = $region193
    $region192: #{tpu_custom_call.1} parent=1 // pred_region
      %s227 = ssub.s32 16, 16
      %228 = vsyncadd [#allocation9], %s227
      %s230 = sshll.u32 [#allocation8], 4
      %s231 = int_to_ptr.vmem [resolvable:$true] %s230
      %233 = dma.hbm_to_vmem [thread:$0]  %s95, 16, %s231, [#allocation9]
    $region193: #{tpu_custom_call.1} parent=1 // pred_fallthru
      _
    // Predicated region
    $region194: #{tpu_custom_call.1} parent=1 // pred_check
      _
    $region195: #{tpu_custom_call.1} parent=1 // pred_check_branch
      %235 = sbr.rel (0) target = $region197
    $region196: #{tpu_custom_call.1} parent=1 // pred_region
      %236 = dma.done [#allocation3], 16
    $region197: #{tpu_custom_call.1} parent=1 // pred_fallthru
      _
    // Predicated region
    $region198: #{tpu_custom_call.1} parent=1 // pred_check
      _
    $region199: #{tpu_custom_call.1} parent=1 // pred_check_branch
      %238 = sbr.rel (0) target = $region201
    $region200: #{tpu_custom_call.1} parent=1 // pred_region
      %239 = dma.done [#allocation6], 16
    $region201: #{tpu_custom_call.1} parent=1 // pred_fallthru
      _
    // Predicated region
    $region202: #{tpu_custom_call.1} parent=1 // pred_check
      _
    $region203: #{tpu_custom_call.1} parent=1 // pred_check_branch
      %241 = sbr.rel (0) target = $region205
    $region204: #{tpu_custom_call.1} parent=1 // pred_region
      %242 = dma.done [#allocation6], 16
    $region205: #{tpu_custom_call.1} parent=1 // pred_fallthru
      _
    // Predicated region
    $region206: #{tpu_custom_call.1} parent=1 // pred_check
      _
    $region207: #{tpu_custom_call.1} parent=1 // pred_check_branch
      %244 = sbr.rel (0) target = $region209
    $region208: #{tpu_custom_call.1} parent=1 // pred_region
      %245 = dma.done [#allocation9], 16
    $region209: #{tpu_custom_call.1} parent=1 // pred_fallthru
      _
    %v247 = vld [vmem:[%s5] sm:$0xf]
    %v248 = vld [vmem:[%s13] sm:$0xf]
    %v249 = vld [vmem:[%s13 + $0x4] sm:$0xf]
    %v250 = vld [vmem:[%s13 + $0x8] sm:$0xf]
    %v251 = vld [vmem:[%s13 + $0xc] sm:$0xf]
    %v252 = vld [vmem:[%s13 + $0x10] sm:$0xf]
    %v253 = vld [vmem:[%s13 + $0x14] sm:$0xf]
    %v254 = vld [vmem:[%s13 + $0x18] sm:$0xf]
    %v255 = vld [vmem:[%s13 + $0x1c] sm:$0xf]
    %v256 = vld [vmem:[%s13 + $0x20] sm:$0xf]
    %v257 = vld [vmem:[%s13 + $0x24] sm:$0xf]
    %v258 = vld [vmem:[%s13 + $0x28] sm:$0xf]
    %v259 = vld [vmem:[%s13 + $0x2c] sm:$0xf]
    %v260 = vld [vmem:[%s13 + $0x30] sm:$0xf]
    %v261 = vld [vmem:[%s13 + $0x34] sm:$0xf]
    %v262 = vld [vmem:[%s13 + $0x38] sm:$0xf]
    %v263 = vld [vmem:[%s13 + $0x3c] sm:$0xf]
    %v264 = vld [vmem:[%s13 + $0x40] sm:$0xf]
    %v265 = vld [vmem:[%s13 + $0x44] sm:$0xf]
    %v266 = vld [vmem:[%s13 + $0x48] sm:$0xf]
    %v267 = vld [vmem:[%s13 + $0x4c] sm:$0xf]
    %v268 = vld [vmem:[%s13 + $0x50] sm:$0xf]
    %v269 = vld [vmem:[%s13 + $0x54] sm:$0xf]
    %v270 = vld [vmem:[%s13 + $0x58] sm:$0xf]
    %v271 = vld [vmem:[%s13 + $0x5c] sm:$0xf]
    %v272 = vld [vmem:[%s13 + $0x60] sm:$0xf]
    %v273 = vld [vmem:[%s13 + $0x64] sm:$0xf]
    %v274 = vld [vmem:[%s13 + $0x68] sm:$0xf]
    %v275 = vld [vmem:[%s13 + $0x6c] sm:$0xf]
    %v276 = vld [vmem:[%s13 + $0x70] sm:$0xf]
    %v277 = vld [vmem:[%s13 + $0x74] sm:$0xf]
    %v278 = vld [vmem:[%s13 + $0x78] sm:$0xf]
    %v279 = vld [vmem:[%s13 + $0x7c] sm:$0xf]
    %v280 = vld [vmem:[%s15] sm:$0x1]
    %v283 = vunpack.c.l.s4 1983009808
    %v284 = vunpack.c.0.s8 %v283
    %v285 = vlaneseq
    %v286 = vshrl.u32 %v285, 7
    %v287 = vsub.s32 %v284, %v286
    %v288 = vrot.slane %v247, %v287
    %v289 = vcombine.high %v288, %v288
    %v292 = vpack.c.bf16 %v288, %v288
    %v293 = vpack.c.bf16 %v289, %v289
    %v295 = vlaneseq
    %v296 = vshrl.u32 %v295, 7
    %v297 = vsub.s32 0, %v296
    %v298 = vrot.slane %v280, %v297
    %v332 = vunpack.c.l.b16 %v248
    %v333 = vunpack.c.l.b16 %v249
    %v334 = vunpack.c.l.b16 %v250
    %v335 = vunpack.c.l.b16 %v251
    %v336 = vunpack.c.l.b16 %v252
    %v337 = vunpack.c.l.b16 %v253
    %v338 = vunpack.c.l.b16 %v254
    %v339 = vunpack.c.l.b16 %v255
    %v340 = vunpack.c.l.b16 %v256
    %v341 = vunpack.c.l.b16 %v257
    %v342 = vunpack.c.l.b16 %v258
    %v343 = vunpack.c.l.b16 %v259
    %v344 = vunpack.c.l.b16 %v260
    %v345 = vunpack.c.l.b16 %v261
    %v346 = vunpack.c.l.b16 %v262
    %v347 = vunpack.c.l.b16 %v263
    %v348 = vunpack.c.l.b16 %v264
    %v349 = vunpack.c.l.b16 %v265
    %v350 = vunpack.c.l.b16 %v266
    %v351 = vunpack.c.l.b16 %v267
    %v352 = vunpack.c.l.b16 %v268
    %v353 = vunpack.c.l.b16 %v269
    %v354 = vunpack.c.l.b16 %v270
    %v355 = vunpack.c.l.b16 %v271
    %v356 = vunpack.c.l.b16 %v272
    %v357 = vunpack.c.l.b16 %v273
    %v358 = vunpack.c.l.b16 %v274
    %v359 = vunpack.c.l.b16 %v275
    %v360 = vunpack.c.l.b16 %v276
    %v361 = vunpack.c.l.b16 %v277
    %v362 = vunpack.c.l.b16 %v278
    %v363 = vunpack.c.l.b16 %v279
    %v364 = vpack.c.b16 %v333, %v332
    %v365 = vpack.c.b16 %v335, %v334
    %v366 = vpack.c.b16 %v337, %v336
    %v367 = vpack.c.b16 %v339, %v338
    %v368 = vpack.c.b16 %v341, %v340
    %v369 = vpack.c.b16 %v343, %v342
    %v370 = vpack.c.b16 %v345, %v344
    %v371 = vpack.c.b16 %v347, %v346
    %v372 = vpack.c.b16 %v349, %v348
    %v373 = vpack.c.b16 %v351, %v350
    %v374 = vpack.c.b16 %v353, %v352
    %v375 = vpack.c.b16 %v355, %v354
    %v376 = vpack.c.b16 %v357, %v356
    %v377 = vpack.c.b16 %v359, %v358
    %v378 = vpack.c.b16 %v361, %v360
    %v379 = vpack.c.b16 %v363, %v362
    %396 = vmatprep.subr.bf16.mxu0 0
    %397 = vmatpush1.bf16.msra.mxu0 %v364
    %398 = vmatprep.subr.bf16.mxu0 0
    %399 = vmatpush1.bf16.msra.mxu0 %v365
    %400 = vmatprep.subr.bf16.mxu0 0
    %401 = vmatpush1.bf16.msra.mxu0 %v366
    %402 = vmatprep.subr.bf16.mxu0 0
    %403 = vmatpush1.bf16.msra.mxu0 %v367
    %404 = vmatprep.subr.bf16.mxu0 0
    %405 = vmatpush1.bf16.msra.mxu0 %v368
    %406 = vmatprep.subr.bf16.mxu0 0
    %407 = vmatpush1.bf16.msra.mxu0 %v369
    %408 = vmatprep.subr.bf16.mxu0 0
    %409 = vmatpush1.bf16.msra.mxu0 %v370
    %410 = vmatprep.subr.bf16.mxu0 0
    %411 = vmatpush1.bf16.msra.mxu0 %v371
    %412 = vmatprep.subr.bf16.mxu0 0
    %413 = vmatpush1.bf16.msra.mxu0 %v372
    %414 = vmatprep.subr.bf16.mxu0 0
    %415 = vmatpush1.bf16.msra.mxu0 %v373
    %416 = vmatprep.subr.bf16.mxu0 0
    %417 = vmatpush1.bf16.msra.mxu0 %v374
    %418 = vmatprep.subr.bf16.mxu0 0
    %419 = vmatpush1.bf16.msra.mxu0 %v375
    %420 = vmatprep.subr.bf16.mxu0 0
    %421 = vmatpush1.bf16.msra.mxu0 %v376
    %422 = vmatprep.subr.bf16.mxu0 0
    %423 = vmatpush1.bf16.msra.mxu0 %v377
    %424 = vmatprep.subr.bf16.mxu0 0
    %425 = vmatpush1.bf16.msra.mxu0 %v378
    %426 = vmatprep.subr.bf16.mxu0 0
    %427 = vmatpush1.bf16.msra.mxu0 %v379
    %428 = vmatprep.mubr.bf16.mxu0 %v293
    %429 = vmatmul.mubr.bf16.gmra.mrb[0].mxu0 %v292
    %v430 = vpop.f32.mrb[0].mxu0
    %v431 = vadd.f32 %v298, %v430
    %v432 = vpop.f32.mrb[0].mxu0
    %v433 = vpop.f32.mrb[0].mxu0
    %v434 = vpop.f32.mrb[0].mxu0
    %435 = vdwg.mxu0
    %v436 = vsub.f32 0.0, %v431
    %v437 = vmul.f32 %v436, 1.442695
    %v438 = vpow.pop %v437
    %v439 = vadd.f32 %v438, 1.0
    %v440 = vrcp.pop %v439
    %v441 = vmul.f32 1.0, %v440
    %v442 = vmul.f32 %v431, %v441
    %v443 = vld [vmem:[%s17] sm:$0xf]
    %v444 = vld [vmem:[%s17 + $0x4] sm:$0xf]
    %v445 = vld [vmem:[%s17 + $0x8] sm:$0xf]
    %v446 = vld [vmem:[%s17 + $0xc] sm:$0xf]
    %v447 = vld [vmem:[%s19] sm:$0x1]
    %v448 = vpack.c.bf16 %v442, %v442
    %v450 = vlaneseq
    %v451 = vshrl.u32 %v450, 7
    %v452 = vsub.s32 0, %v451
    %v453 = vrot.slane %v447, %v452
    %v459 = vunpack.c.l.b16 %v443
    %v460 = vunpack.c.l.b16 %v444
    %v461 = vunpack.c.l.b16 %v445
    %v462 = vunpack.c.l.b16 %v446
    %v463 = vpack.c.b16 %v460, %v459
    %v464 = vpack.c.b16 %v462, %v461
    %vm467 = vcmask 261120
    %v469 = vsel %vm467, %v448, 0
    %471 = vmatprep.subr.bf16.mxu0 0
    %472 = vmatpush1.bf16.msra.mxu0 %v463
    %473 = vmatprep.subr.bf16.mxu0 0
    %474 = vmatpush1.bf16.msra.mxu0 %v464
    %475 = vmatprep.subr.bf16.mxu0 0
    %476 = vmatpush1.bf16.msra.mxu0 0
    %477 = vmatprep.subr.bf16.mxu0 0
    %478 = vmatpush1.bf16.msra.mxu0 0
    %479 = vmatprep.subr.bf16.mxu0 0
    %480 = vmatpush1.bf16.msra.mxu0 0
    %481 = vmatprep.subr.bf16.mxu0 0
    %482 = vmatpush1.bf16.msra.mxu0 0
    %483 = vmatprep.subr.bf16.mxu0 0
    %484 = vmatpush1.bf16.msra.mxu0 0
    %485 = vmatprep.subr.bf16.mxu0 0
    %486 = vmatpush1.bf16.msra.mxu0 0
    %487 = vmatprep.subr.bf16.mxu0 0
    %488 = vmatpush1.bf16.msra.mxu0 0
    %489 = vmatprep.subr.bf16.mxu0 0
    %490 = vmatpush1.bf16.msra.mxu0 0
    %491 = vmatprep.subr.bf16.mxu0 0
    %492 = vmatpush1.bf16.msra.mxu0 0
    %493 = vmatprep.subr.bf16.mxu0 0
    %494 = vmatpush1.bf16.msra.mxu0 0
    %495 = vmatprep.subr.bf16.mxu0 0
    %496 = vmatpush1.bf16.msra.mxu0 0
    %497 = vmatprep.subr.bf16.mxu0 0
    %498 = vmatpush1.bf16.msra.mxu0 0
    %499 = vmatprep.subr.bf16.mxu0 0
    %500 = vmatpush1.bf16.msra.mxu0 0
    %501 = vmatprep.subr.bf16.mxu0 0
    %502 = vmatpush1.bf16.msra.mxu0 0
    %503 = vmatprep.mubr.bf16.mxu0 0
    %504 = vmatmul.mubr.bf16.gmra.mrb[0].mxu0 %v469
    %v505 = vpop.f32.mrb[0].mxu0
    %v506 = vadd.f32 %v453, %v505
    %v507 = vpop.f32.mrb[0].mxu0
    %v508 = vpop.f32.mrb[0].mxu0
    %v509 = vpop.f32.mrb[0].mxu0
    %510 = vdwg.mxu0
    %v511 = vld [vmem:[%s7] sm:$0x3]
    %v512 = vld [vmem:[%s21] sm:$0xf]
    %v513 = vld [vmem:[%s21 + $0x4] sm:$0xf]
    %v514 = vld [vmem:[%s21 + $0x8] sm:$0xf]
    %v515 = vld [vmem:[%s21 + $0xc] sm:$0xf]
    %v516 = vld [vmem:[%s23] sm:$0x1]
    %v517 = vpack.c.bf16 %v511, %v511
    %v519 = vlaneseq
    %v520 = vshrl.u32 %v519, 7
    %v521 = vsub.s32 0, %v520
    %v522 = vrot.slane %v516, %v521
    %v528 = vunpack.c.l.b16 %v512
    %v529 = vunpack.c.l.b16 %v513
    %v530 = vunpack.c.l.b16 %v514
    %v531 = vunpack.c.l.b16 %v515
    %v532 = vpack.c.b16 %v529, %v528
    %v533 = vpack.c.b16 %v531, %v530
    %v537 = vsel %vm467, %v517, 0
    %539 = vmatprep.subr.bf16.mxu0 0
    %540 = vmatpush1.bf16.msra.mxu0 %v532
    %541 = vmatprep.subr.bf16.mxu0 0
    %542 = vmatpush1.bf16.msra.mxu0 %v533
    %543 = vmatprep.subr.bf16.mxu0 0
    %544 = vmatpush1.bf16.msra.mxu0 0
    %545 = vmatprep.subr.bf16.mxu0 0
    %546 = vmatpush1.bf16.msra.mxu0 0
    %547 = vmatprep.subr.bf16.mxu0 0
    %548 = vmatpush1.bf16.msra.mxu0 0
    %549 = vmatprep.subr.bf16.mxu0 0
    %550 = vmatpush1.bf16.msra.mxu0 0
    %551 = vmatprep.subr.bf16.mxu0 0
    %552 = vmatpush1.bf16.msra.mxu0 0
    %553 = vmatprep.subr.bf16.mxu0 0
    %554 = vmatpush1.bf16.msra.mxu0 0
    %555 = vmatprep.subr.bf16.mxu0 0
    %556 = vmatpush1.bf16.msra.mxu0 0
    %557 = vmatprep.subr.bf16.mxu0 0
    %558 = vmatpush1.bf16.msra.mxu0 0
    %559 = vmatprep.subr.bf16.mxu0 0
    %560 = vmatpush1.bf16.msra.mxu0 0
    %561 = vmatprep.subr.bf16.mxu0 0
    %562 = vmatpush1.bf16.msra.mxu0 0
    %563 = vmatprep.subr.bf16.mxu0 0
    %564 = vmatpush1.bf16.msra.mxu0 0
    %565 = vmatprep.subr.bf16.mxu0 0
    %566 = vmatpush1.bf16.msra.mxu0 0
    %567 = vmatprep.subr.bf16.mxu0 0
    %568 = vmatpush1.bf16.msra.mxu0 0
    %569 = vmatprep.subr.bf16.mxu0 0
    %570 = vmatpush1.bf16.msra.mxu0 0
    %571 = vmatprep.mubr.bf16.mxu0 0
    %572 = vmatmul.mubr.bf16.gmra.mrb[0].mxu0 %v537
    %v573 = vpop.f32.mrb[0].mxu0
    %v574 = vadd.f32 %v522, %v573
    %v575 = vpop.f32.mrb[0].mxu0
    %v576 = vpop.f32.mrb[0].mxu0
    %v577 = vpop.f32.mrb[0].mxu0
    %578 = vdwg.mxu0
    %v579 = vmul.f32 %v574, 0.5
    %v580 = vmul.f32 %v574, 0.044715
    %v581 = vmul.f32 %v580, %v574
    %v582 = vmul.f32 %v581, %v574
    %v583 = vadd.f32 %v574, %v582
    %v584 = vmul.f32 %v583, 0.7978846
    %v585 = vtanh.pop %v584
    %v586 = vadd.f32 %v585, 1.0
    %v587 = vmul.f32 %v579, %v586
    %v588 = vld [vmem:[%s25] sm:$0xf]
    %v589 = vld [vmem:[%s25 + $0x4] sm:$0xf]
    %v590 = vld [vmem:[%s25 + $0x8] sm:$0xf]
    %v591 = vld [vmem:[%s25 + $0xc] sm:$0xf]
    %v592 = vld [vmem:[%s27] sm:$0x1]
    %v593 = vpack.c.bf16 %v587, %v587
    %v595 = vlaneseq
    %v596 = vshrl.u32 %v595, 7
    %v597 = vsub.s32 0, %v596
    %v598 = vrot.slane %v592, %v597
    %v604 = vunpack.c.l.b16 %v588
    %v605 = vunpack.c.l.b16 %v589
    %v606 = vunpack.c.l.b16 %v590
    %v607 = vunpack.c.l.b16 %v591
    %v608 = vpack.c.b16 %v605, %v604
    %v609 = vpack.c.b16 %v607, %v606
    %v613 = vsel %vm467, %v593, 0
    %615 = vmatprep.subr.bf16.mxu0 0
    %616 = vmatpush1.bf16.msra.mxu0 %v608
    %617 = vmatprep.subr.bf16.mxu0 0
    %618 = vmatpush1.bf16.msra.mxu0 %v609
    %619 = vmatprep.subr.bf16.mxu0 0
    %620 = vmatpush1.bf16.msra.mxu0 0
    %621 = vmatprep.subr.bf16.mxu0 0
    %622 = vmatpush1.bf16.msra.mxu0 0
    %623 = vmatprep.subr.bf16.mxu0 0
    %624 = vmatpush1.bf16.msra.mxu0 0
    %625 = vmatprep.subr.bf16.mxu0 0
    %626 = vmatpush1.bf16.msra.mxu0 0
    %627 = vmatprep.subr.bf16.mxu0 0
    %628 = vmatpush1.bf16.msra.mxu0 0
    %629 = vmatprep.subr.bf16.mxu0 0
    %630 = vmatpush1.bf16.msra.mxu0 0
    %631 = vmatprep.subr.bf16.mxu0 0
    %632 = vmatpush1.bf16.msra.mxu0 0
    %633 = vmatprep.subr.bf16.mxu0 0
    %634 = vmatpush1.bf16.msra.mxu0 0
    %635 = vmatprep.subr.bf16.mxu0 0
    %636 = vmatpush1.bf16.msra.mxu0 0
    %637 = vmatprep.subr.bf16.mxu0 0
    %638 = vmatpush1.bf16.msra.mxu0 0
    %639 = vmatprep.subr.bf16.mxu0 0
    %640 = vmatpush1.bf16.msra.mxu0 0
    %641 = vmatprep.subr.bf16.mxu0 0
    %642 = vmatpush1.bf16.msra.mxu0 0
    %643 = vmatprep.subr.bf16.mxu0 0
    %644 = vmatpush1.bf16.msra.mxu0 0
    %645 = vmatprep.subr.bf16.mxu0 0
    %646 = vmatpush1.bf16.msra.mxu0 0
    %647 = vmatprep.mubr.bf16.mxu0 0
    %648 = vmatmul.mubr.bf16.gmra.mrb[0].mxu0 %v613
    %v649 = vpop.f32.mrb[0].mxu0
    %v650 = vadd.f32 %v598, %v649
    %v651 = vpop.f32.mrb[0].mxu0
    %v652 = vpop.f32.mrb[0].mxu0
    %v653 = vpop.f32.mrb[0].mxu0
    %654 = vdwg.mxu0
    %v655 = vld [vmem:[%s29] sm:$0xf]
    %v656 = vld [vmem:[%s29 + $0x4] sm:$0xf]
    %v657 = vld [vmem:[%s29 + $0x8] sm:$0xf]
    %v658 = vld [vmem:[%s29 + $0xc] sm:$0xf]
    %v659 = vld [vmem:[%s31] sm:$0x1]
    %v660 = vpack.c.bf16 %v650, %v650
    %v662 = vlaneseq
    %v663 = vshrl.u32 %v662, 7
    %v664 = vsub.s32 0, %v663
    %v665 = vrot.slane %v659, %v664
    %v671 = vunpack.c.l.b16 %v655
    %v672 = vunpack.c.l.b16 %v656
    %v673 = vunpack.c.l.b16 %v657
    %v674 = vunpack.c.l.b16 %v658
    %v675 = vpack.c.b16 %v672, %v671
    %v676 = vpack.c.b16 %v674, %v673
    %v680 = vsel %vm467, %v660, 0
    %682 = vmatprep.subr.bf16.mxu0 0
    %683 = vmatpush1.bf16.msra.mxu0 %v675
    %684 = vmatprep.subr.bf16.mxu0 0
    %685 = vmatpush1.bf16.msra.mxu0 %v676
    %686 = vmatprep.subr.bf16.mxu0 0
    %687 = vmatpush1.bf16.msra.mxu0 0
    %688 = vmatprep.subr.bf16.mxu0 0
    %689 = vmatpush1.bf16.msra.mxu0 0
    %690 = vmatprep.subr.bf16.mxu0 0
    %691 = vmatpush1.bf16.msra.mxu0 0
    %692 = vmatprep.subr.bf16.mxu0 0
    %693 = vmatpush1.bf16.msra.mxu0 0
    %694 = vmatprep.subr.bf16.mxu0 0
    %695 = vmatpush1.bf16.msra.mxu0 0
    %696 = vmatprep.subr.bf16.mxu0 0
    %697 = vmatpush1.bf16.msra.mxu0 0
    %698 = vmatprep.subr.bf16.mxu0 0
    %699 = vmatpush1.bf16.msra.mxu0 0
    %700 = vmatprep.subr.bf16.mxu0 0
    %701 = vmatpush1.bf16.msra.mxu0 0
    %702 = vmatprep.subr.bf16.mxu0 0
    %703 = vmatpush1.bf16.msra.mxu0 0
    %704 = vmatprep.subr.bf16.mxu0 0
    %705 = vmatpush1.bf16.msra.mxu0 0
    %706 = vmatprep.subr.bf16.mxu0 0
    %707 = vmatpush1.bf16.msra.mxu0 0
    %708 = vmatprep.subr.bf16.mxu0 0
    %709 = vmatpush1.bf16.msra.mxu0 0
    %710 = vmatprep.subr.bf16.mxu0 0
    %711 = vmatpush1.bf16.msra.mxu0 0
    %712 = vmatprep.subr.bf16.mxu0 0
    %713 = vmatpush1.bf16.msra.mxu0 0
    %714 = vmatprep.mubr.bf16.mxu0 0
    %715 = vmatmul.mubr.bf16.gmra.mrb[0].mxu0 %v680
    %v716 = vpop.f32.mrb[0].mxu0
    %v717 = vadd.f32 %v665, %v716
    %v718 = vpop.f32.mrb[0].mxu0
    %v719 = vpop.f32.mrb[0].mxu0
    %v720 = vpop.f32.mrb[0].mxu0
    %721 = vdwg.mxu0
    %v722 = vld [vmem:[%s33] sm:$0xf]
    %v723 = vld [vmem:[%s33 + $0x4] sm:$0xf]
    %v724 = vld [vmem:[%s33 + $0x8] sm:$0xf]
    %v725 = vld [vmem:[%s33 + $0xc] sm:$0xf]
    %v726 = vld [vmem:[%s35] sm:$0x1]
    %v727 = vpack.c.bf16 %v717, %v717
    %v729 = vlaneseq
    %v730 = vshrl.u32 %v729, 7
    %v731 = vsub.s32 0, %v730
    %v732 = vrot.slane %v726, %v731
    %v738 = vunpack.c.l.b16 %v722
    %v739 = vunpack.c.l.b16 %v723
    %v740 = vunpack.c.l.b16 %v724
    %v741 = vunpack.c.l.b16 %v725
    %v742 = vpack.c.b16 %v739, %v738
    %v743 = vpack.c.b16 %v741, %v740
    %v747 = vsel %vm467, %v727, 0
    %749 = vmatprep.subr.bf16.mxu0 0
    %750 = vmatpush1.bf16.msra.mxu0 %v742
    %751 = vmatprep.subr.bf16.mxu0 0
    %752 = vmatpush1.bf16.msra.mxu0 %v743
    %753 = vmatprep.subr.bf16.mxu0 0
    %754 = vmatpush1.bf16.msra.mxu0 0
    %755 = vmatprep.subr.bf16.mxu0 0
    %756 = vmatpush1.bf16.msra.mxu0 0
    %757 = vmatprep.subr.bf16.mxu0 0
    %758 = vmatpush1.bf16.msra.mxu0 0
    %759 = vmatprep.subr.bf16.mxu0 0
    %760 = vmatpush1.bf16.msra.mxu0 0
    %761 = vmatprep.subr.bf16.mxu0 0
    %762 = vmatpush1.bf16.msra.mxu0 0
    %763 = vmatprep.subr.bf16.mxu0 0
    %764 = vmatpush1.bf16.msra.mxu0 0
    %765 = vmatprep.subr.bf16.mxu0 0
    %766 = vmatpush1.bf16.msra.mxu0 0
    %767 = vmatprep.subr.bf16.mxu0 0
    %768 = vmatpush1.bf16.msra.mxu0 0
    %769 = vmatprep.subr.bf16.mxu0 0
    %770 = vmatpush1.bf16.msra.mxu0 0
    %771 = vmatprep.subr.bf16.mxu0 0
    %772 = vmatpush1.bf16.msra.mxu0 0
    %773 = vmatprep.subr.bf16.mxu0 0
    %774 = vmatpush1.bf16.msra.mxu0 0
    %775 = vmatprep.subr.bf16.mxu0 0
    %776 = vmatpush1.bf16.msra.mxu0 0
    %777 = vmatprep.subr.bf16.mxu0 0
    %778 = vmatpush1.bf16.msra.mxu0 0
    %779 = vmatprep.subr.bf16.mxu0 0
    %780 = vmatpush1.bf16.msra.mxu0 0
    %781 = vmatprep.mubr.bf16.mxu0 0
    %782 = vmatmul.mubr.bf16.gmra.mrb[0].mxu0 %v747
    %v783 = vpop.f32.mrb[0].mxu0
    %v784 = vadd.f32 %v732, %v783
    %v785 = vpop.f32.mrb[0].mxu0
    %v786 = vpop.f32.mrb[0].mxu0
    %v787 = vpop.f32.mrb[0].mxu0
    %788 = vdwg.mxu0
    %v789 = vld [vmem:[%s37] sm:$0xf]
    %v790 = vld [vmem:[%s37 + $0x4] sm:$0xf]
    %v791 = vld [vmem:[%s37 + $0x8] sm:$0xf]
    %v792 = vld [vmem:[%s37 + $0xc] sm:$0xf]
    %v793 = vld [vmem:[%s39] sm:$0x1]
    %v794 = vpack.c.bf16 %v784, %v784
    %v796 = vlaneseq
    %v797 = vshrl.u32 %v796, 7
    %v798 = vsub.s32 0, %v797
    %v799 = vrot.slane %v793, %v798
    %v805 = vunpack.c.l.b16 %v789
    %v806 = vunpack.c.l.b16 %v790
    %v807 = vunpack.c.l.b16 %v791
    %v808 = vunpack.c.l.b16 %v792
    %v809 = vpack.c.b16 %v806, %v805
    %v810 = vpack.c.b16 %v808, %v807
    %v814 = vsel %vm467, %v794, 0
    %816 = vmatprep.subr.bf16.mxu0 0
    %817 = vmatpush1.bf16.msra.mxu0 %v809
    %818 = vmatprep.subr.bf16.mxu0 0
    %819 = vmatpush1.bf16.msra.mxu0 %v810
    %820 = vmatprep.subr.bf16.mxu0 0
    %821 = vmatpush1.bf16.msra.mxu0 0
    %822 = vmatprep.subr.bf16.mxu0 0
    %823 = vmatpush1.bf16.msra.mxu0 0
    %824 = vmatprep.subr.bf16.mxu0 0
    %825 = vmatpush1.bf16.msra.mxu0 0
    %826 = vmatprep.subr.bf16.mxu0 0
    %827 = vmatpush1.bf16.msra.mxu0 0
    %828 = vmatprep.subr.bf16.mxu0 0
    %829 = vmatpush1.bf16.msra.mxu0 0
    %830 = vmatprep.subr.bf16.mxu0 0
    %831 = vmatpush1.bf16.msra.mxu0 0
    %832 = vmatprep.subr.bf16.mxu0 0
    %833 = vmatpush1.bf16.msra.mxu0 0
    %834 = vmatprep.subr.bf16.mxu0 0
    %835 = vmatpush1.bf16.msra.mxu0 0
    %836 = vmatprep.subr.bf16.mxu0 0
    %837 = vmatpush1.bf16.msra.mxu0 0
    %838 = vmatprep.subr.bf16.mxu0 0
    %839 = vmatpush1.bf16.msra.mxu0 0
    %840 = vmatprep.subr.bf16.mxu0 0
    %841 = vmatpush1.bf16.msra.mxu0 0
    %842 = vmatprep.subr.bf16.mxu0 0
    %843 = vmatpush1.bf16.msra.mxu0 0
    %844 = vmatprep.subr.bf16.mxu0 0
    %845 = vmatpush1.bf16.msra.mxu0 0
    %846 = vmatprep.subr.bf16.mxu0 0
    %847 = vmatpush1.bf16.msra.mxu0 0
    %848 = vmatprep.mubr.bf16.mxu0 0
    %849 = vmatmul.mubr.bf16.gmra.mrb[0].mxu0 %v814
    %v850 = vpop.f32.mrb[0].mxu0
    %v851 = vadd.f32 %v799, %v850
    %v852 = vpop.f32.mrb[0].mxu0
    %v853 = vpop.f32.mrb[0].mxu0
    %v854 = vpop.f32.mrb[0].mxu0
    %855 = vdwg.mxu0
    %v856 = vmul.f32 %v851, 0.5
    %v857 = vmul.f32 %v851, 0.044715
    %v858 = vmul.f32 %v857, %v851
    %v859 = vmul.f32 %v858, %v851
    %v860 = vadd.f32 %v851, %v859
    %v861 = vmul.f32 %v860, 0.7978846
    %v862 = vtanh.pop %v861
    %v863 = vadd.f32 %v862, 1.0
    %v864 = vmul.f32 %v856, %v863
    %v865 = vld [vmem:[%s41] sm:$0xf]
    %v866 = vld [vmem:[%s41 + $0x4] sm:$0xf]
    %v867 = vld [vmem:[%s41 + $0x8] sm:$0xf]
    %v868 = vld [vmem:[%s41 + $0xc] sm:$0xf]
    %v869 = vld [vmem:[%s43] sm:$0x1]
    %v870 = vpack.c.bf16 %v864, %v864
    %v872 = vlaneseq
    %v873 = vshrl.u32 %v872, 7
    %v874 = vsub.s32 0, %v873
    %v875 = vrot.slane %v869, %v874
    %v881 = vunpack.c.l.b16 %v865
    %v882 = vunpack.c.l.b16 %v866
    %v883 = vunpack.c.l.b16 %v867
    %v884 = vunpack.c.l.b16 %v868
    %v885 = vpack.c.b16 %v882, %v881
    %v886 = vpack.c.b16 %v884, %v883
    %v890 = vsel %vm467, %v870, 0
    %892 = vmatprep.subr.bf16.mxu0 0
    %893 = vmatpush1.bf16.msra.mxu0 %v885
    %894 = vmatprep.subr.bf16.mxu0 0
    %895 = vmatpush1.bf16.msra.mxu0 %v886
    %896 = vmatprep.subr.bf16.mxu0 0
    %897 = vmatpush1.bf16.msra.mxu0 0
    %898 = vmatprep.subr.bf16.mxu0 0
    %899 = vmatpush1.bf16.msra.mxu0 0
    %900 = vmatprep.subr.bf16.mxu0 0
    %901 = vmatpush1.bf16.msra.mxu0 0
    %902 = vmatprep.subr.bf16.mxu0 0
    %903 = vmatpush1.bf16.msra.mxu0 0
    %904 = vmatprep.subr.bf16.mxu0 0
    %905 = vmatpush1.bf16.msra.mxu0 0
    %906 = vmatprep.subr.bf16.mxu0 0
    %907 = vmatpush1.bf16.msra.mxu0 0
    %908 = vmatprep.subr.bf16.mxu0 0
    %909 = vmatpush1.bf16.msra.mxu0 0
    %910 = vmatprep.subr.bf16.mxu0 0
    %911 = vmatpush1.bf16.msra.mxu0 0
    %912 = vmatprep.subr.bf16.mxu0 0
    %913 = vmatpush1.bf16.msra.mxu0 0
    %914 = vmatprep.subr.bf16.mxu0 0
    %915 = vmatpush1.bf16.msra.mxu0 0
    %916 = vmatprep.subr.bf16.mxu0 0
    %917 = vmatpush1.bf16.msra.mxu0 0
    %918 = vmatprep.subr.bf16.mxu0 0
    %919 = vmatpush1.bf16.msra.mxu0 0
    %920 = vmatprep.subr.bf16.mxu0 0
    %921 = vmatpush1.bf16.msra.mxu0 0
    %922 = vmatprep.subr.bf16.mxu0 0
    %923 = vmatpush1.bf16.msra.mxu0 0
    %924 = vmatprep.mubr.bf16.mxu0 0
    %925 = vmatmul.mubr.bf16.gmra.mrb[0].mxu0 %v890
    %v926 = vpop.f32.mrb[0].mxu0
    %v927 = vadd.f32 %v875, %v926
    %v928 = vpop.f32.mrb[0].mxu0
    %v929 = vpop.f32.mrb[0].mxu0
    %v930 = vpop.f32.mrb[0].mxu0
    %931 = vdwg.mxu0
    %v932 = vld [vmem:[%s45] sm:$0xf]
    %v933 = vld [vmem:[%s45 + $0x4] sm:$0xf]
    %v934 = vld [vmem:[%s45 + $0x8] sm:$0xf]
    %v935 = vld [vmem:[%s45 + $0xc] sm:$0xf]
    %v936 = vld [vmem:[%s47] sm:$0x1]
    %v937 = vpack.c.bf16 %v927, %v927
    %v939 = vlaneseq
    %v940 = vshrl.u32 %v939, 7
    %v941 = vsub.s32 0, %v940
    %v942 = vrot.slane %v936, %v941
    %v948 = vunpack.c.l.b16 %v932
    %v949 = vunpack.c.l.b16 %v933
    %v950 = vunpack.c.l.b16 %v934
    %v951 = vunpack.c.l.b16 %v935
    %v952 = vpack.c.b16 %v949, %v948
    %v953 = vpack.c.b16 %v951, %v950
    %v957 = vsel %vm467, %v937, 0
    %959 = vmatprep.subr.bf16.mxu0 0
    %960 = vmatpush1.bf16.msra.mxu0 %v952
    %961 = vmatprep.subr.bf16.mxu0 0
    %962 = vmatpush1.bf16.msra.mxu0 %v953
    %963 = vmatprep.subr.bf16.mxu0 0
    %964 = vmatpush1.bf16.msra.mxu0 0
    %965 = vmatprep.subr.bf16.mxu0 0
    %966 = vmatpush1.bf16.msra.mxu0 0
    %967 = vmatprep.subr.bf16.mxu0 0
    %968 = vmatpush1.bf16.msra.mxu0 0
    %969 = vmatprep.subr.bf16.mxu0 0
    %970 = vmatpush1.bf16.msra.mxu0 0
    %971 = vmatprep.subr.bf16.mxu0 0
    %972 = vmatpush1.bf16.msra.mxu0 0
    %973 = vmatprep.subr.bf16.mxu0 0
    %974 = vmatpush1.bf16.msra.mxu0 0
    %975 = vmatprep.subr.bf16.mxu0 0
    %976 = vmatpush1.bf16.msra.mxu0 0
    %977 = vmatprep.subr.bf16.mxu0 0
    %978 = vmatpush1.bf16.msra.mxu0 0
    %979 = vmatprep.subr.bf16.mxu0 0
    %980 = vmatpush1.bf16.msra.mxu0 0
    %981 = vmatprep.subr.bf16.mxu0 0
    %982 = vmatpush1.bf16.msra.mxu0 0
    %983 = vmatprep.subr.bf16.mxu0 0
    %984 = vmatpush1.bf16.msra.mxu0 0
    %985 = vmatprep.subr.bf16.mxu0 0
    %986 = vmatpush1.bf16.msra.mxu0 0
    %987 = vmatprep.subr.bf16.mxu0 0
    %988 = vmatpush1.bf16.msra.mxu0 0
    %989 = vmatprep.subr.bf16.mxu0 0
    %990 = vmatpush1.bf16.msra.mxu0 0
    %991 = vmatprep.mubr.bf16.mxu0 0
    %992 = vmatmul.mubr.bf16.gmra.mrb[0].mxu0 %v957
    %v993 = vpop.f32.mrb[0].mxu0
    %v994 = vadd.f32 %v942, %v993
    %v995 = vpop.f32.mrb[0].mxu0
    %v996 = vpop.f32.mrb[0].mxu0
    %v997 = vpop.f32.mrb[0].mxu0
    %998 = vdwg.mxu0
    %v999 = vmul.f32 %v994, 0.5
    %v1000 = vmul.f32 %v994, 0.044715
    %v1001 = vmul.f32 %v1000, %v994
    %v1002 = vmul.f32 %v1001, %v994
    %v1003 = vadd.f32 %v994, %v1002
    %v1004 = vmul.f32 %v1003, 0.7978846
    %v1005 = vtanh.pop %v1004
    %v1006 = vadd.f32 %v1005, 1.0
    %v1007 = vmul.f32 %v999, %v1006
    %v1008 = vld [vmem:[%s49] sm:$0xf]
    %v1009 = vld [vmem:[%s49 + $0x4] sm:$0xf]
    %v1010 = vld [vmem:[%s49 + $0x8] sm:$0xf]
    %v1011 = vld [vmem:[%s49 + $0xc] sm:$0xf]
    %v1012 = vld [vmem:[#allocation2] sm:$0x1]
    %v1013 = vpack.c.bf16 %v1007, %v1007
    %v1015 = vlaneseq
    %v1016 = vshrl.u32 %v1015, 7
    %v1017 = vsub.s32 0, %v1016
    %v1018 = vrot.slane %v1012, %v1017
    %v1024 = vunpack.c.l.b16 %v1008
    %v1025 = vunpack.c.l.b16 %v1009
    %v1026 = vunpack.c.l.b16 %v1010
    %v1027 = vunpack.c.l.b16 %v1011
    %v1028 = vpack.c.b16 %v1025, %v1024
    %v1029 = vpack.c.b16 %v1027, %v1026
    %v1033 = vsel %vm467, %v1013, 0
    %1035 = vmatprep.subr.bf16.mxu0 0
    %1036 = vmatpush1.bf16.msra.mxu0 %v1028
    %1037 = vmatprep.subr.bf16.mxu0 0
    %1038 = vmatpush1.bf16.msra.mxu0 %v1029
    %1039 = vmatprep.subr.bf16.mxu0 0
    %1040 = vmatpush1.bf16.msra.mxu0 0
    %1041 = vmatprep.subr.bf16.mxu0 0
    %1042 = vmatpush1.bf16.msra.mxu0 0
    %1043 = vmatprep.subr.bf16.mxu0 0
    %1044 = vmatpush1.bf16.msra.mxu0 0
    %1045 = vmatprep.subr.bf16.mxu0 0
    %1046 = vmatpush1.bf16.msra.mxu0 0
    %1047 = vmatprep.subr.bf16.mxu0 0
    %1048 = vmatpush1.bf16.msra.mxu0 0
    %1049 = vmatprep.subr.bf16.mxu0 0
    %1050 = vmatpush1.bf16.msra.mxu0 0
    %1051 = vmatprep.subr.bf16.mxu0 0
    %1052 = vmatpush1.bf16.msra.mxu0 0
    %1053 = vmatprep.subr.bf16.mxu0 0
    %1054 = vmatpush1.bf16.msra.mxu0 0
    %1055 = vmatprep.subr.bf16.mxu0 0
    %1056 = vmatpush1.bf16.msra.mxu0 0
    %1057 = vmatprep.subr.bf16.mxu0 0
    %1058 = vmatpush1.bf16.msra.mxu0 0
    %1059 = vmatprep.subr.bf16.mxu0 0
    %1060 = vmatpush1.bf16.msra.mxu0 0
    %1061 = vmatprep.subr.bf16.mxu0 0
    %1062 = vmatpush1.bf16.msra.mxu0 0
    %1063 = vmatprep.subr.bf16.mxu0 0
    %1064 = vmatpush1.bf16.msra.mxu0 0
    %1065 = vmatprep.subr.bf16.mxu0 0
    %1066 = vmatpush1.bf16.msra.mxu0 0
    %1067 = vmatprep.mubr.bf16.mxu0 0
    %1068 = vmatmul.mubr.bf16.gmra.mrb[0].mxu0 %v1033
    %v1069 = vpop.f32.mrb[0].mxu0
    %v1070 = vadd.f32 %v1018, %v1069
    %v1071 = vpop.f32.mrb[0].mxu0
    %v1072 = vpop.f32.mrb[0].mxu0
    %v1073 = vpop.f32.mrb[0].mxu0
    %1074 = vdwg.mxu0
    %v1075 = vadd.f32 %v1070, %v506
    %v1076 = vld [vmem:[%s53] sm:$0xf]
    %v1077 = vld [vmem:[%s53 + $0x4] sm:$0xf]
    %v1078 = vld [vmem:[%s53 + $0x8] sm:$0xf]
    %v1079 = vld [vmem:[%s53 + $0xc] sm:$0xf]
    %v1080 = vld [vmem:[#allocation5] sm:$0x1]
    %v1082 = vlaneseq
    %v1083 = vshrl.u32 %v1082, 7
    %v1084 = vsub.s32 0, %v1083
    %v1085 = vrot.slane %v1080, %v1084
    %v1091 = vunpack.c.l.b16 %v1076
    %v1092 = vunpack.c.l.b16 %v1077
    %v1093 = vunpack.c.l.b16 %v1078
    %v1094 = vunpack.c.l.b16 %v1079
    %v1095 = vpack.c.b16 %v1092, %v1091
    %v1096 = vpack.c.b16 %v1094, %v1093
    %1099 = vmatprep.subr.bf16.mxu0 0
    %1100 = vmatpush1.bf16.msra.mxu0 %v1095
    %1101 = vmatprep.subr.bf16.mxu0 0
    %1102 = vmatpush1.bf16.msra.mxu0 %v1096
    %1103 = vmatprep.subr.bf16.mxu0 0
    %1104 = vmatpush1.bf16.msra.mxu0 0
    %1105 = vmatprep.subr.bf16.mxu0 0
    %1106 = vmatpush1.bf16.msra.mxu0 0
    %1107 = vmatprep.subr.bf16.mxu0 0
    %1108 = vmatpush1.bf16.msra.mxu0 0
    %1109 = vmatprep.subr.bf16.mxu0 0
    %1110 = vmatpush1.bf16.msra.mxu0 0
    %1111 = vmatprep.subr.bf16.mxu0 0
    %1112 = vmatpush1.bf16.msra.mxu0 0
    %1113 = vmatprep.subr.bf16.mxu0 0
    %1114 = vmatpush1.bf16.msra.mxu0 0
    %1115 = vmatprep.subr.bf16.mxu0 0
    %1116 = vmatpush1.bf16.msra.mxu0 0
    %1117 = vmatprep.subr.bf16.mxu0 0
    %1118 = vmatpush1.bf16.msra.mxu0 0
    %1119 = vmatprep.subr.bf16.mxu0 0
    %1120 = vmatpush1.bf16.msra.mxu0 0
    %1121 = vmatprep.subr.bf16.mxu0 0
    %1122 = vmatpush1.bf16.msra.mxu0 0
    %1123 = vmatprep.subr.bf16.mxu0 0
    %1124 = vmatpush1.bf16.msra.mxu0 0
    %1125 = vmatprep.subr.bf16.mxu0 0
    %1126 = vmatpush1.bf16.msra.mxu0 0
    %1127 = vmatprep.subr.bf16.mxu0 0
    %1128 = vmatpush1.bf16.msra.mxu0 0
    %1129 = vmatprep.subr.bf16.mxu0 0
    %1130 = vmatpush1.bf16.msra.mxu0 0
    %1131 = vmatprep.mubr.bf16.mxu0 0
    %1132 = vmatmul.mubr.bf16.gmra.mrb[0].mxu0 %v957
    %v1133 = vpop.f32.mrb[0].mxu0
    %v1134 = vadd.f32 %v1085, %v1133
    %v1135 = vpop.f32.mrb[0].mxu0
    %v1136 = vpop.f32.mrb[0].mxu0
    %v1137 = vpop.f32.mrb[0].mxu0
    %1138 = vdwg.mxu0
    %v1139 = vadd.f32 %v1134, %v1075
    %v1140 = vadd.f32 %v927, %v1075
    %v1141 = vld [vmem:[%s1] sm:$0xff]
    %v1142 = vld [vmem:[%s1 + $0x8] sm:$0xff]
    %v1143 = vld [vmem:[%s1 + $0x10] sm:$0xff]
    %v1144 = vld [vmem:[%s1 + $0x18] sm:$0xff]
    %v1145 = vld [vmem:[%s9] sm:$0xf]
    %v1146 = vld [vmem:[%s9 + $0x4] sm:$0xf]
    %v1147 = vld [vmem:[%s9 + $0x8] sm:$0xf]
    %v1148 = vld [vmem:[%s9 + $0xc] sm:$0xf]
    %v1149 = vld [vmem:[%s9 + $0x10] sm:$0xf]
    %v1150 = vld [vmem:[%s9 + $0x14] sm:$0xf]
    %v1151 = vld [vmem:[%s9 + $0x18] sm:$0xf]
    %v1152 = vld [vmem:[%s9 + $0x1c] sm:$0xf]
    %v1153 = vld [vmem:[%s11] sm:$0x1]
    %v1154 = vpack.c.bf16 %v1142, %v1141
    %v1155 = vpack.c.bf16 %v1144, %v1143
    %v1157 = vlaneseq
    %v1158 = vshrl.u32 %v1157, 7
    %v1159 = vsub.s32 0, %v1158
    %v1160 = vrot.slane %v1153, %v1159
    %v1170 = vunpack.c.l.b16 %v1145
    %v1171 = vunpack.c.l.b16 %v1146
    %v1172 = vunpack.c.l.b16 %v1147
    %v1173 = vunpack.c.l.b16 %v1148
    %v1174 = vunpack.c.l.b16 %v1149
    %v1175 = vunpack.c.l.b16 %v1150
    %v1176 = vunpack.c.l.b16 %v1151
    %v1177 = vunpack.c.l.b16 %v1152
    %v1178 = vpack.c.b16 %v1171, %v1170
    %v1179 = vpack.c.b16 %v1173, %v1172
    %v1180 = vpack.c.b16 %v1175, %v1174
    %v1181 = vpack.c.b16 %v1177, %v1176
    %vm1186 = vcmask 523264
    %v1188 = vsel %vm1186, %v1154, 0
    %v1191 = vsel %vm1186, %v1155, 0
    %1193 = vmatprep.subr.bf16.mxu0 0
    %1194 = vmatpush1.bf16.msra.mxu0 %v1178
    %1195 = vmatprep.subr.bf16.mxu0 0
    %1196 = vmatpush1.bf16.msra.mxu0 %v1179
    %1197 = vmatprep.subr.bf16.mxu0 0
    %1198 = vmatpush1.bf16.msra.mxu0 %v1180
    %1199 = vmatprep.subr.bf16.mxu0 0
    %1200 = vmatpush1.bf16.msra.mxu0 %v1181
    %1201 = vmatprep.subr.bf16.mxu0 0
    %1202 = vmatpush1.bf16.msra.mxu0 0
    %1203 = vmatprep.subr.bf16.mxu0 0
    %1204 = vmatpush1.bf16.msra.mxu0 0
    %1205 = vmatprep.subr.bf16.mxu0 0
    %1206 = vmatpush1.bf16.msra.mxu0 0
    %1207 = vmatprep.subr.bf16.mxu0 0
    %1208 = vmatpush1.bf16.msra.mxu0 0
    %1209 = vmatprep.subr.bf16.mxu0 0
    %1210 = vmatpush1.bf16.msra.mxu0 0
    %1211 = vmatprep.subr.bf16.mxu0 0
    %1212 = vmatpush1.bf16.msra.mxu0 0
    %1213 = vmatprep.subr.bf16.mxu0 0
    %1214 = vmatpush1.bf16.msra.mxu0 0
    %1215 = vmatprep.subr.bf16.mxu0 0
    %1216 = vmatpush1.bf16.msra.mxu0 0
    %1217 = vmatprep.subr.bf16.mxu0 0
    %1218 = vmatpush1.bf16.msra.mxu0 0
    %1219 = vmatprep.subr.bf16.mxu0 0
    %1220 = vmatpush1.bf16.msra.mxu0 0
    %1221 = vmatprep.subr.bf16.mxu0 0
    %1222 = vmatpush1.bf16.msra.mxu0 0
    %1223 = vmatprep.subr.bf16.mxu0 0
    %1224 = vmatpush1.bf16.msra.mxu0 0
    %1225 = vmatprep.mubr.bf16.mxu0 0
    %1226 = vmatmul.mubr.bf16.gmra.mrb[0].mxu0 %v1188
    %v1227 = vpop.f32.mrb[0].mxu0
    %v1228 = vadd.f32 %v1160, %v1227
    %v1229 = vpop.f32.mrb[0].mxu0
    %v1230 = vpop.f32.mrb[0].mxu0
    %v1231 = vadd.f32 %v1160, %v1230
    %v1232 = vpop.f32.mrb[0].mxu0
    %1233 = vmatprep.mubr.bf16.mxu0 0
    %1234 = vmatmul.mubr.bf16.gmra.mrb[0].mxu0 %v1191
    %v1235 = vpop.f32.mrb[0].mxu0
    %v1236 = vadd.f32 %v1160, %v1235
    %v1237 = vpop.f32.mrb[0].mxu0
    %v1238 = vpop.f32.mrb[0].mxu0
    %v1239 = vadd.f32 %v1160, %v1238
    %v1240 = vpop.f32.mrb[0].mxu0
    %1241 = vdwg.mxu0
    %v1242 = vld [vmem:[%s3] sm:$0xff]
    %v1243 = vld [vmem:[%s3 + $0x8] sm:$0xff]
    %v1244 = vld [vmem:[%s3 + $0x10] sm:$0xff]
    %v1245 = vld [vmem:[%s3 + $0x18] sm:$0xff]
    %v1246 = vadd.f32 %v1228, %v1242
    %v1247 = vadd.f32 %v1231, %v1243
    %v1248 = vadd.f32 %v1236, %v1244
    %v1249 = vadd.f32 %v1239, %v1245
    %v1250 = vlaneseq
    %v1251 = vshrl.u32 %v1250, 7
    %v1252 = vsub.s32 0, %v1251
    %v1253 = vrot.slane %v1139, %v1252
    %v1254 = vlaneseq
    %v1255 = vshrl.u32 %v1254, 7
    %v1256 = vsub.s32 1, %v1255
    %v1257 = vrot.slane %v1139, %v1256
    %v1258 = vadd.f32 %v1246, %v1253
    %v1259 = vadd.f32 %v1247, %v1253
    %v1260 = vadd.f32 %v1248, %v1257
    %v1261 = vadd.f32 %v1249, %v1257
    %v1262 = vld [vmem:[%s57] sm:$0xf]
    %v1263 = vld [vmem:[%s57 + $0x4] sm:$0xf]
    %v1264 = vld [vmem:[%s57 + $0x8] sm:$0xf]
    %v1265 = vld [vmem:[%s57 + $0xc] sm:$0xf]
    %v1266 = vld [vmem:[%s63] sm:$0x1]
    %v1267 = vpack.c.bf16 %v1259, %v1258
    %v1268 = vpack.c.bf16 %v1261, %v1260
    %v1270 = vlaneseq
    %v1271 = vshrl.u32 %v1270, 7
    %v1272 = vsub.s32 0, %v1271
    %v1273 = vrot.slane %v1266, %v1272
    %v1279 = vunpack.c.l.b16 %v1262
    %v1280 = vunpack.c.l.b16 %v1263
    %v1281 = vunpack.c.l.b16 %v1264
    %v1282 = vunpack.c.l.b16 %v1265
    %v1283 = vpack.c.b16 %v1280, %v1279
    %v1284 = vpack.c.b16 %v1282, %v1281
    %v1288 = vsel %vm467, %v1267, 0
    %v1291 = vsel %vm467, %v1268, 0
    %1293 = vmatprep.subr.bf16.mxu0 0
    %1294 = vmatpush1.bf16.msra.mxu0 %v1283
    %1295 = vmatprep.subr.bf16.mxu0 0
    %1296 = vmatpush1.bf16.msra.mxu0 %v1284
    %1297 = vmatprep.subr.bf16.mxu0 0
    %1298 = vmatpush1.bf16.msra.mxu0 0
    %1299 = vmatprep.subr.bf16.mxu0 0
    %1300 = vmatpush1.bf16.msra.mxu0 0
    %1301 = vmatprep.subr.bf16.mxu0 0
    %1302 = vmatpush1.bf16.msra.mxu0 0
    %1303 = vmatprep.subr.bf16.mxu0 0
    %1304 = vmatpush1.bf16.msra.mxu0 0
    %1305 = vmatprep.subr.bf16.mxu0 0
    %1306 = vmatpush1.bf16.msra.mxu0 0
    %1307 = vmatprep.subr.bf16.mxu0 0
    %1308 = vmatpush1.bf16.msra.mxu0 0
    %1309 = vmatprep.subr.bf16.mxu0 0
    %1310 = vmatpush1.bf16.msra.mxu0 0
    %1311 = vmatprep.subr.bf16.mxu0 0
    %1312 = vmatpush1.bf16.msra.mxu0 0
    %1313 = vmatprep.subr.bf16.mxu0 0
    %1314 = vmatpush1.bf16.msra.mxu0 0
    %1315 = vmatprep.subr.bf16.mxu0 0
    %1316 = vmatpush1.bf16.msra.mxu0 0
    %1317 = vmatprep.subr.bf16.mxu0 0
    %1318 = vmatpush1.bf16.msra.mxu0 0
    %1319 = vmatprep.subr.bf16.mxu0 0
    %1320 = vmatpush1.bf16.msra.mxu0 0
    %1321 = vmatprep.subr.bf16.mxu0 0
    %1322 = vmatpush1.bf16.msra.mxu0 0
    %1323 = vmatprep.subr.bf16.mxu0 0
    %1324 = vmatpush1.bf16.msra.mxu0 0
    %1325 = vmatprep.mubr.bf16.mxu0 0
    %1326 = vmatmul.mubr.bf16.gmra.mrb[0].mxu0 %v1288
    %v1327 = vpop.f32.mrb[0].mxu0
    %v1328 = vadd.f32 %v1273, %v1327
    %v1329 = vpop.f32.mrb[0].mxu0
    %v1330 = vpop.f32.mrb[0].mxu0
    %v1331 = vadd.f32 %v1273, %v1330
    %v1332 = vpop.f32.mrb[0].mxu0
    %1333 = vmatprep.mubr.bf16.mxu0 0
    %1334 = vmatmul.mubr.bf16.gmra.mrb[0].mxu0 %v1291
    %v1335 = vpop.f32.mrb[0].mxu0
    %v1336 = vadd.f32 %v1273, %v1335
    %v1337 = vpop.f32.mrb[0].mxu0
    %v1338 = vpop.f32.mrb[0].mxu0
    %v1339 = vadd.f32 %v1273, %v1338
    %v1340 = vpop.f32.mrb[0].mxu0
    %1341 = vdwg.mxu0
    %v1342 = vld [vmem:[%s59] sm:$0xf]
    %v1343 = vld [vmem:[%s59 + $0x4] sm:$0xf]
    %v1344 = vld [vmem:[%s59 + $0x8] sm:$0xf]
    %v1345 = vld [vmem:[%s59 + $0xc] sm:$0xf]
    %v1346 = vld [vmem:[%s65] sm:$0x1]
    %v1348 = vlaneseq
    %v1349 = vshrl.u32 %v1348, 7
    %v1350 = vsub.s32 0, %v1349
    %v1351 = vrot.slane %v1346, %v1350
    %v1357 = vunpack.c.l.b16 %v1342
    %v1358 = vunpack.c.l.b16 %v1343
    %v1359 = vunpack.c.l.b16 %v1344
    %v1360 = vunpack.c.l.b16 %v1345
    %v1361 = vpack.c.b16 %v1358, %v1357
    %v1362 = vpack.c.b16 %v1360, %v1359
    %1365 = vmatprep.subr.bf16.mxu0 0
    %1366 = vmatpush1.bf16.msra.mxu0 %v1361
    %1367 = vmatprep.subr.bf16.mxu0 0
    %1368 = vmatpush1.bf16.msra.mxu0 %v1362
    %1369 = vmatprep.subr.bf16.mxu0 0
    %1370 = vmatpush1.bf16.msra.mxu0 0
    %1371 = vmatprep.subr.bf16.mxu0 0
    %1372 = vmatpush1.bf16.msra.mxu0 0
    %1373 = vmatprep.subr.bf16.mxu0 0
    %1374 = vmatpush1.bf16.msra.mxu0 0
    %1375 = vmatprep.subr.bf16.mxu0 0
    %1376 = vmatpush1.bf16.msra.mxu0 0
    %1377 = vmatprep.subr.bf16.mxu0 0
    %1378 = vmatpush1.bf16.msra.mxu0 0
    %1379 = vmatprep.subr.bf16.mxu0 0
    %1380 = vmatpush1.bf16.msra.mxu0 0
    %1381 = vmatprep.subr.bf16.mxu0 0
    %1382 = vmatpush1.bf16.msra.mxu0 0
    %1383 = vmatprep.subr.bf16.mxu0 0
    %1384 = vmatpush1.bf16.msra.mxu0 0
    %1385 = vmatprep.subr.bf16.mxu0 0
    %1386 = vmatpush1.bf16.msra.mxu0 0
    %1387 = vmatprep.subr.bf16.mxu0 0
    %1388 = vmatpush1.bf16.msra.mxu0 0
    %1389 = vmatprep.subr.bf16.mxu0 0
    %1390 = vmatpush1.bf16.msra.mxu0 0
    %1391 = vmatprep.subr.bf16.mxu0 0
    %1392 = vmatpush1.bf16.msra.mxu0 0
    %1393 = vmatprep.subr.bf16.mxu0 0
    %1394 = vmatpush1.bf16.msra.mxu0 0
    %1395 = vmatprep.subr.bf16.mxu0 0
    %1396 = vmatpush1.bf16.msra.mxu0 0
    %1397 = vmatprep.mubr.bf16.mxu0 0
    %1398 = vmatmul.mubr.bf16.gmra.mrb[0].mxu0 %v1288
    %v1399 = vpop.f32.mrb[0].mxu0
    %v1400 = vadd.f32 %v1351, %v1399
    %v1401 = vpop.f32.mrb[0].mxu0
    %v1402 = vpop.f32.mrb[0].mxu0
    %v1403 = vadd.f32 %v1351, %v1402
    %v1404 = vpop.f32.mrb[0].mxu0
    %1405 = vmatprep.mubr.bf16.mxu0 0
    %1406 = vmatmul.mubr.bf16.gmra.mrb[0].mxu0 %v1291
    %v1407 = vpop.f32.mrb[0].mxu0
    %v1408 = vadd.f32 %v1351, %v1407
    %v1409 = vpop.f32.mrb[0].mxu0
    %v1410 = vpop.f32.mrb[0].mxu0
    %v1411 = vadd.f32 %v1351, %v1410
    %v1412 = vpop.f32.mrb[0].mxu0
    %1413 = vdwg.mxu0
    %v1414 = vld [vmem:[%s61] sm:$0xf]
    %v1415 = vld [vmem:[%s61 + $0x4] sm:$0xf]
    %v1416 = vld [vmem:[%s61 + $0x8] sm:$0xf]
    %v1417 = vld [vmem:[%s61 + $0xc] sm:$0xf]
    %v1418 = vld [vmem:[%s67] sm:$0x1]
    %v1420 = vlaneseq
    %v1421 = vshrl.u32 %v1420, 7
    %v1422 = vsub.s32 0, %v1421
    %v1423 = vrot.slane %v1418, %v1422
    %v1429 = vunpack.c.l.b16 %v1414
    %v1430 = vunpack.c.l.b16 %v1415
    %v1431 = vunpack.c.l.b16 %v1416
    %v1432 = vunpack.c.l.b16 %v1417
    %v1433 = vpack.c.b16 %v1430, %v1429
    %v1434 = vpack.c.b16 %v1432, %v1431
    %1437 = vmatprep.subr.bf16.mxu0 0
    %1438 = vmatpush1.bf16.msra.mxu0 %v1433
    %1439 = vmatprep.subr.bf16.mxu0 0
    %1440 = vmatpush1.bf16.msra.mxu0 %v1434
    %1441 = vmatprep.subr.bf16.mxu0 0
    %1442 = vmatpush1.bf16.msra.mxu0 0
    %1443 = vmatprep.subr.bf16.mxu0 0
    %1444 = vmatpush1.bf16.msra.mxu0 0
    %1445 = vmatprep.subr.bf16.mxu0 0
    %1446 = vmatpush1.bf16.msra.mxu0 0
    %1447 = vmatprep.subr.bf16.mxu0 0
    %1448 = vmatpush1.bf16.msra.mxu0 0
    %1449 = vmatprep.subr.bf16.mxu0 0
    %1450 = vmatpush1.bf16.msra.mxu0 0
    %1451 = vmatprep.subr.bf16.mxu0 0
    %1452 = vmatpush1.bf16.msra.mxu0 0
    %1453 = vmatprep.subr.bf16.mxu0 0
    %1454 = vmatpush1.bf16.msra.mxu0 0
    %1455 = vmatprep.subr.bf16.mxu0 0
    %1456 = vmatpush1.bf16.msra.mxu0 0
    %1457 = vmatprep.subr.bf16.mxu0 0
    %1458 = vmatpush1.bf16.msra.mxu0 0
    %1459 = vmatprep.subr.bf16.mxu0 0
    %1460 = vmatpush1.bf16.msra.mxu0 0
    %1461 = vmatprep.subr.bf16.mxu0 0
    %1462 = vmatpush1.bf16.msra.mxu0 0
    %1463 = vmatprep.subr.bf16.mxu0 0
    %1464 = vmatpush1.bf16.msra.mxu0 0
    %1465 = vmatprep.subr.bf16.mxu0 0
    %1466 = vmatpush1.bf16.msra.mxu0 0
    %1467 = vmatprep.subr.bf16.mxu0 0
    %1468 = vmatpush1.bf16.msra.mxu0 0
    %1469 = vmatprep.mubr.bf16.mxu0 0
    %1470 = vmatmul.mubr.bf16.gmra.mrb[0].mxu0 %v1288
    %v1471 = vpop.f32.mrb[0].mxu0
    %v1472 = vadd.f32 %v1423, %v1471
    %v1473 = vpop.f32.mrb[0].mxu0
    %v1474 = vpop.f32.mrb[0].mxu0
    %v1475 = vadd.f32 %v1423, %v1474
    %v1476 = vpop.f32.mrb[0].mxu0
    %1477 = vmatprep.mubr.bf16.mxu0 0
    %1478 = vmatmul.mubr.bf16.gmra.mrb[0].mxu0 %v1291
    %v1479 = vpop.f32.mrb[0].mxu0
    %v1480 = vadd.f32 %v1423, %v1479
    %v1481 = vpop.f32.mrb[0].mxu0
    %v1482 = vpop.f32.mrb[0].mxu0
    %v1483 = vadd.f32 %v1423, %v1482
    %v1484 = vpop.f32.mrb[0].mxu0
    %1485 = vdwg.mxu0
    %v1486 = vmul.f32 %v1328, 0.35355338
    %v1487 = vmul.f32 %v1331, 0.35355338
    %v1488 = vpack.c.bf16 %v1487, %v1486
    %v1489 = vpack.c.bf16 %v1403, %v1400
    %vm1490 = vcmask 64512
    %v1492 = vsel %vm1490, %v1488, 0
    %v1495 = vsel %vm1490, %v1489, 0
    %1497 = vmatprep.subr.bf16.mxu0 0
    %1498 = vmatpush1.bf16.xpose.msra.mxu0 %v1495
    %1499 = vmatprep.subr.bf16.mxu0 0
    %1500 = vmatpush1.bf16.xpose.msra.mxu0 0
    %1501 = vmatprep.subr.bf16.mxu0 0
    %1502 = vmatpush1.bf16.xpose.msra.mxu0 0
    %1503 = vmatprep.subr.bf16.mxu0 0
    %1504 = vmatpush1.bf16.xpose.msra.mxu0 0
    %1505 = vmatprep.subr.bf16.mxu0 0
    %1506 = vmatpush1.bf16.xpose.msra.mxu0 0
    %1507 = vmatprep.subr.bf16.mxu0 0
    %1508 = vmatpush1.bf16.xpose.msra.mxu0 0
    %1509 = vmatprep.subr.bf16.mxu0 0
    %1510 = vmatpush1.bf16.xpose.msra.mxu0 0
    %1511 = vmatprep.subr.bf16.mxu0 0
    %1512 = vmatpush1.bf16.xpose.msra.mxu0 0
    %1513 = vmatprep.subr.bf16.mxu0 0
    %1514 = vmatpush1.bf16.xpose.msra.mxu0 0
    %1515 = vmatprep.subr.bf16.mxu0 0
    %1516 = vmatpush1.bf16.xpose.msra.mxu0 0
    %1517 = vmatprep.subr.bf16.mxu0 0
    %1518 = vmatpush1.bf16.xpose.msra.mxu0 0
    %1519 = vmatprep.subr.bf16.mxu0 0
    %1520 = vmatpush1.bf16.xpose.msra.mxu0 0
    %1521 = vmatprep.subr.bf16.mxu0 0
    %1522 = vmatpush1.bf16.xpose.msra.mxu0 0
    %1523 = vmatprep.subr.bf16.mxu0 0
    %1524 = vmatpush1.bf16.xpose.msra.mxu0 0
    %1525 = vmatprep.subr.bf16.mxu0 0
    %1526 = vmatpush1.bf16.xpose.msra.mxu0 0
    %1527 = vmatprep.subr.bf16.mxu0 0
    %1528 = vmatpush1.bf16.xpose.msra.mxu0 0
    %1529 = vmatprep.mubr.bf16.mxu0 0
    %1530 = vmatmul.mubr.bf16.gmra.mrb[0].mxu0 %v1492
    %v1531 = vpop.f32.mrb[0].mxu0
    %v1532 = vadd.f32 0.0, %v1531
    %v1533 = vpop.f32.mrb[0].mxu0
    %v1534 = vpop.f32.mrb[0].mxu0
    %v1535 = vadd.f32 0.0, %v1534
    %v1536 = vpop.f32.mrb[0].mxu0
    %1537 = vdwg.mxu0
    %vm1538 = vcmask 130048
    %v1539 = vsel %vm1538, %v1532, -inf
    %1540 = vmax.xlane.f32.xlu0 %v1539
    %v1541 = vpop.xlane.xlu0 %1540
    %v1542 = vsel %vm1538, %v1535, -inf
    %1543 = vmax.xlane.f32.xlu0 %v1542
    %v1544 = vpop.xlane.xlu0 %1543
    %v1545 = vsub.f32 %v1532, %v1541
    %v1546 = vsub.f32 %v1535, %v1544
    %v1547 = vmul.f32 %v1545, 1.442695
    %v1548 = vpow.pop %v1547
    %v1549 = vmul.f32 %v1546, 1.442695
    %v1550 = vpow.pop %v1549
    %v1551 = vsel %vm1538, %v1548, 0.0
    %1552 = vadd.xlane.f32.xlu0 %v1551
    %v1553 = vpop.xlane.xlu0 %1552
    %v1554 = vsel %vm1538, %v1550, 0.0
    %1555 = vadd.xlane.f32.xlu0 %v1554
    %v1556 = vpop.xlane.xlu0 %1555
    %v1557 = vrcp.pop %v1553
    %v1558 = vmul.f32 %v1548, %v1557
    %v1559 = vrcp.pop %v1556
    %v1560 = vmul.f32 %v1550, %v1559
    %v1561 = vpack.c.bf16 %v1560, %v1558
    %v1562 = vpack.c.bf16 %v1475, %v1472
    %v1564 = vsel %vm1538, %v1561, 0
    %1566 = vmatprep.subr.bf16.mxu0 0
    %1567 = vmatpush1.bf16.msra.mxu0 %v1562
    %1568 = vmatprep.subr.bf16.mxu0 0
    %1569 = vmatpush1.bf16.msra.mxu0 0
    %1570 = vmatprep.subr.bf16.mxu0 0
    %1571 = vmatpush1.bf16.msra.mxu0 0
    %1572 = vmatprep.subr.bf16.mxu0 0
    %1573 = vmatpush1.bf16.msra.mxu0 0
    %1574 = vmatprep.subr.bf16.mxu0 0
    %1575 = vmatpush1.bf16.msra.mxu0 0
    %1576 = vmatprep.subr.bf16.mxu0 0
    %1577 = vmatpush1.bf16.msra.mxu0 0
    %1578 = vmatprep.subr.bf16.mxu0 0
    %1579 = vmatpush1.bf16.msra.mxu0 0
    %1580 = vmatprep.subr.bf16.mxu0 0
    %1581 = vmatpush1.bf16.msra.mxu0 0
    %1582 = vmatprep.subr.bf16.mxu0 0
    %1583 = vmatpush1.bf16.msra.mxu0 0
    %1584 = vmatprep.subr.bf16.mxu0 0
    %1585 = vmatpush1.bf16.msra.mxu0 0
    %1586 = vmatprep.subr.bf16.mxu0 0
    %1587 = vmatpush1.bf16.msra.mxu0 0
    %1588 = vmatprep.subr.bf16.mxu0 0
    %1589 = vmatpush1.bf16.msra.mxu0 0
    %1590 = vmatprep.subr.bf16.mxu0 0
    %1591 = vmatpush1.bf16.msra.mxu0 0
    %1592 = vmatprep.subr.bf16.mxu0 0
    %1593 = vmatpush1.bf16.msra.mxu0 0
    %1594 = vmatprep.subr.bf16.mxu0 0
    %1595 = vmatpush1.bf16.msra.mxu0 0
    %1596 = vmatprep.subr.bf16.mxu0 0
    %1597 = vmatpush1.bf16.msra.mxu0 0
    %1598 = vmatprep.mubr.bf16.mxu0 0
    %1599 = vmatmul.mubr.bf16.gmra.mrb[0].mxu0 %v1564
    %v1600 = vpop.f32.mrb[0].mxu0
    %v1601 = vadd.f32 0.0, %v1600
    %v1602 = vpop.f32.mrb[0].mxu0
    %v1603 = vpop.f32.mrb[0].mxu0
    %v1604 = vadd.f32 0.0, %v1603
    %v1605 = vpop.f32.mrb[0].mxu0
    %1606 = vdwg.mxu0
    %v1607 = vmul.f32 %v1336, 0.35355338
    %v1608 = vmul.f32 %v1339, 0.35355338
    %v1609 = vpack.c.bf16 %v1608, %v1607
    %v1610 = vpack.c.bf16 %v1411, %v1408
    %v1612 = vsel %vm1490, %v1609, 0
    %v1615 = vsel %vm1490, %v1610, 0
    %1617 = vmatprep.subr.bf16.mxu0 0
    %1618 = vmatpush1.bf16.xpose.msra.mxu0 %v1615
    %1619 = vmatprep.subr.bf16.mxu0 0
    %1620 = vmatpush1.bf16.xpose.msra.mxu0 0
    %1621 = vmatprep.subr.bf16.mxu0 0
    %1622 = vmatpush1.bf16.xpose.msra.mxu0 0
    %1623 = vmatprep.subr.bf16.mxu0 0
    %1624 = vmatpush1.bf16.xpose.msra.mxu0 0
    %1625 = vmatprep.subr.bf16.mxu0 0
    %1626 = vmatpush1.bf16.xpose.msra.mxu0 0
    %1627 = vmatprep.subr.bf16.mxu0 0
    %1628 = vmatpush1.bf16.xpose.msra.mxu0 0
    %1629 = vmatprep.subr.bf16.mxu0 0
    %1630 = vmatpush1.bf16.xpose.msra.mxu0 0
    %1631 = vmatprep.subr.bf16.mxu0 0
    %1632 = vmatpush1.bf16.xpose.msra.mxu0 0
    %1633 = vmatprep.subr.bf16.mxu0 0
    %1634 = vmatpush1.bf16.xpose.msra.mxu0 0
    %1635 = vmatprep.subr.bf16.mxu0 0
    %1636 = vmatpush1.bf16.xpose.msra.mxu0 0
    %1637 = vmatprep.subr.bf16.mxu0 0
    %1638 = vmatpush1.bf16.xpose.msra.mxu0 0
    %1639 = vmatprep.subr.bf16.mxu0 0
    %1640 = vmatpush1.bf16.xpose.msra.mxu0 0
    %1641 = vmatprep.subr.bf16.mxu0 0
    %1642 = vmatpush1.bf16.xpose.msra.mxu0 0
    %1643 = vmatprep.subr.bf16.mxu0 0
    %1644 = vmatpush1.bf16.xpose.msra.mxu0 0
    %1645 = vmatprep.subr.bf16.mxu0 0
    %1646 = vmatpush1.bf16.xpose.msra.mxu0 0
    %1647 = vmatprep.subr.bf16.mxu0 0
    %1648 = vmatpush1.bf16.xpose.msra.mxu0 0
    %1649 = vmatprep.mubr.bf16.mxu0 0
    %1650 = vmatmul.mubr.bf16.gmra.mrb[0].mxu0 %v1612
    %v1651 = vpop.f32.mrb[0].mxu0
    %v1652 = vadd.f32 0.0, %v1651
    %v1653 = vpop.f32.mrb[0].mxu0
    %v1654 = vpop.f32.mrb[0].mxu0
    %v1655 = vadd.f32 0.0, %v1654
    %v1656 = vpop.f32.mrb[0].mxu0
    %1657 = vdwg.mxu0
    %v1658 = vsel %vm1538, %v1652, -inf
    %1659 = vmax.xlane.f32.xlu0 %v1658
    %v1660 = vpop.xlane.xlu0 %1659
    %v1661 = vsel %vm1538, %v1655, -inf
    %1662 = vmax.xlane.f32.xlu0 %v1661
    %v1663 = vpop.xlane.xlu0 %1662
    %v1664 = vsub.f32 %v1652, %v1660
    %v1665 = vsub.f32 %v1655, %v1663
    %v1666 = vmul.f32 %v1664, 1.442695
    %v1667 = vpow.pop %v1666
    %v1668 = vmul.f32 %v1665, 1.442695
    %v1669 = vpow.pop %v1668
    %v1670 = vsel %vm1538, %v1667, 0.0
    %1671 = vadd.xlane.f32.xlu0 %v1670
    %v1672 = vpop.xlane.xlu0 %1671
    %v1673 = vsel %vm1538, %v1669, 0.0
    %1674 = vadd.xlane.f32.xlu0 %v1673
    %v1675 = vpop.xlane.xlu0 %1674
    %v1676 = vrcp.pop %v1672
    %v1677 = vmul.f32 %v1667, %v1676
    %v1678 = vrcp.pop %v1675
    %v1679 = vmul.f32 %v1669, %v1678
    %v1680 = vpack.c.bf16 %v1679, %v1677
    %v1681 = vpack.c.bf16 %v1483, %v1480
    %v1683 = vsel %vm1538, %v1680, 0
    %1685 = vmatprep.subr.bf16.mxu0 0
    %1686 = vmatpush1.bf16.msra.mxu0 %v1681
    %1687 = vmatprep.subr.bf16.mxu0 0
    %1688 = vmatpush1.bf16.msra.mxu0 0
    %1689 = vmatprep.subr.bf16.mxu0 0
    %1690 = vmatpush1.bf16.msra.mxu0 0
    %1691 = vmatprep.subr.bf16.mxu0 0
    %1692 = vmatpush1.bf16.msra.mxu0 0
    %1693 = vmatprep.subr.bf16.mxu0 0
    %1694 = vmatpush1.bf16.msra.mxu0 0
    %1695 = vmatprep.subr.bf16.mxu0 0
    %1696 = vmatpush1.bf16.msra.mxu0 0
    %1697 = vmatprep.subr.bf16.mxu0 0
    %1698 = vmatpush1.bf16.msra.mxu0 0
    %1699 = vmatprep.subr.bf16.mxu0 0
    %1700 = vmatpush1.bf16.msra.mxu0 0
    %1701 = vmatprep.subr.bf16.mxu0 0
    %1702 = vmatpush1.bf16.msra.mxu0 0
    %1703 = vmatprep.subr.bf16.mxu0 0
    %1704 = vmatpush1.bf16.msra.mxu0 0
    %1705 = vmatprep.subr.bf16.mxu0 0
    %1706 = vmatpush1.bf16.msra.mxu0 0
    %1707 = vmatprep.subr.bf16.mxu0 0
    %1708 = vmatpush1.bf16.msra.mxu0 0
    %1709 = vmatprep.subr.bf16.mxu0 0
    %1710 = vmatpush1.bf16.msra.mxu0 0
    %1711 = vmatprep.subr.bf16.mxu0 0
    %1712 = vmatpush1.bf16.msra.mxu0 0
    %1713 = vmatprep.subr.bf16.mxu0 0
    %1714 = vmatpush1.bf16.msra.mxu0 0
    %1715 = vmatprep.subr.bf16.mxu0 0
    %1716 = vmatpush1.bf16.msra.mxu0 0
    %1717 = vmatprep.mubr.bf16.mxu0 0
    %1718 = vmatmul.mubr.bf16.gmra.mrb[0].mxu0 %v1683
    %v1719 = vpop.f32.mrb[0].mxu0
    %v1720 = vadd.f32 0.0, %v1719
    %v1721 = vpop.f32.mrb[0].mxu0
    %v1722 = vpop.f32.mrb[0].mxu0
    %v1723 = vadd.f32 0.0, %v1722
    %v1724 = vpop.f32.mrb[0].mxu0
    %1725 = vdwg.mxu0
    %s1726 = scalar_lea.vmem %s57, 16
    %v1727 = vld [vmem:[%s1726] sm:$0xf]
    %v1728 = vld [vmem:[%s1726 + $0x4] sm:$0xf]
    %v1729 = vld [vmem:[%s1726 + $0x8] sm:$0xf]
    %v1730 = vld [vmem:[%s1726 + $0xc] sm:$0xf]
    %s1731 = scalar_lea.vmem %s63, 1
    %v1732 = vld [vmem:[%s1731] sm:$0x1]
    %v1734 = vlaneseq
    %v1735 = vshrl.u32 %v1734, 7
    %v1736 = vsub.s32 0, %v1735
    %v1737 = vrot.slane %v1732, %v1736
    %v1743 = vunpack.c.l.b16 %v1727
    %v1744 = vunpack.c.l.b16 %v1728
    %v1745 = vunpack.c.l.b16 %v1729
    %v1746 = vunpack.c.l.b16 %v1730
    %v1747 = vpack.c.b16 %v1744, %v1743
    %v1748 = vpack.c.b16 %v1746, %v1745
    %1751 = vmatprep.subr.bf16.mxu0 0
    %1752 = vmatpush1.bf16.msra.mxu0 %v1747
    %1753 = vmatprep.subr.bf16.mxu0 0
    %1754 = vmatpush1.bf16.msra.mxu0 %v1748
    %1755 = vmatprep.subr.bf16.mxu0 0
    %1756 = vmatpush1.bf16.msra.mxu0 0
    %1757 = vmatprep.subr.bf16.mxu0 0
    %1758 = vmatpush1.bf16.msra.mxu0 0
    %1759 = vmatprep.subr.bf16.mxu0 0
    %1760 = vmatpush1.bf16.msra.mxu0 0
    %1761 = vmatprep.subr.bf16.mxu0 0
    %1762 = vmatpush1.bf16.msra.mxu0 0
    %1763 = vmatprep.subr.bf16.mxu0 0
    %1764 = vmatpush1.bf16.msra.mxu0 0
    %1765 = vmatprep.subr.bf16.mxu0 0
    %1766 = vmatpush1.bf16.msra.mxu0 0
    %1767 = vmatprep.subr.bf16.mxu0 0
    %1768 = vmatpush1.bf16.msra.mxu0 0
    %1769 = vmatprep.subr.bf16.mxu0 0
    %1770 = vmatpush1.bf16.msra.mxu0 0
    %1771 = vmatprep.subr.bf16.mxu0 0
    %1772 = vmatpush1.bf16.msra.mxu0 0
    %1773 = vmatprep.subr.bf16.mxu0 0
    %1774 = vmatpush1.bf16.msra.mxu0 0
    %1775 = vmatprep.subr.bf16.mxu0 0
    %1776 = vmatpush1.bf16.msra.mxu0 0
    %1777 = vmatprep.subr.bf16.mxu0 0
    %1778 = vmatpush1.bf16.msra.mxu0 0
    %1779 = vmatprep.subr.bf16.mxu0 0
    %1780 = vmatpush1.bf16.msra.mxu0 0
    %1781 = vmatprep.subr.bf16.mxu0 0
    %1782 = vmatpush1.bf16.msra.mxu0 0
    %1783 = vmatprep.mubr.bf16.mxu0 0
    %1784 = vmatmul.mubr.bf16.gmra.mrb[0].mxu0 %v1288
    %v1785 = vpop.f32.mrb[0].mxu0
    %v1786 = vadd.f32 %v1737, %v1785
    %v1787 = vpop.f32.mrb[0].mxu0
    %v1788 = vpop.f32.mrb[0].mxu0
    %v1789 = vadd.f32 %v1737, %v1788
    %v1790 = vpop.f32.mrb[0].mxu0
    %1791 = vmatprep.mubr.bf16.mxu0 0
    %1792 = vmatmul.mubr.bf16.gmra.mrb[0].mxu0 %v1291
    %v1793 = vpop.f32.mrb[0].mxu0
    %v1794 = vadd.f32 %v1737, %v1793
    %v1795 = vpop.f32.mrb[0].mxu0
    %v1796 = vpop.f32.mrb[0].mxu0
    %v1797 = vadd.f32 %v1737, %v1796
    %v1798 = vpop.f32.mrb[0].mxu0
    %1799 = vdwg.mxu0
    %s1800 = scalar_lea.vmem %s59, 16
    %v1801 = vld [vmem:[%s1800] sm:$0xf]
    %v1802 = vld [vmem:[%s1800 + $0x4] sm:$0xf]
    %v1803 = vld [vmem:[%s1800 + $0x8] sm:$0xf]
    %v1804 = vld [vmem:[%s1800 + $0xc] sm:$0xf]
    %s1805 = scalar_lea.vmem %s65, 1
    %v1806 = vld [vmem:[%s1805] sm:$0x1]
    %v1808 = vlaneseq
    %v1809 = vshrl.u32 %v1808, 7
    %v1810 = vsub.s32 0, %v1809
    %v1811 = vrot.slane %v1806, %v1810
    %v1817 = vunpack.c.l.b16 %v1801
    %v1818 = vunpack.c.l.b16 %v1802
    %v1819 = vunpack.c.l.b16 %v1803
    %v1820 = vunpack.c.l.b16 %v1804
    %v1821 = vpack.c.b16 %v1818, %v1817
    %v1822 = vpack.c.b16 %v1820, %v1819
    %1825 = vmatprep.subr.bf16.mxu0 0
    %1826 = vmatpush1.bf16.msra.mxu0 %v1821
    %1827 = vmatprep.subr.bf16.mxu0 0
    %1828 = vmatpush1.bf16.msra.mxu0 %v1822
    %1829 = vmatprep.subr.bf16.mxu0 0
    %1830 = vmatpush1.bf16.msra.mxu0 0
    %1831 = vmatprep.subr.bf16.mxu0 0
    %1832 = vmatpush1.bf16.msra.mxu0 0
    %1833 = vmatprep.subr.bf16.mxu0 0
    %1834 = vmatpush1.bf16.msra.mxu0 0
    %1835 = vmatprep.subr.bf16.mxu0 0
    %1836 = vmatpush1.bf16.msra.mxu0 0
    %1837 = vmatprep.subr.bf16.mxu0 0
    %1838 = vmatpush1.bf16.msra.mxu0 0
    %1839 = vmatprep.subr.bf16.mxu0 0
    %1840 = vmatpush1.bf16.msra.mxu0 0
    %1841 = vmatprep.subr.bf16.mxu0 0
    %1842 = vmatpush1.bf16.msra.mxu0 0
    %1843 = vmatprep.subr.bf16.mxu0 0
    %1844 = vmatpush1.bf16.msra.mxu0 0
    %1845 = vmatprep.subr.bf16.mxu0 0
    %1846 = vmatpush1.bf16.msra.mxu0 0
    %1847 = vmatprep.subr.bf16.mxu0 0
    %1848 = vmatpush1.bf16.msra.mxu0 0
    %1849 = vmatprep.subr.bf16.mxu0 0
    %1850 = vmatpush1.bf16.msra.mxu0 0
    %1851 = vmatprep.subr.bf16.mxu0 0
    %1852 = vmatpush1.bf16.msra.mxu0 0
    %1853 = vmatprep.subr.bf16.mxu0 0
    %1854 = vmatpush1.bf16.msra.mxu0 0
    %1855 = vmatprep.subr.bf16.mxu0 0
    %1856 = vmatpush1.bf16.msra.mxu0 0
    %1857 = vmatprep.mubr.bf16.mxu0 0
    %1858 = vmatmul.mubr.bf16.gmra.mrb[0].mxu0 %v1288
    %v1859 = vpop.f32.mrb[0].mxu0
    %v1860 = vadd.f32 %v1811, %v1859
    %v1861 = vpop.f32.mrb[0].mxu0
    %v1862 = vpop.f32.mrb[0].mxu0
    %v1863 = vadd.f32 %v1811, %v1862
    %v1864 = vpop.f32.mrb[0].mxu0
    %1865 = vmatprep.mubr.bf16.mxu0 0
    %1866 = vmatmul.mubr.bf16.gmra.mrb[0].mxu0 %v1291
    %v1867 = vpop.f32.mrb[0].mxu0
    %v1868 = vadd.f32 %v1811, %v1867
    %v1869 = vpop.f32.mrb[0].mxu0
    %v1870 = vpop.f32.mrb[0].mxu0
    %v1871 = vadd.f32 %v1811, %v1870
    %v1872 = vpop.f32.mrb[0].mxu0
    %1873 = vdwg.mxu0
    %s1874 = scalar_lea.vmem %s61, 16
    %v1875 = vld [vmem:[%s1874] sm:$0xf]
    %v1876 = vld [vmem:[%s1874 + $0x4] sm:$0xf]
    %v1877 = vld [vmem:[%s1874 + $0x8] sm:$0xf]
    %v1878 = vld [vmem:[%s1874 + $0xc] sm:$0xf]
    %s1879 = scalar_lea.vmem %s67, 1
    %v1880 = vld [vmem:[%s1879] sm:$0x1]
    %v1882 = vlaneseq
    %v1883 = vshrl.u32 %v1882, 7
    %v1884 = vsub.s32 0, %v1883
    %v1885 = vrot.slane %v1880, %v1884
    %v1891 = vunpack.c.l.b16 %v1875
    %v1892 = vunpack.c.l.b16 %v1876
    %v1893 = vunpack.c.l.b16 %v1877
    %v1894 = vunpack.c.l.b16 %v1878
    %v1895 = vpack.c.b16 %v1892, %v1891
    %v1896 = vpack.c.b16 %v1894, %v1893
    %1899 = vmatprep.subr.bf16.mxu0 0
    %1900 = vmatpush1.bf16.msra.mxu0 %v1895
    %1901 = vmatprep.subr.bf16.mxu0 0
    %1902 = vmatpush1.bf16.msra.mxu0 %v1896
    %1903 = vmatprep.subr.bf16.mxu0 0
    %1904 = vmatpush1.bf16.msra.mxu0 0
    %1905 = vmatprep.subr.bf16.mxu0 0
    %1906 = vmatpush1.bf16.msra.mxu0 0
    %1907 = vmatprep.subr.bf16.mxu0 0
    %1908 = vmatpush1.bf16.msra.mxu0 0
    %1909 = vmatprep.subr.bf16.mxu0 0
    %1910 = vmatpush1.bf16.msra.mxu0 0
    %1911 = vmatprep.subr.bf16.mxu0 0
    %1912 = vmatpush1.bf16.msra.mxu0 0
    %1913 = vmatprep.subr.bf16.mxu0 0
    %1914 = vmatpush1.bf16.msra.mxu0 0
    %1915 = vmatprep.subr.bf16.mxu0 0
    %1916 = vmatpush1.bf16.msra.mxu0 0
    %1917 = vmatprep.subr.bf16.mxu0 0
    %1918 = vmatpush1.bf16.msra.mxu0 0
    %1919 = vmatprep.subr.bf16.mxu0 0
    %1920 = vmatpush1.bf16.msra.mxu0 0
    %1921 = vmatprep.subr.bf16.mxu0 0
    %1922 = vmatpush1.bf16.msra.mxu0 0
    %1923 = vmatprep.subr.bf16.mxu0 0
    %1924 = vmatpush1.bf16.msra.mxu0 0
    %1925 = vmatprep.subr.bf16.mxu0 0
    %1926 = vmatpush1.bf16.msra.mxu0 0
    %1927 = vmatprep.subr.bf16.mxu0 0
    %1928 = vmatpush1.bf16.msra.mxu0 0
    %1929 = vmatprep.subr.bf16.mxu0 0
    %1930 = vmatpush1.bf16.msra.mxu0 0
    %1931 = vmatprep.mubr.bf16.mxu0 0
    %1932 = vmatmul.mubr.bf16.gmra.mrb[0].mxu0 %v1288
    %v1933 = vpop.f32.mrb[0].mxu0
    %v1934 = vadd.f32 %v1885, %v1933
    %v1935 = vpop.f32.mrb[0].mxu0
    %v1936 = vpop.f32.mrb[0].mxu0
    %v1937 = vadd.f32 %v1885, %v1936
    %v1938 = vpop.f32.mrb[0].mxu0
    %1939 = vmatprep.mubr.bf16.mxu0 0
    %1940 = vmatmul.mubr.bf16.gmra.mrb[0].mxu0 %v1291
    %v1941 = vpop.f32.mrb[0].mxu0
    %v1942 = vadd.f32 %v1885, %v1941
    %v1943 = vpop.f32.mrb[0].mxu0
    %v1944 = vpop.f32.mrb[0].mxu0
    %v1945 = vadd.f32 %v1885, %v1944
    %v1946 = vpop.f32.mrb[0].mxu0
    %1947 = vdwg.mxu0
    %v1948 = vmul.f32 %v1786, 0.35355338
    %v1949 = vmul.f32 %v1789, 0.35355338
    %v1950 = vpack.c.bf16 %v1949, %v1948
    %v1951 = vpack.c.bf16 %v1863, %v1860
    %v1953 = vsel %vm1490, %v1950, 0
    %v1956 = vsel %vm1490, %v1951, 0
    %1958 = vmatprep.subr.bf16.mxu0 0
    %1959 = vmatpush1.bf16.xpose.msra.mxu0 %v1956
    %1960 = vmatprep.subr.bf16.mxu0 0
    %1961 = vmatpush1.bf16.xpose.msra.mxu0 0
    %1962 = vmatprep.subr.bf16.mxu0 0
    %1963 = vmatpush1.bf16.xpose.msra.mxu0 0
    %1964 = vmatprep.subr.bf16.mxu0 0
    %1965 = vmatpush1.bf16.xpose.msra.mxu0 0
    %1966 = vmatprep.subr.bf16.mxu0 0
    %1967 = vmatpush1.bf16.xpose.msra.mxu0 0
    %1968 = vmatprep.subr.bf16.mxu0 0
    %1969 = vmatpush1.bf16.xpose.msra.mxu0 0
    %1970 = vmatprep.subr.bf16.mxu0 0
    %1971 = vmatpush1.bf16.xpose.msra.mxu0 0
    %1972 = vmatprep.subr.bf16.mxu0 0
    %1973 = vmatpush1.bf16.xpose.msra.mxu0 0
    %1974 = vmatprep.subr.bf16.mxu0 0
    %1975 = vmatpush1.bf16.xpose.msra.mxu0 0
    %1976 = vmatprep.subr.bf16.mxu0 0
    %1977 = vmatpush1.bf16.xpose.msra.mxu0 0
    %1978 = vmatprep.subr.bf16.mxu0 0
    %1979 = vmatpush1.bf16.xpose.msra.mxu0 0
    %1980 = vmatprep.subr.bf16.mxu0 0
    %1981 = vmatpush1.bf16.xpose.msra.mxu0 0
    %1982 = vmatprep.subr.bf16.mxu0 0
    %1983 = vmatpush1.bf16.xpose.msra.mxu0 0
    %1984 = vmatprep.subr.bf16.mxu0 0
    %1985 = vmatpush1.bf16.xpose.msra.mxu0 0
    %1986 = vmatprep.subr.bf16.mxu0 0
    %1987 = vmatpush1.bf16.xpose.msra.mxu0 0
    %1988 = vmatprep.subr.bf16.mxu0 0
    %1989 = vmatpush1.bf16.xpose.msra.mxu0 0
    %1990 = vmatprep.mubr.bf16.mxu0 0
    %1991 = vmatmul.mubr.bf16.gmra.mrb[0].mxu0 %v1953
    %v1992 = vpop.f32.mrb[0].mxu0
    %v1993 = vadd.f32 0.0, %v1992
    %v1994 = vpop.f32.mrb[0].mxu0
    %v1995 = vpop.f32.mrb[0].mxu0
    %v1996 = vadd.f32 0.0, %v1995
    %v1997 = vpop.f32.mrb[0].mxu0
    %1998 = vdwg.mxu0
    %v1999 = vsel %vm1538, %v1993, -inf
    %2000 = vmax.xlane.f32.xlu0 %v1999
    %v2001 = vpop.xlane.xlu0 %2000
    %v2002 = vsel %vm1538, %v1996, -inf
    %2003 = vmax.xlane.f32.xlu0 %v2002
    %v2004 = vpop.xlane.xlu0 %2003
    %v2005 = vsub.f32 %v1993, %v2001
    %v2006 = vsub.f32 %v1996, %v2004
    %v2007 = vmul.f32 %v2005, 1.442695
    %v2008 = vpow.pop %v2007
    %v2009 = vmul.f32 %v2006, 1.442695
    %v2010 = vpow.pop %v2009
    %v2011 = vsel %vm1538, %v2008, 0.0
    %2012 = vadd.xlane.f32.xlu0 %v2011
    %v2013 = vpop.xlane.xlu0 %2012
    %v2014 = vsel %vm1538, %v2010, 0.0
    %2015 = vadd.xlane.f32.xlu0 %v2014
    %v2016 = vpop.xlane.xlu0 %2015
    %v2017 = vrcp.pop %v2013
    %v2018 = vmul.f32 %v2008, %v2017
    %v2019 = vrcp.pop %v2016
    %v2020 = vmul.f32 %v2010, %v2019
    %v2021 = vpack.c.bf16 %v2020, %v2018
    %v2022 = vpack.c.bf16 %v1937, %v1934
    %v2024 = vsel %vm1538, %v2021, 0
    %2026 = vmatprep.subr.bf16.mxu0 0
    %2027 = vmatpush1.bf16.msra.mxu0 %v2022
    %2028 = vmatprep.subr.bf16.mxu0 0
    %2029 = vmatpush1.bf16.msra.mxu0 0
    %2030 = vmatprep.subr.bf16.mxu0 0
    %2031 = vmatpush1.bf16.msra.mxu0 0
    %2032 = vmatprep.subr.bf16.mxu0 0
    %2033 = vmatpush1.bf16.msra.mxu0 0
    %2034 = vmatprep.subr.bf16.mxu0 0
    %2035 = vmatpush1.bf16.msra.mxu0 0
    %2036 = vmatprep.subr.bf16.mxu0 0
    %2037 = vmatpush1.bf16.msra.mxu0 0
    %2038 = vmatprep.subr.bf16.mxu0 0
    %2039 = vmatpush1.bf16.msra.mxu0 0
    %2040 = vmatprep.subr.bf16.mxu0 0
    %2041 = vmatpush1.bf16.msra.mxu0 0
    %2042 = vmatprep.subr.bf16.mxu0 0
    %2043 = vmatpush1.bf16.msra.mxu0 0
    %2044 = vmatprep.subr.bf16.mxu0 0
    %2045 = vmatpush1.bf16.msra.mxu0 0
    %2046 = vmatprep.subr.bf16.mxu0 0
    %2047 = vmatpush1.bf16.msra.mxu0 0
    %2048 = vmatprep.subr.bf16.mxu0 0
    %2049 = vmatpush1.bf16.msra.mxu0 0
    %2050 = vmatprep.subr.bf16.mxu0 0
    %2051 = vmatpush1.bf16.msra.mxu0 0
    %2052 = vmatprep.subr.bf16.mxu0 0
    %2053 = vmatpush1.bf16.msra.mxu0 0
    %2054 = vmatprep.subr.bf16.mxu0 0
    %2055 = vmatpush1.bf16.msra.mxu0 0
    %2056 = vmatprep.subr.bf16.mxu0 0
    %2057 = vmatpush1.bf16.msra.mxu0 0
    %2058 = vmatprep.mubr.bf16.mxu0 0
    %2059 = vmatmul.mubr.bf16.gmra.mrb[0].mxu0 %v2024
    %v2060 = vpop.f32.mrb[0].mxu0
    %v2061 = vadd.f32 0.0, %v2060
    %v2062 = vpop.f32.mrb[0].mxu0
    %v2063 = vpop.f32.mrb[0].mxu0
    %v2064 = vadd.f32 0.0, %v2063
    %v2065 = vpop.f32.mrb[0].mxu0
    %2066 = vdwg.mxu0
    %v2067 = vmul.f32 %v1794, 0.35355338
    %v2068 = vmul.f32 %v1797, 0.35355338
    %v2069 = vpack.c.bf16 %v2068, %v2067
    %v2070 = vpack.c.bf16 %v1871, %v1868
    %v2072 = vsel %vm1490, %v2069, 0
    %v2075 = vsel %vm1490, %v2070, 0
    %2077 = vmatprep.subr.bf16.mxu0 0
    %2078 = vmatpush1.bf16.xpose.msra.mxu0 %v2075
    %2079 = vmatprep.subr.bf16.mxu0 0
    %2080 = vmatpush1.bf16.xpose.msra.mxu0 0
    %2081 = vmatprep.subr.bf16.mxu0 0
    %2082 = vmatpush1.bf16.xpose.msra.mxu0 0
    %2083 = vmatprep.subr.bf16.mxu0 0
    %2084 = vmatpush1.bf16.xpose.msra.mxu0 0
    %2085 = vmatprep.subr.bf16.mxu0 0
    %2086 = vmatpush1.bf16.xpose.msra.mxu0 0
    %2087 = vmatprep.subr.bf16.mxu0 0
    %2088 = vmatpush1.bf16.xpose.msra.mxu0 0
    %2089 = vmatprep.subr.bf16.mxu0 0
    %2090 = vmatpush1.bf16.xpose.msra.mxu0 0
    %2091 = vmatprep.subr.bf16.mxu0 0
    %2092 = vmatpush1.bf16.xpose.msra.mxu0 0
    %2093 = vmatprep.subr.bf16.mxu0 0
    %2094 = vmatpush1.bf16.xpose.msra.mxu0 0
    %2095 = vmatprep.subr.bf16.mxu0 0
    %2096 = vmatpush1.bf16.xpose.msra.mxu0 0
    %2097 = vmatprep.subr.bf16.mxu0 0
    %2098 = vmatpush1.bf16.xpose.msra.mxu0 0
    %2099 = vmatprep.subr.bf16.mxu0 0
    %2100 = vmatpush1.bf16.xpose.msra.mxu0 0
    %2101 = vmatprep.subr.bf16.mxu0 0
    %2102 = vmatpush1.bf16.xpose.msra.mxu0 0
    %2103 = vmatprep.subr.bf16.mxu0 0
    %2104 = vmatpush1.bf16.xpose.msra.mxu0 0
    %2105 = vmatprep.subr.bf16.mxu0 0
    %2106 = vmatpush1.bf16.xpose.msra.mxu0 0
    %2107 = vmatprep.subr.bf16.mxu0 0
    %2108 = vmatpush1.bf16.xpose.msra.mxu0 0
    %2109 = vmatprep.mubr.bf16.mxu0 0
    %2110 = vmatmul.mubr.bf16.gmra.mrb[0].mxu0 %v2072
    %v2111 = vpop.f32.mrb[0].mxu0
    %v2112 = vadd.f32 0.0, %v2111
    %v2113 = vpop.f32.mrb[0].mxu0
    %v2114 = vpop.f32.mrb[0].mxu0
    %v2115 = vadd.f32 0.0, %v2114
    %v2116 = vpop.f32.mrb[0].mxu0
    %2117 = vdwg.mxu0
    %v2118 = vsel %vm1538, %v2112, -inf
    %2119 = vmax.xlane.f32.xlu0 %v2118
    %v2120 = vpop.xlane.xlu0 %2119
    %v2121 = vsel %vm1538, %v2115, -inf
    %2122 = vmax.xlane.f32.xlu0 %v2121
    %v2123 = vpop.xlane.xlu0 %2122
    %v2124 = vsub.f32 %v2112, %v2120
    %v2125 = vsub.f32 %v2115, %v2123
    %v2126 = vmul.f32 %v2124, 1.442695
    %v2127 = vpow.pop %v2126
    %v2128 = vmul.f32 %v2125, 1.442695
    %v2129 = vpow.pop %v2128
    %v2130 = vsel %vm1538, %v2127, 0.0
    %2131 = vadd.xlane.f32.xlu0 %v2130
    %v2132 = vpop.xlane.xlu0 %2131
    %v2133 = vsel %vm1538, %v2129, 0.0
    %2134 = vadd.xlane.f32.xlu0 %v2133
    %v2135 = vpop.xlane.xlu0 %2134
    %v2136 = vrcp.pop %v2132
    %v2137 = vmul.f32 %v2127, %v2136
    %v2138 = vrcp.pop %v2135
    %v2139 = vmul.f32 %v2129, %v2138
    %v2140 = vpack.c.bf16 %v2139, %v2137
    %v2141 = vpack.c.bf16 %v1945, %v1942
    %v2143 = vsel %vm1538, %v2140, 0
    %2145 = vmatprep.subr.bf16.mxu0 0
    %2146 = vmatpush1.bf16.msra.mxu0 %v2141
    %2147 = vmatprep.subr.bf16.mxu0 0
    %2148 = vmatpush1.bf16.msra.mxu0 0
    %2149 = vmatprep.subr.bf16.mxu0 0
    %2150 = vmatpush1.bf16.msra.mxu0 0
    %2151 = vmatprep.subr.bf16.mxu0 0
    %2152 = vmatpush1.bf16.msra.mxu0 0
    %2153 = vmatprep.subr.bf16.mxu0 0
    %2154 = vmatpush1.bf16.msra.mxu0 0
    %2155 = vmatprep.subr.bf16.mxu0 0
    %2156 = vmatpush1.bf16.msra.mxu0 0
    %2157 = vmatprep.subr.bf16.mxu0 0
    %2158 = vmatpush1.bf16.msra.mxu0 0
    %2159 = vmatprep.subr.bf16.mxu0 0
    %2160 = vmatpush1.bf16.msra.mxu0 0
    %2161 = vmatprep.subr.bf16.mxu0 0
    %2162 = vmatpush1.bf16.msra.mxu0 0
    %2163 = vmatprep.subr.bf16.mxu0 0
    %2164 = vmatpush1.bf16.msra.mxu0 0
    %2165 = vmatprep.subr.bf16.mxu0 0
    %2166 = vmatpush1.bf16.msra.mxu0 0
    %2167 = vmatprep.subr.bf16.mxu0 0
    %2168 = vmatpush1.bf16.msra.mxu0 0
    %2169 = vmatprep.subr.bf16.mxu0 0
    %2170 = vmatpush1.bf16.msra.mxu0 0
    %2171 = vmatprep.subr.bf16.mxu0 0
    %2172 = vmatpush1.bf16.msra.mxu0 0
    %2173 = vmatprep.subr.bf16.mxu0 0
    %2174 = vmatpush1.bf16.msra.mxu0 0
    %2175 = vmatprep.subr.bf16.mxu0 0
    %2176 = vmatpush1.bf16.msra.mxu0 0
    %2177 = vmatprep.mubr.bf16.mxu0 0
    %2178 = vmatmul.mubr.bf16.gmra.mrb[0].mxu0 %v2143
    %v2179 = vpop.f32.mrb[0].mxu0
    %v2180 = vadd.f32 0.0, %v2179
    %v2181 = vpop.f32.mrb[0].mxu0
    %v2182 = vpop.f32.mrb[0].mxu0
    %v2183 = vadd.f32 0.0, %v2182
    %v2184 = vpop.f32.mrb[0].mxu0
    %2185 = vdwg.mxu0
    %s2186 = scalar_lea.vmem %s57, 32
    %v2187 = vld [vmem:[%s2186] sm:$0xf]
    %v2188 = vld [vmem:[%s2186 + $0x4] sm:$0xf]
    %v2189 = vld [vmem:[%s2186 + $0x8] sm:$0xf]
    %v2190 = vld [vmem:[%s2186 + $0xc] sm:$0xf]
    %s2191 = scalar_lea.vmem %s63, 2
    %v2192 = vld [vmem:[%s2191] sm:$0x1]
    %v2194 = vlaneseq
    %v2195 = vshrl.u32 %v2194, 7
    %v2196 = vsub.s32 0, %v2195
    %v2197 = vrot.slane %v2192, %v2196
    %v2203 = vunpack.c.l.b16 %v2187
    %v2204 = vunpack.c.l.b16 %v2188
    %v2205 = vunpack.c.l.b16 %v2189
    %v2206 = vunpack.c.l.b16 %v2190
    %v2207 = vpack.c.b16 %v2204, %v2203
    %v2208 = vpack.c.b16 %v2206, %v2205
    %2211 = vmatprep.subr.bf16.mxu0 0
    %2212 = vmatpush1.bf16.msra.mxu0 %v2207
    %2213 = vmatprep.subr.bf16.mxu0 0
    %2214 = vmatpush1.bf16.msra.mxu0 %v2208
    %2215 = vmatprep.subr.bf16.mxu0 0
    %2216 = vmatpush1.bf16.msra.mxu0 0
    %2217 = vmatprep.subr.bf16.mxu0 0
    %2218 = vmatpush1.bf16.msra.mxu0 0
    %2219 = vmatprep.subr.bf16.mxu0 0
    %2220 = vmatpush1.bf16.msra.mxu0 0
    %2221 = vmatprep.subr.bf16.mxu0 0
    %2222 = vmatpush1.bf16.msra.mxu0 0
    %2223 = vmatprep.subr.bf16.mxu0 0
    %2224 = vmatpush1.bf16.msra.mxu0 0
    %2225 = vmatprep.subr.bf16.mxu0 0
    %2226 = vmatpush1.bf16.msra.mxu0 0
    %2227 = vmatprep.subr.bf16.mxu0 0
    %2228 = vmatpush1.bf16.msra.mxu0 0
    %2229 = vmatprep.subr.bf16.mxu0 0
    %2230 = vmatpush1.bf16.msra.mxu0 0
    %2231 = vmatprep.subr.bf16.mxu0 0
    %2232 = vmatpush1.bf16.msra.mxu0 0
    %2233 = vmatprep.subr.bf16.mxu0 0
    %2234 = vmatpush1.bf16.msra.mxu0 0
    %2235 = vmatprep.subr.bf16.mxu0 0
    %2236 = vmatpush1.bf16.msra.mxu0 0
    %2237 = vmatprep.subr.bf16.mxu0 0
    %2238 = vmatpush1.bf16.msra.mxu0 0
    %2239 = vmatprep.subr.bf16.mxu0 0
    %2240 = vmatpush1.bf16.msra.mxu0 0
    %2241 = vmatprep.subr.bf16.mxu0 0
    %2242 = vmatpush1.bf16.msra.mxu0 0
    %2243 = vmatprep.mubr.bf16.mxu0 0
    %2244 = vmatmul.mubr.bf16.gmra.mrb[0].mxu0 %v1288
    %v2245 = vpop.f32.mrb[0].mxu0
    %v2246 = vadd.f32 %v2197, %v2245
    %v2247 = vpop.f32.mrb[0].mxu0
    %v2248 = vpop.f32.mrb[0].mxu0
    %v2249 = vadd.f32 %v2197, %v2248
    %v2250 = vpop.f32.mrb[0].mxu0
    %2251 = vmatprep.mubr.bf16.mxu0 0
    %2252 = vmatmul.mubr.bf16.gmra.mrb[0].mxu0 %v1291
    %v2253 = vpop.f32.mrb[0].mxu0
    %v2254 = vadd.f32 %v2197, %v2253
    %v2255 = vpop.f32.mrb[0].mxu0
    %v2256 = vpop.f32.mrb[0].mxu0
    %v2257 = vadd.f32 %v2197, %v2256
    %v2258 = vpop.f32.mrb[0].mxu0
    %2259 = vdwg.mxu0
    %s2260 = scalar_lea.vmem %s59, 32
    %v2261 = vld [vmem:[%s2260] sm:$0xf]
    %v2262 = vld [vmem:[%s2260 + $0x4] sm:$0xf]
    %v2263 = vld [vmem:[%s2260 + $0x8] sm:$0xf]
    %v2264 = vld [vmem:[%s2260 + $0xc] sm:$0xf]
    %s2265 = scalar_lea.vmem %s65, 2
    %v2266 = vld [vmem:[%s2265] sm:$0x1]
    %v2268 = vlaneseq
    %v2269 = vshrl.u32 %v2268, 7
    %v2270 = vsub.s32 0, %v2269
    %v2271 = vrot.slane %v2266, %v2270
    %v2277 = vunpack.c.l.b16 %v2261
    %v2278 = vunpack.c.l.b16 %v2262
    %v2279 = vunpack.c.l.b16 %v2263
    %v2280 = vunpack.c.l.b16 %v2264
    %v2281 = vpack.c.b16 %v2278, %v2277
    %v2282 = vpack.c.b16 %v2280, %v2279
    %2285 = vmatprep.subr.bf16.mxu0 0
    %2286 = vmatpush1.bf16.msra.mxu0 %v2281
    %2287 = vmatprep.subr.bf16.mxu0 0
    %2288 = vmatpush1.bf16.msra.mxu0 %v2282
    %2289 = vmatprep.subr.bf16.mxu0 0
    %2290 = vmatpush1.bf16.msra.mxu0 0
    %2291 = vmatprep.subr.bf16.mxu0 0
    %2292 = vmatpush1.bf16.msra.mxu0 0
    %2293 = vmatprep.subr.bf16.mxu0 0
    %2294 = vmatpush1.bf16.msra.mxu0 0
    %2295 = vmatprep.subr.bf16.mxu0 0
    %2296 = vmatpush1.bf16.msra.mxu0 0
    %2297 = vmatprep.subr.bf16.mxu0 0
    %2298 = vmatpush1.bf16.msra.mxu0 0
    %2299 = vmatprep.subr.bf16.mxu0 0
    %2300 = vmatpush1.bf16.msra.mxu0 0
    %2301 = vmatprep.subr.bf16.mxu0 0
    %2302 = vmatpush1.bf16.msra.mxu0 0
    %2303 = vmatprep.subr.bf16.mxu0 0
    %2304 = vmatpush1.bf16.msra.mxu0 0
    %2305 = vmatprep.subr.bf16.mxu0 0
    %2306 = vmatpush1.bf16.msra.mxu0 0
    %2307 = vmatprep.subr.bf16.mxu0 0
    %2308 = vmatpush1.bf16.msra.mxu0 0
    %2309 = vmatprep.subr.bf16.mxu0 0
    %2310 = vmatpush1.bf16.msra.mxu0 0
    %2311 = vmatprep.subr.bf16.mxu0 0
    %2312 = vmatpush1.bf16.msra.mxu0 0
    %2313 = vmatprep.subr.bf16.mxu0 0
    %2314 = vmatpush1.bf16.msra.mxu0 0
    %2315 = vmatprep.subr.bf16.mxu0 0
    %2316 = vmatpush1.bf16.msra.mxu0 0
    %2317 = vmatprep.mubr.bf16.mxu0 0
    %2318 = vmatmul.mubr.bf16.gmra.mrb[0].mxu0 %v1288
    %v2319 = vpop.f32.mrb[0].mxu0
    %v2320 = vadd.f32 %v2271, %v2319
    %v2321 = vpop.f32.mrb[0].mxu0
    %v2322 = vpop.f32.mrb[0].mxu0
    %v2323 = vadd.f32 %v2271, %v2322
    %v2324 = vpop.f32.mrb[0].mxu0
    %2325 = vmatprep.mubr.bf16.mxu0 0
    %2326 = vmatmul.mubr.bf16.gmra.mrb[0].mxu0 %v1291
    %v2327 = vpop.f32.mrb[0].mxu0
    %v2328 = vadd.f32 %v2271, %v2327
    %v2329 = vpop.f32.mrb[0].mxu0
    %v2330 = vpop.f32.mrb[0].mxu0
    %v2331 = vadd.f32 %v2271, %v2330
    %v2332 = vpop.f32.mrb[0].mxu0
    %2333 = vdwg.mxu0
    %s2334 = scalar_lea.vmem %s61, 32
    %v2335 = vld [vmem:[%s2334] sm:$0xf]
    %v2336 = vld [vmem:[%s2334 + $0x4] sm:$0xf]
    %v2337 = vld [vmem:[%s2334 + $0x8] sm:$0xf]
    %v2338 = vld [vmem:[%s2334 + $0xc] sm:$0xf]
    %s2339 = scalar_lea.vmem %s67, 2
    %v2340 = vld [vmem:[%s2339] sm:$0x1]
    %v2342 = vlaneseq
    %v2343 = vshrl.u32 %v2342, 7
    %v2344 = vsub.s32 0, %v2343
    %v2345 = vrot.slane %v2340, %v2344
    %v2351 = vunpack.c.l.b16 %v2335
    %v2352 = vunpack.c.l.b16 %v2336
    %v2353 = vunpack.c.l.b16 %v2337
    %v2354 = vunpack.c.l.b16 %v2338
    %v2355 = vpack.c.b16 %v2352, %v2351
    %v2356 = vpack.c.b16 %v2354, %v2353
    %2359 = vmatprep.subr.bf16.mxu0 0
    %2360 = vmatpush1.bf16.msra.mxu0 %v2355
    %2361 = vmatprep.subr.bf16.mxu0 0
    %2362 = vmatpush1.bf16.msra.mxu0 %v2356
    %2363 = vmatprep.subr.bf16.mxu0 0
    %2364 = vmatpush1.bf16.msra.mxu0 0
    %2365 = vmatprep.subr.bf16.mxu0 0
    %2366 = vmatpush1.bf16.msra.mxu0 0
    %2367 = vmatprep.subr.bf16.mxu0 0
    %2368 = vmatpush1.bf16.msra.mxu0 0
    %2369 = vmatprep.subr.bf16.mxu0 0
    %2370 = vmatpush1.bf16.msra.mxu0 0
    %2371 = vmatprep.subr.bf16.mxu0 0
    %2372 = vmatpush1.bf16.msra.mxu0 0
    %2373 = vmatprep.subr.bf16.mxu0 0
    %2374 = vmatpush1.bf16.msra.mxu0 0
    %2375 = vmatprep.subr.bf16.mxu0 0
    %2376 = vmatpush1.bf16.msra.mxu0 0
    %2377 = vmatprep.subr.bf16.mxu0 0
    %2378 = vmatpush1.bf16.msra.mxu0 0
    %2379 = vmatprep.subr.bf16.mxu0 0
    %2380 = vmatpush1.bf16.msra.mxu0 0
    %2381 = vmatprep.subr.bf16.mxu0 0
    %2382 = vmatpush1.bf16.msra.mxu0 0
    %2383 = vmatprep.subr.bf16.mxu0 0
    %2384 = vmatpush1.bf16.msra.mxu0 0
    %2385 = vmatprep.subr.bf16.mxu0 0
    %2386 = vmatpush1.bf16.msra.mxu0 0
    %2387 = vmatprep.subr.bf16.mxu0 0
    %2388 = vmatpush1.bf16.msra.mxu0 0
    %2389 = vmatprep.subr.bf16.mxu0 0
    %2390 = vmatpush1.bf16.msra.mxu0 0
    %2391 = vmatprep.mubr.bf16.mxu0 0
    %2392 = vmatmul.mubr.bf16.gmra.mrb[0].mxu0 %v1288
    %v2393 = vpop.f32.mrb[0].mxu0
    %v2394 = vadd.f32 %v2345, %v2393
    %v2395 = vpop.f32.mrb[0].mxu0
    %v2396 = vpop.f32.mrb[0].mxu0
    %v2397 = vadd.f32 %v2345, %v2396
    %v2398 = vpop.f32.mrb[0].mxu0
    %2399 = vmatprep.mubr.bf16.mxu0 0
    %2400 = vmatmul.mubr.bf16.gmra.mrb[0].mxu0 %v1291
    %v2401 = vpop.f32.mrb[0].mxu0
    %v2402 = vadd.f32 %v2345, %v2401
    %v2403 = vpop.f32.mrb[0].mxu0
    %v2404 = vpop.f32.mrb[0].mxu0
    %v2405 = vadd.f32 %v2345, %v2404
    %v2406 = vpop.f32.mrb[0].mxu0
    %2407 = vdwg.mxu0
    %v2408 = vmul.f32 %v2246, 0.35355338
    %v2409 = vmul.f32 %v2249, 0.35355338
    %v2410 = vpack.c.bf16 %v2409, %v2408
    %v2411 = vpack.c.bf16 %v2323, %v2320
    %v2413 = vsel %vm1490, %v2410, 0
    %v2416 = vsel %vm1490, %v2411, 0
    %2418 = vmatprep.subr.bf16.mxu0 0
    %2419 = vmatpush1.bf16.xpose.msra.mxu0 %v2416
    %2420 = vmatprep.subr.bf16.mxu0 0
    %2421 = vmatpush1.bf16.xpose.msra.mxu0 0
    %2422 = vmatprep.subr.bf16.mxu0 0
    %2423 = vmatpush1.bf16.xpose.msra.mxu0 0
    %2424 = vmatprep.subr.bf16.mxu0 0
    %2425 = vmatpush1.bf16.xpose.msra.mxu0 0
    %2426 = vmatprep.subr.bf16.mxu0 0
    %2427 = vmatpush1.bf16.xpose.msra.mxu0 0
    %2428 = vmatprep.subr.bf16.mxu0 0
    %2429 = vmatpush1.bf16.xpose.msra.mxu0 0
    %2430 = vmatprep.subr.bf16.mxu0 0
    %2431 = vmatpush1.bf16.xpose.msra.mxu0 0
    %2432 = vmatprep.subr.bf16.mxu0 0
    %2433 = vmatpush1.bf16.xpose.msra.mxu0 0
    %2434 = vmatprep.subr.bf16.mxu0 0
    %2435 = vmatpush1.bf16.xpose.msra.mxu0 0
    %2436 = vmatprep.subr.bf16.mxu0 0
    %2437 = vmatpush1.bf16.xpose.msra.mxu0 0
    %2438 = vmatprep.subr.bf16.mxu0 0
    %2439 = vmatpush1.bf16.xpose.msra.mxu0 0
    %2440 = vmatprep.subr.bf16.mxu0 0
    %2441 = vmatpush1.bf16.xpose.msra.mxu0 0
    %2442 = vmatprep.subr.bf16.mxu0 0
    %2443 = vmatpush1.bf16.xpose.msra.mxu0 0
    %2444 = vmatprep.subr.bf16.mxu0 0
    %2445 = vmatpush1.bf16.xpose.msra.mxu0 0
    %2446 = vmatprep.subr.bf16.mxu0 0
    %2447 = vmatpush1.bf16.xpose.msra.mxu0 0
    %2448 = vmatprep.subr.bf16.mxu0 0
    %2449 = vmatpush1.bf16.xpose.msra.mxu0 0
    %2450 = vmatprep.mubr.bf16.mxu0 0
    %2451 = vmatmul.mubr.bf16.gmra.mrb[0].mxu0 %v2413
    %v2452 = vpop.f32.mrb[0].mxu0
    %v2453 = vadd.f32 0.0, %v2452
    %v2454 = vpop.f32.mrb[0].mxu0
    %v2455 = vpop.f32.mrb[0].mxu0
    %v2456 = vadd.f32 0.0, %v2455
    %v2457 = vpop.f32.mrb[0].mxu0
    %2458 = vdwg.mxu0
    %v2459 = vsel %vm1538, %v2453, -inf
    %2460 = vmax.xlane.f32.xlu0 %v2459
    %v2461 = vpop.xlane.xlu0 %2460
    %v2462 = vsel %vm1538, %v2456, -inf
    %2463 = vmax.xlane.f32.xlu0 %v2462
    %v2464 = vpop.xlane.xlu0 %2463
    %v2465 = vsub.f32 %v2453, %v2461
    %v2466 = vsub.f32 %v2456, %v2464
    %v2467 = vmul.f32 %v2465, 1.442695
    %v2468 = vpow.pop %v2467
    %v2469 = vmul.f32 %v2466, 1.442695
    %v2470 = vpow.pop %v2469
    %v2471 = vsel %vm1538, %v2468, 0.0
    %2472 = vadd.xlane.f32.xlu0 %v2471
    %v2473 = vpop.xlane.xlu0 %2472
    %v2474 = vsel %vm1538, %v2470, 0.0
    %2475 = vadd.xlane.f32.xlu0 %v2474
    %v2476 = vpop.xlane.xlu0 %2475
    %v2477 = vrcp.pop %v2473
    %v2478 = vmul.f32 %v2468, %v2477
    %v2479 = vrcp.pop %v2476
    %v2480 = vmul.f32 %v2470, %v2479
    %v2481 = vpack.c.bf16 %v2480, %v2478
    %v2482 = vpack.c.bf16 %v2397, %v2394
    %v2484 = vsel %vm1538, %v2481, 0
    %2486 = vmatprep.subr.bf16.mxu0 0
    %2487 = vmatpush1.bf16.msra.mxu0 %v2482
    %2488 = vmatprep.subr.bf16.mxu0 0
    %2489 = vmatpush1.bf16.msra.mxu0 0
    %2490 = vmatprep.subr.bf16.mxu0 0
    %2491 = vmatpush1.bf16.msra.mxu0 0
    %2492 = vmatprep.subr.bf16.mxu0 0
    %2493 = vmatpush1.bf16.msra.mxu0 0
    %2494 = vmatprep.subr.bf16.mxu0 0
    %2495 = vmatpush1.bf16.msra.mxu0 0
    %2496 = vmatprep.subr.bf16.mxu0 0
    %2497 = vmatpush1.bf16.msra.mxu0 0
    %2498 = vmatprep.subr.bf16.mxu0 0
    %2499 = vmatpush1.bf16.msra.mxu0 0
    %2500 = vmatprep.subr.bf16.mxu0 0
    %2501 = vmatpush1.bf16.msra.mxu0 0
    %2502 = vmatprep.subr.bf16.mxu0 0
    %2503 = vmatpush1.bf16.msra.mxu0 0
    %2504 = vmatprep.subr.bf16.mxu0 0
    %2505 = vmatpush1.bf16.msra.mxu0 0
    %2506 = vmatprep.subr.bf16.mxu0 0
    %2507 = vmatpush1.bf16.msra.mxu0 0
    %2508 = vmatprep.subr.bf16.mxu0 0
    %2509 = vmatpush1.bf16.msra.mxu0 0
    %2510 = vmatprep.subr.bf16.mxu0 0
    %2511 = vmatpush1.bf16.msra.mxu0 0
    %2512 = vmatprep.subr.bf16.mxu0 0
    %2513 = vmatpush1.bf16.msra.mxu0 0
    %2514 = vmatprep.subr.bf16.mxu0 0
    %2515 = vmatpush1.bf16.msra.mxu0 0
    %2516 = vmatprep.subr.bf16.mxu0 0
    %2517 = vmatpush1.bf16.msra.mxu0 0
    %2518 = vmatprep.mubr.bf16.mxu0 0
    %2519 = vmatmul.mubr.bf16.gmra.mrb[0].mxu0 %v2484
    %v2520 = vpop.f32.mrb[0].mxu0
    %v2521 = vadd.f32 0.0, %v2520
    %v2522 = vpop.f32.mrb[0].mxu0
    %v2523 = vpop.f32.mrb[0].mxu0
    %v2524 = vadd.f32 0.0, %v2523
    %v2525 = vpop.f32.mrb[0].mxu0
    %2526 = vdwg.mxu0
    %v2527 = vmul.f32 %v2254, 0.35355338
    %v2528 = vmul.f32 %v2257, 0.35355338
    %v2529 = vpack.c.bf16 %v2528, %v2527
    %v2530 = vpack.c.bf16 %v2331, %v2328
    %v2532 = vsel %vm1490, %v2529, 0
    %v2535 = vsel %vm1490, %v2530, 0
    %2537 = vmatprep.subr.bf16.mxu0 0
    %2538 = vmatpush1.bf16.xpose.msra.mxu0 %v2535
    %2539 = vmatprep.subr.bf16.mxu0 0
    %2540 = vmatpush1.bf16.xpose.msra.mxu0 0
    %2541 = vmatprep.subr.bf16.mxu0 0
    %2542 = vmatpush1.bf16.xpose.msra.mxu0 0
    %2543 = vmatprep.subr.bf16.mxu0 0
    %2544 = vmatpush1.bf16.xpose.msra.mxu0 0
    %2545 = vmatprep.subr.bf16.mxu0 0
    %2546 = vmatpush1.bf16.xpose.msra.mxu0 0
    %2547 = vmatprep.subr.bf16.mxu0 0
    %2548 = vmatpush1.bf16.xpose.msra.mxu0 0
    %2549 = vmatprep.subr.bf16.mxu0 0
    %2550 = vmatpush1.bf16.xpose.msra.mxu0 0
    %2551 = vmatprep.subr.bf16.mxu0 0
    %2552 = vmatpush1.bf16.xpose.msra.mxu0 0
    %2553 = vmatprep.subr.bf16.mxu0 0
    %2554 = vmatpush1.bf16.xpose.msra.mxu0 0
    %2555 = vmatprep.subr.bf16.mxu0 0
    %2556 = vmatpush1.bf16.xpose.msra.mxu0 0
    %2557 = vmatprep.subr.bf16.mxu0 0
    %2558 = vmatpush1.bf16.xpose.msra.mxu0 0
    %2559 = vmatprep.subr.bf16.mxu0 0
    %2560 = vmatpush1.bf16.xpose.msra.mxu0 0
    %2561 = vmatprep.subr.bf16.mxu0 0
    %2562 = vmatpush1.bf16.xpose.msra.mxu0 0
    %2563 = vmatprep.subr.bf16.mxu0 0
    %2564 = vmatpush1.bf16.xpose.msra.mxu0 0
    %2565 = vmatprep.subr.bf16.mxu0 0
    %2566 = vmatpush1.bf16.xpose.msra.mxu0 0
    %2567 = vmatprep.subr.bf16.mxu0 0
    %2568 = vmatpush1.bf16.xpose.msra.mxu0 0
    %2569 = vmatprep.mubr.bf16.mxu0 0
    %2570 = vmatmul.mubr.bf16.gmra.mrb[0].mxu0 %v2532
    %v2571 = vpop.f32.mrb[0].mxu0
    %v2572 = vadd.f32 0.0, %v2571
    %v2573 = vpop.f32.mrb[0].mxu0
    %v2574 = vpop.f32.mrb[0].mxu0
    %v2575 = vadd.f32 0.0, %v2574
    %v2576 = vpop.f32.mrb[0].mxu0
    %2577 = vdwg.mxu0
    %v2578 = vsel %vm1538, %v2572, -inf
    %2579 = vmax.xlane.f32.xlu0 %v2578
    %v2580 = vpop.xlane.xlu0 %2579
    %v2581 = vsel %vm1538, %v2575, -inf
    %2582 = vmax.xlane.f32.xlu0 %v2581
    %v2583 = vpop.xlane.xlu0 %2582
    %v2584 = vsub.f32 %v2572, %v2580
    %v2585 = vsub.f32 %v2575, %v2583
    %v2586 = vmul.f32 %v2584, 1.442695
    %v2587 = vpow.pop %v2586
    %v2588 = vmul.f32 %v2585, 1.442695
    %v2589 = vpow.pop %v2588
    %v2590 = vsel %vm1538, %v2587, 0.0
    %2591 = vadd.xlane.f32.xlu0 %v2590
    %v2592 = vpop.xlane.xlu0 %2591
    %v2593 = vsel %vm1538, %v2589, 0.0
    %2594 = vadd.xlane.f32.xlu0 %v2593
    %v2595 = vpop.xlane.xlu0 %2594
    %v2596 = vrcp.pop %v2592
    %v2597 = vmul.f32 %v2587, %v2596
    %v2598 = vrcp.pop %v2595
    %v2599 = vmul.f32 %v2589, %v2598
    %v2600 = vpack.c.bf16 %v2599, %v2597
    %v2601 = vpack.c.bf16 %v2405, %v2402
    %v2603 = vsel %vm1538, %v2600, 0
    %2605 = vmatprep.subr.bf16.mxu0 0
    %2606 = vmatpush1.bf16.msra.mxu0 %v2601
    %2607 = vmatprep.subr.bf16.mxu0 0
    %2608 = vmatpush1.bf16.msra.mxu0 0
    %2609 = vmatprep.subr.bf16.mxu0 0
    %2610 = vmatpush1.bf16.msra.mxu0 0
    %2611 = vmatprep.subr.bf16.mxu0 0
    %2612 = vmatpush1.bf16.msra.mxu0 0
    %2613 = vmatprep.subr.bf16.mxu0 0
    %2614 = vmatpush1.bf16.msra.mxu0 0
    %2615 = vmatprep.subr.bf16.mxu0 0
    %2616 = vmatpush1.bf16.msra.mxu0 0
    %2617 = vmatprep.subr.bf16.mxu0 0
    %2618 = vmatpush1.bf16.msra.mxu0 0
    %2619 = vmatprep.subr.bf16.mxu0 0
    %2620 = vmatpush1.bf16.msra.mxu0 0
    %2621 = vmatprep.subr.bf16.mxu0 0
    %2622 = vmatpush1.bf16.msra.mxu0 0
    %2623 = vmatprep.subr.bf16.mxu0 0
    %2624 = vmatpush1.bf16.msra.mxu0 0
    %2625 = vmatprep.subr.bf16.mxu0 0
    %2626 = vmatpush1.bf16.msra.mxu0 0
    %2627 = vmatprep.subr.bf16.mxu0 0
    %2628 = vmatpush1.bf16.msra.mxu0 0
    %2629 = vmatprep.subr.bf16.mxu0 0
    %2630 = vmatpush1.bf16.msra.mxu0 0
    %2631 = vmatprep.subr.bf16.mxu0 0
    %2632 = vmatpush1.bf16.msra.mxu0 0
    %2633 = vmatprep.subr.bf16.mxu0 0
    %2634 = vmatpush1.bf16.msra.mxu0 0
    %2635 = vmatprep.subr.bf16.mxu0 0
    %2636 = vmatpush1.bf16.msra.mxu0 0
    %2637 = vmatprep.mubr.bf16.mxu0 0
    %2638 = vmatmul.mubr.bf16.gmra.mrb[0].mxu0 %v2603
    %v2639 = vpop.f32.mrb[0].mxu0
    %v2640 = vadd.f32 0.0, %v2639
    %v2641 = vpop.f32.mrb[0].mxu0
    %v2642 = vpop.f32.mrb[0].mxu0
    %v2643 = vadd.f32 0.0, %v2642
    %v2644 = vpop.f32.mrb[0].mxu0
    %2645 = vdwg.mxu0
    %s2646 = scalar_lea.vmem %s57, 48
    %v2647 = vld [vmem:[%s2646] sm:$0xf]
    %v2648 = vld [vmem:[%s2646 + $0x4] sm:$0xf]
    %v2649 = vld [vmem:[%s2646 + $0x8] sm:$0xf]
    %v2650 = vld [vmem:[%s2646 + $0xc] sm:$0xf]
    %s2651 = scalar_lea.vmem %s63, 3
    %v2652 = vld [vmem:[%s2651] sm:$0x1]
    %v2654 = vlaneseq
    %v2655 = vshrl.u32 %v2654, 7
    %v2656 = vsub.s32 0, %v2655
    %v2657 = vrot.slane %v2652, %v2656
    %v2663 = vunpack.c.l.b16 %v2647
    %v2664 = vunpack.c.l.b16 %v2648
    %v2665 = vunpack.c.l.b16 %v2649
    %v2666 = vunpack.c.l.b16 %v2650
    %v2667 = vpack.c.b16 %v2664, %v2663
    %v2668 = vpack.c.b16 %v2666, %v2665
    %2671 = vmatprep.subr.bf16.mxu0 0
    %2672 = vmatpush1.bf16.msra.mxu0 %v2667
    %2673 = vmatprep.subr.bf16.mxu0 0
    %2674 = vmatpush1.bf16.msra.mxu0 %v2668
    %2675 = vmatprep.subr.bf16.mxu0 0
    %2676 = vmatpush1.bf16.msra.mxu0 0
    %2677 = vmatprep.subr.bf16.mxu0 0
    %2678 = vmatpush1.bf16.msra.mxu0 0
    %2679 = vmatprep.subr.bf16.mxu0 0
    %2680 = vmatpush1.bf16.msra.mxu0 0
    %2681 = vmatprep.subr.bf16.mxu0 0
    %2682 = vmatpush1.bf16.msra.mxu0 0
    %2683 = vmatprep.subr.bf16.mxu0 0
    %2684 = vmatpush1.bf16.msra.mxu0 0
    %2685 = vmatprep.subr.bf16.mxu0 0
    %2686 = vmatpush1.bf16.msra.mxu0 0
    %2687 = vmatprep.subr.bf16.mxu0 0
    %2688 = vmatpush1.bf16.msra.mxu0 0
    %2689 = vmatprep.subr.bf16.mxu0 0
    %2690 = vmatpush1.bf16.msra.mxu0 0
    %2691 = vmatprep.subr.bf16.mxu0 0
    %2692 = vmatpush1.bf16.msra.mxu0 0
    %2693 = vmatprep.subr.bf16.mxu0 0
    %2694 = vmatpush1.bf16.msra.mxu0 0
    %2695 = vmatprep.subr.bf16.mxu0 0
    %2696 = vmatpush1.bf16.msra.mxu0 0
    %2697 = vmatprep.subr.bf16.mxu0 0
    %2698 = vmatpush1.bf16.msra.mxu0 0
    %2699 = vmatprep.subr.bf16.mxu0 0
    %2700 = vmatpush1.bf16.msra.mxu0 0
    %2701 = vmatprep.subr.bf16.mxu0 0
    %2702 = vmatpush1.bf16.msra.mxu0 0
    %2703 = vmatprep.mubr.bf16.mxu0 0
    %2704 = vmatmul.mubr.bf16.gmra.mrb[0].mxu0 %v1288
    %v2705 = vpop.f32.mrb[0].mxu0
    %v2706 = vadd.f32 %v2657, %v2705
    %v2707 = vpop.f32.mrb[0].mxu0
    %v2708 = vpop.f32.mrb[0].mxu0
    %v2709 = vadd.f32 %v2657, %v2708
    %v2710 = vpop.f32.mrb[0].mxu0
    %2711 = vmatprep.mubr.bf16.mxu0 0
    %2712 = vmatmul.mubr.bf16.gmra.mrb[0].mxu0 %v1291
    %v2713 = vpop.f32.mrb[0].mxu0
    %v2714 = vadd.f32 %v2657, %v2713
    %v2715 = vpop.f32.mrb[0].mxu0
    %v2716 = vpop.f32.mrb[0].mxu0
    %v2717 = vadd.f32 %v2657, %v2716
    %v2718 = vpop.f32.mrb[0].mxu0
    %2719 = vdwg.mxu0
    %s2720 = scalar_lea.vmem %s59, 48
    %v2721 = vld [vmem:[%s2720] sm:$0xf]
    %v2722 = vld [vmem:[%s2720 + $0x4] sm:$0xf]
    %v2723 = vld [vmem:[%s2720 + $0x8] sm:$0xf]
    %v2724 = vld [vmem:[%s2720 + $0xc] sm:$0xf]
    %s2725 = scalar_lea.vmem %s65, 3
    %v2726 = vld [vmem:[%s2725] sm:$0x1]
    %v2728 = vlaneseq
    %v2729 = vshrl.u32 %v2728, 7
    %v2730 = vsub.s32 0, %v2729
    %v2731 = vrot.slane %v2726, %v2730
    %v2737 = vunpack.c.l.b16 %v2721
    %v2738 = vunpack.c.l.b16 %v2722
    %v2739 = vunpack.c.l.b16 %v2723
    %v2740 = vunpack.c.l.b16 %v2724
    %v2741 = vpack.c.b16 %v2738, %v2737
    %v2742 = vpack.c.b16 %v2740, %v2739
    %2745 = vmatprep.subr.bf16.mxu0 0
    %2746 = vmatpush1.bf16.msra.mxu0 %v2741
    %2747 = vmatprep.subr.bf16.mxu0 0
    %2748 = vmatpush1.bf16.msra.mxu0 %v2742
    %2749 = vmatprep.subr.bf16.mxu0 0
    %2750 = vmatpush1.bf16.msra.mxu0 0
    %2751 = vmatprep.subr.bf16.mxu0 0
    %2752 = vmatpush1.bf16.msra.mxu0 0
    %2753 = vmatprep.subr.bf16.mxu0 0
    %2754 = vmatpush1.bf16.msra.mxu0 0
    %2755 = vmatprep.subr.bf16.mxu0 0
    %2756 = vmatpush1.bf16.msra.mxu0 0
    %2757 = vmatprep.subr.bf16.mxu0 0
    %2758 = vmatpush1.bf16.msra.mxu0 0
    %2759 = vmatprep.subr.bf16.mxu0 0
    %2760 = vmatpush1.bf16.msra.mxu0 0
    %2761 = vmatprep.subr.bf16.mxu0 0
    %2762 = vmatpush1.bf16.msra.mxu0 0
    %2763 = vmatprep.subr.bf16.mxu0 0
    %2764 = vmatpush1.bf16.msra.mxu0 0
    %2765 = vmatprep.subr.bf16.mxu0 0
    %2766 = vmatpush1.bf16.msra.mxu0 0
    %2767 = vmatprep.subr.bf16.mxu0 0
    %2768 = vmatpush1.bf16.msra.mxu0 0
    %2769 = vmatprep.subr.bf16.mxu0 0
    %2770 = vmatpush1.bf16.msra.mxu0 0
    %2771 = vmatprep.subr.bf16.mxu0 0
    %2772 = vmatpush1.bf16.msra.mxu0 0
    %2773 = vmatprep.subr.bf16.mxu0 0
    %2774 = vmatpush1.bf16.msra.mxu0 0
    %2775 = vmatprep.subr.bf16.mxu0 0
    %2776 = vmatpush1.bf16.msra.mxu0 0
    %2777 = vmatprep.mubr.bf16.mxu0 0
    %2778 = vmatmul.mubr.bf16.gmra.mrb[0].mxu0 %v1288
    %v2779 = vpop.f32.mrb[0].mxu0
    %v2780 = vadd.f32 %v2731, %v2779
    %v2781 = vpop.f32.mrb[0].mxu0
    %v2782 = vpop.f32.mrb[0].mxu0
    %v2783 = vadd.f32 %v2731, %v2782
    %v2784 = vpop.f32.mrb[0].mxu0
    %2785 = vmatprep.mubr.bf16.mxu0 0
    %2786 = vmatmul.mubr.bf16.gmra.mrb[0].mxu0 %v1291
    %v2787 = vpop.f32.mrb[0].mxu0
    %v2788 = vadd.f32 %v2731, %v2787
    %v2789 = vpop.f32.mrb[0].mxu0
    %v2790 = vpop.f32.mrb[0].mxu0
    %v2791 = vadd.f32 %v2731, %v2790
    %v2792 = vpop.f32.mrb[0].mxu0
    %2793 = vdwg.mxu0
    %s2794 = scalar_lea.vmem %s61, 48
    %v2795 = vld [vmem:[%s2794] sm:$0xf]
    %v2796 = vld [vmem:[%s2794 + $0x4] sm:$0xf]
    %v2797 = vld [vmem:[%s2794 + $0x8] sm:$0xf]
    %v2798 = vld [vmem:[%s2794 + $0xc] sm:$0xf]
    %s2799 = scalar_lea.vmem %s67, 3
    %v2800 = vld [vmem:[%s2799] sm:$0x1]
    %v2802 = vlaneseq
    %v2803 = vshrl.u32 %v2802, 7
    %v2804 = vsub.s32 0, %v2803
    %v2805 = vrot.slane %v2800, %v2804
    %v2811 = vunpack.c.l.b16 %v2795
    %v2812 = vunpack.c.l.b16 %v2796
    %v2813 = vunpack.c.l.b16 %v2797
    %v2814 = vunpack.c.l.b16 %v2798
    %v2815 = vpack.c.b16 %v2812, %v2811
    %v2816 = vpack.c.b16 %v2814, %v2813
    %2819 = vmatprep.subr.bf16.mxu0 0
    %2820 = vmatpush1.bf16.msra.mxu0 %v2815
    %2821 = vmatprep.subr.bf16.mxu0 0
    %2822 = vmatpush1.bf16.msra.mxu0 %v2816
    %2823 = vmatprep.subr.bf16.mxu0 0
    %2824 = vmatpush1.bf16.msra.mxu0 0
    %2825 = vmatprep.subr.bf16.mxu0 0
    %2826 = vmatpush1.bf16.msra.mxu0 0
    %2827 = vmatprep.subr.bf16.mxu0 0
    %2828 = vmatpush1.bf16.msra.mxu0 0
    %2829 = vmatprep.subr.bf16.mxu0 0
    %2830 = vmatpush1.bf16.msra.mxu0 0
    %2831 = vmatprep.subr.bf16.mxu0 0
    %2832 = vmatpush1.bf16.msra.mxu0 0
    %2833 = vmatprep.subr.bf16.mxu0 0
    %2834 = vmatpush1.bf16.msra.mxu0 0
    %2835 = vmatprep.subr.bf16.mxu0 0
    %2836 = vmatpush1.bf16.msra.mxu0 0
    %2837 = vmatprep.subr.bf16.mxu0 0
    %2838 = vmatpush1.bf16.msra.mxu0 0
    %2839 = vmatprep.subr.bf16.mxu0 0
    %2840 = vmatpush1.bf16.msra.mxu0 0
    %2841 = vmatprep.subr.bf16.mxu0 0
    %2842 = vmatpush1.bf16.msra.mxu0 0
    %2843 = vmatprep.subr.bf16.mxu0 0
    %2844 = vmatpush1.bf16.msra.mxu0 0
    %2845 = vmatprep.subr.bf16.mxu0 0
    %2846 = vmatpush1.bf16.msra.mxu0 0
    %2847 = vmatprep.subr.bf16.mxu0 0
    %2848 = vmatpush1.bf16.msra.mxu0 0
    %2849 = vmatprep.subr.bf16.mxu0 0
    %2850 = vmatpush1.bf16.msra.mxu0 0
    %2851 = vmatprep.mubr.bf16.mxu0 0
    %2852 = vmatmul.mubr.bf16.gmra.mrb[0].mxu0 %v1288
    %v2853 = vpop.f32.mrb[0].mxu0
    %v2854 = vadd.f32 %v2805, %v2853
    %v2855 = vpop.f32.mrb[0].mxu0
    %v2856 = vpop.f32.mrb[0].mxu0
    %v2857 = vadd.f32 %v2805, %v2856
    %v2858 = vpop.f32.mrb[0].mxu0
    %2859 = vmatprep.mubr.bf16.mxu0 0
    %2860 = vmatmul.mubr.bf16.gmra.mrb[0].mxu0 %v1291
    %v2861 = vpop.f32.mrb[0].mxu0
    %v2862 = vadd.f32 %v2805, %v2861
    %v2863 = vpop.f32.mrb[0].mxu0
    %v2864 = vpop.f32.mrb[0].mxu0
    %v2865 = vadd.f32 %v2805, %v2864
    %v2866 = vpop.f32.mrb[0].mxu0
    %2867 = vdwg.mxu0
    %v2868 = vmul.f32 %v2706, 0.35355338
    %v2869 = vmul.f32 %v2709, 0.35355338
    %v2870 = vpack.c.bf16 %v2869, %v2868
    %v2871 = vpack.c.bf16 %v2783, %v2780
    %v2873 = vsel %vm1490, %v2870, 0
    %v2876 = vsel %vm1490, %v2871, 0
    %2878 = vmatprep.subr.bf16.mxu0 0
    %2879 = vmatpush1.bf16.xpose.msra.mxu0 %v2876
    %2880 = vmatprep.subr.bf16.mxu0 0
    %2881 = vmatpush1.bf16.xpose.msra.mxu0 0
    %2882 = vmatprep.subr.bf16.mxu0 0
    %2883 = vmatpush1.bf16.xpose.msra.mxu0 0
    %2884 = vmatprep.subr.bf16.mxu0 0
    %2885 = vmatpush1.bf16.xpose.msra.mxu0 0
    %2886 = vmatprep.subr.bf16.mxu0 0
    %2887 = vmatpush1.bf16.xpose.msra.mxu0 0
    %2888 = vmatprep.subr.bf16.mxu0 0
    %2889 = vmatpush1.bf16.xpose.msra.mxu0 0
    %2890 = vmatprep.subr.bf16.mxu0 0
    %2891 = vmatpush1.bf16.xpose.msra.mxu0 0
    %2892 = vmatprep.subr.bf16.mxu0 0
    %2893 = vmatpush1.bf16.xpose.msra.mxu0 0
    %2894 = vmatprep.subr.bf16.mxu0 0
    %2895 = vmatpush1.bf16.xpose.msra.mxu0 0
    %2896 = vmatprep.subr.bf16.mxu0 0
    %2897 = vmatpush1.bf16.xpose.msra.mxu0 0
    %2898 = vmatprep.subr.bf16.mxu0 0
    %2899 = vmatpush1.bf16.xpose.msra.mxu0 0
    %2900 = vmatprep.subr.bf16.mxu0 0
    %2901 = vmatpush1.bf16.xpose.msra.mxu0 0
    %2902 = vmatprep.subr.bf16.mxu0 0
    %2903 = vmatpush1.bf16.xpose.msra.mxu0 0
    %2904 = vmatprep.subr.bf16.mxu0 0
    %2905 = vmatpush1.bf16.xpose.msra.mxu0 0
    %2906 = vmatprep.subr.bf16.mxu0 0
    %2907 = vmatpush1.bf16.xpose.msra.mxu0 0
    %2908 = vmatprep.subr.bf16.mxu0 0
    %2909 = vmatpush1.bf16.xpose.msra.mxu0 0
    %2910 = vmatprep.mubr.bf16.mxu0 0
    %2911 = vmatmul.mubr.bf16.gmra.mrb[0].mxu0 %v2873
    %v2912 = vpop.f32.mrb[0].mxu0
    %v2913 = vadd.f32 0.0, %v2912
    %v2914 = vpop.f32.mrb[0].mxu0
    %v2915 = vpop.f32.mrb[0].mxu0
    %v2916 = vadd.f32 0.0, %v2915
    %v2917 = vpop.f32.mrb[0].mxu0
    %2918 = vdwg.mxu0
    %v2919 = vsel %vm1538, %v2913, -inf
    %2920 = vmax.xlane.f32.xlu0 %v2919
    %v2921 = vpop.xlane.xlu0 %2920
    %v2922 = vsel %vm1538, %v2916, -inf
    %2923 = vmax.xlane.f32.xlu0 %v2922
    %v2924 = vpop.xlane.xlu0 %2923
    %v2925 = vsub.f32 %v2913, %v2921
    %v2926 = vsub.f32 %v2916, %v2924
    %v2927 = vmul.f32 %v2925, 1.442695
    %v2928 = vpow.pop %v2927
    %v2929 = vmul.f32 %v2926, 1.442695
    %v2930 = vpow.pop %v2929
    %v2931 = vsel %vm1538, %v2928, 0.0
    %2932 = vadd.xlane.f32.xlu0 %v2931
    %v2933 = vpop.xlane.xlu0 %2932
    %v2934 = vsel %vm1538, %v2930, 0.0
    %2935 = vadd.xlane.f32.xlu0 %v2934
    %v2936 = vpop.xlane.xlu0 %2935
    %v2937 = vrcp.pop %v2933
    %v2938 = vmul.f32 %v2928, %v2937
    %v2939 = vrcp.pop %v2936
    %v2940 = vmul.f32 %v2930, %v2939
    %v2941 = vpack.c.bf16 %v2940, %v2938
    %v2942 = vpack.c.bf16 %v2857, %v2854
    %v2944 = vsel %vm1538, %v2941, 0
    %2946 = vmatprep.subr.bf16.mxu0 0
    %2947 = vmatpush1.bf16.msra.mxu0 %v2942
    %2948 = vmatprep.subr.bf16.mxu0 0
    %2949 = vmatpush1.bf16.msra.mxu0 0
    %2950 = vmatprep.subr.bf16.mxu0 0
    %2951 = vmatpush1.bf16.msra.mxu0 0
    %2952 = vmatprep.subr.bf16.mxu0 0
    %2953 = vmatpush1.bf16.msra.mxu0 0
    %2954 = vmatprep.subr.bf16.mxu0 0
    %2955 = vmatpush1.bf16.msra.mxu0 0
    %2956 = vmatprep.subr.bf16.mxu0 0
    %2957 = vmatpush1.bf16.msra.mxu0 0
    %2958 = vmatprep.subr.bf16.mxu0 0
    %2959 = vmatpush1.bf16.msra.mxu0 0
    %2960 = vmatprep.subr.bf16.mxu0 0
    %2961 = vmatpush1.bf16.msra.mxu0 0
    %2962 = vmatprep.subr.bf16.mxu0 0
    %2963 = vmatpush1.bf16.msra.mxu0 0
    %2964 = vmatprep.subr.bf16.mxu0 0
    %2965 = vmatpush1.bf16.msra.mxu0 0
    %2966 = vmatprep.subr.bf16.mxu0 0
    %2967 = vmatpush1.bf16.msra.mxu0 0
    %2968 = vmatprep.subr.bf16.mxu0 0
    %2969 = vmatpush1.bf16.msra.mxu0 0
    %2970 = vmatprep.subr.bf16.mxu0 0
    %2971 = vmatpush1.bf16.msra.mxu0 0
    %2972 = vmatprep.subr.bf16.mxu0 0
    %2973 = vmatpush1.bf16.msra.mxu0 0
    %2974 = vmatprep.subr.bf16.mxu0 0
    %2975 = vmatpush1.bf16.msra.mxu0 0
    %2976 = vmatprep.subr.bf16.mxu0 0
    %2977 = vmatpush1.bf16.msra.mxu0 0
    %2978 = vmatprep.mubr.bf16.mxu0 0
    %2979 = vmatmul.mubr.bf16.gmra.mrb[0].mxu0 %v2944
    %v2980 = vpop.f32.mrb[0].mxu0
    %v2981 = vadd.f32 0.0, %v2980
    %v2982 = vpop.f32.mrb[0].mxu0
    %v2983 = vpop.f32.mrb[0].mxu0
    %v2984 = vadd.f32 0.0, %v2983
    %v2985 = vpop.f32.mrb[0].mxu0
    %2986 = vdwg.mxu0
    %v2987 = vmul.f32 %v2714, 0.35355338
    %v2988 = vmul.f32 %v2717, 0.35355338
    %v2989 = vpack.c.bf16 %v2988, %v2987
    %v2990 = vpack.c.bf16 %v2791, %v2788
    %v2992 = vsel %vm1490, %v2989, 0
    %v2995 = vsel %vm1490, %v2990, 0
    %2997 = vmatprep.subr.bf16.mxu0 0
    %2998 = vmatpush1.bf16.xpose.msra.mxu0 %v2995
    %2999 = vmatprep.subr.bf16.mxu0 0
    %3000 = vmatpush1.bf16.xpose.msra.mxu0 0
    %3001 = vmatprep.subr.bf16.mxu0 0
    %3002 = vmatpush1.bf16.xpose.msra.mxu0 0
    %3003 = vmatprep.subr.bf16.mxu0 0
    %3004 = vmatpush1.bf16.xpose.msra.mxu0 0
    %3005 = vmatprep.subr.bf16.mxu0 0
    %3006 = vmatpush1.bf16.xpose.msra.mxu0 0
    %3007 = vmatprep.subr.bf16.mxu0 0
    %3008 = vmatpush1.bf16.xpose.msra.mxu0 0
    %3009 = vmatprep.subr.bf16.mxu0 0
    %3010 = vmatpush1.bf16.xpose.msra.mxu0 0
    %3011 = vmatprep.subr.bf16.mxu0 0
    %3012 = vmatpush1.bf16.xpose.msra.mxu0 0
    %3013 = vmatprep.subr.bf16.mxu0 0
    %3014 = vmatpush1.bf16.xpose.msra.mxu0 0
    %3015 = vmatprep.subr.bf16.mxu0 0
    %3016 = vmatpush1.bf16.xpose.msra.mxu0 0
    %3017 = vmatprep.subr.bf16.mxu0 0
    %3018 = vmatpush1.bf16.xpose.msra.mxu0 0
    %3019 = vmatprep.subr.bf16.mxu0 0
    %3020 = vmatpush1.bf16.xpose.msra.mxu0 0
    %3021 = vmatprep.subr.bf16.mxu0 0
    %3022 = vmatpush1.bf16.xpose.msra.mxu0 0
    %3023 = vmatprep.subr.bf16.mxu0 0
    %3024 = vmatpush1.bf16.xpose.msra.mxu0 0
    %3025 = vmatprep.subr.bf16.mxu0 0
    %3026 = vmatpush1.bf16.xpose.msra.mxu0 0
    %3027 = vmatprep.subr.bf16.mxu0 0
    %3028 = vmatpush1.bf16.xpose.msra.mxu0 0
    %3029 = vmatprep.mubr.bf16.mxu0 0
    %3030 = vmatmul.mubr.bf16.gmra.mrb[0].mxu0 %v2992
    %v3031 = vpop.f32.mrb[0].mxu0
    %v3032 = vadd.f32 0.0, %v3031
    %v3033 = vpop.f32.mrb[0].mxu0
    %v3034 = vpop.f32.mrb[0].mxu0
    %v3035 = vadd.f32 0.0, %v3034
    %v3036 = vpop.f32.mrb[0].mxu0
    %3037 = vdwg.mxu0
    %v3038 = vsel %vm1538, %v3032, -inf
    %3039 = vmax.xlane.f32.xlu0 %v3038
    %v3040 = vpop.xlane.xlu0 %3039
    %v3041 = vsel %vm1538, %v3035, -inf
    %3042 = vmax.xlane.f32.xlu0 %v3041
    %v3043 = vpop.xlane.xlu0 %3042
    %v3044 = vsub.f32 %v3032, %v3040
    %v3045 = vsub.f32 %v3035, %v3043
    %v3046 = vmul.f32 %v3044, 1.442695
    %v3047 = vpow.pop %v3046
    %v3048 = vmul.f32 %v3045, 1.442695
    %v3049 = vpow.pop %v3048
    %v3050 = vsel %vm1538, %v3047, 0.0
    %3051 = vadd.xlane.f32.xlu0 %v3050
    %v3052 = vpop.xlane.xlu0 %3051
    %v3053 = vsel %vm1538, %v3049, 0.0
    %3054 = vadd.xlane.f32.xlu0 %v3053
    %v3055 = vpop.xlane.xlu0 %3054
    %v3056 = vrcp.pop %v3052
    %v3057 = vmul.f32 %v3047, %v3056
    %v3058 = vrcp.pop %v3055
    %v3059 = vmul.f32 %v3049, %v3058
    %v3060 = vpack.c.bf16 %v3059, %v3057
    %v3061 = vpack.c.bf16 %v2865, %v2862
    %v3063 = vsel %vm1538, %v3060, 0
    %3065 = vmatprep.subr.bf16.mxu0 0
    %3066 = vmatpush1.bf16.msra.mxu0 %v3061
    %3067 = vmatprep.subr.bf16.mxu0 0
    %3068 = vmatpush1.bf16.msra.mxu0 0
    %3069 = vmatprep.subr.bf16.mxu0 0
    %3070 = vmatpush1.bf16.msra.mxu0 0
    %3071 = vmatprep.subr.bf16.mxu0 0
    %3072 = vmatpush1.bf16.msra.mxu0 0
    %3073 = vmatprep.subr.bf16.mxu0 0
    %3074 = vmatpush1.bf16.msra.mxu0 0
    %3075 = vmatprep.subr.bf16.mxu0 0
    %3076 = vmatpush1.bf16.msra.mxu0 0
    %3077 = vmatprep.subr.bf16.mxu0 0
    %3078 = vmatpush1.bf16.msra.mxu0 0
    %3079 = vmatprep.subr.bf16.mxu0 0
    %3080 = vmatpush1.bf16.msra.mxu0 0
    %3081 = vmatprep.subr.bf16.mxu0 0
    %3082 = vmatpush1.bf16.msra.mxu0 0
    %3083 = vmatprep.subr.bf16.mxu0 0
    %3084 = vmatpush1.bf16.msra.mxu0 0
    %3085 = vmatprep.subr.bf16.mxu0 0
    %3086 = vmatpush1.bf16.msra.mxu0 0
    %3087 = vmatprep.subr.bf16.mxu0 0
    %3088 = vmatpush1.bf16.msra.mxu0 0
    %3089 = vmatprep.subr.bf16.mxu0 0
    %3090 = vmatpush1.bf16.msra.mxu0 0
    %3091 = vmatprep.subr.bf16.mxu0 0
    %3092 = vmatpush1.bf16.msra.mxu0 0
    %3093 = vmatprep.subr.bf16.mxu0 0
    %3094 = vmatpush1.bf16.msra.mxu0 0
    %3095 = vmatprep.subr.bf16.mxu0 0
    %3096 = vmatpush1.bf16.msra.mxu0 0
    %3097 = vmatprep.mubr.bf16.mxu0 0
    %3098 = vmatmul.mubr.bf16.gmra.mrb[0].mxu0 %v3063
    %v3099 = vpop.f32.mrb[0].mxu0
    %v3100 = vadd.f32 0.0, %v3099
    %v3101 = vpop.f32.mrb[0].mxu0
    %v3102 = vpop.f32.mrb[0].mxu0
    %v3103 = vadd.f32 0.0, %v3102
    %v3104 = vpop.f32.mrb[0].mxu0
    %3105 = vdwg.mxu0
    %3108 = vrot.lane.b32.xlu0 %v2061, 8
    %v3109 = vpop.permute.xlu0 %3108
    %3110 = vrot.lane.b32.xlu0 %v2064, 8
    %v3111 = vpop.permute.xlu0 %3110
    %3116 = vrot.lane.b32.xlu0 %v2521, 16
    %v3117 = vpop.permute.xlu0 %3116
    %3118 = vrot.lane.b32.xlu0 %v2524, 16
    %v3119 = vpop.permute.xlu0 %3118
    %3124 = vrot.lane.b32.xlu0 %v2981, 24
    %v3125 = vpop.permute.xlu0 %3124
    %3126 = vrot.lane.b32.xlu0 %v2984, 24
    %v3127 = vpop.permute.xlu0 %3126
    %v3130 = vsel %vm1490, %v1601, %v3109
    %v3131 = vsel %vm1490, %v1604, %v3111
    %v3132 = vsel %vm1538, %v3130, %v3117
    %v3133 = vsel %vm1538, %v3131, %v3119
    %vm3134 = vcmask 195584
    %v3135 = vsel %vm3134, %v3132, %v3125
    %v3136 = vsel %vm3134, %v3133, %v3127
    %3139 = vrot.lane.b32.xlu0 %v2180, 8
    %v3140 = vpop.permute.xlu0 %3139
    %3141 = vrot.lane.b32.xlu0 %v2183, 8
    %v3142 = vpop.permute.xlu0 %3141
    %3147 = vrot.lane.b32.xlu0 %v2640, 16
    %v3148 = vpop.permute.xlu0 %3147
    %3149 = vrot.lane.b32.xlu0 %v2643, 16
    %v3150 = vpop.permute.xlu0 %3149
    %3155 = vrot.lane.b32.xlu0 %v3100, 24
    %v3156 = vpop.permute.xlu0 %3155
    %3157 = vrot.lane.b32.xlu0 %v3103, 24
    %v3158 = vpop.permute.xlu0 %3157
    %v3161 = vsel %vm1490, %v1720, %v3140
    %v3162 = vsel %vm1490, %v1723, %v3142
    %v3163 = vsel %vm1538, %v3161, %v3148
    %v3164 = vsel %vm1538, %v3162, %v3150
    %v3165 = vsel %vm3134, %v3163, %v3156
    %v3166 = vsel %vm3134, %v3164, %v3158
    %v3167 = vld [vmem:[%s69] sm:$0xf]
    %v3168 = vld [vmem:[%s69 + $0x4] sm:$0xf]
    %v3169 = vld [vmem:[%s69 + $0x8] sm:$0xf]
    %v3170 = vld [vmem:[%s69 + $0xc] sm:$0xf]
    %v3171 = vld [vmem:[%s71] sm:$0x1]
    %v3172 = vpack.c.bf16 %v3136, %v3135
    %v3173 = vpack.c.bf16 %v3166, %v3165
    %v3175 = vlaneseq
    %v3176 = vshrl.u32 %v3175, 7
    %v3177 = vsub.s32 0, %v3176
    %v3178 = vrot.slane %v3171, %v3177
    %v3184 = vunpack.c.l.b16 %v3167
    %v3185 = vunpack.c.l.b16 %v3168
    %v3186 = vunpack.c.l.b16 %v3169
    %v3187 = vunpack.c.l.b16 %v3170
    %v3188 = vpack.c.b16 %v3185, %v3184
    %v3189 = vpack.c.b16 %v3187, %v3186
    %v3193 = vsel %vm467, %v3172, 0
    %v3196 = vsel %vm467, %v3173, 0
    %3198 = vmatprep.subr.bf16.mxu0 0
    %3199 = vmatpush1.bf16.msra.mxu0 %v3188
    %3200 = vmatprep.subr.bf16.mxu0 0
    %3201 = vmatpush1.bf16.msra.mxu0 %v3189
    %3202 = vmatprep.subr.bf16.mxu0 0
    %3203 = vmatpush1.bf16.msra.mxu0 0
    %3204 = vmatprep.subr.bf16.mxu0 0
    %3205 = vmatpush1.bf16.msra.mxu0 0
    %3206 = vmatprep.subr.bf16.mxu0 0
    %3207 = vmatpush1.bf16.msra.mxu0 0
    %3208 = vmatprep.subr.bf16.mxu0 0
    %3209 = vmatpush1.bf16.msra.mxu0 0
    %3210 = vmatprep.subr.bf16.mxu0 0
    %3211 = vmatpush1.bf16.msra.mxu0 0
    %3212 = vmatprep.subr.bf16.mxu0 0
    %3213 = vmatpush1.bf16.msra.mxu0 0
    %3214 = vmatprep.subr.bf16.mxu0 0
    %3215 = vmatpush1.bf16.msra.mxu0 0
    %3216 = vmatprep.subr.bf16.mxu0 0
    %3217 = vmatpush1.bf16.msra.mxu0 0
    %3218 = vmatprep.subr.bf16.mxu0 0
    %3219 = vmatpush1.bf16.msra.mxu0 0
    %3220 = vmatprep.subr.bf16.mxu0 0
    %3221 = vmatpush1.bf16.msra.mxu0 0
    %3222 = vmatprep.subr.bf16.mxu0 0
    %3223 = vmatpush1.bf16.msra.mxu0 0
    %3224 = vmatprep.subr.bf16.mxu0 0
    %3225 = vmatpush1.bf16.msra.mxu0 0
    %3226 = vmatprep.subr.bf16.mxu0 0
    %3227 = vmatpush1.bf16.msra.mxu0 0
    %3228 = vmatprep.subr.bf16.mxu0 0
    %3229 = vmatpush1.bf16.msra.mxu0 0
    %3230 = vmatprep.mubr.bf16.mxu0 0
    %3231 = vmatmul.mubr.bf16.gmra.mrb[0].mxu0 %v3193
    %v3232 = vpop.f32.mrb[0].mxu0
    %v3233 = vadd.f32 %v3178, %v3232
    %v3234 = vpop.f32.mrb[0].mxu0
    %v3235 = vpop.f32.mrb[0].mxu0
    %v3236 = vadd.f32 %v3178, %v3235
    %v3237 = vpop.f32.mrb[0].mxu0
    %3238 = vmatprep.mubr.bf16.mxu0 0
    %3239 = vmatmul.mubr.bf16.gmra.mrb[0].mxu0 %v3196
    %v3240 = vpop.f32.mrb[0].mxu0
    %v3241 = vadd.f32 %v3178, %v3240
    %v3242 = vpop.f32.mrb[0].mxu0
    %v3243 = vpop.f32.mrb[0].mxu0
    %v3244 = vadd.f32 %v3178, %v3243
    %v3245 = vpop.f32.mrb[0].mxu0
    %3246 = vdwg.mxu0
    %v3247 = vadd.f32 %v1258, %v3233
    %v3248 = vadd.f32 %v1259, %v3236
    %v3249 = vadd.f32 %v1260, %v3241
    %v3250 = vadd.f32 %v1261, %v3244
    %v3251 = vld [vmem:[%s73] sm:$0x1]
    %v3252 = vld [vmem:[%s75] sm:$0x1]
    %v3253 = vsel %vm467, %v3247, 0.0
    %3254 = vadd.xlane.f32.xlu0 %v3253
    %v3255 = vpop.xlane.xlu0 %3254
    %v3256 = vsel %vm467, %v3248, 0.0
    %3257 = vadd.xlane.f32.xlu0 %v3256
    %v3258 = vpop.xlane.xlu0 %3257
    %v3259 = vsel %vm467, %v3249, 0.0
    %3260 = vadd.xlane.f32.xlu0 %v3259
    %v3261 = vpop.xlane.xlu0 %3260
    %v3262 = vsel %vm467, %v3250, 0.0
    %3263 = vadd.xlane.f32.xlu0 %v3262
    %v3264 = vpop.xlane.xlu0 %3263
    %v3265 = vrcp.pop 32.0
    %v3266 = vmul.f32 %v3255, %v3265
    %v3267 = vmul.f32 %v3258, %v3265
    %v3268 = vmul.f32 %v3261, %v3265
    %v3269 = vmul.f32 %v3264, %v3265
    %v3270 = vsub.f32 %v3247, %v3266
    %v3271 = vsub.f32 %v3248, %v3267
    %v3272 = vsub.f32 %v3249, %v3268
    %v3273 = vsub.f32 %v3250, %v3269
    %v3274 = vmul.f32 %v3270, %v3270
    %v3275 = vmul.f32 %v3271, %v3271
    %v3276 = vmul.f32 %v3272, %v3272
    %v3277 = vmul.f32 %v3273, %v3273
    %v3278 = vsel %vm467, %v3274, 0.0
    %3279 = vadd.xlane.f32.xlu0 %v3278
    %v3280 = vpop.xlane.xlu0 %3279
    %v3281 = vsel %vm467, %v3275, 0.0
    %3282 = vadd.xlane.f32.xlu0 %v3281
    %v3283 = vpop.xlane.xlu0 %3282
    %v3284 = vsel %vm467, %v3276, 0.0
    %3285 = vadd.xlane.f32.xlu0 %v3284
    %v3286 = vpop.xlane.xlu0 %3285
    %v3287 = vsel %vm467, %v3277, 0.0
    %3288 = vadd.xlane.f32.xlu0 %v3287
    %v3289 = vpop.xlane.xlu0 %3288
    %v3290 = vmul.f32 %v3280, %v3265
    %v3291 = vmul.f32 %v3283, %v3265
    %v3292 = vmul.f32 %v3286, %v3265
    %v3293 = vmul.f32 %v3289, %v3265
    %v3294 = vadd.f32 %v3290, 1e-05
    %v3295 = vadd.f32 %v3291, 1e-05
    %v3296 = vadd.f32 %v3292, 1e-05
    %v3297 = vadd.f32 %v3293, 1e-05
    %v3298 = vrsqrt.pop %v3294
    %v3299 = vrsqrt.pop %v3295
    %v3300 = vrsqrt.pop %v3296
    %v3301 = vrsqrt.pop %v3297
    %v3302 = vmul.f32 %v3270, %v3298
    %v3303 = vmul.f32 %v3271, %v3299
    %v3304 = vmul.f32 %v3272, %v3300
    %v3305 = vmul.f32 %v3273, %v3301
    %v3307 = vlaneseq
    %v3308 = vshrl.u32 %v3307, 7
    %v3309 = vsub.s32 0, %v3308
    %v3310 = vrot.slane %v3251, %v3309
    %v3312 = vmul.f32 %v3302, %v3310
    %v3313 = vmul.f32 %v3303, %v3310
    %v3314 = vmul.f32 %v3304, %v3310
    %v3315 = vmul.f32 %v3305, %v3310
    %v3317 = vlaneseq
    %v3318 = vshrl.u32 %v3317, 7
    %v3319 = vsub.s32 0, %v3318
    %v3320 = vrot.slane %v3252, %v3319
    %v3322 = vadd.f32 %v3312, %v3320
    %v3323 = vadd.f32 %v3313, %v3320
    %v3324 = vadd.f32 %v3314, %v3320
    %v3325 = vadd.f32 %v3315, %v3320
    %v3326 = vld [vmem:[%s77] sm:$0xff]
    %v3327 = vld [vmem:[%s77 + $0x8] sm:$0xff]
    %v3328 = vld [vmem:[%s77 + $0x10] sm:$0xff]
    %v3329 = vld [vmem:[%s77 + $0x18] sm:$0xff]
    %v3330 = vld [vmem:[%s77 + $0x20] sm:$0xff]
    %v3331 = vld [vmem:[%s77 + $0x28] sm:$0xff]
    %v3332 = vld [vmem:[%s77 + $0x30] sm:$0xff]
    %v3333 = vld [vmem:[%s77 + $0x38] sm:$0xff]
    %v3334 = vld [vmem:[%s77 + $0x40] sm:$0xff]
    %v3335 = vld [vmem:[%s77 + $0x48] sm:$0xff]
    %v3336 = vld [vmem:[%s77 + $0x50] sm:$0xff]
    %v3337 = vld [vmem:[%s77 + $0x58] sm:$0xff]
    %v3338 = vld [vmem:[%s77 + $0x60] sm:$0xff]
    %v3339 = vld [vmem:[%s77 + $0x68] sm:$0xff]
    %v3340 = vld [vmem:[%s77 + $0x70] sm:$0xff]
    %v3341 = vld [vmem:[%s77 + $0x78] sm:$0xff]
    %v3342 = vld [vmem:[%s77 + $0x80] sm:$0xff]
    %v3343 = vld [vmem:[%s77 + $0x88] sm:$0xff]
    %v3344 = vld [vmem:[%s77 + $0x90] sm:$0xff]
    %v3345 = vld [vmem:[%s77 + $0x98] sm:$0xff]
    %v3346 = vld [vmem:[%s77 + $0xa0] sm:$0xff]
    %v3347 = vld [vmem:[%s77 + $0xa8] sm:$0xff]
    %v3348 = vld [vmem:[%s77 + $0xb0] sm:$0xff]
    %v3349 = vld [vmem:[%s77 + $0xb8] sm:$0xff]
    %v3350 = vld [vmem:[%s77 + $0xc0] sm:$0xff]
    %v3351 = vld [vmem:[%s77 + $0xc8] sm:$0xff]
    %v3352 = vld [vmem:[%s77 + $0xd0] sm:$0xff]
    %v3353 = vld [vmem:[%s77 + $0xd8] sm:$0xff]
    %v3354 = vld [vmem:[%s77 + $0xe0] sm:$0xff]
    %v3355 = vld [vmem:[%s77 + $0xe8] sm:$0xff]
    %v3356 = vld [vmem:[%s77 + $0xf0] sm:$0xff]
    %v3357 = vld [vmem:[%s77 + $0xf8] sm:$0xff]
    %v3358 = vld [vmem:[%s79] sm:$0xff]
    %v3359 = vld [vmem:[%s79 + $0x8] sm:$0xff]
    %v3360 = vpack.c.bf16 %v3323, %v3322
    %v3361 = vpack.c.bf16 %v3325, %v3324
    %v3364 = vlaneseq
    %v3365 = vshrl.u32 %v3364, 7
    %v3366 = vsub.s32 0, %v3365
    %v3367 = vrot.slane %v3358, %v3366
    %v3368 = vlaneseq
    %v3369 = vshrl.u32 %v3368, 7
    %v3370 = vsub.s32 1, %v3369
    %v3371 = vrot.slane %v3358, %v3370
    %v3372 = vlaneseq
    %v3373 = vshrl.u32 %v3372, 7
    %v3374 = vsub.s32 2, %v3373
    %v3375 = vrot.slane %v3358, %v3374
    %v3376 = vlaneseq
    %v3377 = vshrl.u32 %v3376, 7
    %v3378 = vsub.s32 3, %v3377
    %v3379 = vrot.slane %v3358, %v3378
    %v3380 = vlaneseq
    %v3381 = vshrl.u32 %v3380, 7
    %v3382 = vsub.s32 4, %v3381
    %v3383 = vrot.slane %v3358, %v3382
    %v3384 = vlaneseq
    %v3385 = vshrl.u32 %v3384, 7
    %v3386 = vsub.s32 5, %v3385
    %v3387 = vrot.slane %v3358, %v3386
    %v3388 = vlaneseq
    %v3389 = vshrl.u32 %v3388, 7
    %v3390 = vsub.s32 6, %v3389
    %v3391 = vrot.slane %v3358, %v3390
    %v3392 = vlaneseq
    %v3393 = vshrl.u32 %v3392, 7
    %v3394 = vsub.s32 7, %v3393
    %v3395 = vrot.slane %v3358, %v3394
    %v3396 = vlaneseq
    %v3397 = vshrl.u32 %v3396, 7
    %v3398 = vsub.s32 0, %v3397
    %v3399 = vrot.slane %v3359, %v3398
    %v3400 = vlaneseq
    %v3401 = vshrl.u32 %v3400, 7
    %v3402 = vsub.s32 1, %v3401
    %v3403 = vrot.slane %v3359, %v3402
    %v3404 = vlaneseq
    %v3405 = vshrl.u32 %v3404, 7
    %v3406 = vsub.s32 2, %v3405
    %v3407 = vrot.slane %v3359, %v3406
    %v3408 = vlaneseq
    %v3409 = vshrl.u32 %v3408, 7
    %v3410 = vsub.s32 3, %v3409
    %v3411 = vrot.slane %v3359, %v3410
    %v3412 = vlaneseq
    %v3413 = vshrl.u32 %v3412, 7
    %v3414 = vsub.s32 4, %v3413
    %v3415 = vrot.slane %v3359, %v3414
    %v3416 = vlaneseq
    %v3417 = vshrl.u32 %v3416, 7
    %v3418 = vsub.s32 5, %v3417
    %v3419 = vrot.slane %v3359, %v3418
    %v3420 = vlaneseq
    %v3421 = vshrl.u32 %v3420, 7
    %v3422 = vsub.s32 6, %v3421
    %v3423 = vrot.slane %v3359, %v3422
    %v3424 = vlaneseq
    %v3425 = vshrl.u32 %v3424, 7
    %v3426 = vsub.s32 7, %v3425
    %v3427 = vrot.slane %v3359, %v3426
    %v3476 = vunpack.c.l.b16 %v3326
    %v3477 = vunpack.c.h.b16 %v3326
    %v3478 = vunpack.c.l.b16 %v3327
    %v3479 = vunpack.c.h.b16 %v3327
    %v3480 = vunpack.c.l.b16 %v3328
    %v3481 = vunpack.c.h.b16 %v3328
    %v3482 = vunpack.c.l.b16 %v3329
    %v3483 = vunpack.c.h.b16 %v3329
    %v3484 = vunpack.c.l.b16 %v3330
    %v3485 = vunpack.c.h.b16 %v3330
    %v3486 = vunpack.c.l.b16 %v3331
    %v3487 = vunpack.c.h.b16 %v3331
    %v3488 = vunpack.c.l.b16 %v3332
    %v3489 = vunpack.c.h.b16 %v3332
    %v3490 = vunpack.c.l.b16 %v3333
    %v3491 = vunpack.c.h.b16 %v3333
    %v3492 = vunpack.c.l.b16 %v3334
    %v3493 = vunpack.c.h.b16 %v3334
    %v3494 = vunpack.c.l.b16 %v3335
    %v3495 = vunpack.c.h.b16 %v3335
    %v3496 = vunpack.c.l.b16 %v3336
    %v3497 = vunpack.c.h.b16 %v3336
    %v3498 = vunpack.c.l.b16 %v3337
    %v3499 = vunpack.c.h.b16 %v3337
    %v3500 = vunpack.c.l.b16 %v3338
    %v3501 = vunpack.c.h.b16 %v3338
    %v3502 = vunpack.c.l.b16 %v3339
    %v3503 = vunpack.c.h.b16 %v3339
    %v3504 = vunpack.c.l.b16 %v3340
    %v3505 = vunpack.c.h.b16 %v3340
    %v3506 = vunpack.c.l.b16 %v3341
    %v3507 = vunpack.c.h.b16 %v3341
    %v3508 = vunpack.c.l.b16 %v3342
    %v3509 = vunpack.c.h.b16 %v3342
    %v3510 = vunpack.c.l.b16 %v3343
    %v3511 = vunpack.c.h.b16 %v3343
    %v3512 = vunpack.c.l.b16 %v3344
    %v3513 = vunpack.c.h.b16 %v3344
    %v3514 = vunpack.c.l.b16 %v3345
    %v3515 = vunpack.c.h.b16 %v3345
    %v3516 = vunpack.c.l.b16 %v3346
    %v3517 = vunpack.c.h.b16 %v3346
    %v3518 = vunpack.c.l.b16 %v3347
    %v3519 = vunpack.c.h.b16 %v3347
    %v3520 = vunpack.c.l.b16 %v3348
    %v3521 = vunpack.c.h.b16 %v3348
    %v3522 = vunpack.c.l.b16 %v3349
    %v3523 = vunpack.c.h.b16 %v3349
    %v3524 = vunpack.c.l.b16 %v3350
    %v3525 = vunpack.c.h.b16 %v3350
    %v3526 = vunpack.c.l.b16 %v3351
    %v3527 = vunpack.c.h.b16 %v3351
    %v3528 = vunpack.c.l.b16 %v3352
    %v3529 = vunpack.c.h.b16 %v3352
    %v3530 = vunpack.c.l.b16 %v3353
    %v3531 = vunpack.c.h.b16 %v3353
    %v3532 = vunpack.c.l.b16 %v3354
    %v3533 = vunpack.c.h.b16 %v3354
    %v3534 = vunpack.c.l.b16 %v3355
    %v3535 = vunpack.c.h.b16 %v3355
    %v3536 = vunpack.c.l.b16 %v3356
    %v3537 = vunpack.c.h.b16 %v3356
    %v3538 = vunpack.c.l.b16 %v3357
    %v3539 = vunpack.c.h.b16 %v3357
    %v3540 = vpack.c.b16 %v3492, %v3476
    %v3541 = vpack.c.b16 %v3493, %v3477
    %v3542 = vpack.c.b16 %v3494, %v3478
    %v3543 = vpack.c.b16 %v3495, %v3479
    %v3544 = vpack.c.b16 %v3496, %v3480
    %v3545 = vpack.c.b16 %v3497, %v3481
    %v3546 = vpack.c.b16 %v3498, %v3482
    %v3547 = vpack.c.b16 %v3499, %v3483
    %v3548 = vpack.c.b16 %v3500, %v3484
    %v3549 = vpack.c.b16 %v3501, %v3485
    %v3550 = vpack.c.b16 %v3502, %v3486
    %v3551 = vpack.c.b16 %v3503, %v3487
    %v3552 = vpack.c.b16 %v3504, %v3488
    %v3553 = vpack.c.b16 %v3505, %v3489
    %v3554 = vpack.c.b16 %v3506, %v3490
    %v3555 = vpack.c.b16 %v3507, %v3491
    %v3556 = vpack.c.b16 %v3524, %v3508
    %v3557 = vpack.c.b16 %v3525, %v3509
    %v3558 = vpack.c.b16 %v3526, %v3510
    %v3559 = vpack.c.b16 %v3527, %v3511
    %v3560 = vpack.c.b16 %v3528, %v3512
    %v3561 = vpack.c.b16 %v3529, %v3513
    %v3562 = vpack.c.b16 %v3530, %v3514
    %v3563 = vpack.c.b16 %v3531, %v3515
    %v3564 = vpack.c.b16 %v3532, %v3516
    %v3565 = vpack.c.b16 %v3533, %v3517
    %v3566 = vpack.c.b16 %v3534, %v3518
    %v3567 = vpack.c.b16 %v3535, %v3519
    %v3568 = vpack.c.b16 %v3536, %v3520
    %v3569 = vpack.c.b16 %v3537, %v3521
    %v3570 = vpack.c.b16 %v3538, %v3522
    %v3571 = vpack.c.b16 %v3539, %v3523
    %v3605 = vsel %vm467, %v3360, 0
    %v3608 = vsel %vm467, %v3361, 0
    %3610 = vmatprep.subr.bf16.mxu0 %v3541
    %3611 = vmatpush1.bf16.msra.mxu0 %v3540
    %3612 = vmatprep.subr.bf16.mxu0 %v3557
    %3613 = vmatpush1.bf16.msra.mxu0 %v3556
    %3614 = vmatprep.subr.bf16.mxu0 0
    %3615 = vmatpush1.bf16.msra.mxu0 0
    %3616 = vmatprep.subr.bf16.mxu0 0
    %3617 = vmatpush1.bf16.msra.mxu0 0
    %3618 = vmatprep.subr.bf16.mxu0 0
    %3619 = vmatpush1.bf16.msra.mxu0 0
    %3620 = vmatprep.subr.bf16.mxu0 0
    %3621 = vmatpush1.bf16.msra.mxu0 0
    %3622 = vmatprep.subr.bf16.mxu0 0
    %3623 = vmatpush1.bf16.msra.mxu0 0
    %3624 = vmatprep.subr.bf16.mxu0 0
    %3625 = vmatpush1.bf16.msra.mxu0 0
    %3626 = vmatprep.subr.bf16.mxu0 0
    %3627 = vmatpush1.bf16.msra.mxu0 0
    %3628 = vmatprep.subr.bf16.mxu0 0
    %3629 = vmatpush1.bf16.msra.mxu0 0
    %3630 = vmatprep.subr.bf16.mxu0 0
    %3631 = vmatpush1.bf16.msra.mxu0 0
    %3632 = vmatprep.subr.bf16.mxu0 0
    %3633 = vmatpush1.bf16.msra.mxu0 0
    %3634 = vmatprep.subr.bf16.mxu0 0
    %3635 = vmatpush1.bf16.msra.mxu0 0
    %3636 = vmatprep.subr.bf16.mxu0 0
    %3637 = vmatpush1.bf16.msra.mxu0 0
    %3638 = vmatprep.subr.bf16.mxu0 0
    %3639 = vmatpush1.bf16.msra.mxu0 0
    %3640 = vmatprep.subr.bf16.mxu0 0
    %3641 = vmatpush1.bf16.msra.mxu0 0
    %3642 = vmatprep.mubr.bf16.mxu0 0
    %3643 = vmatmul.mubr.bf16.gmra.mrb[0].mxu0 %v3605
    %v3644 = vpop.f32.mrb[0].mxu0
    %v3645 = vadd.f32 %v3367, %v3644
    %v3646 = vpop.f32.mrb[0].mxu0
    %v3647 = vadd.f32 %v3371, %v3646
    %v3648 = vpop.f32.mrb[0].mxu0
    %v3649 = vadd.f32 %v3367, %v3648
    %v3650 = vpop.f32.mrb[0].mxu0
    %v3651 = vadd.f32 %v3371, %v3650
    %3652 = vmatprep.mubr.bf16.mxu0 0
    %3653 = vmatmul.mubr.bf16.gmra.mrb[0].mxu0 %v3608
    %v3654 = vpop.f32.mrb[0].mxu0
    %v3655 = vadd.f32 %v3367, %v3654
    %v3656 = vpop.f32.mrb[0].mxu0
    %v3657 = vadd.f32 %v3371, %v3656
    %v3658 = vpop.f32.mrb[0].mxu0
    %v3659 = vadd.f32 %v3367, %v3658
    %v3660 = vpop.f32.mrb[0].mxu0
    %v3661 = vadd.f32 %v3371, %v3660
    %3662 = vdwg.mxu0
    %3663 = vmatprep.subr.bf16.mxu0 %v3543
    %3664 = vmatpush1.bf16.msra.mxu0 %v3542
    %3665 = vmatprep.subr.bf16.mxu0 %v3559
    %3666 = vmatpush1.bf16.msra.mxu0 %v3558
    %3667 = vmatprep.subr.bf16.mxu0 0
    %3668 = vmatpush1.bf16.msra.mxu0 0
    %3669 = vmatprep.subr.bf16.mxu0 0
    %3670 = vmatpush1.bf16.msra.mxu0 0
    %3671 = vmatprep.subr.bf16.mxu0 0
    %3672 = vmatpush1.bf16.msra.mxu0 0
    %3673 = vmatprep.subr.bf16.mxu0 0
    %3674 = vmatpush1.bf16.msra.mxu0 0
    %3675 = vmatprep.subr.bf16.mxu0 0
    %3676 = vmatpush1.bf16.msra.mxu0 0
    %3677 = vmatprep.subr.bf16.mxu0 0
    %3678 = vmatpush1.bf16.msra.mxu0 0
    %3679 = vmatprep.subr.bf16.mxu0 0
    %3680 = vmatpush1.bf16.msra.mxu0 0
    %3681 = vmatprep.subr.bf16.mxu0 0
    %3682 = vmatpush1.bf16.msra.mxu0 0
    %3683 = vmatprep.subr.bf16.mxu0 0
    %3684 = vmatpush1.bf16.msra.mxu0 0
    %3685 = vmatprep.subr.bf16.mxu0 0
    %3686 = vmatpush1.bf16.msra.mxu0 0
    %3687 = vmatprep.subr.bf16.mxu0 0
    %3688 = vmatpush1.bf16.msra.mxu0 0
    %3689 = vmatprep.subr.bf16.mxu0 0
    %3690 = vmatpush1.bf16.msra.mxu0 0
    %3691 = vmatprep.subr.bf16.mxu0 0
    %3692 = vmatpush1.bf16.msra.mxu0 0
    %3693 = vmatprep.subr.bf16.mxu0 0
    %3694 = vmatpush1.bf16.msra.mxu0 0
    %3695 = vmatprep.mubr.bf16.mxu0 0
    %3696 = vmatmul.mubr.bf16.gmra.mrb[0].mxu0 %v3605
    %v3697 = vpop.f32.mrb[0].mxu0
    %v3698 = vadd.f32 %v3375, %v3697
    %v3699 = vpop.f32.mrb[0].mxu0
    %v3700 = vadd.f32 %v3379, %v3699
    %v3701 = vpop.f32.mrb[0].mxu0
    %v3702 = vadd.f32 %v3375, %v3701
    %v3703 = vpop.f32.mrb[0].mxu0
    %v3704 = vadd.f32 %v3379, %v3703
    %3705 = vmatprep.mubr.bf16.mxu0 0
    %3706 = vmatmul.mubr.bf16.gmra.mrb[0].mxu0 %v3608
    %v3707 = vpop.f32.mrb[0].mxu0
    %v3708 = vadd.f32 %v3375, %v3707
    %v3709 = vpop.f32.mrb[0].mxu0
    %v3710 = vadd.f32 %v3379, %v3709
    %v3711 = vpop.f32.mrb[0].mxu0
    %v3712 = vadd.f32 %v3375, %v3711
    %v3713 = vpop.f32.mrb[0].mxu0
    %v3714 = vadd.f32 %v3379, %v3713
    %3715 = vdwg.mxu0
    %3716 = vmatprep.subr.bf16.mxu0 %v3545
    %3717 = vmatpush1.bf16.msra.mxu0 %v3544
    %3718 = vmatprep.subr.bf16.mxu0 %v3561
    %3719 = vmatpush1.bf16.msra.mxu0 %v3560
    %3720 = vmatprep.subr.bf16.mxu0 0
    %3721 = vmatpush1.bf16.msra.mxu0 0
    %3722 = vmatprep.subr.bf16.mxu0 0
    %3723 = vmatpush1.bf16.msra.mxu0 0
    %3724 = vmatprep.subr.bf16.mxu0 0
    %3725 = vmatpush1.bf16.msra.mxu0 0
    %3726 = vmatprep.subr.bf16.mxu0 0
    %3727 = vmatpush1.bf16.msra.mxu0 0
    %3728 = vmatprep.subr.bf16.mxu0 0
    %3729 = vmatpush1.bf16.msra.mxu0 0
    %3730 = vmatprep.subr.bf16.mxu0 0
    %3731 = vmatpush1.bf16.msra.mxu0 0
    %3732 = vmatprep.subr.bf16.mxu0 0
    %3733 = vmatpush1.bf16.msra.mxu0 0
    %3734 = vmatprep.subr.bf16.mxu0 0
    %3735 = vmatpush1.bf16.msra.mxu0 0
    %3736 = vmatprep.subr.bf16.mxu0 0
    %3737 = vmatpush1.bf16.msra.mxu0 0
    %3738 = vmatprep.subr.bf16.mxu0 0
    %3739 = vmatpush1.bf16.msra.mxu0 0
    %3740 = vmatprep.subr.bf16.mxu0 0
    %3741 = vmatpush1.bf16.msra.mxu0 0
    %3742 = vmatprep.subr.bf16.mxu0 0
    %3743 = vmatpush1.bf16.msra.mxu0 0
    %3744 = vmatprep.subr.bf16.mxu0 0
    %3745 = vmatpush1.bf16.msra.mxu0 0
    %3746 = vmatprep.subr.bf16.mxu0 0
    %3747 = vmatpush1.bf16.msra.mxu0 0
    %3748 = vmatprep.mubr.bf16.mxu0 0
    %3749 = vmatmul.mubr.bf16.gmra.mrb[0].mxu0 %v3605
    %v3750 = vpop.f32.mrb[0].mxu0
    %v3751 = vadd.f32 %v3383, %v3750
    %v3752 = vpop.f32.mrb[0].mxu0
    %v3753 = vadd.f32 %v3387, %v3752
    %v3754 = vpop.f32.mrb[0].mxu0
    %v3755 = vadd.f32 %v3383, %v3754
    %v3756 = vpop.f32.mrb[0].mxu0
    %v3757 = vadd.f32 %v3387, %v3756
    %3758 = vmatprep.mubr.bf16.mxu0 0
    %3759 = vmatmul.mubr.bf16.gmra.mrb[0].mxu0 %v3608
    %v3760 = vpop.f32.mrb[0].mxu0
    %v3761 = vadd.f32 %v3383, %v3760
    %v3762 = vpop.f32.mrb[0].mxu0
    %v3763 = vadd.f32 %v3387, %v3762
    %v3764 = vpop.f32.mrb[0].mxu0
    %v3765 = vadd.f32 %v3383, %v3764
    %v3766 = vpop.f32.mrb[0].mxu0
    %v3767 = vadd.f32 %v3387, %v3766
    %3768 = vdwg.mxu0
    %3769 = vmatprep.subr.bf16.mxu0 %v3547
    %3770 = vmatpush1.bf16.msra.mxu0 %v3546
    %3771 = vmatprep.subr.bf16.mxu0 %v3563
    %3772 = vmatpush1.bf16.msra.mxu0 %v3562
    %3773 = vmatprep.subr.bf16.mxu0 0
    %3774 = vmatpush1.bf16.msra.mxu0 0
    %3775 = vmatprep.subr.bf16.mxu0 0
    %3776 = vmatpush1.bf16.msra.mxu0 0
    %3777 = vmatprep.subr.bf16.mxu0 0
    %3778 = vmatpush1.bf16.msra.mxu0 0
    %3779 = vmatprep.subr.bf16.mxu0 0
    %3780 = vmatpush1.bf16.msra.mxu0 0
    %3781 = vmatprep.subr.bf16.mxu0 0
    %3782 = vmatpush1.bf16.msra.mxu0 0
    %3783 = vmatprep.subr.bf16.mxu0 0
    %3784 = vmatpush1.bf16.msra.mxu0 0
    %3785 = vmatprep.subr.bf16.mxu0 0
    %3786 = vmatpush1.bf16.msra.mxu0 0
    %3787 = vmatprep.subr.bf16.mxu0 0
    %3788 = vmatpush1.bf16.msra.mxu0 0
    %3789 = vmatprep.subr.bf16.mxu0 0
    %3790 = vmatpush1.bf16.msra.mxu0 0
    %3791 = vmatprep.subr.bf16.mxu0 0
    %3792 = vmatpush1.bf16.msra.mxu0 0
    %3793 = vmatprep.subr.bf16.mxu0 0
    %3794 = vmatpush1.bf16.msra.mxu0 0
    %3795 = vmatprep.subr.bf16.mxu0 0
    %3796 = vmatpush1.bf16.msra.mxu0 0
    %3797 = vmatprep.subr.bf16.mxu0 0
    %3798 = vmatpush1.bf16.msra.mxu0 0
    %3799 = vmatprep.subr.bf16.mxu0 0
    %3800 = vmatpush1.bf16.msra.mxu0 0
    %3801 = vmatprep.mubr.bf16.mxu0 0
    %3802 = vmatmul.mubr.bf16.gmra.mrb[0].mxu0 %v3605
    %v3803 = vpop.f32.mrb[0].mxu0
    %v3804 = vadd.f32 %v3391, %v3803
    %v3805 = vpop.f32.mrb[0].mxu0
    %v3806 = vadd.f32 %v3395, %v3805
    %v3807 = vpop.f32.mrb[0].mxu0
    %v3808 = vadd.f32 %v3391, %v3807
    %v3809 = vpop.f32.mrb[0].mxu0
    %v3810 = vadd.f32 %v3395, %v3809
    %3811 = vmatprep.mubr.bf16.mxu0 0
    %3812 = vmatmul.mubr.bf16.gmra.mrb[0].mxu0 %v3608
    %v3813 = vpop.f32.mrb[0].mxu0
    %v3814 = vadd.f32 %v3391, %v3813
    %v3815 = vpop.f32.mrb[0].mxu0
    %v3816 = vadd.f32 %v3395, %v3815
    %v3817 = vpop.f32.mrb[0].mxu0
    %v3818 = vadd.f32 %v3391, %v3817
    %v3819 = vpop.f32.mrb[0].mxu0
    %v3820 = vadd.f32 %v3395, %v3819
    %3821 = vdwg.mxu0
    %3822 = vmatprep.subr.bf16.mxu0 %v3549
    %3823 = vmatpush1.bf16.msra.mxu0 %v3548
    %3824 = vmatprep.subr.bf16.mxu0 %v3565
    %3825 = vmatpush1.bf16.msra.mxu0 %v3564
    %3826 = vmatprep.subr.bf16.mxu0 0
    %3827 = vmatpush1.bf16.msra.mxu0 0
    %3828 = vmatprep.subr.bf16.mxu0 0
    %3829 = vmatpush1.bf16.msra.mxu0 0
    %3830 = vmatprep.subr.bf16.mxu0 0
    %3831 = vmatpush1.bf16.msra.mxu0 0
    %3832 = vmatprep.subr.bf16.mxu0 0
    %3833 = vmatpush1.bf16.msra.mxu0 0
    %3834 = vmatprep.subr.bf16.mxu0 0
    %3835 = vmatpush1.bf16.msra.mxu0 0
    %3836 = vmatprep.subr.bf16.mxu0 0
    %3837 = vmatpush1.bf16.msra.mxu0 0
    %3838 = vmatprep.subr.bf16.mxu0 0
    %3839 = vmatpush1.bf16.msra.mxu0 0
    %3840 = vmatprep.subr.bf16.mxu0 0
    %3841 = vmatpush1.bf16.msra.mxu0 0
    %3842 = vmatprep.subr.bf16.mxu0 0
    %3843 = vmatpush1.bf16.msra.mxu0 0
    %3844 = vmatprep.subr.bf16.mxu0 0
    %3845 = vmatpush1.bf16.msra.mxu0 0
    %3846 = vmatprep.subr.bf16.mxu0 0
    %3847 = vmatpush1.bf16.msra.mxu0 0
    %3848 = vmatprep.subr.bf16.mxu0 0
    %3849 = vmatpush1.bf16.msra.mxu0 0
    %3850 = vmatprep.subr.bf16.mxu0 0
    %3851 = vmatpush1.bf16.msra.mxu0 0
    %3852 = vmatprep.subr.bf16.mxu0 0
    %3853 = vmatpush1.bf16.msra.mxu0 0
    %3854 = vmatprep.mubr.bf16.mxu0 0
    %3855 = vmatmul.mubr.bf16.gmra.mrb[0].mxu0 %v3605
    %v3856 = vpop.f32.mrb[0].mxu0
    %v3857 = vadd.f32 %v3399, %v3856
    %v3858 = vpop.f32.mrb[0].mxu0
    %v3859 = vadd.f32 %v3403, %v3858
    %v3860 = vpop.f32.mrb[0].mxu0
    %v3861 = vadd.f32 %v3399, %v3860
    %v3862 = vpop.f32.mrb[0].mxu0
    %v3863 = vadd.f32 %v3403, %v3862
    %3864 = vmatprep.mubr.bf16.mxu0 0
    %3865 = vmatmul.mubr.bf16.gmra.mrb[0].mxu0 %v3608
    %v3866 = vpop.f32.mrb[0].mxu0
    %v3867 = vadd.f32 %v3399, %v3866
    %v3868 = vpop.f32.mrb[0].mxu0
    %v3869 = vadd.f32 %v3403, %v3868
    %v3870 = vpop.f32.mrb[0].mxu0
    %v3871 = vadd.f32 %v3399, %v3870
    %v3872 = vpop.f32.mrb[0].mxu0
    %v3873 = vadd.f32 %v3403, %v3872
    %3874 = vdwg.mxu0
    %3875 = vmatprep.subr.bf16.mxu0 %v3551
    %3876 = vmatpush1.bf16.msra.mxu0 %v3550
    %3877 = vmatprep.subr.bf16.mxu0 %v3567
    %3878 = vmatpush1.bf16.msra.mxu0 %v3566
    %3879 = vmatprep.subr.bf16.mxu0 0
    %3880 = vmatpush1.bf16.msra.mxu0 0
    %3881 = vmatprep.subr.bf16.mxu0 0
    %3882 = vmatpush1.bf16.msra.mxu0 0
    %3883 = vmatprep.subr.bf16.mxu0 0
    %3884 = vmatpush1.bf16.msra.mxu0 0
    %3885 = vmatprep.subr.bf16.mxu0 0
    %3886 = vmatpush1.bf16.msra.mxu0 0
    %3887 = vmatprep.subr.bf16.mxu0 0
    %3888 = vmatpush1.bf16.msra.mxu0 0
    %3889 = vmatprep.subr.bf16.mxu0 0
    %3890 = vmatpush1.bf16.msra.mxu0 0
    %3891 = vmatprep.subr.bf16.mxu0 0
    %3892 = vmatpush1.bf16.msra.mxu0 0
    %3893 = vmatprep.subr.bf16.mxu0 0
    %3894 = vmatpush1.bf16.msra.mxu0 0
    %3895 = vmatprep.subr.bf16.mxu0 0
    %3896 = vmatpush1.bf16.msra.mxu0 0
    %3897 = vmatprep.subr.bf16.mxu0 0
    %3898 = vmatpush1.bf16.msra.mxu0 0
    %3899 = vmatprep.subr.bf16.mxu0 0
    %3900 = vmatpush1.bf16.msra.mxu0 0
    %3901 = vmatprep.subr.bf16.mxu0 0
    %3902 = vmatpush1.bf16.msra.mxu0 0
    %3903 = vmatprep.subr.bf16.mxu0 0
    %3904 = vmatpush1.bf16.msra.mxu0 0
    %3905 = vmatprep.subr.bf16.mxu0 0
    %3906 = vmatpush1.bf16.msra.mxu0 0
    %3907 = vmatprep.mubr.bf16.mxu0 0
    %3908 = vmatmul.mubr.bf16.gmra.mrb[0].mxu0 %v3605
    %v3909 = vpop.f32.mrb[0].mxu0
    %v3910 = vadd.f32 %v3407, %v3909
    %v3911 = vpop.f32.mrb[0].mxu0
    %v3912 = vadd.f32 %v3411, %v3911
    %v3913 = vpop.f32.mrb[0].mxu0
    %v3914 = vadd.f32 %v3407, %v3913
    %v3915 = vpop.f32.mrb[0].mxu0
    %v3916 = vadd.f32 %v3411, %v3915
    %3917 = vmatprep.mubr.bf16.mxu0 0
    %3918 = vmatmul.mubr.bf16.gmra.mrb[0].mxu0 %v3608
    %v3919 = vpop.f32.mrb[0].mxu0
    %v3920 = vadd.f32 %v3407, %v3919
    %v3921 = vpop.f32.mrb[0].mxu0
    %v3922 = vadd.f32 %v3411, %v3921
    %v3923 = vpop.f32.mrb[0].mxu0
    %v3924 = vadd.f32 %v3407, %v3923
    %v3925 = vpop.f32.mrb[0].mxu0
    %v3926 = vadd.f32 %v3411, %v3925
    %3927 = vdwg.mxu0
    %3928 = vmatprep.subr.bf16.mxu0 %v3553
    %3929 = vmatpush1.bf16.msra.mxu0 %v3552
    %3930 = vmatprep.subr.bf16.mxu0 %v3569
    %3931 = vmatpush1.bf16.msra.mxu0 %v3568
    %3932 = vmatprep.subr.bf16.mxu0 0
    %3933 = vmatpush1.bf16.msra.mxu0 0
    %3934 = vmatprep.subr.bf16.mxu0 0
    %3935 = vmatpush1.bf16.msra.mxu0 0
    %3936 = vmatprep.subr.bf16.mxu0 0
    %3937 = vmatpush1.bf16.msra.mxu0 0
    %3938 = vmatprep.subr.bf16.mxu0 0
    %3939 = vmatpush1.bf16.msra.mxu0 0
    %3940 = vmatprep.subr.bf16.mxu0 0
    %3941 = vmatpush1.bf16.msra.mxu0 0
    %3942 = vmatprep.subr.bf16.mxu0 0
    %3943 = vmatpush1.bf16.msra.mxu0 0
    %3944 = vmatprep.subr.bf16.mxu0 0
    %3945 = vmatpush1.bf16.msra.mxu0 0
    %3946 = vmatprep.subr.bf16.mxu0 0
    %3947 = vmatpush1.bf16.msra.mxu0 0
    %3948 = vmatprep.subr.bf16.mxu0 0
    %3949 = vmatpush1.bf16.msra.mxu0 0
    %3950 = vmatprep.subr.bf16.mxu0 0
    %3951 = vmatpush1.bf16.msra.mxu0 0
    %3952 = vmatprep.subr.bf16.mxu0 0
    %3953 = vmatpush1.bf16.msra.mxu0 0
    %3954 = vmatprep.subr.bf16.mxu0 0
    %3955 = vmatpush1.bf16.msra.mxu0 0
    %3956 = vmatprep.subr.bf16.mxu0 0
    %3957 = vmatpush1.bf16.msra.mxu0 0
    %3958 = vmatprep.subr.bf16.mxu0 0
    %3959 = vmatpush1.bf16.msra.mxu0 0
    %3960 = vmatprep.mubr.bf16.mxu0 0
    %3961 = vmatmul.mubr.bf16.gmra.mrb[0].mxu0 %v3605
    %v3962 = vpop.f32.mrb[0].mxu0
    %v3963 = vadd.f32 %v3415, %v3962
    %v3964 = vpop.f32.mrb[0].mxu0
    %v3965 = vadd.f32 %v3419, %v3964
    %v3966 = vpop.f32.mrb[0].mxu0
    %v3967 = vadd.f32 %v3415, %v3966
    %v3968 = vpop.f32.mrb[0].mxu0
    %v3969 = vadd.f32 %v3419, %v3968
    %3970 = vmatprep.mubr.bf16.mxu0 0
    %3971 = vmatmul.mubr.bf16.gmra.mrb[0].mxu0 %v3608
    %v3972 = vpop.f32.mrb[0].mxu0
    %v3973 = vadd.f32 %v3415, %v3972
    %v3974 = vpop.f32.mrb[0].mxu0
    %v3975 = vadd.f32 %v3419, %v3974
    %v3976 = vpop.f32.mrb[0].mxu0
    %v3977 = vadd.f32 %v3415, %v3976
    %v3978 = vpop.f32.mrb[0].mxu0
    %v3979 = vadd.f32 %v3419, %v3978
    %3980 = vdwg.mxu0
    %3981 = vmatprep.subr.bf16.mxu0 %v3555
    %3982 = vmatpush1.bf16.msra.mxu0 %v3554
    %3983 = vmatprep.subr.bf16.mxu0 %v3571
    %3984 = vmatpush1.bf16.msra.mxu0 %v3570
    %3985 = vmatprep.subr.bf16.mxu0 0
    %3986 = vmatpush1.bf16.msra.mxu0 0
    %3987 = vmatprep.subr.bf16.mxu0 0
    %3988 = vmatpush1.bf16.msra.mxu0 0
    %3989 = vmatprep.subr.bf16.mxu0 0
    %3990 = vmatpush1.bf16.msra.mxu0 0
    %3991 = vmatprep.subr.bf16.mxu0 0
    %3992 = vmatpush1.bf16.msra.mxu0 0
    %3993 = vmatprep.subr.bf16.mxu0 0
    %3994 = vmatpush1.bf16.msra.mxu0 0
    %3995 = vmatprep.subr.bf16.mxu0 0
    %3996 = vmatpush1.bf16.msra.mxu0 0
    %3997 = vmatprep.subr.bf16.mxu0 0
    %3998 = vmatpush1.bf16.msra.mxu0 0
    %3999 = vmatprep.subr.bf16.mxu0 0
    %4000 = vmatpush1.bf16.msra.mxu0 0
    %4001 = vmatprep.subr.bf16.mxu0 0
    %4002 = vmatpush1.bf16.msra.mxu0 0
    %4003 = vmatprep.subr.bf16.mxu0 0
    %4004 = vmatpush1.bf16.msra.mxu0 0
    %4005 = vmatprep.subr.bf16.mxu0 0
    %4006 = vmatpush1.bf16.msra.mxu0 0
    %4007 = vmatprep.subr.bf16.mxu0 0
    %4008 = vmatpush1.bf16.msra.mxu0 0
    %4009 = vmatprep.subr.bf16.mxu0 0
    %4010 = vmatpush1.bf16.msra.mxu0 0
    %4011 = vmatprep.subr.bf16.mxu0 0
    %4012 = vmatpush1.bf16.msra.mxu0 0
    %4013 = vmatprep.mubr.bf16.mxu0 0
    %4014 = vmatmul.mubr.bf16.gmra.mrb[0].mxu0 %v3605
    %v4015 = vpop.f32.mrb[0].mxu0
    %v4016 = vadd.f32 %v3423, %v4015
    %v4017 = vpop.f32.mrb[0].mxu0
    %v4018 = vadd.f32 %v3427, %v4017
    %v4019 = vpop.f32.mrb[0].mxu0
    %v4020 = vadd.f32 %v3423, %v4019
    %v4021 = vpop.f32.mrb[0].mxu0
    %v4022 = vadd.f32 %v3427, %v4021
    %4023 = vmatprep.mubr.bf16.mxu0 0
    %4024 = vmatmul.mubr.bf16.gmra.mrb[0].mxu0 %v3608
    %v4025 = vpop.f32.mrb[0].mxu0
    %v4026 = vadd.f32 %v3423, %v4025
    %v4027 = vpop.f32.mrb[0].mxu0
    %v4028 = vadd.f32 %v3427, %v4027
    %v4029 = vpop.f32.mrb[0].mxu0
    %v4030 = vadd.f32 %v3423, %v4029
    %v4031 = vpop.f32.mrb[0].mxu0
    %v4032 = vadd.f32 %v3427, %v4031
    %4033 = vdwg.mxu0
    %v4034 = vmax.f32 %v3645, 0.0
    %v4035 = vmax.f32 %v3647, 0.0
    %v4036 = vmax.f32 %v3698, 0.0
    %v4037 = vmax.f32 %v3700, 0.0
    %v4038 = vmax.f32 %v3751, 0.0
    %v4039 = vmax.f32 %v3753, 0.0
    %v4040 = vmax.f32 %v3804, 0.0
    %v4041 = vmax.f32 %v3806, 0.0
    %v4042 = vmax.f32 %v3857, 0.0
    %v4043 = vmax.f32 %v3859, 0.0
    %v4044 = vmax.f32 %v3910, 0.0
    %v4045 = vmax.f32 %v3912, 0.0
    %v4046 = vmax.f32 %v3963, 0.0
    %v4047 = vmax.f32 %v3965, 0.0
    %v4048 = vmax.f32 %v4016, 0.0
    %v4049 = vmax.f32 %v4018, 0.0
    %v4050 = vmax.f32 %v3649, 0.0
    %v4051 = vmax.f32 %v3651, 0.0
    %v4052 = vmax.f32 %v3702, 0.0
    %v4053 = vmax.f32 %v3704, 0.0
    %v4054 = vmax.f32 %v3755, 0.0
    %v4055 = vmax.f32 %v3757, 0.0
    %v4056 = vmax.f32 %v3808, 0.0
    %v4057 = vmax.f32 %v3810, 0.0
    %v4058 = vmax.f32 %v3861, 0.0
    %v4059 = vmax.f32 %v3863, 0.0
    %v4060 = vmax.f32 %v3914, 0.0
    %v4061 = vmax.f32 %v3916, 0.0
    %v4062 = vmax.f32 %v3967, 0.0
    %v4063 = vmax.f32 %v3969, 0.0
    %v4064 = vmax.f32 %v4020, 0.0
    %v4065 = vmax.f32 %v4022, 0.0
    %v4066 = vmax.f32 %v3655, 0.0
    %v4067 = vmax.f32 %v3657, 0.0
    %v4068 = vmax.f32 %v3708, 0.0
    %v4069 = vmax.f32 %v3710, 0.0
    %v4070 = vmax.f32 %v3761, 0.0
    %v4071 = vmax.f32 %v3763, 0.0
    %v4072 = vmax.f32 %v3814, 0.0
    %v4073 = vmax.f32 %v3816, 0.0
    %v4074 = vmax.f32 %v3867, 0.0
    %v4075 = vmax.f32 %v3869, 0.0
    %v4076 = vmax.f32 %v3920, 0.0
    %v4077 = vmax.f32 %v3922, 0.0
    %v4078 = vmax.f32 %v3973, 0.0
    %v4079 = vmax.f32 %v3975, 0.0
    %v4080 = vmax.f32 %v4026, 0.0
    %v4081 = vmax.f32 %v4028, 0.0
    %v4082 = vmax.f32 %v3659, 0.0
    %v4083 = vmax.f32 %v3661, 0.0
    %v4084 = vmax.f32 %v3712, 0.0
    %v4085 = vmax.f32 %v3714, 0.0
    %v4086 = vmax.f32 %v3765, 0.0
    %v4087 = vmax.f32 %v3767, 0.0
    %v4088 = vmax.f32 %v3818, 0.0
    %v4089 = vmax.f32 %v3820, 0.0
    %v4090 = vmax.f32 %v3871, 0.0
    %v4091 = vmax.f32 %v3873, 0.0
    %v4092 = vmax.f32 %v3924, 0.0
    %v4093 = vmax.f32 %v3926, 0.0
    %v4094 = vmax.f32 %v3977, 0.0
    %v4095 = vmax.f32 %v3979, 0.0
    %v4096 = vmax.f32 %v4030, 0.0
    %v4097 = vmax.f32 %v4032, 0.0
    %v4098 = vld [vmem:[%s81] sm:$0xf]
    %v4099 = vld [vmem:[%s81 + $0x4] sm:$0xf]
    %v4100 = vld [vmem:[%s81 + $0x8] sm:$0xf]
    %v4101 = vld [vmem:[%s81 + $0xc] sm:$0xf]
    %v4102 = vld [vmem:[%s81 + $0x10] sm:$0xf]
    %v4103 = vld [vmem:[%s81 + $0x14] sm:$0xf]
    %v4104 = vld [vmem:[%s81 + $0x18] sm:$0xf]
    %v4105 = vld [vmem:[%s81 + $0x1c] sm:$0xf]
    %v4106 = vld [vmem:[%s81 + $0x20] sm:$0xf]
    %v4107 = vld [vmem:[%s81 + $0x24] sm:$0xf]
    %v4108 = vld [vmem:[%s81 + $0x28] sm:$0xf]
    %v4109 = vld [vmem:[%s81 + $0x2c] sm:$0xf]
    %v4110 = vld [vmem:[%s81 + $0x30] sm:$0xf]
    %v4111 = vld [vmem:[%s81 + $0x34] sm:$0xf]
    %v4112 = vld [vmem:[%s81 + $0x38] sm:$0xf]
    %v4113 = vld [vmem:[%s81 + $0x3c] sm:$0xf]
    %v4114 = vld [vmem:[%s81 + $0x40] sm:$0xf]
    %v4115 = vld [vmem:[%s81 + $0x44] sm:$0xf]
    %v4116 = vld [vmem:[%s81 + $0x48] sm:$0xf]
    %v4117 = vld [vmem:[%s81 + $0x4c] sm:$0xf]
    %v4118 = vld [vmem:[%s81 + $0x50] sm:$0xf]
    %v4119 = vld [vmem:[%s81 + $0x54] sm:$0xf]
    %v4120 = vld [vmem:[%s81 + $0x58] sm:$0xf]
    %v4121 = vld [vmem:[%s81 + $0x5c] sm:$0xf]
    %v4122 = vld [vmem:[%s81 + $0x60] sm:$0xf]
    %v4123 = vld [vmem:[%s81 + $0x64] sm:$0xf]
    %v4124 = vld [vmem:[%s81 + $0x68] sm:$0xf]
    %v4125 = vld [vmem:[%s81 + $0x6c] sm:$0xf]
    %v4126 = vld [vmem:[%s81 + $0x70] sm:$0xf]
    %v4127 = vld [vmem:[%s81 + $0x74] sm:$0xf]
    %v4128 = vld [vmem:[%s81 + $0x78] sm:$0xf]
    %v4129 = vld [vmem:[%s81 + $0x7c] sm:$0xf]
    %v4130 = vld [vmem:[%s81 + $0x80] sm:$0xf]
    %v4131 = vld [vmem:[%s81 + $0x84] sm:$0xf]
    %v4132 = vld [vmem:[%s81 + $0x88] sm:$0xf]
    %v4133 = vld [vmem:[%s81 + $0x8c] sm:$0xf]
    %v4134 = vld [vmem:[%s81 + $0x90] sm:$0xf]
    %v4135 = vld [vmem:[%s81 + $0x94] sm:$0xf]
    %v4136 = vld [vmem:[%s81 + $0x98] sm:$0xf]
    %v4137 = vld [vmem:[%s81 + $0x9c] sm:$0xf]
    %v4138 = vld [vmem:[%s81 + $0xa0] sm:$0xf]
    %v4139 = vld [vmem:[%s81 + $0xa4] sm:$0xf]
    %v4140 = vld [vmem:[%s81 + $0xa8] sm:$0xf]
    %v4141 = vld [vmem:[%s81 + $0xac] sm:$0xf]
    %v4142 = vld [vmem:[%s81 + $0xb0] sm:$0xf]
    %v4143 = vld [vmem:[%s81 + $0xb4] sm:$0xf]
    %v4144 = vld [vmem:[%s81 + $0xb8] sm:$0xf]
    %v4145 = vld [vmem:[%s81 + $0xbc] sm:$0xf]
    %v4146 = vld [vmem:[%s81 + $0xc0] sm:$0xf]
    %v4147 = vld [vmem:[%s81 + $0xc4] sm:$0xf]
    %v4148 = vld [vmem:[%s81 + $0xc8] sm:$0xf]
    %v4149 = vld [vmem:[%s81 + $0xcc] sm:$0xf]
    %v4150 = vld [vmem:[%s81 + $0xd0] sm:$0xf]
    %v4151 = vld [vmem:[%s81 + $0xd4] sm:$0xf]
    %v4152 = vld [vmem:[%s81 + $0xd8] sm:$0xf]
    %v4153 = vld [vmem:[%s81 + $0xdc] sm:$0xf]
    %v4154 = vld [vmem:[%s81 + $0xe0] sm:$0xf]
    %v4155 = vld [vmem:[%s81 + $0xe4] sm:$0xf]
    %v4156 = vld [vmem:[%s81 + $0xe8] sm:$0xf]
    %v4157 = vld [vmem:[%s81 + $0xec] sm:$0xf]
    %v4158 = vld [vmem:[%s81 + $0xf0] sm:$0xf]
    %v4159 = vld [vmem:[%s81 + $0xf4] sm:$0xf]
    %v4160 = vld [vmem:[%s81 + $0xf8] sm:$0xf]
    %v4161 = vld [vmem:[%s81 + $0xfc] sm:$0xf]
    %v4162 = vld [vmem:[%s81 + $0x100] sm:$0xf]
    %v4163 = vld [vmem:[%s81 + $0x104] sm:$0xf]
    %v4164 = vld [vmem:[%s81 + $0x108] sm:$0xf]
    %v4165 = vld [vmem:[%s81 + $0x10c] sm:$0xf]
    %v4166 = vld [vmem:[%s81 + $0x110] sm:$0xf]
    %v4167 = vld [vmem:[%s81 + $0x114] sm:$0xf]
    %v4168 = vld [vmem:[%s81 + $0x118] sm:$0xf]
    %v4169 = vld [vmem:[%s81 + $0x11c] sm:$0xf]
    %v4170 = vld [vmem:[%s81 + $0x120] sm:$0xf]
    %v4171 = vld [vmem:[%s81 + $0x124] sm:$0xf]
    %v4172 = vld [vmem:[%s81 + $0x128] sm:$0xf]
    %v4173 = vld [vmem:[%s81 + $0x12c] sm:$0xf]
    %v4174 = vld [vmem:[%s81 + $0x130] sm:$0xf]
    %v4175 = vld [vmem:[%s81 + $0x134] sm:$0xf]
    %v4176 = vld [vmem:[%s81 + $0x138] sm:$0xf]
    %v4177 = vld [vmem:[%s81 + $0x13c] sm:$0xf]
    %v4178 = vld [vmem:[%s81 + $0x140] sm:$0xf]
    %v4179 = vld [vmem:[%s81 + $0x144] sm:$0xf]
    %v4180 = vld [vmem:[%s81 + $0x148] sm:$0xf]
    %v4181 = vld [vmem:[%s81 + $0x14c] sm:$0xf]
    %v4182 = vld [vmem:[%s81 + $0x150] sm:$0xf]
    %v4183 = vld [vmem:[%s81 + $0x154] sm:$0xf]
    %v4184 = vld [vmem:[%s81 + $0x158] sm:$0xf]
    %v4185 = vld [vmem:[%s81 + $0x15c] sm:$0xf]
    %v4186 = vld [vmem:[%s81 + $0x160] sm:$0xf]
    %v4187 = vld [vmem:[%s81 + $0x164] sm:$0xf]
    %v4188 = vld [vmem:[%s81 + $0x168] sm:$0xf]
    %v4189 = vld [vmem:[%s81 + $0x16c] sm:$0xf]
    %v4190 = vld [vmem:[%s81 + $0x170] sm:$0xf]
    %v4191 = vld [vmem:[%s81 + $0x174] sm:$0xf]
    %v4192 = vld [vmem:[%s81 + $0x178] sm:$0xf]
    %v4193 = vld [vmem:[%s81 + $0x17c] sm:$0xf]
    %v4194 = vld [vmem:[%s81 + $0x180] sm:$0xf]
    %v4195 = vld [vmem:[%s81 + $0x184] sm:$0xf]
    %v4196 = vld [vmem:[%s81 + $0x188] sm:$0xf]
    %v4197 = vld [vmem:[%s81 + $0x18c] sm:$0xf]
    %v4198 = vld [vmem:[%s81 + $0x190] sm:$0xf]
    %v4199 = vld [vmem:[%s81 + $0x194] sm:$0xf]
    %v4200 = vld [vmem:[%s81 + $0x198] sm:$0xf]
    %v4201 = vld [vmem:[%s81 + $0x19c] sm:$0xf]
    %v4202 = vld [vmem:[%s81 + $0x1a0] sm:$0xf]
    %v4203 = vld [vmem:[%s81 + $0x1a4] sm:$0xf]
    %v4204 = vld [vmem:[%s81 + $0x1a8] sm:$0xf]
    %v4205 = vld [vmem:[%s81 + $0x1ac] sm:$0xf]
    %v4206 = vld [vmem:[%s81 + $0x1b0] sm:$0xf]
    %v4207 = vld [vmem:[%s81 + $0x1b4] sm:$0xf]
    %v4208 = vld [vmem:[%s81 + $0x1b8] sm:$0xf]
    %v4209 = vld [vmem:[%s81 + $0x1bc] sm:$0xf]
    %v4210 = vld [vmem:[%s81 + $0x1c0] sm:$0xf]
    %v4211 = vld [vmem:[%s81 + $0x1c4] sm:$0xf]
    %v4212 = vld [vmem:[%s81 + $0x1c8] sm:$0xf]
    %v4213 = vld [vmem:[%s81 + $0x1cc] sm:$0xf]
    %v4214 = vld [vmem:[%s81 + $0x1d0] sm:$0xf]
    %v4215 = vld [vmem:[%s81 + $0x1d4] sm:$0xf]
    %v4216 = vld [vmem:[%s81 + $0x1d8] sm:$0xf]
    %v4217 = vld [vmem:[%s81 + $0x1dc] sm:$0xf]
    %v4218 = vld [vmem:[%s81 + $0x1e0] sm:$0xf]
    %v4219 = vld [vmem:[%s81 + $0x1e4] sm:$0xf]
    %v4220 = vld [vmem:[%s81 + $0x1e8] sm:$0xf]
    %v4221 = vld [vmem:[%s81 + $0x1ec] sm:$0xf]
    %v4222 = vld [vmem:[%s81 + $0x1f0] sm:$0xf]
    %v4223 = vld [vmem:[%s81 + $0x1f4] sm:$0xf]
    %v4224 = vld [vmem:[%s81 + $0x1f8] sm:$0xf]
    %v4225 = vld [vmem:[%s81 + $0x1fc] sm:$0xf]
    %v4226 = vld [vmem:[%s81 + $0x200] sm:$0xf]
    %v4227 = vld [vmem:[%s81 + $0x204] sm:$0xf]
    %v4228 = vld [vmem:[%s81 + $0x208] sm:$0xf]
    %v4229 = vld [vmem:[%s81 + $0x20c] sm:$0xf]
    %v4230 = vld [vmem:[%s81 + $0x210] sm:$0xf]
    %v4231 = vld [vmem:[%s81 + $0x214] sm:$0xf]
    %v4232 = vld [vmem:[%s81 + $0x218] sm:$0xf]
    %v4233 = vld [vmem:[%s81 + $0x21c] sm:$0xf]
    %v4234 = vld [vmem:[%s81 + $0x220] sm:$0xf]
    %v4235 = vld [vmem:[%s81 + $0x224] sm:$0xf]
    %v4236 = vld [vmem:[%s81 + $0x228] sm:$0xf]
    %v4237 = vld [vmem:[%s81 + $0x22c] sm:$0xf]
    %v4238 = vld [vmem:[%s81 + $0x230] sm:$0xf]
    %v4239 = vld [vmem:[%s81 + $0x234] sm:$0xf]
    %v4240 = vld [vmem:[%s81 + $0x238] sm:$0xf]
    %v4241 = vld [vmem:[%s81 + $0x23c] sm:$0xf]
    %v4242 = vld [vmem:[%s81 + $0x240] sm:$0xf]
    %v4243 = vld [vmem:[%s81 + $0x244] sm:$0xf]
    %v4244 = vld [vmem:[%s81 + $0x248] sm:$0xf]
    %v4245 = vld [vmem:[%s81 + $0x24c] sm:$0xf]
    %v4246 = vld [vmem:[%s81 + $0x250] sm:$0xf]
    %v4247 = vld [vmem:[%s81 + $0x254] sm:$0xf]
    %v4248 = vld [vmem:[%s81 + $0x258] sm:$0xf]
    %v4249 = vld [vmem:[%s81 + $0x25c] sm:$0xf]
    %v4250 = vld [vmem:[%s81 + $0x260] sm:$0xf]
    %v4251 = vld [vmem:[%s81 + $0x264] sm:$0xf]
    %v4252 = vld [vmem:[%s81 + $0x268] sm:$0xf]
    %v4253 = vld [vmem:[%s81 + $0x26c] sm:$0xf]
    %v4254 = vld [vmem:[%s81 + $0x270] sm:$0xf]
    %v4255 = vld [vmem:[%s81 + $0x274] sm:$0xf]
    %v4256 = vld [vmem:[%s81 + $0x278] sm:$0xf]
    %v4257 = vld [vmem:[%s81 + $0x27c] sm:$0xf]
    %v4258 = vld [vmem:[%s81 + $0x280] sm:$0xf]
    %v4259 = vld [vmem:[%s81 + $0x284] sm:$0xf]
    %v4260 = vld [vmem:[%s81 + $0x288] sm:$0xf]
    %v4261 = vld [vmem:[%s81 + $0x28c] sm:$0xf]
    %v4262 = vld [vmem:[%s81 + $0x290] sm:$0xf]
    %v4263 = vld [vmem:[%s81 + $0x294] sm:$0xf]
    %v4264 = vld [vmem:[%s81 + $0x298] sm:$0xf]
    %v4265 = vld [vmem:[%s81 + $0x29c] sm:$0xf]
    %v4266 = vld [vmem:[%s81 + $0x2a0] sm:$0xf]
    %v4267 = vld [vmem:[%s81 + $0x2a4] sm:$0xf]
    %v4268 = vld [vmem:[%s81 + $0x2a8] sm:$0xf]
    %v4269 = vld [vmem:[%s81 + $0x2ac] sm:$0xf]
    %v4270 = vld [vmem:[%s81 + $0x2b0] sm:$0xf]
    %v4271 = vld [vmem:[%s81 + $0x2b4] sm:$0xf]
    %v4272 = vld [vmem:[%s81 + $0x2b8] sm:$0xf]
    %v4273 = vld [vmem:[%s81 + $0x2bc] sm:$0xf]
    %v4274 = vld [vmem:[%s81 + $0x2c0] sm:$0xf]
    %v4275 = vld [vmem:[%s81 + $0x2c4] sm:$0xf]
    %v4276 = vld [vmem:[%s81 + $0x2c8] sm:$0xf]
    %v4277 = vld [vmem:[%s81 + $0x2cc] sm:$0xf]
    %v4278 = vld [vmem:[%s81 + $0x2d0] sm:$0xf]
    %v4279 = vld [vmem:[%s81 + $0x2d4] sm:$0xf]
    %v4280 = vld [vmem:[%s81 + $0x2d8] sm:$0xf]
    %v4281 = vld [vmem:[%s81 + $0x2dc] sm:$0xf]
    %v4282 = vld [vmem:[%s81 + $0x2e0] sm:$0xf]
    %v4283 = vld [vmem:[%s81 + $0x2e4] sm:$0xf]
    %v4284 = vld [vmem:[%s81 + $0x2e8] sm:$0xf]
    %v4285 = vld [vmem:[%s81 + $0x2ec] sm:$0xf]
    %v4286 = vld [vmem:[%s81 + $0x2f0] sm:$0xf]
    %v4287 = vld [vmem:[%s81 + $0x2f4] sm:$0xf]
    %v4288 = vld [vmem:[%s81 + $0x2f8] sm:$0xf]
    %v4289 = vld [vmem:[%s81 + $0x2fc] sm:$0xf]
    %v4290 = vld [vmem:[%s81 + $0x300] sm:$0xf]
    %v4291 = vld [vmem:[%s81 + $0x304] sm:$0xf]
    %v4292 = vld [vmem:[%s81 + $0x308] sm:$0xf]
    %v4293 = vld [vmem:[%s81 + $0x30c] sm:$0xf]
    %v4294 = vld [vmem:[%s81 + $0x310] sm:$0xf]
    %v4295 = vld [vmem:[%s81 + $0x314] sm:$0xf]
    %v4296 = vld [vmem:[%s81 + $0x318] sm:$0xf]
    %v4297 = vld [vmem:[%s81 + $0x31c] sm:$0xf]
    %v4298 = vld [vmem:[%s81 + $0x320] sm:$0xf]
    %v4299 = vld [vmem:[%s81 + $0x324] sm:$0xf]
    %v4300 = vld [vmem:[%s81 + $0x328] sm:$0xf]
    %v4301 = vld [vmem:[%s81 + $0x32c] sm:$0xf]
    %v4302 = vld [vmem:[%s81 + $0x330] sm:$0xf]
    %v4303 = vld [vmem:[%s81 + $0x334] sm:$0xf]
    %v4304 = vld [vmem:[%s81 + $0x338] sm:$0xf]
    %v4305 = vld [vmem:[%s81 + $0x33c] sm:$0xf]
    %v4306 = vld [vmem:[%s81 + $0x340] sm:$0xf]
    %v4307 = vld [vmem:[%s81 + $0x344] sm:$0xf]
    %v4308 = vld [vmem:[%s81 + $0x348] sm:$0xf]
    %v4309 = vld [vmem:[%s81 + $0x34c] sm:$0xf]
    %v4310 = vld [vmem:[%s81 + $0x350] sm:$0xf]
    %v4311 = vld [vmem:[%s81 + $0x354] sm:$0xf]
    %v4312 = vld [vmem:[%s81 + $0x358] sm:$0xf]
    %v4313 = vld [vmem:[%s81 + $0x35c] sm:$0xf]
    %v4314 = vld [vmem:[%s81 + $0x360] sm:$0xf]
    %v4315 = vld [vmem:[%s81 + $0x364] sm:$0xf]
    %v4316 = vld [vmem:[%s81 + $0x368] sm:$0xf]
    %v4317 = vld [vmem:[%s81 + $0x36c] sm:$0xf]
    %v4318 = vld [vmem:[%s81 + $0x370] sm:$0xf]
    %v4319 = vld [vmem:[%s81 + $0x374] sm:$0xf]
    %v4320 = vld [vmem:[%s81 + $0x378] sm:$0xf]
    %v4321 = vld [vmem:[%s81 + $0x37c] sm:$0xf]
    %v4322 = vld [vmem:[%s81 + $0x380] sm:$0xf]
    %v4323 = vld [vmem:[%s81 + $0x384] sm:$0xf]
    %v4324 = vld [vmem:[%s81 + $0x388] sm:$0xf]
    %v4325 = vld [vmem:[%s81 + $0x38c] sm:$0xf]
    %v4326 = vld [vmem:[%s81 + $0x390] sm:$0xf]
    %v4327 = vld [vmem:[%s81 + $0x394] sm:$0xf]
    %v4328 = vld [vmem:[%s81 + $0x398] sm:$0xf]
    %v4329 = vld [vmem:[%s81 + $0x39c] sm:$0xf]
    %v4330 = vld [vmem:[%s81 + $0x3a0] sm:$0xf]
    %v4331 = vld [vmem:[%s81 + $0x3a4] sm:$0xf]
    %v4332 = vld [vmem:[%s81 + $0x3a8] sm:$0xf]
    %v4333 = vld [vmem:[%s81 + $0x3ac] sm:$0xf]
    %v4334 = vld [vmem:[%s81 + $0x3b0] sm:$0xf]
    %v4335 = vld [vmem:[%s81 + $0x3b4] sm:$0xf]
    %v4336 = vld [vmem:[%s81 + $0x3b8] sm:$0xf]
    %v4337 = vld [vmem:[%s81 + $0x3bc] sm:$0xf]
    %v4338 = vld [vmem:[%s81 + $0x3c0] sm:$0xf]
    %v4339 = vld [vmem:[%s81 + $0x3c4] sm:$0xf]
    %v4340 = vld [vmem:[%s81 + $0x3c8] sm:$0xf]
    %v4341 = vld [vmem:[%s81 + $0x3cc] sm:$0xf]
    %v4342 = vld [vmem:[%s81 + $0x3d0] sm:$0xf]
    %v4343 = vld [vmem:[%s81 + $0x3d4] sm:$0xf]
    %v4344 = vld [vmem:[%s81 + $0x3d8] sm:$0xf]
    %v4345 = vld [vmem:[%s81 + $0x3dc] sm:$0xf]
    %v4346 = vld [vmem:[%s81 + $0x3e0] sm:$0xf]
    %v4347 = vld [vmem:[%s81 + $0x3e4] sm:$0xf]
    %v4348 = vld [vmem:[%s81 + $0x3e8] sm:$0xf]
    %v4349 = vld [vmem:[%s81 + $0x3ec] sm:$0xf]
    %v4350 = vld [vmem:[%s81 + $0x3f0] sm:$0xf]
    %v4351 = vld [vmem:[%s81 + $0x3f4] sm:$0xf]
    %v4352 = vld [vmem:[%s81 + $0x3f8] sm:$0xf]
    %v4353 = vld [vmem:[%s81 + $0x3fc] sm:$0xf]
    %v4354 = vld [vmem:[%s83] sm:$0x1]
    %v4355 = vpack.c.bf16 %v4050, %v4034
    %v4356 = vpack.c.bf16 %v4051, %v4035
    %v4357 = vpack.c.bf16 %v4052, %v4036
    %v4358 = vpack.c.bf16 %v4053, %v4037
    %v4359 = vpack.c.bf16 %v4054, %v4038
    %v4360 = vpack.c.bf16 %v4055, %v4039
    %v4361 = vpack.c.bf16 %v4056, %v4040
    %v4362 = vpack.c.bf16 %v4057, %v4041
    %v4363 = vpack.c.bf16 %v4058, %v4042
    %v4364 = vpack.c.bf16 %v4059, %v4043
    %v4365 = vpack.c.bf16 %v4060, %v4044
    %v4366 = vpack.c.bf16 %v4061, %v4045
    %v4367 = vpack.c.bf16 %v4062, %v4046
    %v4368 = vpack.c.bf16 %v4063, %v4047
    %v4369 = vpack.c.bf16 %v4064, %v4048
    %v4370 = vpack.c.bf16 %v4065, %v4049
    %v4371 = vpack.c.bf16 %v4082, %v4066
    %v4372 = vpack.c.bf16 %v4083, %v4067
    %v4373 = vpack.c.bf16 %v4084, %v4068
    %v4374 = vpack.c.bf16 %v4085, %v4069
    %v4375 = vpack.c.bf16 %v4086, %v4070
    %v4376 = vpack.c.bf16 %v4087, %v4071
    %v4377 = vpack.c.bf16 %v4088, %v4072
    %v4378 = vpack.c.bf16 %v4089, %v4073
    %v4379 = vpack.c.bf16 %v4090, %v4074
    %v4380 = vpack.c.bf16 %v4091, %v4075
    %v4381 = vpack.c.bf16 %v4092, %v4076
    %v4382 = vpack.c.bf16 %v4093, %v4077
    %v4383 = vpack.c.bf16 %v4094, %v4078
    %v4384 = vpack.c.bf16 %v4095, %v4079
    %v4385 = vpack.c.bf16 %v4096, %v4080
    %v4386 = vpack.c.bf16 %v4097, %v4081
    %v4388 = vlaneseq
    %v4389 = vshrl.u32 %v4388, 7
    %v4390 = vsub.s32 0, %v4389
    %v4391 = vrot.slane %v4354, %v4390
    %v4649 = vunpack.c.l.b16 %v4098
    %v4650 = vunpack.c.l.b16 %v4099
    %v4651 = vunpack.c.l.b16 %v4100
    %v4652 = vunpack.c.l.b16 %v4101
    %v4653 = vunpack.c.l.b16 %v4102
    %v4654 = vunpack.c.l.b16 %v4103
    %v4655 = vunpack.c.l.b16 %v4104
    %v4656 = vunpack.c.l.b16 %v4105
    %v4657 = vunpack.c.l.b16 %v4106
    %v4658 = vunpack.c.l.b16 %v4107
    %v4659 = vunpack.c.l.b16 %v4108
    %v4660 = vunpack.c.l.b16 %v4109
    %v4661 = vunpack.c.l.b16 %v4110
    %v4662 = vunpack.c.l.b16 %v4111
    %v4663 = vunpack.c.l.b16 %v4112
    %v4664 = vunpack.c.l.b16 %v4113
    %v4665 = vunpack.c.l.b16 %v4114
    %v4666 = vunpack.c.l.b16 %v4115
    %v4667 = vunpack.c.l.b16 %v4116
    %v4668 = vunpack.c.l.b16 %v4117
    %v4669 = vunpack.c.l.b16 %v4118
    %v4670 = vunpack.c.l.b16 %v4119
    %v4671 = vunpack.c.l.b16 %v4120
    %v4672 = vunpack.c.l.b16 %v4121
    %v4673 = vunpack.c.l.b16 %v4122
    %v4674 = vunpack.c.l.b16 %v4123
    %v4675 = vunpack.c.l.b16 %v4124
    %v4676 = vunpack.c.l.b16 %v4125
    %v4677 = vunpack.c.l.b16 %v4126
    %v4678 = vunpack.c.l.b16 %v4127
    %v4679 = vunpack.c.l.b16 %v4128
    %v4680 = vunpack.c.l.b16 %v4129
    %v4681 = vunpack.c.l.b16 %v4130
    %v4682 = vunpack.c.l.b16 %v4131
    %v4683 = vunpack.c.l.b16 %v4132
    %v4684 = vunpack.c.l.b16 %v4133
    %v4685 = vunpack.c.l.b16 %v4134
    %v4686 = vunpack.c.l.b16 %v4135
    %v4687 = vunpack.c.l.b16 %v4136
    %v4688 = vunpack.c.l.b16 %v4137
    %v4689 = vunpack.c.l.b16 %v4138
    %v4690 = vunpack.c.l.b16 %v4139
    %v4691 = vunpack.c.l.b16 %v4140
    %v4692 = vunpack.c.l.b16 %v4141
    %v4693 = vunpack.c.l.b16 %v4142
    %v4694 = vunpack.c.l.b16 %v4143
    %v4695 = vunpack.c.l.b16 %v4144
    %v4696 = vunpack.c.l.b16 %v4145
    %v4697 = vunpack.c.l.b16 %v4146
    %v4698 = vunpack.c.l.b16 %v4147
    %v4699 = vunpack.c.l.b16 %v4148
    %v4700 = vunpack.c.l.b16 %v4149
    %v4701 = vunpack.c.l.b16 %v4150
    %v4702 = vunpack.c.l.b16 %v4151
    %v4703 = vunpack.c.l.b16 %v4152
    %v4704 = vunpack.c.l.b16 %v4153
    %v4705 = vunpack.c.l.b16 %v4154
    %v4706 = vunpack.c.l.b16 %v4155
    %v4707 = vunpack.c.l.b16 %v4156
    %v4708 = vunpack.c.l.b16 %v4157
    %v4709 = vunpack.c.l.b16 %v4158
    %v4710 = vunpack.c.l.b16 %v4159
    %v4711 = vunpack.c.l.b16 %v4160
    %v4712 = vunpack.c.l.b16 %v4161
    %v4713 = vunpack.c.l.b16 %v4162
    %v4714 = vunpack.c.l.b16 %v4163
    %v4715 = vunpack.c.l.b16 %v4164
    %v4716 = vunpack.c.l.b16 %v4165
    %v4717 = vunpack.c.l.b16 %v4166
    %v4718 = vunpack.c.l.b16 %v4167
    %v4719 = vunpack.c.l.b16 %v4168
    %v4720 = vunpack.c.l.b16 %v4169
    %v4721 = vunpack.c.l.b16 %v4170
    %v4722 = vunpack.c.l.b16 %v4171
    %v4723 = vunpack.c.l.b16 %v4172
    %v4724 = vunpack.c.l.b16 %v4173
    %v4725 = vunpack.c.l.b16 %v4174
    %v4726 = vunpack.c.l.b16 %v4175
    %v4727 = vunpack.c.l.b16 %v4176
    %v4728 = vunpack.c.l.b16 %v4177
    %v4729 = vunpack.c.l.b16 %v4178
    %v4730 = vunpack.c.l.b16 %v4179
    %v4731 = vunpack.c.l.b16 %v4180
    %v4732 = vunpack.c.l.b16 %v4181
    %v4733 = vunpack.c.l.b16 %v4182
    %v4734 = vunpack.c.l.b16 %v4183
    %v4735 = vunpack.c.l.b16 %v4184
    %v4736 = vunpack.c.l.b16 %v4185
    %v4737 = vunpack.c.l.b16 %v4186
    %v4738 = vunpack.c.l.b16 %v4187
    %v4739 = vunpack.c.l.b16 %v4188
    %v4740 = vunpack.c.l.b16 %v4189
    %v4741 = vunpack.c.l.b16 %v4190
    %v4742 = vunpack.c.l.b16 %v4191
    %v4743 = vunpack.c.l.b16 %v4192
    %v4744 = vunpack.c.l.b16 %v4193
    %v4745 = vunpack.c.l.b16 %v4194
    %v4746 = vunpack.c.l.b16 %v4195
    %v4747 = vunpack.c.l.b16 %v4196
    %v4748 = vunpack.c.l.b16 %v4197
    %v4749 = vunpack.c.l.b16 %v4198
    %v4750 = vunpack.c.l.b16 %v4199
    %v4751 = vunpack.c.l.b16 %v4200
    %v4752 = vunpack.c.l.b16 %v4201
    %v4753 = vunpack.c.l.b16 %v4202
    %v4754 = vunpack.c.l.b16 %v4203
    %v4755 = vunpack.c.l.b16 %v4204
    %v4756 = vunpack.c.l.b16 %v4205
    %v4757 = vunpack.c.l.b16 %v4206
    %v4758 = vunpack.c.l.b16 %v4207
    %v4759 = vunpack.c.l.b16 %v4208
    %v4760 = vunpack.c.l.b16 %v4209
    %v4761 = vunpack.c.l.b16 %v4210
    %v4762 = vunpack.c.l.b16 %v4211
    %v4763 = vunpack.c.l.b16 %v4212
    %v4764 = vunpack.c.l.b16 %v4213
    %v4765 = vunpack.c.l.b16 %v4214
    %v4766 = vunpack.c.l.b16 %v4215
    %v4767 = vunpack.c.l.b16 %v4216
    %v4768 = vunpack.c.l.b16 %v4217
    %v4769 = vunpack.c.l.b16 %v4218
    %v4770 = vunpack.c.l.b16 %v4219
    %v4771 = vunpack.c.l.b16 %v4220
    %v4772 = vunpack.c.l.b16 %v4221
    %v4773 = vunpack.c.l.b16 %v4222
    %v4774 = vunpack.c.l.b16 %v4223
    %v4775 = vunpack.c.l.b16 %v4224
    %v4776 = vunpack.c.l.b16 %v4225
    %v4777 = vunpack.c.l.b16 %v4226
    %v4778 = vunpack.c.l.b16 %v4227
    %v4779 = vunpack.c.l.b16 %v4228
    %v4780 = vunpack.c.l.b16 %v4229
    %v4781 = vunpack.c.l.b16 %v4230
    %v4782 = vunpack.c.l.b16 %v4231
    %v4783 = vunpack.c.l.b16 %v4232
    %v4784 = vunpack.c.l.b16 %v4233
    %v4785 = vunpack.c.l.b16 %v4234
    %v4786 = vunpack.c.l.b16 %v4235
    %v4787 = vunpack.c.l.b16 %v4236
    %v4788 = vunpack.c.l.b16 %v4237
    %v4789 = vunpack.c.l.b16 %v4238
    %v4790 = vunpack.c.l.b16 %v4239
    %v4791 = vunpack.c.l.b16 %v4240
    %v4792 = vunpack.c.l.b16 %v4241
    %v4793 = vunpack.c.l.b16 %v4242
    %v4794 = vunpack.c.l.b16 %v4243
    %v4795 = vunpack.c.l.b16 %v4244
    %v4796 = vunpack.c.l.b16 %v4245
    %v4797 = vunpack.c.l.b16 %v4246
    %v4798 = vunpack.c.l.b16 %v4247
    %v4799 = vunpack.c.l.b16 %v4248
    %v4800 = vunpack.c.l.b16 %v4249
    %v4801 = vunpack.c.l.b16 %v4250
    %v4802 = vunpack.c.l.b16 %v4251
    %v4803 = vunpack.c.l.b16 %v4252
    %v4804 = vunpack.c.l.b16 %v4253
    %v4805 = vunpack.c.l.b16 %v4254
    %v4806 = vunpack.c.l.b16 %v4255
    %v4807 = vunpack.c.l.b16 %v4256
    %v4808 = vunpack.c.l.b16 %v4257
    %v4809 = vunpack.c.l.b16 %v4258
    %v4810 = vunpack.c.l.b16 %v4259
    %v4811 = vunpack.c.l.b16 %v4260
    %v4812 = vunpack.c.l.b16 %v4261
    %v4813 = vunpack.c.l.b16 %v4262
    %v4814 = vunpack.c.l.b16 %v4263
    %v4815 = vunpack.c.l.b16 %v4264
    %v4816 = vunpack.c.l.b16 %v4265
    %v4817 = vunpack.c.l.b16 %v4266
    %v4818 = vunpack.c.l.b16 %v4267
    %v4819 = vunpack.c.l.b16 %v4268
    %v4820 = vunpack.c.l.b16 %v4269
    %v4821 = vunpack.c.l.b16 %v4270
    %v4822 = vunpack.c.l.b16 %v4271
    %v4823 = vunpack.c.l.b16 %v4272
    %v4824 = vunpack.c.l.b16 %v4273
    %v4825 = vunpack.c.l.b16 %v4274
    %v4826 = vunpack.c.l.b16 %v4275
    %v4827 = vunpack.c.l.b16 %v4276
    %v4828 = vunpack.c.l.b16 %v4277
    %v4829 = vunpack.c.l.b16 %v4278
    %v4830 = vunpack.c.l.b16 %v4279
    %v4831 = vunpack.c.l.b16 %v4280
    %v4832 = vunpack.c.l.b16 %v4281
    %v4833 = vunpack.c.l.b16 %v4282
    %v4834 = vunpack.c.l.b16 %v4283
    %v4835 = vunpack.c.l.b16 %v4284
    %v4836 = vunpack.c.l.b16 %v4285
    %v4837 = vunpack.c.l.b16 %v4286
    %v4838 = vunpack.c.l.b16 %v4287
    %v4839 = vunpack.c.l.b16 %v4288
    %v4840 = vunpack.c.l.b16 %v4289
    %v4841 = vunpack.c.l.b16 %v4290
    %v4842 = vunpack.c.l.b16 %v4291
    %v4843 = vunpack.c.l.b16 %v4292
    %v4844 = vunpack.c.l.b16 %v4293
    %v4845 = vunpack.c.l.b16 %v4294
    %v4846 = vunpack.c.l.b16 %v4295
    %v4847 = vunpack.c.l.b16 %v4296
    %v4848 = vunpack.c.l.b16 %v4297
    %v4849 = vunpack.c.l.b16 %v4298
    %v4850 = vunpack.c.l.b16 %v4299
    %v4851 = vunpack.c.l.b16 %v4300
    %v4852 = vunpack.c.l.b16 %v4301
    %v4853 = vunpack.c.l.b16 %v4302
    %v4854 = vunpack.c.l.b16 %v4303
    %v4855 = vunpack.c.l.b16 %v4304
    %v4856 = vunpack.c.l.b16 %v4305
    %v4857 = vunpack.c.l.b16 %v4306
    %v4858 = vunpack.c.l.b16 %v4307
    %v4859 = vunpack.c.l.b16 %v4308
    %v4860 = vunpack.c.l.b16 %v4309
    %v4861 = vunpack.c.l.b16 %v4310
    %v4862 = vunpack.c.l.b16 %v4311
    %v4863 = vunpack.c.l.b16 %v4312
    %v4864 = vunpack.c.l.b16 %v4313
    %v4865 = vunpack.c.l.b16 %v4314
    %v4866 = vunpack.c.l.b16 %v4315
    %v4867 = vunpack.c.l.b16 %v4316
    %v4868 = vunpack.c.l.b16 %v4317
    %v4869 = vunpack.c.l.b16 %v4318
    %v4870 = vunpack.c.l.b16 %v4319
    %v4871 = vunpack.c.l.b16 %v4320
    %v4872 = vunpack.c.l.b16 %v4321
    %v4873 = vunpack.c.l.b16 %v4322
    %v4874 = vunpack.c.l.b16 %v4323
    %v4875 = vunpack.c.l.b16 %v4324
    %v4876 = vunpack.c.l.b16 %v4325
    %v4877 = vunpack.c.l.b16 %v4326
    %v4878 = vunpack.c.l.b16 %v4327
    %v4879 = vunpack.c.l.b16 %v4328
    %v4880 = vunpack.c.l.b16 %v4329
    %v4881 = vunpack.c.l.b16 %v4330
    %v4882 = vunpack.c.l.b16 %v4331
    %v4883 = vunpack.c.l.b16 %v4332
    %v4884 = vunpack.c.l.b16 %v4333
    %v4885 = vunpack.c.l.b16 %v4334
    %v4886 = vunpack.c.l.b16 %v4335
    %v4887 = vunpack.c.l.b16 %v4336
    %v4888 = vunpack.c.l.b16 %v4337
    %v4889 = vunpack.c.l.b16 %v4338
    %v4890 = vunpack.c.l.b16 %v4339
    %v4891 = vunpack.c.l.b16 %v4340
    %v4892 = vunpack.c.l.b16 %v4341
    %v4893 = vunpack.c.l.b16 %v4342
    %v4894 = vunpack.c.l.b16 %v4343
    %v4895 = vunpack.c.l.b16 %v4344
    %v4896 = vunpack.c.l.b16 %v4345
    %v4897 = vunpack.c.l.b16 %v4346
    %v4898 = vunpack.c.l.b16 %v4347
    %v4899 = vunpack.c.l.b16 %v4348
    %v4900 = vunpack.c.l.b16 %v4349
    %v4901 = vunpack.c.l.b16 %v4350
    %v4902 = vunpack.c.l.b16 %v4351
    %v4903 = vunpack.c.l.b16 %v4352
    %v4904 = vunpack.c.l.b16 %v4353
    %v4905 = vpack.c.b16 %v4650, %v4649
    %v4906 = vpack.c.b16 %v4652, %v4651
    %v4907 = vpack.c.b16 %v4654, %v4653
    %v4908 = vpack.c.b16 %v4656, %v4655
    %v4909 = vpack.c.b16 %v4658, %v4657
    %v4910 = vpack.c.b16 %v4660, %v4659
    %v4911 = vpack.c.b16 %v4662, %v4661
    %v4912 = vpack.c.b16 %v4664, %v4663
    %v4913 = vpack.c.b16 %v4666, %v4665
    %v4914 = vpack.c.b16 %v4668, %v4667
    %v4915 = vpack.c.b16 %v4670, %v4669
    %v4916 = vpack.c.b16 %v4672, %v4671
    %v4917 = vpack.c.b16 %v4674, %v4673
    %v4918 = vpack.c.b16 %v4676, %v4675
    %v4919 = vpack.c.b16 %v4678, %v4677
    %v4920 = vpack.c.b16 %v4680, %v4679
    %v4921 = vpack.c.b16 %v4682, %v4681
    %v4922 = vpack.c.b16 %v4684, %v4683
    %v4923 = vpack.c.b16 %v4686, %v4685
    %v4924 = vpack.c.b16 %v4688, %v4687
    %v4925 = vpack.c.b16 %v4690, %v4689
    %v4926 = vpack.c.b16 %v4692, %v4691
    %v4927 = vpack.c.b16 %v4694, %v4693
    %v4928 = vpack.c.b16 %v4696, %v4695
    %v4929 = vpack.c.b16 %v4698, %v4697
    %v4930 = vpack.c.b16 %v4700, %v4699
    %v4931 = vpack.c.b16 %v4702, %v4701
    %v4932 = vpack.c.b16 %v4704, %v4703
    %v4933 = vpack.c.b16 %v4706, %v4705
    %v4934 = vpack.c.b16 %v4708, %v4707
    %v4935 = vpack.c.b16 %v4710, %v4709
    %v4936 = vpack.c.b16 %v4712, %v4711
    %v4937 = vpack.c.b16 %v4714, %v4713
    %v4938 = vpack.c.b16 %v4716, %v4715
    %v4939 = vpack.c.b16 %v4718, %v4717
    %v4940 = vpack.c.b16 %v4720, %v4719
    %v4941 = vpack.c.b16 %v4722, %v4721
    %v4942 = vpack.c.b16 %v4724, %v4723
    %v4943 = vpack.c.b16 %v4726, %v4725
    %v4944 = vpack.c.b16 %v4728, %v4727
    %v4945 = vpack.c.b16 %v4730, %v4729
    %v4946 = vpack.c.b16 %v4732, %v4731
    %v4947 = vpack.c.b16 %v4734, %v4733
    %v4948 = vpack.c.b16 %v4736, %v4735
    %v4949 = vpack.c.b16 %v4738, %v4737
    %v4950 = vpack.c.b16 %v4740, %v4739
    %v4951 = vpack.c.b16 %v4742, %v4741
    %v4952 = vpack.c.b16 %v4744, %v4743
    %v4953 = vpack.c.b16 %v4746, %v4745
    %v4954 = vpack.c.b16 %v4748, %v4747
    %v4955 = vpack.c.b16 %v4750, %v4749
    %v4956 = vpack.c.b16 %v4752, %v4751
    %v4957 = vpack.c.b16 %v4754, %v4753
    %v4958 = vpack.c.b16 %v4756, %v4755
    %v4959 = vpack.c.b16 %v4758, %v4757
    %v4960 = vpack.c.b16 %v4760, %v4759
    %v4961 = vpack.c.b16 %v4762, %v4761
    %v4962 = vpack.c.b16 %v4764, %v4763
    %v4963 = vpack.c.b16 %v4766, %v4765
    %v4964 = vpack.c.b16 %v4768, %v4767
    %v4965 = vpack.c.b16 %v4770, %v4769
    %v4966 = vpack.c.b16 %v4772, %v4771
    %v4967 = vpack.c.b16 %v4774, %v4773
    %v4968 = vpack.c.b16 %v4776, %v4775
    %v4969 = vpack.c.b16 %v4778, %v4777
    %v4970 = vpack.c.b16 %v4780, %v4779
    %v4971 = vpack.c.b16 %v4782, %v4781
    %v4972 = vpack.c.b16 %v4784, %v4783
    %v4973 = vpack.c.b16 %v4786, %v4785
    %v4974 = vpack.c.b16 %v4788, %v4787
    %v4975 = vpack.c.b16 %v4790, %v4789
    %v4976 = vpack.c.b16 %v4792, %v4791
    %v4977 = vpack.c.b16 %v4794, %v4793
    %v4978 = vpack.c.b16 %v4796, %v4795
    %v4979 = vpack.c.b16 %v4798, %v4797
    %v4980 = vpack.c.b16 %v4800, %v4799
    %v4981 = vpack.c.b16 %v4802, %v4801
    %v4982 = vpack.c.b16 %v4804, %v4803
    %v4983 = vpack.c.b16 %v4806, %v4805
    %v4984 = vpack.c.b16 %v4808, %v4807
    %v4985 = vpack.c.b16 %v4810, %v4809
    %v4986 = vpack.c.b16 %v4812, %v4811
    %v4987 = vpack.c.b16 %v4814, %v4813
    %v4988 = vpack.c.b16 %v4816, %v4815
    %v4989 = vpack.c.b16 %v4818, %v4817
    %v4990 = vpack.c.b16 %v4820, %v4819
    %v4991 = vpack.c.b16 %v4822, %v4821
    %v4992 = vpack.c.b16 %v4824, %v4823
    %v4993 = vpack.c.b16 %v4826, %v4825
    %v4994 = vpack.c.b16 %v4828, %v4827
    %v4995 = vpack.c.b16 %v4830, %v4829
    %v4996 = vpack.c.b16 %v4832, %v4831
    %v4997 = vpack.c.b16 %v4834, %v4833
    %v4998 = vpack.c.b16 %v4836, %v4835
    %v4999 = vpack.c.b16 %v4838, %v4837
    %v5000 = vpack.c.b16 %v4840, %v4839
    %v5001 = vpack.c.b16 %v4842, %v4841
    %v5002 = vpack.c.b16 %v4844, %v4843
    %v5003 = vpack.c.b16 %v4846, %v4845
    %v5004 = vpack.c.b16 %v4848, %v4847
    %v5005 = vpack.c.b16 %v4850, %v4849
    %v5006 = vpack.c.b16 %v4852, %v4851
    %v5007 = vpack.c.b16 %v4854, %v4853
    %v5008 = vpack.c.b16 %v4856, %v4855
    %v5009 = vpack.c.b16 %v4858, %v4857
    %v5010 = vpack.c.b16 %v4860, %v4859
    %v5011 = vpack.c.b16 %v4862, %v4861
    %v5012 = vpack.c.b16 %v4864, %v4863
    %v5013 = vpack.c.b16 %v4866, %v4865
    %v5014 = vpack.c.b16 %v4868, %v4867
    %v5015 = vpack.c.b16 %v4870, %v4869
    %v5016 = vpack.c.b16 %v4872, %v4871
    %v5017 = vpack.c.b16 %v4874, %v4873
    %v5018 = vpack.c.b16 %v4876, %v4875
    %v5019 = vpack.c.b16 %v4878, %v4877
    %v5020 = vpack.c.b16 %v4880, %v4879
    %v5021 = vpack.c.b16 %v4882, %v4881
    %v5022 = vpack.c.b16 %v4884, %v4883
    %v5023 = vpack.c.b16 %v4886, %v4885
    %v5024 = vpack.c.b16 %v4888, %v4887
    %v5025 = vpack.c.b16 %v4890, %v4889
    %v5026 = vpack.c.b16 %v4892, %v4891
    %v5027 = vpack.c.b16 %v4894, %v4893
    %v5028 = vpack.c.b16 %v4896, %v4895
    %v5029 = vpack.c.b16 %v4898, %v4897
    %v5030 = vpack.c.b16 %v4900, %v4899
    %v5031 = vpack.c.b16 %v4902, %v4901
    %v5032 = vpack.c.b16 %v4904, %v4903
    %5161 = vmatprep.subr.bf16.mxu0 0
    %5162 = vmatpush1.bf16.msra.mxu0 %v4905
    %5163 = vmatprep.subr.bf16.mxu0 0
    %5164 = vmatpush1.bf16.msra.mxu0 %v4906
    %5165 = vmatprep.subr.bf16.mxu0 0
    %5166 = vmatpush1.bf16.msra.mxu0 %v4907
    %5167 = vmatprep.subr.bf16.mxu0 0
    %5168 = vmatpush1.bf16.msra.mxu0 %v4908
    %5169 = vmatprep.subr.bf16.mxu0 0
    %5170 = vmatpush1.bf16.msra.mxu0 %v4909
    %5171 = vmatprep.subr.bf16.mxu0 0
    %5172 = vmatpush1.bf16.msra.mxu0 %v4910
    %5173 = vmatprep.subr.bf16.mxu0 0
    %5174 = vmatpush1.bf16.msra.mxu0 %v4911
    %5175 = vmatprep.subr.bf16.mxu0 0
    %5176 = vmatpush1.bf16.msra.mxu0 %v4912
    %5177 = vmatprep.subr.bf16.mxu0 0
    %5178 = vmatpush1.bf16.msra.mxu0 %v4913
    %5179 = vmatprep.subr.bf16.mxu0 0
    %5180 = vmatpush1.bf16.msra.mxu0 %v4914
    %5181 = vmatprep.subr.bf16.mxu0 0
    %5182 = vmatpush1.bf16.msra.mxu0 %v4915
    %5183 = vmatprep.subr.bf16.mxu0 0
    %5184 = vmatpush1.bf16.msra.mxu0 %v4916
    %5185 = vmatprep.subr.bf16.mxu0 0
    %5186 = vmatpush1.bf16.msra.mxu0 %v4917
    %5187 = vmatprep.subr.bf16.mxu0 0
    %5188 = vmatpush1.bf16.msra.mxu0 %v4918
    %5189 = vmatprep.subr.bf16.mxu0 0
    %5190 = vmatpush1.bf16.msra.mxu0 %v4919
    %5191 = vmatprep.subr.bf16.mxu0 0
    %5192 = vmatpush1.bf16.msra.mxu0 %v4920
    %5193 = vmatprep.mubr.bf16.mxu0 %v4356
    %5194 = vmatmul.mubr.bf16.gmra.mrb[0].mxu0 %v4355
    %v5195 = vpop.f32.mrb[0].mxu0
    %v5196 = vadd.f32 %v4391, %v5195
    %v5197 = vpop.f32.mrb[0].mxu0
    %v5198 = vpop.f32.mrb[0].mxu0
    %v5199 = vadd.f32 %v4391, %v5198
    %v5200 = vpop.f32.mrb[0].mxu0
    %5201 = vmatprep.mubr.bf16.mxu0 %v4372
    %5202 = vmatmul.mubr.bf16.gmra.mrb[0].mxu0 %v4371
    %v5203 = vpop.f32.mrb[0].mxu0
    %v5204 = vadd.f32 %v4391, %v5203
    %v5205 = vpop.f32.mrb[0].mxu0
    %v5206 = vpop.f32.mrb[0].mxu0
    %v5207 = vadd.f32 %v4391, %v5206
    %v5208 = vpop.f32.mrb[0].mxu0
    %5209 = vdwg.mxu0
    %5210 = vmatprep.subr.bf16.mxu0 0
    %5211 = vmatpush1.bf16.msra.mxu0 %v4921
    %5212 = vmatprep.subr.bf16.mxu0 0
    %5213 = vmatpush1.bf16.msra.mxu0 %v4922
    %5214 = vmatprep.subr.bf16.mxu0 0
    %5215 = vmatpush1.bf16.msra.mxu0 %v4923
    %5216 = vmatprep.subr.bf16.mxu0 0
    %5217 = vmatpush1.bf16.msra.mxu0 %v4924
    %5218 = vmatprep.subr.bf16.mxu0 0
    %5219 = vmatpush1.bf16.msra.mxu0 %v4925
    %5220 = vmatprep.subr.bf16.mxu0 0
    %5221 = vmatpush1.bf16.msra.mxu0 %v4926
    %5222 = vmatprep.subr.bf16.mxu0 0
    %5223 = vmatpush1.bf16.msra.mxu0 %v4927
    %5224 = vmatprep.subr.bf16.mxu0 0
    %5225 = vmatpush1.bf16.msra.mxu0 %v4928
    %5226 = vmatprep.subr.bf16.mxu0 0
    %5227 = vmatpush1.bf16.msra.mxu0 %v4929
    %5228 = vmatprep.subr.bf16.mxu0 0
    %5229 = vmatpush1.bf16.msra.mxu0 %v4930
    %5230 = vmatprep.subr.bf16.mxu0 0
    %5231 = vmatpush1.bf16.msra.mxu0 %v4931
    %5232 = vmatprep.subr.bf16.mxu0 0
    %5233 = vmatpush1.bf16.msra.mxu0 %v4932
    %5234 = vmatprep.subr.bf16.mxu0 0
    %5235 = vmatpush1.bf16.msra.mxu0 %v4933
    %5236 = vmatprep.subr.bf16.mxu0 0
    %5237 = vmatpush1.bf16.msra.mxu0 %v4934
    %5238 = vmatprep.subr.bf16.mxu0 0
    %5239 = vmatpush1.bf16.msra.mxu0 %v4935
    %5240 = vmatprep.subr.bf16.mxu0 0
    %5241 = vmatpush1.bf16.msra.mxu0 %v4936
    %5242 = vmatprep.mubr.bf16.mxu0 %v4358
    %5243 = vmatmul.mubr.bf16.gmra.mrb[0].mxu0 %v4357
    %v5244 = vpop.f32.mrb[0].mxu0
    %v5245 = vadd.f32 %v5196, %v5244
    %v5246 = vpop.f32.mrb[0].mxu0
    %v5247 = vpop.f32.mrb[0].mxu0
    %v5248 = vadd.f32 %v5199, %v5247
    %v5249 = vpop.f32.mrb[0].mxu0
    %5250 = vmatprep.mubr.bf16.mxu0 %v4374
    %5251 = vmatmul.mubr.bf16.gmra.mrb[0].mxu0 %v4373
    %v5252 = vpop.f32.mrb[0].mxu0
    %v5253 = vadd.f32 %v5204, %v5252
    %v5254 = vpop.f32.mrb[0].mxu0
    %v5255 = vpop.f32.mrb[0].mxu0
    %v5256 = vadd.f32 %v5207, %v5255
    %v5257 = vpop.f32.mrb[0].mxu0
    %5258 = vdwg.mxu0
    %5259 = vmatprep.subr.bf16.mxu0 0
    %5260 = vmatpush1.bf16.msra.mxu0 %v4937
    %5261 = vmatprep.subr.bf16.mxu0 0
    %5262 = vmatpush1.bf16.msra.mxu0 %v4938
    %5263 = vmatprep.subr.bf16.mxu0 0
    %5264 = vmatpush1.bf16.msra.mxu0 %v4939
    %5265 = vmatprep.subr.bf16.mxu0 0
    %5266 = vmatpush1.bf16.msra.mxu0 %v4940
    %5267 = vmatprep.subr.bf16.mxu0 0
    %5268 = vmatpush1.bf16.msra.mxu0 %v4941
    %5269 = vmatprep.subr.bf16.mxu0 0
    %5270 = vmatpush1.bf16.msra.mxu0 %v4942
    %5271 = vmatprep.subr.bf16.mxu0 0
    %5272 = vmatpush1.bf16.msra.mxu0 %v4943
    %5273 = vmatprep.subr.bf16.mxu0 0
    %5274 = vmatpush1.bf16.msra.mxu0 %v4944
    %5275 = vmatprep.subr.bf16.mxu0 0
    %5276 = vmatpush1.bf16.msra.mxu0 %v4945
    %5277 = vmatprep.subr.bf16.mxu0 0
    %5278 = vmatpush1.bf16.msra.mxu0 %v4946
    %5279 = vmatprep.subr.bf16.mxu0 0
    %5280 = vmatpush1.bf16.msra.mxu0 %v4947
    %5281 = vmatprep.subr.bf16.mxu0 0
    %5282 = vmatpush1.bf16.msra.mxu0 %v4948
    %5283 = vmatprep.subr.bf16.mxu0 0
    %5284 = vmatpush1.bf16.msra.mxu0 %v4949
    %5285 = vmatprep.subr.bf16.mxu0 0
    %5286 = vmatpush1.bf16.msra.mxu0 %v4950
    %5287 = vmatprep.subr.bf16.mxu0 0
    %5288 = vmatpush1.bf16.msra.mxu0 %v4951
    %5289 = vmatprep.subr.bf16.mxu0 0
    %5290 = vmatpush1.bf16.msra.mxu0 %v4952
    %5291 = vmatprep.mubr.bf16.mxu0 %v4360
    %5292 = vmatmul.mubr.bf16.gmra.mrb[0].mxu0 %v4359
    %v5293 = vpop.f32.mrb[0].mxu0
    %v5294 = vadd.f32 %v5245, %v5293
    %v5295 = vpop.f32.mrb[0].mxu0
    %v5296 = vpop.f32.mrb[0].mxu0
    %v5297 = vadd.f32 %v5248, %v5296
    %v5298 = vpop.f32.mrb[0].mxu0
    %5299 = vmatprep.mubr.bf16.mxu0 %v4376
    %5300 = vmatmul.mubr.bf16.gmra.mrb[0].mxu0 %v4375
    %v5301 = vpop.f32.mrb[0].mxu0
    %v5302 = vadd.f32 %v5253, %v5301
    %v5303 = vpop.f32.mrb[0].mxu0
    %v5304 = vpop.f32.mrb[0].mxu0
    %v5305 = vadd.f32 %v5256, %v5304
    %v5306 = vpop.f32.mrb[0].mxu0
    %5307 = vdwg.mxu0
    %5308 = vmatprep.subr.bf16.mxu0 0
    %5309 = vmatpush1.bf16.msra.mxu0 %v4953
    %5310 = vmatprep.subr.bf16.mxu0 0
    %5311 = vmatpush1.bf16.msra.mxu0 %v4954
    %5312 = vmatprep.subr.bf16.mxu0 0
    %5313 = vmatpush1.bf16.msra.mxu0 %v4955
    %5314 = vmatprep.subr.bf16.mxu0 0
    %5315 = vmatpush1.bf16.msra.mxu0 %v4956
    %5316 = vmatprep.subr.bf16.mxu0 0
    %5317 = vmatpush1.bf16.msra.mxu0 %v4957
    %5318 = vmatprep.subr.bf16.mxu0 0
    %5319 = vmatpush1.bf16.msra.mxu0 %v4958
    %5320 = vmatprep.subr.bf16.mxu0 0
    %5321 = vmatpush1.bf16.msra.mxu0 %v4959
    %5322 = vmatprep.subr.bf16.mxu0 0
    %5323 = vmatpush1.bf16.msra.mxu0 %v4960
    %5324 = vmatprep.subr.bf16.mxu0 0
    %5325 = vmatpush1.bf16.msra.mxu0 %v4961
    %5326 = vmatprep.subr.bf16.mxu0 0
    %5327 = vmatpush1.bf16.msra.mxu0 %v4962
    %5328 = vmatprep.subr.bf16.mxu0 0
    %5329 = vmatpush1.bf16.msra.mxu0 %v4963
    %5330 = vmatprep.subr.bf16.mxu0 0
    %5331 = vmatpush1.bf16.msra.mxu0 %v4964
    %5332 = vmatprep.subr.bf16.mxu0 0
    %5333 = vmatpush1.bf16.msra.mxu0 %v4965
    %5334 = vmatprep.subr.bf16.mxu0 0
    %5335 = vmatpush1.bf16.msra.mxu0 %v4966
    %5336 = vmatprep.subr.bf16.mxu0 0
    %5337 = vmatpush1.bf16.msra.mxu0 %v4967
    %5338 = vmatprep.subr.bf16.mxu0 0
    %5339 = vmatpush1.bf16.msra.mxu0 %v4968
    %5340 = vmatprep.mubr.bf16.mxu0 %v4362
    %5341 = vmatmul.mubr.bf16.gmra.mrb[0].mxu0 %v4361
    %v5342 = vpop.f32.mrb[0].mxu0
    %v5343 = vadd.f32 %v5294, %v5342
    %v5344 = vpop.f32.mrb[0].mxu0
    %v5345 = vpop.f32.mrb[0].mxu0
    %v5346 = vadd.f32 %v5297, %v5345
    %v5347 = vpop.f32.mrb[0].mxu0
    %5348 = vmatprep.mubr.bf16.mxu0 %v4378
    %5349 = vmatmul.mubr.bf16.gmra.mrb[0].mxu0 %v4377
    %v5350 = vpop.f32.mrb[0].mxu0
    %v5351 = vadd.f32 %v5302, %v5350
    %v5352 = vpop.f32.mrb[0].mxu0
    %v5353 = vpop.f32.mrb[0].mxu0
    %v5354 = vadd.f32 %v5305, %v5353
    %v5355 = vpop.f32.mrb[0].mxu0
    %5356 = vdwg.mxu0
    %5357 = vmatprep.subr.bf16.mxu0 0
    %5358 = vmatpush1.bf16.msra.mxu0 %v4969
    %5359 = vmatprep.subr.bf16.mxu0 0
    %5360 = vmatpush1.bf16.msra.mxu0 %v4970
    %5361 = vmatprep.subr.bf16.mxu0 0
    %5362 = vmatpush1.bf16.msra.mxu0 %v4971
    %5363 = vmatprep.subr.bf16.mxu0 0
    %5364 = vmatpush1.bf16.msra.mxu0 %v4972
    %5365 = vmatprep.subr.bf16.mxu0 0
    %5366 = vmatpush1.bf16.msra.mxu0 %v4973
    %5367 = vmatprep.subr.bf16.mxu0 0
    %5368 = vmatpush1.bf16.msra.mxu0 %v4974
    %5369 = vmatprep.subr.bf16.mxu0 0
    %5370 = vmatpush1.bf16.msra.mxu0 %v4975
    %5371 = vmatprep.subr.bf16.mxu0 0
    %5372 = vmatpush1.bf16.msra.mxu0 %v4976
    %5373 = vmatprep.subr.bf16.mxu0 0
    %5374 = vmatpush1.bf16.msra.mxu0 %v4977
    %5375 = vmatprep.subr.bf16.mxu0 0
    %5376 = vmatpush1.bf16.msra.mxu0 %v4978
    %5377 = vmatprep.subr.bf16.mxu0 0
    %5378 = vmatpush1.bf16.msra.mxu0 %v4979
    %5379 = vmatprep.subr.bf16.mxu0 0
    %5380 = vmatpush1.bf16.msra.mxu0 %v4980
    %5381 = vmatprep.subr.bf16.mxu0 0
    %5382 = vmatpush1.bf16.msra.mxu0 %v4981
    %5383 = vmatprep.subr.bf16.mxu0 0
    %5384 = vmatpush1.bf16.msra.mxu0 %v4982
    %5385 = vmatprep.subr.bf16.mxu0 0
    %5386 = vmatpush1.bf16.msra.mxu0 %v4983
    %5387 = vmatprep.subr.bf16.mxu0 0
    %5388 = vmatpush1.bf16.msra.mxu0 %v4984
    %5389 = vmatprep.mubr.bf16.mxu0 %v4364
    %5390 = vmatmul.mubr.bf16.gmra.mrb[0].mxu0 %v4363
    %v5391 = vpop.f32.mrb[0].mxu0
    %v5392 = vadd.f32 %v5343, %v5391
    %v5393 = vpop.f32.mrb[0].mxu0
    %v5394 = vpop.f32.mrb[0].mxu0
    %v5395 = vadd.f32 %v5346, %v5394
    %v5396 = vpop.f32.mrb[0].mxu0
    %5397 = vmatprep.mubr.bf16.mxu0 %v4380
    %5398 = vmatmul.mubr.bf16.gmra.mrb[0].mxu0 %v4379
    %v5399 = vpop.f32.mrb[0].mxu0
    %v5400 = vadd.f32 %v5351, %v5399
    %v5401 = vpop.f32.mrb[0].mxu0
    %v5402 = vpop.f32.mrb[0].mxu0
    %v5403 = vadd.f32 %v5354, %v5402
    %v5404 = vpop.f32.mrb[0].mxu0
    %5405 = vdwg.mxu0
    %5406 = vmatprep.subr.bf16.mxu0 0
    %5407 = vmatpush1.bf16.msra.mxu0 %v4985
    %5408 = vmatprep.subr.bf16.mxu0 0
    %5409 = vmatpush1.bf16.msra.mxu0 %v4986
    %5410 = vmatprep.subr.bf16.mxu0 0
    %5411 = vmatpush1.bf16.msra.mxu0 %v4987
    %5412 = vmatprep.subr.bf16.mxu0 0
    %5413 = vmatpush1.bf16.msra.mxu0 %v4988
    %5414 = vmatprep.subr.bf16.mxu0 0
    %5415 = vmatpush1.bf16.msra.mxu0 %v4989
    %5416 = vmatprep.subr.bf16.mxu0 0
    %5417 = vmatpush1.bf16.msra.mxu0 %v4990
    %5418 = vmatprep.subr.bf16.mxu0 0
    %5419 = vmatpush1.bf16.msra.mxu0 %v4991
    %5420 = vmatprep.subr.bf16.mxu0 0
    %5421 = vmatpush1.bf16.msra.mxu0 %v4992
    %5422 = vmatprep.subr.bf16.mxu0 0
    %5423 = vmatpush1.bf16.msra.mxu0 %v4993
    %5424 = vmatprep.subr.bf16.mxu0 0
    %5425 = vmatpush1.bf16.msra.mxu0 %v4994
    %5426 = vmatprep.subr.bf16.mxu0 0
    %5427 = vmatpush1.bf16.msra.mxu0 %v4995
    %5428 = vmatprep.subr.bf16.mxu0 0
    %5429 = vmatpush1.bf16.msra.mxu0 %v4996
    %5430 = vmatprep.subr.bf16.mxu0 0
    %5431 = vmatpush1.bf16.msra.mxu0 %v4997
    %5432 = vmatprep.subr.bf16.mxu0 0
    %5433 = vmatpush1.bf16.msra.mxu0 %v4998
    %5434 = vmatprep.subr.bf16.mxu0 0
    %5435 = vmatpush1.bf16.msra.mxu0 %v4999
    %5436 = vmatprep.subr.bf16.mxu0 0
    %5437 = vmatpush1.bf16.msra.mxu0 %v5000
    %5438 = vmatprep.mubr.bf16.mxu0 %v4366
    %5439 = vmatmul.mubr.bf16.gmra.mrb[0].mxu0 %v4365
    %v5440 = vpop.f32.mrb[0].mxu0
    %v5441 = vadd.f32 %v5392, %v5440
    %v5442 = vpop.f32.mrb[0].mxu0
    %v5443 = vpop.f32.mrb[0].mxu0
    %v5444 = vadd.f32 %v5395, %v5443
    %v5445 = vpop.f32.mrb[0].mxu0
    %5446 = vmatprep.mubr.bf16.mxu0 %v4382
    %5447 = vmatmul.mubr.bf16.gmra.mrb[0].mxu0 %v4381
    %v5448 = vpop.f32.mrb[0].mxu0
    %v5449 = vadd.f32 %v5400, %v5448
    %v5450 = vpop.f32.mrb[0].mxu0
    %v5451 = vpop.f32.mrb[0].mxu0
    %v5452 = vadd.f32 %v5403, %v5451
    %v5453 = vpop.f32.mrb[0].mxu0
    %5454 = vdwg.mxu0
    %5455 = vmatprep.subr.bf16.mxu0 0
    %5456 = vmatpush1.bf16.msra.mxu0 %v5001
    %5457 = vmatprep.subr.bf16.mxu0 0
    %5458 = vmatpush1.bf16.msra.mxu0 %v5002
    %5459 = vmatprep.subr.bf16.mxu0 0
    %5460 = vmatpush1.bf16.msra.mxu0 %v5003
    %5461 = vmatprep.subr.bf16.mxu0 0
    %5462 = vmatpush1.bf16.msra.mxu0 %v5004
    %5463 = vmatprep.subr.bf16.mxu0 0
    %5464 = vmatpush1.bf16.msra.mxu0 %v5005
    %5465 = vmatprep.subr.bf16.mxu0 0
    %5466 = vmatpush1.bf16.msra.mxu0 %v5006
    %5467 = vmatprep.subr.bf16.mxu0 0
    %5468 = vmatpush1.bf16.msra.mxu0 %v5007
    %5469 = vmatprep.subr.bf16.mxu0 0
    %5470 = vmatpush1.bf16.msra.mxu0 %v5008
    %5471 = vmatprep.subr.bf16.mxu0 0
    %5472 = vmatpush1.bf16.msra.mxu0 %v5009
    %5473 = vmatprep.subr.bf16.mxu0 0
    %5474 = vmatpush1.bf16.msra.mxu0 %v5010
    %5475 = vmatprep.subr.bf16.mxu0 0
    %5476 = vmatpush1.bf16.msra.mxu0 %v5011
    %5477 = vmatprep.subr.bf16.mxu0 0
    %5478 = vmatpush1.bf16.msra.mxu0 %v5012
    %5479 = vmatprep.subr.bf16.mxu0 0
    %5480 = vmatpush1.bf16.msra.mxu0 %v5013
    %5481 = vmatprep.subr.bf16.mxu0 0
    %5482 = vmatpush1.bf16.msra.mxu0 %v5014
    %5483 = vmatprep.subr.bf16.mxu0 0
    %5484 = vmatpush1.bf16.msra.mxu0 %v5015
    %5485 = vmatprep.subr.bf16.mxu0 0
    %5486 = vmatpush1.bf16.msra.mxu0 %v5016
    %5487 = vmatprep.mubr.bf16.mxu0 %v4368
    %5488 = vmatmul.mubr.bf16.gmra.mrb[0].mxu0 %v4367
    %v5489 = vpop.f32.mrb[0].mxu0
    %v5490 = vadd.f32 %v5441, %v5489
    %v5491 = vpop.f32.mrb[0].mxu0
    %v5492 = vpop.f32.mrb[0].mxu0
    %v5493 = vadd.f32 %v5444, %v5492
    %v5494 = vpop.f32.mrb[0].mxu0
    %5495 = vmatprep.mubr.bf16.mxu0 %v4384
    %5496 = vmatmul.mubr.bf16.gmra.mrb[0].mxu0 %v4383
    %v5497 = vpop.f32.mrb[0].mxu0
    %v5498 = vadd.f32 %v5449, %v5497
    %v5499 = vpop.f32.mrb[0].mxu0
    %v5500 = vpop.f32.mrb[0].mxu0
    %v5501 = vadd.f32 %v5452, %v5500
    %v5502 = vpop.f32.mrb[0].mxu0
    %5503 = vdwg.mxu0
    %5504 = vmatprep.subr.bf16.mxu0 0
    %5505 = vmatpush1.bf16.msra.mxu0 %v5017
    %5506 = vmatprep.subr.bf16.mxu0 0
    %5507 = vmatpush1.bf16.msra.mxu0 %v5018
    %5508 = vmatprep.subr.bf16.mxu0 0
    %5509 = vmatpush1.bf16.msra.mxu0 %v5019
    %5510 = vmatprep.subr.bf16.mxu0 0
    %5511 = vmatpush1.bf16.msra.mxu0 %v5020
    %5512 = vmatprep.subr.bf16.mxu0 0
    %5513 = vmatpush1.bf16.msra.mxu0 %v5021
    %5514 = vmatprep.subr.bf16.mxu0 0
    %5515 = vmatpush1.bf16.msra.mxu0 %v5022
    %5516 = vmatprep.subr.bf16.mxu0 0
    %5517 = vmatpush1.bf16.msra.mxu0 %v5023
    %5518 = vmatprep.subr.bf16.mxu0 0
    %5519 = vmatpush1.bf16.msra.mxu0 %v5024
    %5520 = vmatprep.subr.bf16.mxu0 0
    %5521 = vmatpush1.bf16.msra.mxu0 %v5025
    %5522 = vmatprep.subr.bf16.mxu0 0
    %5523 = vmatpush1.bf16.msra.mxu0 %v5026
    %5524 = vmatprep.subr.bf16.mxu0 0
    %5525 = vmatpush1.bf16.msra.mxu0 %v5027
    %5526 = vmatprep.subr.bf16.mxu0 0
    %5527 = vmatpush1.bf16.msra.mxu0 %v5028
    %5528 = vmatprep.subr.bf16.mxu0 0
    %5529 = vmatpush1.bf16.msra.mxu0 %v5029
    %5530 = vmatprep.subr.bf16.mxu0 0
    %5531 = vmatpush1.bf16.msra.mxu0 %v5030
    %5532 = vmatprep.subr.bf16.mxu0 0
    %5533 = vmatpush1.bf16.msra.mxu0 %v5031
    %5534 = vmatprep.subr.bf16.mxu0 0
    %5535 = vmatpush1.bf16.msra.mxu0 %v5032
    %5536 = vmatprep.mubr.bf16.mxu0 %v4370
    %5537 = vmatmul.mubr.bf16.gmra.mrb[0].mxu0 %v4369
    %v5538 = vpop.f32.mrb[0].mxu0
    %v5539 = vadd.f32 %v5490, %v5538
    %v5540 = vpop.f32.mrb[0].mxu0
    %v5541 = vpop.f32.mrb[0].mxu0
    %v5542 = vadd.f32 %v5493, %v5541
    %v5543 = vpop.f32.mrb[0].mxu0
    %5544 = vmatprep.mubr.bf16.mxu0 %v4386
    %5545 = vmatmul.mubr.bf16.gmra.mrb[0].mxu0 %v4385
    %v5546 = vpop.f32.mrb[0].mxu0
    %v5547 = vadd.f32 %v5498, %v5546
    %v5548 = vpop.f32.mrb[0].mxu0
    %v5549 = vpop.f32.mrb[0].mxu0
    %v5550 = vadd.f32 %v5501, %v5549
    %v5551 = vpop.f32.mrb[0].mxu0
    %5552 = vdwg.mxu0
    %v5553 = vadd.f32 %v3322, %v5539
    %v5554 = vadd.f32 %v3323, %v5542
    %v5555 = vadd.f32 %v3324, %v5547
    %v5556 = vadd.f32 %v3325, %v5550
    %v5557 = vld [vmem:[%s85] sm:$0x1]
    %v5558 = vld [vmem:[%s87] sm:$0x1]
    %v5559 = vsel %vm467, %v5553, 0.0
    %5560 = vadd.xlane.f32.xlu0 %v5559
    %v5561 = vpop.xlane.xlu0 %5560
    %v5562 = vsel %vm467, %v5554, 0.0
    %5563 = vadd.xlane.f32.xlu0 %v5562
    %v5564 = vpop.xlane.xlu0 %5563
    %v5565 = vsel %vm467, %v5555, 0.0
    %5566 = vadd.xlane.f32.xlu0 %v5565
    %v5567 = vpop.xlane.xlu0 %5566
    %v5568 = vsel %vm467, %v5556, 0.0
    %5569 = vadd.xlane.f32.xlu0 %v5568
    %v5570 = vpop.xlane.xlu0 %5569
    %v5571 = vmul.f32 %v5561, %v3265
    %v5572 = vmul.f32 %v5564, %v3265
    %v5573 = vmul.f32 %v5567, %v3265
    %v5574 = vmul.f32 %v5570, %v3265
    %v5575 = vsub.f32 %v5553, %v5571
    %v5576 = vsub.f32 %v5554, %v5572
    %v5577 = vsub.f32 %v5555, %v5573
    %v5578 = vsub.f32 %v5556, %v5574
    %v5579 = vmul.f32 %v5575, %v5575
    %v5580 = vmul.f32 %v5576, %v5576
    %v5581 = vmul.f32 %v5577, %v5577
    %v5582 = vmul.f32 %v5578, %v5578
    %v5583 = vsel %vm467, %v5579, 0.0
    %5584 = vadd.xlane.f32.xlu0 %v5583
    %v5585 = vpop.xlane.xlu0 %5584
    %v5586 = vsel %vm467, %v5580, 0.0
    %5587 = vadd.xlane.f32.xlu0 %v5586
    %v5588 = vpop.xlane.xlu0 %5587
    %v5589 = vsel %vm467, %v5581, 0.0
    %5590 = vadd.xlane.f32.xlu0 %v5589
    %v5591 = vpop.xlane.xlu0 %5590
    %v5592 = vsel %vm467, %v5582, 0.0
    %5593 = vadd.xlane.f32.xlu0 %v5592
    %v5594 = vpop.xlane.xlu0 %5593
    %v5595 = vmul.f32 %v5585, %v3265
    %v5596 = vmul.f32 %v5588, %v3265
    %v5597 = vmul.f32 %v5591, %v3265
    %v5598 = vmul.f32 %v5594, %v3265
    %v5599 = vadd.f32 %v5595, 1e-05
    %v5600 = vadd.f32 %v5596, 1e-05
    %v5601 = vadd.f32 %v5597, 1e-05
    %v5602 = vadd.f32 %v5598, 1e-05
    %v5603 = vrsqrt.pop %v5599
    %v5604 = vrsqrt.pop %v5600
    %v5605 = vrsqrt.pop %v5601
    %v5606 = vrsqrt.pop %v5602
    %v5607 = vmul.f32 %v5575, %v5603
    %v5608 = vmul.f32 %v5576, %v5604
    %v5609 = vmul.f32 %v5577, %v5605
    %v5610 = vmul.f32 %v5578, %v5606
    %v5612 = vlaneseq
    %v5613 = vshrl.u32 %v5612, 7
    %v5614 = vsub.s32 0, %v5613
    %v5615 = vrot.slane %v5557, %v5614
    %v5617 = vmul.f32 %v5607, %v5615
    %v5618 = vmul.f32 %v5608, %v5615
    %v5619 = vmul.f32 %v5609, %v5615
    %v5620 = vmul.f32 %v5610, %v5615
    %v5622 = vlaneseq
    %v5623 = vshrl.u32 %v5622, 7
    %v5624 = vsub.s32 0, %v5623
    %v5625 = vrot.slane %v5558, %v5624
    %v5627 = vadd.f32 %v5617, %v5625
    %v5628 = vadd.f32 %v5618, %v5625
    %v5629 = vadd.f32 %v5619, %v5625
    %v5630 = vadd.f32 %v5620, %v5625
    %s5631 = scalar_lea.vmem %s57, 64
    %v5632 = vld [vmem:[%s5631] sm:$0xf]
    %v5633 = vld [vmem:[%s5631 + $0x4] sm:$0xf]
    %v5634 = vld [vmem:[%s5631 + $0x8] sm:$0xf]
    %v5635 = vld [vmem:[%s5631 + $0xc] sm:$0xf]
    %s5636 = scalar_lea.vmem %s63, 4
    %v5637 = vld [vmem:[%s5636] sm:$0x1]
    %v5638 = vpack.c.bf16 %v5628, %v5627
    %v5639 = vpack.c.bf16 %v5630, %v5629
    %v5641 = vlaneseq
    %v5642 = vshrl.u32 %v5641, 7
    %v5643 = vsub.s32 0, %v5642
    %v5644 = vrot.slane %v5637, %v5643
    %v5650 = vunpack.c.l.b16 %v5632
    %v5651 = vunpack.c.l.b16 %v5633
    %v5652 = vunpack.c.l.b16 %v5634
    %v5653 = vunpack.c.l.b16 %v5635
    %v5654 = vpack.c.b16 %v5651, %v5650
    %v5655 = vpack.c.b16 %v5653, %v5652
    %v5659 = vsel %vm467, %v5638, 0
    %v5662 = vsel %vm467, %v5639, 0
    %5664 = vmatprep.subr.bf16.mxu0 0
    %5665 = vmatpush1.bf16.msra.mxu0 %v5654
    %5666 = vmatprep.subr.bf16.mxu0 0
    %5667 = vmatpush1.bf16.msra.mxu0 %v5655
    %5668 = vmatprep.subr.bf16.mxu0 0
    %5669 = vmatpush1.bf16.msra.mxu0 0
    %5670 = vmatprep.subr.bf16.mxu0 0
    %5671 = vmatpush1.bf16.msra.mxu0 0
    %5672 = vmatprep.subr.bf16.mxu0 0
    %5673 = vmatpush1.bf16.msra.mxu0 0
    %5674 = vmatprep.subr.bf16.mxu0 0
    %5675 = vmatpush1.bf16.msra.mxu0 0
    %5676 = vmatprep.subr.bf16.mxu0 0
    %5677 = vmatpush1.bf16.msra.mxu0 0
    %5678 = vmatprep.subr.bf16.mxu0 0
    %5679 = vmatpush1.bf16.msra.mxu0 0
    %5680 = vmatprep.subr.bf16.mxu0 0
    %5681 = vmatpush1.bf16.msra.mxu0 0
    %5682 = vmatprep.subr.bf16.mxu0 0
    %5683 = vmatpush1.bf16.msra.mxu0 0
    %5684 = vmatprep.subr.bf16.mxu0 0
    %5685 = vmatpush1.bf16.msra.mxu0 0
    %5686 = vmatprep.subr.bf16.mxu0 0
    %5687 = vmatpush1.bf16.msra.mxu0 0
    %5688 = vmatprep.subr.bf16.mxu0 0
    %5689 = vmatpush1.bf16.msra.mxu0 0
    %5690 = vmatprep.subr.bf16.mxu0 0
    %5691 = vmatpush1.bf16.msra.mxu0 0
    %5692 = vmatprep.subr.bf16.mxu0 0
    %5693 = vmatpush1.bf16.msra.mxu0 0
    %5694 = vmatprep.subr.bf16.mxu0 0
    %5695 = vmatpush1.bf16.msra.mxu0 0
    %5696 = vmatprep.mubr.bf16.mxu0 0
    %5697 = vmatmul.mubr.bf16.gmra.mrb[0].mxu0 %v5659
    %v5698 = vpop.f32.mrb[0].mxu0
    %v5699 = vadd.f32 %v5644, %v5698
    %v5700 = vpop.f32.mrb[0].mxu0
    %v5701 = vpop.f32.mrb[0].mxu0
    %v5702 = vadd.f32 %v5644, %v5701
    %v5703 = vpop.f32.mrb[0].mxu0
    %5704 = vmatprep.mubr.bf16.mxu0 0
    %5705 = vmatmul.mubr.bf16.gmra.mrb[0].mxu0 %v5662
    %v5706 = vpop.f32.mrb[0].mxu0
    %v5707 = vadd.f32 %v5644, %v5706
    %v5708 = vpop.f32.mrb[0].mxu0
    %v5709 = vpop.f32.mrb[0].mxu0
    %v5710 = vadd.f32 %v5644, %v5709
    %v5711 = vpop.f32.mrb[0].mxu0
    %5712 = vdwg.mxu0
    %s5713 = scalar_lea.vmem %s59, 64
    %v5714 = vld [vmem:[%s5713] sm:$0xf]
    %v5715 = vld [vmem:[%s5713 + $0x4] sm:$0xf]
    %v5716 = vld [vmem:[%s5713 + $0x8] sm:$0xf]
    %v5717 = vld [vmem:[%s5713 + $0xc] sm:$0xf]
    %s5718 = scalar_lea.vmem %s65, 4
    %v5719 = vld [vmem:[%s5718] sm:$0x1]
    %v5721 = vlaneseq
    %v5722 = vshrl.u32 %v5721, 7
    %v5723 = vsub.s32 0, %v5722
    %v5724 = vrot.slane %v5719, %v5723
    %v5730 = vunpack.c.l.b16 %v5714
    %v5731 = vunpack.c.l.b16 %v5715
    %v5732 = vunpack.c.l.b16 %v5716
    %v5733 = vunpack.c.l.b16 %v5717
    %v5734 = vpack.c.b16 %v5731, %v5730
    %v5735 = vpack.c.b16 %v5733, %v5732
    %5738 = vmatprep.subr.bf16.mxu0 0
    %5739 = vmatpush1.bf16.msra.mxu0 %v5734
    %5740 = vmatprep.subr.bf16.mxu0 0
    %5741 = vmatpush1.bf16.msra.mxu0 %v5735
    %5742 = vmatprep.subr.bf16.mxu0 0
    %5743 = vmatpush1.bf16.msra.mxu0 0
    %5744 = vmatprep.subr.bf16.mxu0 0
    %5745 = vmatpush1.bf16.msra.mxu0 0
    %5746 = vmatprep.subr.bf16.mxu0 0
    %5747 = vmatpush1.bf16.msra.mxu0 0
    %5748 = vmatprep.subr.bf16.mxu0 0
    %5749 = vmatpush1.bf16.msra.mxu0 0
    %5750 = vmatprep.subr.bf16.mxu0 0
    %5751 = vmatpush1.bf16.msra.mxu0 0
    %5752 = vmatprep.subr.bf16.mxu0 0
    %5753 = vmatpush1.bf16.msra.mxu0 0
    %5754 = vmatprep.subr.bf16.mxu0 0
    %5755 = vmatpush1.bf16.msra.mxu0 0
    %5756 = vmatprep.subr.bf16.mxu0 0
    %5757 = vmatpush1.bf16.msra.mxu0 0
    %5758 = vmatprep.subr.bf16.mxu0 0
    %5759 = vmatpush1.bf16.msra.mxu0 0
    %5760 = vmatprep.subr.bf16.mxu0 0
    %5761 = vmatpush1.bf16.msra.mxu0 0
    %5762 = vmatprep.subr.bf16.mxu0 0
    %5763 = vmatpush1.bf16.msra.mxu0 0
    %5764 = vmatprep.subr.bf16.mxu0 0
    %5765 = vmatpush1.bf16.msra.mxu0 0
    %5766 = vmatprep.subr.bf16.mxu0 0
    %5767 = vmatpush1.bf16.msra.mxu0 0
    %5768 = vmatprep.subr.bf16.mxu0 0
    %5769 = vmatpush1.bf16.msra.mxu0 0
    %5770 = vmatprep.mubr.bf16.mxu0 0
    %5771 = vmatmul.mubr.bf16.gmra.mrb[0].mxu0 %v5659
    %v5772 = vpop.f32.mrb[0].mxu0
    %v5773 = vadd.f32 %v5724, %v5772
    %v5774 = vpop.f32.mrb[0].mxu0
    %v5775 = vpop.f32.mrb[0].mxu0
    %v5776 = vadd.f32 %v5724, %v5775
    %v5777 = vpop.f32.mrb[0].mxu0
    %5778 = vmatprep.mubr.bf16.mxu0 0
    %5779 = vmatmul.mubr.bf16.gmra.mrb[0].mxu0 %v5662
    %v5780 = vpop.f32.mrb[0].mxu0
    %v5781 = vadd.f32 %v5724, %v5780
    %v5782 = vpop.f32.mrb[0].mxu0
    %v5783 = vpop.f32.mrb[0].mxu0
    %v5784 = vadd.f32 %v5724, %v5783
    %v5785 = vpop.f32.mrb[0].mxu0
    %5786 = vdwg.mxu0
    %s5787 = scalar_lea.vmem %s61, 64
    %v5788 = vld [vmem:[%s5787] sm:$0xf]
    %v5789 = vld [vmem:[%s5787 + $0x4] sm:$0xf]
    %v5790 = vld [vmem:[%s5787 + $0x8] sm:$0xf]
    %v5791 = vld [vmem:[%s5787 + $0xc] sm:$0xf]
    %s5792 = scalar_lea.vmem %s67, 4
    %v5793 = vld [vmem:[%s5792] sm:$0x1]
    %v5795 = vlaneseq
    %v5796 = vshrl.u32 %v5795, 7
    %v5797 = vsub.s32 0, %v5796
    %v5798 = vrot.slane %v5793, %v5797
    %v5804 = vunpack.c.l.b16 %v5788
    %v5805 = vunpack.c.l.b16 %v5789
    %v5806 = vunpack.c.l.b16 %v5790
    %v5807 = vunpack.c.l.b16 %v5791
    %v5808 = vpack.c.b16 %v5805, %v5804
    %v5809 = vpack.c.b16 %v5807, %v5806
    %5812 = vmatprep.subr.bf16.mxu0 0
    %5813 = vmatpush1.bf16.msra.mxu0 %v5808
    %5814 = vmatprep.subr.bf16.mxu0 0
    %5815 = vmatpush1.bf16.msra.mxu0 %v5809
    %5816 = vmatprep.subr.bf16.mxu0 0
    %5817 = vmatpush1.bf16.msra.mxu0 0
    %5818 = vmatprep.subr.bf16.mxu0 0
    %5819 = vmatpush1.bf16.msra.mxu0 0
    %5820 = vmatprep.subr.bf16.mxu0 0
    %5821 = vmatpush1.bf16.msra.mxu0 0
    %5822 = vmatprep.subr.bf16.mxu0 0
    %5823 = vmatpush1.bf16.msra.mxu0 0
    %5824 = vmatprep.subr.bf16.mxu0 0
    %5825 = vmatpush1.bf16.msra.mxu0 0
    %5826 = vmatprep.subr.bf16.mxu0 0
    %5827 = vmatpush1.bf16.msra.mxu0 0
    %5828 = vmatprep.subr.bf16.mxu0 0
    %5829 = vmatpush1.bf16.msra.mxu0 0
    %5830 = vmatprep.subr.bf16.mxu0 0
    %5831 = vmatpush1.bf16.msra.mxu0 0
    %5832 = vmatprep.subr.bf16.mxu0 0
    %5833 = vmatpush1.bf16.msra.mxu0 0
    %5834 = vmatprep.subr.bf16.mxu0 0
    %5835 = vmatpush1.bf16.msra.mxu0 0
    %5836 = vmatprep.subr.bf16.mxu0 0
    %5837 = vmatpush1.bf16.msra.mxu0 0
    %5838 = vmatprep.subr.bf16.mxu0 0
    %5839 = vmatpush1.bf16.msra.mxu0 0
    %5840 = vmatprep.subr.bf16.mxu0 0
    %5841 = vmatpush1.bf16.msra.mxu0 0
    %5842 = vmatprep.subr.bf16.mxu0 0
    %5843 = vmatpush1.bf16.msra.mxu0 0
    %5844 = vmatprep.mubr.bf16.mxu0 0
    %5845 = vmatmul.mubr.bf16.gmra.mrb[0].mxu0 %v5659
    %v5846 = vpop.f32.mrb[0].mxu0
    %v5847 = vadd.f32 %v5798, %v5846
    %v5848 = vpop.f32.mrb[0].mxu0
    %v5849 = vpop.f32.mrb[0].mxu0
    %v5850 = vadd.f32 %v5798, %v5849
    %v5851 = vpop.f32.mrb[0].mxu0
    %5852 = vmatprep.mubr.bf16.mxu0 0
    %5853 = vmatmul.mubr.bf16.gmra.mrb[0].mxu0 %v5662
    %v5854 = vpop.f32.mrb[0].mxu0
    %v5855 = vadd.f32 %v5798, %v5854
    %v5856 = vpop.f32.mrb[0].mxu0
    %v5857 = vpop.f32.mrb[0].mxu0
    %v5858 = vadd.f32 %v5798, %v5857
    %v5859 = vpop.f32.mrb[0].mxu0
    %5860 = vdwg.mxu0
    %v5861 = vmul.f32 %v5699, 0.35355338
    %v5862 = vmul.f32 %v5702, 0.35355338
    %v5863 = vpack.c.bf16 %v5862, %v5861
    %v5864 = vpack.c.bf16 %v5776, %v5773
    %v5866 = vsel %vm1490, %v5863, 0
    %v5869 = vsel %vm1490, %v5864, 0
    %5871 = vmatprep.subr.bf16.mxu0 0
    %5872 = vmatpush1.bf16.xpose.msra.mxu0 %v5869
    %5873 = vmatprep.subr.bf16.mxu0 0
    %5874 = vmatpush1.bf16.xpose.msra.mxu0 0
    %5875 = vmatprep.subr.bf16.mxu0 0
    %5876 = vmatpush1.bf16.xpose.msra.mxu0 0
    %5877 = vmatprep.subr.bf16.mxu0 0
    %5878 = vmatpush1.bf16.xpose.msra.mxu0 0
    %5879 = vmatprep.subr.bf16.mxu0 0
    %5880 = vmatpush1.bf16.xpose.msra.mxu0 0
    %5881 = vmatprep.subr.bf16.mxu0 0
    %5882 = vmatpush1.bf16.xpose.msra.mxu0 0
    %5883 = vmatprep.subr.bf16.mxu0 0
    %5884 = vmatpush1.bf16.xpose.msra.mxu0 0
    %5885 = vmatprep.subr.bf16.mxu0 0
    %5886 = vmatpush1.bf16.xpose.msra.mxu0 0
    %5887 = vmatprep.subr.bf16.mxu0 0
    %5888 = vmatpush1.bf16.xpose.msra.mxu0 0
    %5889 = vmatprep.subr.bf16.mxu0 0
    %5890 = vmatpush1.bf16.xpose.msra.mxu0 0
    %5891 = vmatprep.subr.bf16.mxu0 0
    %5892 = vmatpush1.bf16.xpose.msra.mxu0 0
    %5893 = vmatprep.subr.bf16.mxu0 0
    %5894 = vmatpush1.bf16.xpose.msra.mxu0 0
    %5895 = vmatprep.subr.bf16.mxu0 0
    %5896 = vmatpush1.bf16.xpose.msra.mxu0 0
    %5897 = vmatprep.subr.bf16.mxu0 0
    %5898 = vmatpush1.bf16.xpose.msra.mxu0 0
    %5899 = vmatprep.subr.bf16.mxu0 0
    %5900 = vmatpush1.bf16.xpose.msra.mxu0 0
    %5901 = vmatprep.subr.bf16.mxu0 0
    %5902 = vmatpush1.bf16.xpose.msra.mxu0 0
    %5903 = vmatprep.mubr.bf16.mxu0 0
    %5904 = vmatmul.mubr.bf16.gmra.mrb[0].mxu0 %v5866
    %v5905 = vpop.f32.mrb[0].mxu0
    %v5906 = vadd.f32 0.0, %v5905
    %v5907 = vpop.f32.mrb[0].mxu0
    %v5908 = vpop.f32.mrb[0].mxu0
    %v5909 = vadd.f32 0.0, %v5908
    %v5910 = vpop.f32.mrb[0].mxu0
    %5911 = vdwg.mxu0
    %v5912 = vsel %vm1538, %v5906, -inf
    %5913 = vmax.xlane.f32.xlu0 %v5912
    %v5914 = vpop.xlane.xlu0 %5913
    %v5915 = vsel %vm1538, %v5909, -inf
    %5916 = vmax.xlane.f32.xlu0 %v5915
    %v5917 = vpop.xlane.xlu0 %5916
    %v5918 = vsub.f32 %v5906, %v5914
    %v5919 = vsub.f32 %v5909, %v5917
    %v5920 = vmul.f32 %v5918, 1.442695
    %v5921 = vpow.pop %v5920
    %v5922 = vmul.f32 %v5919, 1.442695
    %v5923 = vpow.pop %v5922
    %v5924 = vsel %vm1538, %v5921, 0.0
    %5925 = vadd.xlane.f32.xlu0 %v5924
    %v5926 = vpop.xlane.xlu0 %5925
    %v5927 = vsel %vm1538, %v5923, 0.0
    %5928 = vadd.xlane.f32.xlu0 %v5927
    %v5929 = vpop.xlane.xlu0 %5928
    %v5930 = vrcp.pop %v5926
    %v5931 = vmul.f32 %v5921, %v5930
    %v5932 = vrcp.pop %v5929
    %v5933 = vmul.f32 %v5923, %v5932
    %v5934 = vpack.c.bf16 %v5933, %v5931
    %v5935 = vpack.c.bf16 %v5850, %v5847
    %v5937 = vsel %vm1538, %v5934, 0
    %5939 = vmatprep.subr.bf16.mxu0 0
    %5940 = vmatpush1.bf16.msra.mxu0 %v5935
    %5941 = vmatprep.subr.bf16.mxu0 0
    %5942 = vmatpush1.bf16.msra.mxu0 0
    %5943 = vmatprep.subr.bf16.mxu0 0
    %5944 = vmatpush1.bf16.msra.mxu0 0
    %5945 = vmatprep.subr.bf16.mxu0 0
    %5946 = vmatpush1.bf16.msra.mxu0 0
    %5947 = vmatprep.subr.bf16.mxu0 0
    %5948 = vmatpush1.bf16.msra.mxu0 0
    %5949 = vmatprep.subr.bf16.mxu0 0
    %5950 = vmatpush1.bf16.msra.mxu0 0
    %5951 = vmatprep.subr.bf16.mxu0 0
    %5952 = vmatpush1.bf16.msra.mxu0 0
    %5953 = vmatprep.subr.bf16.mxu0 0
    %5954 = vmatpush1.bf16.msra.mxu0 0
    %5955 = vmatprep.subr.bf16.mxu0 0
    %5956 = vmatpush1.bf16.msra.mxu0 0
    %5957 = vmatprep.subr.bf16.mxu0 0
    %5958 = vmatpush1.bf16.msra.mxu0 0
    %5959 = vmatprep.subr.bf16.mxu0 0
    %5960 = vmatpush1.bf16.msra.mxu0 0
    %5961 = vmatprep.subr.bf16.mxu0 0
    %5962 = vmatpush1.bf16.msra.mxu0 0
    %5963 = vmatprep.subr.bf16.mxu0 0
    %5964 = vmatpush1.bf16.msra.mxu0 0
    %5965 = vmatprep.subr.bf16.mxu0 0
    %5966 = vmatpush1.bf16.msra.mxu0 0
    %5967 = vmatprep.subr.bf16.mxu0 0
    %5968 = vmatpush1.bf16.msra.mxu0 0
    %5969 = vmatprep.subr.bf16.mxu0 0
    %5970 = vmatpush1.bf16.msra.mxu0 0
    %5971 = vmatprep.mubr.bf16.mxu0 0
    %5972 = vmatmul.mubr.bf16.gmra.mrb[0].mxu0 %v5937
    %v5973 = vpop.f32.mrb[0].mxu0
    %v5974 = vadd.f32 0.0, %v5973
    %v5975 = vpop.f32.mrb[0].mxu0
    %v5976 = vpop.f32.mrb[0].mxu0
    %v5977 = vadd.f32 0.0, %v5976
    %v5978 = vpop.f32.mrb[0].mxu0
    %5979 = vdwg.mxu0
    %v5980 = vmul.f32 %v5707, 0.35355338
    %v5981 = vmul.f32 %v5710, 0.35355338
    %v5982 = vpack.c.bf16 %v5981, %v5980
    %v5983 = vpack.c.bf16 %v5784, %v5781
    %v5985 = vsel %vm1490, %v5982, 0
    %v5988 = vsel %vm1490, %v5983, 0
    %5990 = vmatprep.subr.bf16.mxu0 0
    %5991 = vmatpush1.bf16.xpose.msra.mxu0 %v5988
    %5992 = vmatprep.subr.bf16.mxu0 0
    %5993 = vmatpush1.bf16.xpose.msra.mxu0 0
    %5994 = vmatprep.subr.bf16.mxu0 0
    %5995 = vmatpush1.bf16.xpose.msra.mxu0 0
    %5996 = vmatprep.subr.bf16.mxu0 0
    %5997 = vmatpush1.bf16.xpose.msra.mxu0 0
    %5998 = vmatprep.subr.bf16.mxu0 0
    %5999 = vmatpush1.bf16.xpose.msra.mxu0 0
    %6000 = vmatprep.subr.bf16.mxu0 0
    %6001 = vmatpush1.bf16.xpose.msra.mxu0 0
    %6002 = vmatprep.subr.bf16.mxu0 0
    %6003 = vmatpush1.bf16.xpose.msra.mxu0 0
    %6004 = vmatprep.subr.bf16.mxu0 0
    %6005 = vmatpush1.bf16.xpose.msra.mxu0 0
    %6006 = vmatprep.subr.bf16.mxu0 0
    %6007 = vmatpush1.bf16.xpose.msra.mxu0 0
    %6008 = vmatprep.subr.bf16.mxu0 0
    %6009 = vmatpush1.bf16.xpose.msra.mxu0 0
    %6010 = vmatprep.subr.bf16.mxu0 0
    %6011 = vmatpush1.bf16.xpose.msra.mxu0 0
    %6012 = vmatprep.subr.bf16.mxu0 0
    %6013 = vmatpush1.bf16.xpose.msra.mxu0 0
    %6014 = vmatprep.subr.bf16.mxu0 0
    %6015 = vmatpush1.bf16.xpose.msra.mxu0 0
    %6016 = vmatprep.subr.bf16.mxu0 0
    %6017 = vmatpush1.bf16.xpose.msra.mxu0 0
    %6018 = vmatprep.subr.bf16.mxu0 0
    %6019 = vmatpush1.bf16.xpose.msra.mxu0 0
    %6020 = vmatprep.subr.bf16.mxu0 0
    %6021 = vmatpush1.bf16.xpose.msra.mxu0 0
    %6022 = vmatprep.mubr.bf16.mxu0 0
    %6023 = vmatmul.mubr.bf16.gmra.mrb[0].mxu0 %v5985
    %v6024 = vpop.f32.mrb[0].mxu0
    %v6025 = vadd.f32 0.0, %v6024
    %v6026 = vpop.f32.mrb[0].mxu0
    %v6027 = vpop.f32.mrb[0].mxu0
    %v6028 = vadd.f32 0.0, %v6027
    %v6029 = vpop.f32.mrb[0].mxu0
    %6030 = vdwg.mxu0
    %v6031 = vsel %vm1538, %v6025, -inf
    %6032 = vmax.xlane.f32.xlu0 %v6031
    %v6033 = vpop.xlane.xlu0 %6032
    %v6034 = vsel %vm1538, %v6028, -inf
    %6035 = vmax.xlane.f32.xlu0 %v6034
    %v6036 = vpop.xlane.xlu0 %6035
    %v6037 = vsub.f32 %v6025, %v6033
    %v6038 = vsub.f32 %v6028, %v6036
    %v6039 = vmul.f32 %v6037, 1.442695
    %v6040 = vpow.pop %v6039
    %v6041 = vmul.f32 %v6038, 1.442695
    %v6042 = vpow.pop %v6041
    %v6043 = vsel %vm1538, %v6040, 0.0
    %6044 = vadd.xlane.f32.xlu0 %v6043
    %v6045 = vpop.xlane.xlu0 %6044
    %v6046 = vsel %vm1538, %v6042, 0.0
    %6047 = vadd.xlane.f32.xlu0 %v6046
    %v6048 = vpop.xlane.xlu0 %6047
    %v6049 = vrcp.pop %v6045
    %v6050 = vmul.f32 %v6040, %v6049
    %v6051 = vrcp.pop %v6048
    %v6052 = vmul.f32 %v6042, %v6051
    %v6053 = vpack.c.bf16 %v6052, %v6050
    %v6054 = vpack.c.bf16 %v5858, %v5855
    %v6056 = vsel %vm1538, %v6053, 0
    %6058 = vmatprep.subr.bf16.mxu0 0
    %6059 = vmatpush1.bf16.msra.mxu0 %v6054
    %6060 = vmatprep.subr.bf16.mxu0 0
    %6061 = vmatpush1.bf16.msra.mxu0 0
    %6062 = vmatprep.subr.bf16.mxu0 0
    %6063 = vmatpush1.bf16.msra.mxu0 0
    %6064 = vmatprep.subr.bf16.mxu0 0
    %6065 = vmatpush1.bf16.msra.mxu0 0
    %6066 = vmatprep.subr.bf16.mxu0 0
    %6067 = vmatpush1.bf16.msra.mxu0 0
    %6068 = vmatprep.subr.bf16.mxu0 0
    %6069 = vmatpush1.bf16.msra.mxu0 0
    %6070 = vmatprep.subr.bf16.mxu0 0
    %6071 = vmatpush1.bf16.msra.mxu0 0
    %6072 = vmatprep.subr.bf16.mxu0 0
    %6073 = vmatpush1.bf16.msra.mxu0 0
    %6074 = vmatprep.subr.bf16.mxu0 0
    %6075 = vmatpush1.bf16.msra.mxu0 0
    %6076 = vmatprep.subr.bf16.mxu0 0
    %6077 = vmatpush1.bf16.msra.mxu0 0
    %6078 = vmatprep.subr.bf16.mxu0 0
    %6079 = vmatpush1.bf16.msra.mxu0 0
    %6080 = vmatprep.subr.bf16.mxu0 0
    %6081 = vmatpush1.bf16.msra.mxu0 0
    %6082 = vmatprep.subr.bf16.mxu0 0
    %6083 = vmatpush1.bf16.msra.mxu0 0
    %6084 = vmatprep.subr.bf16.mxu0 0
    %6085 = vmatpush1.bf16.msra.mxu0 0
    %6086 = vmatprep.subr.bf16.mxu0 0
    %6087 = vmatpush1.bf16.msra.mxu0 0
    %6088 = vmatprep.subr.bf16.mxu0 0
    %6089 = vmatpush1.bf16.msra.mxu0 0
    %6090 = vmatprep.mubr.bf16.mxu0 0
    %6091 = vmatmul.mubr.bf16.gmra.mrb[0].mxu0 %v6056
    %v6092 = vpop.f32.mrb[0].mxu0
    %v6093 = vadd.f32 0.0, %v6092
    %v6094 = vpop.f32.mrb[0].mxu0
    %v6095 = vpop.f32.mrb[0].mxu0
    %v6096 = vadd.f32 0.0, %v6095
    %v6097 = vpop.f32.mrb[0].mxu0
    %6098 = vdwg.mxu0
    %s6099 = scalar_lea.vmem %s57, 80
    %v6100 = vld [vmem:[%s6099] sm:$0xf]
    %v6101 = vld [vmem:[%s6099 + $0x4] sm:$0xf]
    %v6102 = vld [vmem:[%s6099 + $0x8] sm:$0xf]
    %v6103 = vld [vmem:[%s6099 + $0xc] sm:$0xf]
    %s6104 = scalar_lea.vmem %s63, 5
    %v6105 = vld [vmem:[%s6104] sm:$0x1]
    %v6107 = vlaneseq
    %v6108 = vshrl.u32 %v6107, 7
    %v6109 = vsub.s32 0, %v6108
    %v6110 = vrot.slane %v6105, %v6109
    %v6116 = vunpack.c.l.b16 %v6100
    %v6117 = vunpack.c.l.b16 %v6101
    %v6118 = vunpack.c.l.b16 %v6102
    %v6119 = vunpack.c.l.b16 %v6103
    %v6120 = vpack.c.b16 %v6117, %v6116
    %v6121 = vpack.c.b16 %v6119, %v6118
    %6124 = vmatprep.subr.bf16.mxu0 0
    %6125 = vmatpush1.bf16.msra.mxu0 %v6120
    %6126 = vmatprep.subr.bf16.mxu0 0
    %6127 = vmatpush1.bf16.msra.mxu0 %v6121
    %6128 = vmatprep.subr.bf16.mxu0 0
    %6129 = vmatpush1.bf16.msra.mxu0 0
    %6130 = vmatprep.subr.bf16.mxu0 0
    %6131 = vmatpush1.bf16.msra.mxu0 0
    %6132 = vmatprep.subr.bf16.mxu0 0
    %6133 = vmatpush1.bf16.msra.mxu0 0
    %6134 = vmatprep.subr.bf16.mxu0 0
    %6135 = vmatpush1.bf16.msra.mxu0 0
    %6136 = vmatprep.subr.bf16.mxu0 0
    %6137 = vmatpush1.bf16.msra.mxu0 0
    %6138 = vmatprep.subr.bf16.mxu0 0
    %6139 = vmatpush1.bf16.msra.mxu0 0
    %6140 = vmatprep.subr.bf16.mxu0 0
    %6141 = vmatpush1.bf16.msra.mxu0 0
    %6142 = vmatprep.subr.bf16.mxu0 0
    %6143 = vmatpush1.bf16.msra.mxu0 0
    %6144 = vmatprep.subr.bf16.mxu0 0
    %6145 = vmatpush1.bf16.msra.mxu0 0
    %6146 = vmatprep.subr.bf16.mxu0 0
    %6147 = vmatpush1.bf16.msra.mxu0 0
    %6148 = vmatprep.subr.bf16.mxu0 0
    %6149 = vmatpush1.bf16.msra.mxu0 0
    %6150 = vmatprep.subr.bf16.mxu0 0
    %6151 = vmatpush1.bf16.msra.mxu0 0
    %6152 = vmatprep.subr.bf16.mxu0 0
    %6153 = vmatpush1.bf16.msra.mxu0 0
    %6154 = vmatprep.subr.bf16.mxu0 0
    %6155 = vmatpush1.bf16.msra.mxu0 0
    %6156 = vmatprep.mubr.bf16.mxu0 0
    %6157 = vmatmul.mubr.bf16.gmra.mrb[0].mxu0 %v5659
    %v6158 = vpop.f32.mrb[0].mxu0
    %v6159 = vadd.f32 %v6110, %v6158
    %v6160 = vpop.f32.mrb[0].mxu0
    %v6161 = vpop.f32.mrb[0].mxu0
    %v6162 = vadd.f32 %v6110, %v6161
    %v6163 = vpop.f32.mrb[0].mxu0
    %6164 = vmatprep.mubr.bf16.mxu0 0
    %6165 = vmatmul.mubr.bf16.gmra.mrb[0].mxu0 %v5662
    %v6166 = vpop.f32.mrb[0].mxu0
    %v6167 = vadd.f32 %v6110, %v6166
    %v6168 = vpop.f32.mrb[0].mxu0
    %v6169 = vpop.f32.mrb[0].mxu0
    %v6170 = vadd.f32 %v6110, %v6169
    %v6171 = vpop.f32.mrb[0].mxu0
    %6172 = vdwg.mxu0
    %s6173 = scalar_lea.vmem %s59, 80
    %v6174 = vld [vmem:[%s6173] sm:$0xf]
    %v6175 = vld [vmem:[%s6173 + $0x4] sm:$0xf]
    %v6176 = vld [vmem:[%s6173 + $0x8] sm:$0xf]
    %v6177 = vld [vmem:[%s6173 + $0xc] sm:$0xf]
    %s6178 = scalar_lea.vmem %s65, 5
    %v6179 = vld [vmem:[%s6178] sm:$0x1]
    %v6181 = vlaneseq
    %v6182 = vshrl.u32 %v6181, 7
    %v6183 = vsub.s32 0, %v6182
    %v6184 = vrot.slane %v6179, %v6183
    %v6190 = vunpack.c.l.b16 %v6174
    %v6191 = vunpack.c.l.b16 %v6175
    %v6192 = vunpack.c.l.b16 %v6176
    %v6193 = vunpack.c.l.b16 %v6177
    %v6194 = vpack.c.b16 %v6191, %v6190
    %v6195 = vpack.c.b16 %v6193, %v6192
    %6198 = vmatprep.subr.bf16.mxu0 0
    %6199 = vmatpush1.bf16.msra.mxu0 %v6194
    %6200 = vmatprep.subr.bf16.mxu0 0
    %6201 = vmatpush1.bf16.msra.mxu0 %v6195
    %6202 = vmatprep.subr.bf16.mxu0 0
    %6203 = vmatpush1.bf16.msra.mxu0 0
    %6204 = vmatprep.subr.bf16.mxu0 0
    %6205 = vmatpush1.bf16.msra.mxu0 0
    %6206 = vmatprep.subr.bf16.mxu0 0
    %6207 = vmatpush1.bf16.msra.mxu0 0
    %6208 = vmatprep.subr.bf16.mxu0 0
    %6209 = vmatpush1.bf16.msra.mxu0 0
    %6210 = vmatprep.subr.bf16.mxu0 0
    %6211 = vmatpush1.bf16.msra.mxu0 0
    %6212 = vmatprep.subr.bf16.mxu0 0
    %6213 = vmatpush1.bf16.msra.mxu0 0
    %6214 = vmatprep.subr.bf16.mxu0 0
    %6215 = vmatpush1.bf16.msra.mxu0 0
    %6216 = vmatprep.subr.bf16.mxu0 0
    %6217 = vmatpush1.bf16.msra.mxu0 0
    %6218 = vmatprep.subr.bf16.mxu0 0
    %6219 = vmatpush1.bf16.msra.mxu0 0
    %6220 = vmatprep.subr.bf16.mxu0 0
    %6221 = vmatpush1.bf16.msra.mxu0 0
    %6222 = vmatprep.subr.bf16.mxu0 0
    %6223 = vmatpush1.bf16.msra.mxu0 0
    %6224 = vmatprep.subr.bf16.mxu0 0
    %6225 = vmatpush1.bf16.msra.mxu0 0
    %6226 = vmatprep.subr.bf16.mxu0 0
    %6227 = vmatpush1.bf16.msra.mxu0 0
    %6228 = vmatprep.subr.bf16.mxu0 0
    %6229 = vmatpush1.bf16.msra.mxu0 0
    %6230 = vmatprep.mubr.bf16.mxu0 0
    %6231 = vmatmul.mubr.bf16.gmra.mrb[0].mxu0 %v5659
    %v6232 = vpop.f32.mrb[0].mxu0
    %v6233 = vadd.f32 %v6184, %v6232
    %v6234 = vpop.f32.mrb[0].mxu0
    %v6235 = vpop.f32.mrb[0].mxu0
    %v6236 = vadd.f32 %v6184, %v6235
    %v6237 = vpop.f32.mrb[0].mxu0
    %6238 = vmatprep.mubr.bf16.mxu0 0
    %6239 = vmatmul.mubr.bf16.gmra.mrb[0].mxu0 %v5662
    %v6240 = vpop.f32.mrb[0].mxu0
    %v6241 = vadd.f32 %v6184, %v6240
    %v6242 = vpop.f32.mrb[0].mxu0
    %v6243 = vpop.f32.mrb[0].mxu0
    %v6244 = vadd.f32 %v6184, %v6243
    %v6245 = vpop.f32.mrb[0].mxu0
    %6246 = vdwg.mxu0
    %s6247 = scalar_lea.vmem %s61, 80
    %v6248 = vld [vmem:[%s6247] sm:$0xf]
    %v6249 = vld [vmem:[%s6247 + $0x4] sm:$0xf]
    %v6250 = vld [vmem:[%s6247 + $0x8] sm:$0xf]
    %v6251 = vld [vmem:[%s6247 + $0xc] sm:$0xf]
    %s6252 = scalar_lea.vmem %s67, 5
    %v6253 = vld [vmem:[%s6252] sm:$0x1]
    %v6255 = vlaneseq
    %v6256 = vshrl.u32 %v6255, 7
    %v6257 = vsub.s32 0, %v6256
    %v6258 = vrot.slane %v6253, %v6257
    %v6264 = vunpack.c.l.b16 %v6248
    %v6265 = vunpack.c.l.b16 %v6249
    %v6266 = vunpack.c.l.b16 %v6250
    %v6267 = vunpack.c.l.b16 %v6251
    %v6268 = vpack.c.b16 %v6265, %v6264
    %v6269 = vpack.c.b16 %v6267, %v6266
    %6272 = vmatprep.subr.bf16.mxu0 0
    %6273 = vmatpush1.bf16.msra.mxu0 %v6268
    %6274 = vmatprep.subr.bf16.mxu0 0
    %6275 = vmatpush1.bf16.msra.mxu0 %v6269
    %6276 = vmatprep.subr.bf16.mxu0 0
    %6277 = vmatpush1.bf16.msra.mxu0 0
    %6278 = vmatprep.subr.bf16.mxu0 0
    %6279 = vmatpush1.bf16.msra.mxu0 0
    %6280 = vmatprep.subr.bf16.mxu0 0
    %6281 = vmatpush1.bf16.msra.mxu0 0
    %6282 = vmatprep.subr.bf16.mxu0 0
    %6283 = vmatpush1.bf16.msra.mxu0 0
    %6284 = vmatprep.subr.bf16.mxu0 0
    %6285 = vmatpush1.bf16.msra.mxu0 0
    %6286 = vmatprep.subr.bf16.mxu0 0
    %6287 = vmatpush1.bf16.msra.mxu0 0
    %6288 = vmatprep.subr.bf16.mxu0 0
    %6289 = vmatpush1.bf16.msra.mxu0 0
    %6290 = vmatprep.subr.bf16.mxu0 0
    %6291 = vmatpush1.bf16.msra.mxu0 0
    %6292 = vmatprep.subr.bf16.mxu0 0
    %6293 = vmatpush1.bf16.msra.mxu0 0
    %6294 = vmatprep.subr.bf16.mxu0 0
    %6295 = vmatpush1.bf16.msra.mxu0 0
    %6296 = vmatprep.subr.bf16.mxu0 0
    %6297 = vmatpush1.bf16.msra.mxu0 0
    %6298 = vmatprep.subr.bf16.mxu0 0
    %6299 = vmatpush1.bf16.msra.mxu0 0
    %6300 = vmatprep.subr.bf16.mxu0 0
    %6301 = vmatpush1.bf16.msra.mxu0 0
    %6302 = vmatprep.subr.bf16.mxu0 0
    %6303 = vmatpush1.bf16.msra.mxu0 0
    %6304 = vmatprep.mubr.bf16.mxu0 0
    %6305 = vmatmul.mubr.bf16.gmra.mrb[0].mxu0 %v5659
    %v6306 = vpop.f32.mrb[0].mxu0
    %v6307 = vadd.f32 %v6258, %v6306
    %v6308 = vpop.f32.mrb[0].mxu0
    %v6309 = vpop.f32.mrb[0].mxu0
    %v6310 = vadd.f32 %v6258, %v6309
    %v6311 = vpop.f32.mrb[0].mxu0
    %6312 = vmatprep.mubr.bf16.mxu0 0
    %6313 = vmatmul.mubr.bf16.gmra.mrb[0].mxu0 %v5662
    %v6314 = vpop.f32.mrb[0].mxu0
    %v6315 = vadd.f32 %v6258, %v6314
    %v6316 = vpop.f32.mrb[0].mxu0
    %v6317 = vpop.f32.mrb[0].mxu0
    %v6318 = vadd.f32 %v6258, %v6317
    %v6319 = vpop.f32.mrb[0].mxu0
    %6320 = vdwg.mxu0
    %v6321 = vmul.f32 %v6159, 0.35355338
    %v6322 = vmul.f32 %v6162, 0.35355338
    %v6323 = vpack.c.bf16 %v6322, %v6321
    %v6324 = vpack.c.bf16 %v6236, %v6233
    %v6326 = vsel %vm1490, %v6323, 0
    %v6329 = vsel %vm1490, %v6324, 0
    %6331 = vmatprep.subr.bf16.mxu0 0
    %6332 = vmatpush1.bf16.xpose.msra.mxu0 %v6329
    %6333 = vmatprep.subr.bf16.mxu0 0
    %6334 = vmatpush1.bf16.xpose.msra.mxu0 0
    %6335 = vmatprep.subr.bf16.mxu0 0
    %6336 = vmatpush1.bf16.xpose.msra.mxu0 0
    %6337 = vmatprep.subr.bf16.mxu0 0
    %6338 = vmatpush1.bf16.xpose.msra.mxu0 0
    %6339 = vmatprep.subr.bf16.mxu0 0
    %6340 = vmatpush1.bf16.xpose.msra.mxu0 0
    %6341 = vmatprep.subr.bf16.mxu0 0
    %6342 = vmatpush1.bf16.xpose.msra.mxu0 0
    %6343 = vmatprep.subr.bf16.mxu0 0
    %6344 = vmatpush1.bf16.xpose.msra.mxu0 0
    %6345 = vmatprep.subr.bf16.mxu0 0
    %6346 = vmatpush1.bf16.xpose.msra.mxu0 0
    %6347 = vmatprep.subr.bf16.mxu0 0
    %6348 = vmatpush1.bf16.xpose.msra.mxu0 0
    %6349 = vmatprep.subr.bf16.mxu0 0
    %6350 = vmatpush1.bf16.xpose.msra.mxu0 0
    %6351 = vmatprep.subr.bf16.mxu0 0
    %6352 = vmatpush1.bf16.xpose.msra.mxu0 0
    %6353 = vmatprep.subr.bf16.mxu0 0
    %6354 = vmatpush1.bf16.xpose.msra.mxu0 0
    %6355 = vmatprep.subr.bf16.mxu0 0
    %6356 = vmatpush1.bf16.xpose.msra.mxu0 0
    %6357 = vmatprep.subr.bf16.mxu0 0
    %6358 = vmatpush1.bf16.xpose.msra.mxu0 0
    %6359 = vmatprep.subr.bf16.mxu0 0
    %6360 = vmatpush1.bf16.xpose.msra.mxu0 0
    %6361 = vmatprep.subr.bf16.mxu0 0
    %6362 = vmatpush1.bf16.xpose.msra.mxu0 0
    %6363 = vmatprep.mubr.bf16.mxu0 0
    %6364 = vmatmul.mubr.bf16.gmra.mrb[0].mxu0 %v6326
    %v6365 = vpop.f32.mrb[0].mxu0
    %v6366 = vadd.f32 0.0, %v6365
    %v6367 = vpop.f32.mrb[0].mxu0
    %v6368 = vpop.f32.mrb[0].mxu0
    %v6369 = vadd.f32 0.0, %v6368
    %v6370 = vpop.f32.mrb[0].mxu0
    %6371 = vdwg.mxu0
    %v6372 = vsel %vm1538, %v6366, -inf
    %6373 = vmax.xlane.f32.xlu0 %v6372
    %v6374 = vpop.xlane.xlu0 %6373
    %v6375 = vsel %vm1538, %v6369, -inf
    %6376 = vmax.xlane.f32.xlu0 %v6375
    %v6377 = vpop.xlane.xlu0 %6376
    %v6378 = vsub.f32 %v6366, %v6374
    %v6379 = vsub.f32 %v6369, %v6377
    %v6380 = vmul.f32 %v6378, 1.442695
    %v6381 = vpow.pop %v6380
    %v6382 = vmul.f32 %v6379, 1.442695
    %v6383 = vpow.pop %v6382
    %v6384 = vsel %vm1538, %v6381, 0.0
    %6385 = vadd.xlane.f32.xlu0 %v6384
    %v6386 = vpop.xlane.xlu0 %6385
    %v6387 = vsel %vm1538, %v6383, 0.0
    %6388 = vadd.xlane.f32.xlu0 %v6387
    %v6389 = vpop.xlane.xlu0 %6388
    %v6390 = vrcp.pop %v6386
    %v6391 = vmul.f32 %v6381, %v6390
    %v6392 = vrcp.pop %v6389
    %v6393 = vmul.f32 %v6383, %v6392
    %v6394 = vpack.c.bf16 %v6393, %v6391
    %v6395 = vpack.c.bf16 %v6310, %v6307
    %v6397 = vsel %vm1538, %v6394, 0
    %6399 = vmatprep.subr.bf16.mxu0 0
    %6400 = vmatpush1.bf16.msra.mxu0 %v6395
    %6401 = vmatprep.subr.bf16.mxu0 0
    %6402 = vmatpush1.bf16.msra.mxu0 0
    %6403 = vmatprep.subr.bf16.mxu0 0
    %6404 = vmatpush1.bf16.msra.mxu0 0
    %6405 = vmatprep.subr.bf16.mxu0 0
    %6406 = vmatpush1.bf16.msra.mxu0 0
    %6407 = vmatprep.subr.bf16.mxu0 0
    %6408 = vmatpush1.bf16.msra.mxu0 0
    %6409 = vmatprep.subr.bf16.mxu0 0
    %6410 = vmatpush1.bf16.msra.mxu0 0
    %6411 = vmatprep.subr.bf16.mxu0 0
    %6412 = vmatpush1.bf16.msra.mxu0 0
    %6413 = vmatprep.subr.bf16.mxu0 0
    %6414 = vmatpush1.bf16.msra.mxu0 0
    %6415 = vmatprep.subr.bf16.mxu0 0
    %6416 = vmatpush1.bf16.msra.mxu0 0
    %6417 = vmatprep.subr.bf16.mxu0 0
    %6418 = vmatpush1.bf16.msra.mxu0 0
    %6419 = vmatprep.subr.bf16.mxu0 0
    %6420 = vmatpush1.bf16.msra.mxu0 0
    %6421 = vmatprep.subr.bf16.mxu0 0
    %6422 = vmatpush1.bf16.msra.mxu0 0
    %6423 = vmatprep.subr.bf16.mxu0 0
    %6424 = vmatpush1.bf16.msra.mxu0 0
    %6425 = vmatprep.subr.bf16.mxu0 0
    %6426 = vmatpush1.bf16.msra.mxu0 0
    %6427 = vmatprep.subr.bf16.mxu0 0
    %6428 = vmatpush1.bf16.msra.mxu0 0
    %6429 = vmatprep.subr.bf16.mxu0 0
    %6430 = vmatpush1.bf16.msra.mxu0 0
    %6431 = vmatprep.mubr.bf16.mxu0 0
    %6432 = vmatmul.mubr.bf16.gmra.mrb[0].mxu0 %v6397
    %v6433 = vpop.f32.mrb[0].mxu0
    %v6434 = vadd.f32 0.0, %v6433
    %v6435 = vpop.f32.mrb[0].mxu0
    %v6436 = vpop.f32.mrb[0].mxu0
    %v6437 = vadd.f32 0.0, %v6436
    %v6438 = vpop.f32.mrb[0].mxu0
    %6439 = vdwg.mxu0
    %v6440 = vmul.f32 %v6167, 0.35355338
    %v6441 = vmul.f32 %v6170, 0.35355338
    %v6442 = vpack.c.bf16 %v6441, %v6440
    %v6443 = vpack.c.bf16 %v6244, %v6241
    %v6445 = vsel %vm1490, %v6442, 0
    %v6448 = vsel %vm1490, %v6443, 0
    %6450 = vmatprep.subr.bf16.mxu0 0
    %6451 = vmatpush1.bf16.xpose.msra.mxu0 %v6448
    %6452 = vmatprep.subr.bf16.mxu0 0
    %6453 = vmatpush1.bf16.xpose.msra.mxu0 0
    %6454 = vmatprep.subr.bf16.mxu0 0
    %6455 = vmatpush1.bf16.xpose.msra.mxu0 0
    %6456 = vmatprep.subr.bf16.mxu0 0
    %6457 = vmatpush1.bf16.xpose.msra.mxu0 0
    %6458 = vmatprep.subr.bf16.mxu0 0
    %6459 = vmatpush1.bf16.xpose.msra.mxu0 0
    %6460 = vmatprep.subr.bf16.mxu0 0
    %6461 = vmatpush1.bf16.xpose.msra.mxu0 0
    %6462 = vmatprep.subr.bf16.mxu0 0
    %6463 = vmatpush1.bf16.xpose.msra.mxu0 0
    %6464 = vmatprep.subr.bf16.mxu0 0
    %6465 = vmatpush1.bf16.xpose.msra.mxu0 0
    %6466 = vmatprep.subr.bf16.mxu0 0
    %6467 = vmatpush1.bf16.xpose.msra.mxu0 0
    %6468 = vmatprep.subr.bf16.mxu0 0
    %6469 = vmatpush1.bf16.xpose.msra.mxu0 0
    %6470 = vmatprep.subr.bf16.mxu0 0
    %6471 = vmatpush1.bf16.xpose.msra.mxu0 0
    %6472 = vmatprep.subr.bf16.mxu0 0
    %6473 = vmatpush1.bf16.xpose.msra.mxu0 0
    %6474 = vmatprep.subr.bf16.mxu0 0
    %6475 = vmatpush1.bf16.xpose.msra.mxu0 0
    %6476 = vmatprep.subr.bf16.mxu0 0
    %6477 = vmatpush1.bf16.xpose.msra.mxu0 0
    %6478 = vmatprep.subr.bf16.mxu0 0
    %6479 = vmatpush1.bf16.xpose.msra.mxu0 0
    %6480 = vmatprep.subr.bf16.mxu0 0
    %6481 = vmatpush1.bf16.xpose.msra.mxu0 0
    %6482 = vmatprep.mubr.bf16.mxu0 0
    %6483 = vmatmul.mubr.bf16.gmra.mrb[0].mxu0 %v6445
    %v6484 = vpop.f32.mrb[0].mxu0
    %v6485 = vadd.f32 0.0, %v6484
    %v6486 = vpop.f32.mrb[0].mxu0
    %v6487 = vpop.f32.mrb[0].mxu0
    %v6488 = vadd.f32 0.0, %v6487
    %v6489 = vpop.f32.mrb[0].mxu0
    %6490 = vdwg.mxu0
    %v6491 = vsel %vm1538, %v6485, -inf
    %6492 = vmax.xlane.f32.xlu0 %v6491
    %v6493 = vpop.xlane.xlu0 %6492
    %v6494 = vsel %vm1538, %v6488, -inf
    %6495 = vmax.xlane.f32.xlu0 %v6494
    %v6496 = vpop.xlane.xlu0 %6495
    %v6497 = vsub.f32 %v6485, %v6493
    %v6498 = vsub.f32 %v6488, %v6496
    %v6499 = vmul.f32 %v6497, 1.442695
    %v6500 = vpow.pop %v6499
    %v6501 = vmul.f32 %v6498, 1.442695
    %v6502 = vpow.pop %v6501
    %v6503 = vsel %vm1538, %v6500, 0.0
    %6504 = vadd.xlane.f32.xlu0 %v6503
    %v6505 = vpop.xlane.xlu0 %6504
    %v6506 = vsel %vm1538, %v6502, 0.0
    %6507 = vadd.xlane.f32.xlu0 %v6506
    %v6508 = vpop.xlane.xlu0 %6507
    %v6509 = vrcp.pop %v6505
    %v6510 = vmul.f32 %v6500, %v6509
    %v6511 = vrcp.pop %v6508
    %v6512 = vmul.f32 %v6502, %v6511
    %v6513 = vpack.c.bf16 %v6512, %v6510
    %v6514 = vpack.c.bf16 %v6318, %v6315
    %v6516 = vsel %vm1538, %v6513, 0
    %6518 = vmatprep.subr.bf16.mxu0 0
    %6519 = vmatpush1.bf16.msra.mxu0 %v6514
    %6520 = vmatprep.subr.bf16.mxu0 0
    %6521 = vmatpush1.bf16.msra.mxu0 0
    %6522 = vmatprep.subr.bf16.mxu0 0
    %6523 = vmatpush1.bf16.msra.mxu0 0
    %6524 = vmatprep.subr.bf16.mxu0 0
    %6525 = vmatpush1.bf16.msra.mxu0 0
    %6526 = vmatprep.subr.bf16.mxu0 0
    %6527 = vmatpush1.bf16.msra.mxu0 0
    %6528 = vmatprep.subr.bf16.mxu0 0
    %6529 = vmatpush1.bf16.msra.mxu0 0
    %6530 = vmatprep.subr.bf16.mxu0 0
    %6531 = vmatpush1.bf16.msra.mxu0 0
    %6532 = vmatprep.subr.bf16.mxu0 0
    %6533 = vmatpush1.bf16.msra.mxu0 0
    %6534 = vmatprep.subr.bf16.mxu0 0
    %6535 = vmatpush1.bf16.msra.mxu0 0
    %6536 = vmatprep.subr.bf16.mxu0 0
    %6537 = vmatpush1.bf16.msra.mxu0 0
    %6538 = vmatprep.subr.bf16.mxu0 0
    %6539 = vmatpush1.bf16.msra.mxu0 0
    %6540 = vmatprep.subr.bf16.mxu0 0
    %6541 = vmatpush1.bf16.msra.mxu0 0
    %6542 = vmatprep.subr.bf16.mxu0 0
    %6543 = vmatpush1.bf16.msra.mxu0 0
    %6544 = vmatprep.subr.bf16.mxu0 0
    %6545 = vmatpush1.bf16.msra.mxu0 0
    %6546 = vmatprep.subr.bf16.mxu0 0
    %6547 = vmatpush1.bf16.msra.mxu0 0
    %6548 = vmatprep.subr.bf16.mxu0 0
    %6549 = vmatpush1.bf16.msra.mxu0 0
    %6550 = vmatprep.mubr.bf16.mxu0 0
    %6551 = vmatmul.mubr.bf16.gmra.mrb[0].mxu0 %v6516
    %v6552 = vpop.f32.mrb[0].mxu0
    %v6553 = vadd.f32 0.0, %v6552
    %v6554 = vpop.f32.mrb[0].mxu0
    %v6555 = vpop.f32.mrb[0].mxu0
    %v6556 = vadd.f32 0.0, %v6555
    %v6557 = vpop.f32.mrb[0].mxu0
    %6558 = vdwg.mxu0
    %s6559 = scalar_lea.vmem %s57, 96
    %v6560 = vld [vmem:[%s6559] sm:$0xf]
    %v6561 = vld [vmem:[%s6559 + $0x4] sm:$0xf]
    %v6562 = vld [vmem:[%s6559 + $0x8] sm:$0xf]
    %v6563 = vld [vmem:[%s6559 + $0xc] sm:$0xf]
    %s6564 = scalar_lea.vmem %s63, 6
    %v6565 = vld [vmem:[%s6564] sm:$0x1]
    %v6567 = vlaneseq
    %v6568 = vshrl.u32 %v6567, 7
    %v6569 = vsub.s32 0, %v6568
    %v6570 = vrot.slane %v6565, %v6569
    %v6576 = vunpack.c.l.b16 %v6560
    %v6577 = vunpack.c.l.b16 %v6561
    %v6578 = vunpack.c.l.b16 %v6562
    %v6579 = vunpack.c.l.b16 %v6563
    %v6580 = vpack.c.b16 %v6577, %v6576
    %v6581 = vpack.c.b16 %v6579, %v6578
    %6584 = vmatprep.subr.bf16.mxu0 0
    %6585 = vmatpush1.bf16.msra.mxu0 %v6580
    %6586 = vmatprep.subr.bf16.mxu0 0
    %6587 = vmatpush1.bf16.msra.mxu0 %v6581
    %6588 = vmatprep.subr.bf16.mxu0 0
    %6589 = vmatpush1.bf16.msra.mxu0 0
    %6590 = vmatprep.subr.bf16.mxu0 0
    %6591 = vmatpush1.bf16.msra.mxu0 0
    %6592 = vmatprep.subr.bf16.mxu0 0
    %6593 = vmatpush1.bf16.msra.mxu0 0
    %6594 = vmatprep.subr.bf16.mxu0 0
    %6595 = vmatpush1.bf16.msra.mxu0 0
    %6596 = vmatprep.subr.bf16.mxu0 0
    %6597 = vmatpush1.bf16.msra.mxu0 0
    %6598 = vmatprep.subr.bf16.mxu0 0
    %6599 = vmatpush1.bf16.msra.mxu0 0
    %6600 = vmatprep.subr.bf16.mxu0 0
    %6601 = vmatpush1.bf16.msra.mxu0 0
    %6602 = vmatprep.subr.bf16.mxu0 0
    %6603 = vmatpush1.bf16.msra.mxu0 0
    %6604 = vmatprep.subr.bf16.mxu0 0
    %6605 = vmatpush1.bf16.msra.mxu0 0
    %6606 = vmatprep.subr.bf16.mxu0 0
    %6607 = vmatpush1.bf16.msra.mxu0 0
    %6608 = vmatprep.subr.bf16.mxu0 0
    %6609 = vmatpush1.bf16.msra.mxu0 0
    %6610 = vmatprep.subr.bf16.mxu0 0
    %6611 = vmatpush1.bf16.msra.mxu0 0
    %6612 = vmatprep.subr.bf16.mxu0 0
    %6613 = vmatpush1.bf16.msra.mxu0 0
    %6614 = vmatprep.subr.bf16.mxu0 0
    %6615 = vmatpush1.bf16.msra.mxu0 0
    %6616 = vmatprep.mubr.bf16.mxu0 0
    %6617 = vmatmul.mubr.bf16.gmra.mrb[0].mxu0 %v5659
    %v6618 = vpop.f32.mrb[0].mxu0
    %v6619 = vadd.f32 %v6570, %v6618
    %v6620 = vpop.f32.mrb[0].mxu0
    %v6621 = vpop.f32.mrb[0].mxu0
    %v6622 = vadd.f32 %v6570, %v6621
    %v6623 = vpop.f32.mrb[0].mxu0
    %6624 = vmatprep.mubr.bf16.mxu0 0
    %6625 = vmatmul.mubr.bf16.gmra.mrb[0].mxu0 %v5662
    %v6626 = vpop.f32.mrb[0].mxu0
    %v6627 = vadd.f32 %v6570, %v6626
    %v6628 = vpop.f32.mrb[0].mxu0
    %v6629 = vpop.f32.mrb[0].mxu0
    %v6630 = vadd.f32 %v6570, %v6629
    %v6631 = vpop.f32.mrb[0].mxu0
    %6632 = vdwg.mxu0
    %s6633 = scalar_lea.vmem %s59, 96
    %v6634 = vld [vmem:[%s6633] sm:$0xf]
    %v6635 = vld [vmem:[%s6633 + $0x4] sm:$0xf]
    %v6636 = vld [vmem:[%s6633 + $0x8] sm:$0xf]
    %v6637 = vld [vmem:[%s6633 + $0xc] sm:$0xf]
    %s6638 = scalar_lea.vmem %s65, 6
    %v6639 = vld [vmem:[%s6638] sm:$0x1]
    %v6641 = vlaneseq
    %v6642 = vshrl.u32 %v6641, 7
    %v6643 = vsub.s32 0, %v6642
    %v6644 = vrot.slane %v6639, %v6643
    %v6650 = vunpack.c.l.b16 %v6634
    %v6651 = vunpack.c.l.b16 %v6635
    %v6652 = vunpack.c.l.b16 %v6636
    %v6653 = vunpack.c.l.b16 %v6637
    %v6654 = vpack.c.b16 %v6651, %v6650
    %v6655 = vpack.c.b16 %v6653, %v6652
    %6658 = vmatprep.subr.bf16.mxu0 0
    %6659 = vmatpush1.bf16.msra.mxu0 %v6654
    %6660 = vmatprep.subr.bf16.mxu0 0
    %6661 = vmatpush1.bf16.msra.mxu0 %v6655
    %6662 = vmatprep.subr.bf16.mxu0 0
    %6663 = vmatpush1.bf16.msra.mxu0 0
    %6664 = vmatprep.subr.bf16.mxu0 0
    %6665 = vmatpush1.bf16.msra.mxu0 0
    %6666 = vmatprep.subr.bf16.mxu0 0
    %6667 = vmatpush1.bf16.msra.mxu0 0
    %6668 = vmatprep.subr.bf16.mxu0 0
    %6669 = vmatpush1.bf16.msra.mxu0 0
    %6670 = vmatprep.subr.bf16.mxu0 0
    %6671 = vmatpush1.bf16.msra.mxu0 0
    %6672 = vmatprep.subr.bf16.mxu0 0
    %6673 = vmatpush1.bf16.msra.mxu0 0
    %6674 = vmatprep.subr.bf16.mxu0 0
    %6675 = vmatpush1.bf16.msra.mxu0 0
    %6676 = vmatprep.subr.bf16.mxu0 0
    %6677 = vmatpush1.bf16.msra.mxu0 0
    %6678 = vmatprep.subr.bf16.mxu0 0
    %6679 = vmatpush1.bf16.msra.mxu0 0
    %6680 = vmatprep.subr.bf16.mxu0 0
    %6681 = vmatpush1.bf16.msra.mxu0 0
    %6682 = vmatprep.subr.bf16.mxu0 0
    %6683 = vmatpush1.bf16.msra.mxu0 0
    %6684 = vmatprep.subr.bf16.mxu0 0
    %6685 = vmatpush1.bf16.msra.mxu0 0
    %6686 = vmatprep.subr.bf16.mxu0 0
    %6687 = vmatpush1.bf16.msra.mxu0 0
    %6688 = vmatprep.subr.bf16.mxu0 0
    %6689 = vmatpush1.bf16.msra.mxu0 0
    %6690 = vmatprep.mubr.bf16.mxu0 0
    %6691 = vmatmul.mubr.bf16.gmra.mrb[0].mxu0 %v5659
    %v6692 = vpop.f32.mrb[0].mxu0
    %v6693 = vadd.f32 %v6644, %v6692
    %v6694 = vpop.f32.mrb[0].mxu0
    %v6695 = vpop.f32.mrb[0].mxu0
    %v6696 = vadd.f32 %v6644, %v6695
    %v6697 = vpop.f32.mrb[0].mxu0
    %6698 = vmatprep.mubr.bf16.mxu0 0
    %6699 = vmatmul.mubr.bf16.gmra.mrb[0].mxu0 %v5662
    %v6700 = vpop.f32.mrb[0].mxu0
    %v6701 = vadd.f32 %v6644, %v6700
    %v6702 = vpop.f32.mrb[0].mxu0
    %v6703 = vpop.f32.mrb[0].mxu0
    %v6704 = vadd.f32 %v6644, %v6703
    %v6705 = vpop.f32.mrb[0].mxu0
    %6706 = vdwg.mxu0
    %s6707 = scalar_lea.vmem %s61, 96
    %v6708 = vld [vmem:[%s6707] sm:$0xf]
    %v6709 = vld [vmem:[%s6707 + $0x4] sm:$0xf]
    %v6710 = vld [vmem:[%s6707 + $0x8] sm:$0xf]
    %v6711 = vld [vmem:[%s6707 + $0xc] sm:$0xf]
    %s6712 = scalar_lea.vmem %s67, 6
    %v6713 = vld [vmem:[%s6712] sm:$0x1]
    %v6715 = vlaneseq
    %v6716 = vshrl.u32 %v6715, 7
    %v6717 = vsub.s32 0, %v6716
    %v6718 = vrot.slane %v6713, %v6717
    %v6724 = vunpack.c.l.b16 %v6708
    %v6725 = vunpack.c.l.b16 %v6709
    %v6726 = vunpack.c.l.b16 %v6710
    %v6727 = vunpack.c.l.b16 %v6711
    %v6728 = vpack.c.b16 %v6725, %v6724
    %v6729 = vpack.c.b16 %v6727, %v6726
    %6732 = vmatprep.subr.bf16.mxu0 0
    %6733 = vmatpush1.bf16.msra.mxu0 %v6728
    %6734 = vmatprep.subr.bf16.mxu0 0
    %6735 = vmatpush1.bf16.msra.mxu0 %v6729
    %6736 = vmatprep.subr.bf16.mxu0 0
    %6737 = vmatpush1.bf16.msra.mxu0 0
    %6738 = vmatprep.subr.bf16.mxu0 0
    %6739 = vmatpush1.bf16.msra.mxu0 0
    %6740 = vmatprep.subr.bf16.mxu0 0
    %6741 = vmatpush1.bf16.msra.mxu0 0
    %6742 = vmatprep.subr.bf16.mxu0 0
    %6743 = vmatpush1.bf16.msra.mxu0 0
    %6744 = vmatprep.subr.bf16.mxu0 0
    %6745 = vmatpush1.bf16.msra.mxu0 0
    %6746 = vmatprep.subr.bf16.mxu0 0
    %6747 = vmatpush1.bf16.msra.mxu0 0
    %6748 = vmatprep.subr.bf16.mxu0 0
    %6749 = vmatpush1.bf16.msra.mxu0 0
    %6750 = vmatprep.subr.bf16.mxu0 0
    %6751 = vmatpush1.bf16.msra.mxu0 0
    %6752 = vmatprep.subr.bf16.mxu0 0
    %6753 = vmatpush1.bf16.msra.mxu0 0
    %6754 = vmatprep.subr.bf16.mxu0 0
    %6755 = vmatpush1.bf16.msra.mxu0 0
    %6756 = vmatprep.subr.bf16.mxu0 0
    %6757 = vmatpush1.bf16.msra.mxu0 0
    %6758 = vmatprep.subr.bf16.mxu0 0
    %6759 = vmatpush1.bf16.msra.mxu0 0
    %6760 = vmatprep.subr.bf16.mxu0 0
    %6761 = vmatpush1.bf16.msra.mxu0 0
    %6762 = vmatprep.subr.bf16.mxu0 0
    %6763 = vmatpush1.bf16.msra.mxu0 0
    %6764 = vmatprep.mubr.bf16.mxu0 0
    %6765 = vmatmul.mubr.bf16.gmra.mrb[0].mxu0 %v5659
    %v6766 = vpop.f32.mrb[0].mxu0
    %v6767 = vadd.f32 %v6718, %v6766
    %v6768 = vpop.f32.mrb[0].mxu0
    %v6769 = vpop.f32.mrb[0].mxu0
    %v6770 = vadd.f32 %v6718, %v6769
    %v6771 = vpop.f32.mrb[0].mxu0
    %6772 = vmatprep.mubr.bf16.mxu0 0
    %6773 = vmatmul.mubr.bf16.gmra.mrb[0].mxu0 %v5662
    %v6774 = vpop.f32.mrb[0].mxu0
    %v6775 = vadd.f32 %v6718, %v6774
    %v6776 = vpop.f32.mrb[0].mxu0
    %v6777 = vpop.f32.mrb[0].mxu0
    %v6778 = vadd.f32 %v6718, %v6777
    %v6779 = vpop.f32.mrb[0].mxu0
    %6780 = vdwg.mxu0
    %v6781 = vmul.f32 %v6619, 0.35355338
    %v6782 = vmul.f32 %v6622, 0.35355338
    %v6783 = vpack.c.bf16 %v6782, %v6781
    %v6784 = vpack.c.bf16 %v6696, %v6693
    %v6786 = vsel %vm1490, %v6783, 0
    %v6789 = vsel %vm1490, %v6784, 0
    %6791 = vmatprep.subr.bf16.mxu0 0
    %6792 = vmatpush1.bf16.xpose.msra.mxu0 %v6789
    %6793 = vmatprep.subr.bf16.mxu0 0
    %6794 = vmatpush1.bf16.xpose.msra.mxu0 0
    %6795 = vmatprep.subr.bf16.mxu0 0
    %6796 = vmatpush1.bf16.xpose.msra.mxu0 0
    %6797 = vmatprep.subr.bf16.mxu0 0
    %6798 = vmatpush1.bf16.xpose.msra.mxu0 0
    %6799 = vmatprep.subr.bf16.mxu0 0
    %6800 = vmatpush1.bf16.xpose.msra.mxu0 0
    %6801 = vmatprep.subr.bf16.mxu0 0
    %6802 = vmatpush1.bf16.xpose.msra.mxu0 0
    %6803 = vmatprep.subr.bf16.mxu0 0
    %6804 = vmatpush1.bf16.xpose.msra.mxu0 0
    %6805 = vmatprep.subr.bf16.mxu0 0
    %6806 = vmatpush1.bf16.xpose.msra.mxu0 0
    %6807 = vmatprep.subr.bf16.mxu0 0
    %6808 = vmatpush1.bf16.xpose.msra.mxu0 0
    %6809 = vmatprep.subr.bf16.mxu0 0
    %6810 = vmatpush1.bf16.xpose.msra.mxu0 0
    %6811 = vmatprep.subr.bf16.mxu0 0
    %6812 = vmatpush1.bf16.xpose.msra.mxu0 0
    %6813 = vmatprep.subr.bf16.mxu0 0
    %6814 = vmatpush1.bf16.xpose.msra.mxu0 0
    %6815 = vmatprep.subr.bf16.mxu0 0
    %6816 = vmatpush1.bf16.xpose.msra.mxu0 0
    %6817 = vmatprep.subr.bf16.mxu0 0
    %6818 = vmatpush1.bf16.xpose.msra.mxu0 0
    %6819 = vmatprep.subr.bf16.mxu0 0
    %6820 = vmatpush1.bf16.xpose.msra.mxu0 0
    %6821 = vmatprep.subr.bf16.mxu0 0
    %6822 = vmatpush1.bf16.xpose.msra.mxu0 0
    %6823 = vmatprep.mubr.bf16.mxu0 0
    %6824 = vmatmul.mubr.bf16.gmra.mrb[0].mxu0 %v6786
    %v6825 = vpop.f32.mrb[0].mxu0
    %v6826 = vadd.f32 0.0, %v6825
    %v6827 = vpop.f32.mrb[0].mxu0
    %v6828 = vpop.f32.mrb[0].mxu0
    %v6829 = vadd.f32 0.0, %v6828
    %v6830 = vpop.f32.mrb[0].mxu0
    %6831 = vdwg.mxu0
    %v6832 = vsel %vm1538, %v6826, -inf
    %6833 = vmax.xlane.f32.xlu0 %v6832
    %v6834 = vpop.xlane.xlu0 %6833
    %v6835 = vsel %vm1538, %v6829, -inf
    %6836 = vmax.xlane.f32.xlu0 %v6835
    %v6837 = vpop.xlane.xlu0 %6836
    %v6838 = vsub.f32 %v6826, %v6834
    %v6839 = vsub.f32 %v6829, %v6837
    %v6840 = vmul.f32 %v6838, 1.442695
    %v6841 = vpow.pop %v6840
    %v6842 = vmul.f32 %v6839, 1.442695
    %v6843 = vpow.pop %v6842
    %v6844 = vsel %vm1538, %v6841, 0.0
    %6845 = vadd.xlane.f32.xlu0 %v6844
    %v6846 = vpop.xlane.xlu0 %6845
    %v6847 = vsel %vm1538, %v6843, 0.0
    %6848 = vadd.xlane.f32.xlu0 %v6847
    %v6849 = vpop.xlane.xlu0 %6848
    %v6850 = vrcp.pop %v6846
    %v6851 = vmul.f32 %v6841, %v6850
    %v6852 = vrcp.pop %v6849
    %v6853 = vmul.f32 %v6843, %v6852
    %v6854 = vpack.c.bf16 %v6853, %v6851
    %v6855 = vpack.c.bf16 %v6770, %v6767
    %v6857 = vsel %vm1538, %v6854, 0
    %6859 = vmatprep.subr.bf16.mxu0 0
    %6860 = vmatpush1.bf16.msra.mxu0 %v6855
    %6861 = vmatprep.subr.bf16.mxu0 0
    %6862 = vmatpush1.bf16.msra.mxu0 0
    %6863 = vmatprep.subr.bf16.mxu0 0
    %6864 = vmatpush1.bf16.msra.mxu0 0
    %6865 = vmatprep.subr.bf16.mxu0 0
    %6866 = vmatpush1.bf16.msra.mxu0 0
    %6867 = vmatprep.subr.bf16.mxu0 0
    %6868 = vmatpush1.bf16.msra.mxu0 0
    %6869 = vmatprep.subr.bf16.mxu0 0
    %6870 = vmatpush1.bf16.msra.mxu0 0
    %6871 = vmatprep.subr.bf16.mxu0 0
    %6872 = vmatpush1.bf16.msra.mxu0 0
    %6873 = vmatprep.subr.bf16.mxu0 0
    %6874 = vmatpush1.bf16.msra.mxu0 0
    %6875 = vmatprep.subr.bf16.mxu0 0
    %6876 = vmatpush1.bf16.msra.mxu0 0
    %6877 = vmatprep.subr.bf16.mxu0 0
    %6878 = vmatpush1.bf16.msra.mxu0 0
    %6879 = vmatprep.subr.bf16.mxu0 0
    %6880 = vmatpush1.bf16.msra.mxu0 0
    %6881 = vmatprep.subr.bf16.mxu0 0
    %6882 = vmatpush1.bf16.msra.mxu0 0
    %6883 = vmatprep.subr.bf16.mxu0 0
    %6884 = vmatpush1.bf16.msra.mxu0 0
    %6885 = vmatprep.subr.bf16.mxu0 0
    %6886 = vmatpush1.bf16.msra.mxu0 0
    %6887 = vmatprep.subr.bf16.mxu0 0
    %6888 = vmatpush1.bf16.msra.mxu0 0
    %6889 = vmatprep.subr.bf16.mxu0 0
    %6890 = vmatpush1.bf16.msra.mxu0 0
    %6891 = vmatprep.mubr.bf16.mxu0 0
    %6892 = vmatmul.mubr.bf16.gmra.mrb[0].mxu0 %v6857
    %v6893 = vpop.f32.mrb[0].mxu0
    %v6894 = vadd.f32 0.0, %v6893
    %v6895 = vpop.f32.mrb[0].mxu0
    %v6896 = vpop.f32.mrb[0].mxu0
    %v6897 = vadd.f32 0.0, %v6896
    %v6898 = vpop.f32.mrb[0].mxu0
    %6899 = vdwg.mxu0
    %v6900 = vmul.f32 %v6627, 0.35355338
    %v6901 = vmul.f32 %v6630, 0.35355338
    %v6902 = vpack.c.bf16 %v6901, %v6900
    %v6903 = vpack.c.bf16 %v6704, %v6701
    %v6905 = vsel %vm1490, %v6902, 0
    %v6908 = vsel %vm1490, %v6903, 0
    %6910 = vmatprep.subr.bf16.mxu0 0
    %6911 = vmatpush1.bf16.xpose.msra.mxu0 %v6908
    %6912 = vmatprep.subr.bf16.mxu0 0
    %6913 = vmatpush1.bf16.xpose.msra.mxu0 0
    %6914 = vmatprep.subr.bf16.mxu0 0
    %6915 = vmatpush1.bf16.xpose.msra.mxu0 0
    %6916 = vmatprep.subr.bf16.mxu0 0
    %6917 = vmatpush1.bf16.xpose.msra.mxu0 0
    %6918 = vmatprep.subr.bf16.mxu0 0
    %6919 = vmatpush1.bf16.xpose.msra.mxu0 0
    %6920 = vmatprep.subr.bf16.mxu0 0
    %6921 = vmatpush1.bf16.xpose.msra.mxu0 0
    %6922 = vmatprep.subr.bf16.mxu0 0
    %6923 = vmatpush1.bf16.xpose.msra.mxu0 0
    %6924 = vmatprep.subr.bf16.mxu0 0
    %6925 = vmatpush1.bf16.xpose.msra.mxu0 0
    %6926 = vmatprep.subr.bf16.mxu0 0
    %6927 = vmatpush1.bf16.xpose.msra.mxu0 0
    %6928 = vmatprep.subr.bf16.mxu0 0
    %6929 = vmatpush1.bf16.xpose.msra.mxu0 0
    %6930 = vmatprep.subr.bf16.mxu0 0
    %6931 = vmatpush1.bf16.xpose.msra.mxu0 0
    %6932 = vmatprep.subr.bf16.mxu0 0
    %6933 = vmatpush1.bf16.xpose.msra.mxu0 0
    %6934 = vmatprep.subr.bf16.mxu0 0
    %6935 = vmatpush1.bf16.xpose.msra.mxu0 0
    %6936 = vmatprep.subr.bf16.mxu0 0
    %6937 = vmatpush1.bf16.xpose.msra.mxu0 0
    %6938 = vmatprep.subr.bf16.mxu0 0
    %6939 = vmatpush1.bf16.xpose.msra.mxu0 0
    %6940 = vmatprep.subr.bf16.mxu0 0
    %6941 = vmatpush1.bf16.xpose.msra.mxu0 0
    %6942 = vmatprep.mubr.bf16.mxu0 0
    %6943 = vmatmul.mubr.bf16.gmra.mrb[0].mxu0 %v6905
    %v6944 = vpop.f32.mrb[0].mxu0
    %v6945 = vadd.f32 0.0, %v6944
    %v6946 = vpop.f32.mrb[0].mxu0
    %v6947 = vpop.f32.mrb[0].mxu0
    %v6948 = vadd.f32 0.0, %v6947
    %v6949 = vpop.f32.mrb[0].mxu0
    %6950 = vdwg.mxu0
    %v6951 = vsel %vm1538, %v6945, -inf
    %6952 = vmax.xlane.f32.xlu0 %v6951
    %v6953 = vpop.xlane.xlu0 %6952
    %v6954 = vsel %vm1538, %v6948, -inf
    %6955 = vmax.xlane.f32.xlu0 %v6954
    %v6956 = vpop.xlane.xlu0 %6955
    %v6957 = vsub.f32 %v6945, %v6953
    %v6958 = vsub.f32 %v6948, %v6956
    %v6959 = vmul.f32 %v6957, 1.442695
    %v6960 = vpow.pop %v6959
    %v6961 = vmul.f32 %v6958, 1.442695
    %v6962 = vpow.pop %v6961
    %v6963 = vsel %vm1538, %v6960, 0.0
    %6964 = vadd.xlane.f32.xlu0 %v6963
    %v6965 = vpop.xlane.xlu0 %6964
    %v6966 = vsel %vm1538, %v6962, 0.0
    %6967 = vadd.xlane.f32.xlu0 %v6966
    %v6968 = vpop.xlane.xlu0 %6967
    %v6969 = vrcp.pop %v6965
    %v6970 = vmul.f32 %v6960, %v6969
    %v6971 = vrcp.pop %v6968
    %v6972 = vmul.f32 %v6962, %v6971
    %v6973 = vpack.c.bf16 %v6972, %v6970
    %v6974 = vpack.c.bf16 %v6778, %v6775
    %v6976 = vsel %vm1538, %v6973, 0
    %6978 = vmatprep.subr.bf16.mxu0 0
    %6979 = vmatpush1.bf16.msra.mxu0 %v6974
    %6980 = vmatprep.subr.bf16.mxu0 0
    %6981 = vmatpush1.bf16.msra.mxu0 0
    %6982 = vmatprep.subr.bf16.mxu0 0
    %6983 = vmatpush1.bf16.msra.mxu0 0
    %6984 = vmatprep.subr.bf16.mxu0 0
    %6985 = vmatpush1.bf16.msra.mxu0 0
    %6986 = vmatprep.subr.bf16.mxu0 0
    %6987 = vmatpush1.bf16.msra.mxu0 0
    %6988 = vmatprep.subr.bf16.mxu0 0
    %6989 = vmatpush1.bf16.msra.mxu0 0
    %6990 = vmatprep.subr.bf16.mxu0 0
    %6991 = vmatpush1.bf16.msra.mxu0 0
    %6992 = vmatprep.subr.bf16.mxu0 0
    %6993 = vmatpush1.bf16.msra.mxu0 0
    %6994 = vmatprep.subr.bf16.mxu0 0
    %6995 = vmatpush1.bf16.msra.mxu0 0
    %6996 = vmatprep.subr.bf16.mxu0 0
    %6997 = vmatpush1.bf16.msra.mxu0 0
    %6998 = vmatprep.subr.bf16.mxu0 0
    %6999 = vmatpush1.bf16.msra.mxu0 0
    %7000 = vmatprep.subr.bf16.mxu0 0
    %7001 = vmatpush1.bf16.msra.mxu0 0
    %7002 = vmatprep.subr.bf16.mxu0 0
    %7003 = vmatpush1.bf16.msra.mxu0 0
    %7004 = vmatprep.subr.bf16.mxu0 0
    %7005 = vmatpush1.bf16.msra.mxu0 0
    %7006 = vmatprep.subr.bf16.mxu0 0
    %7007 = vmatpush1.bf16.msra.mxu0 0
    %7008 = vmatprep.subr.bf16.mxu0 0
    %7009 = vmatpush1.bf16.msra.mxu0 0
    %7010 = vmatprep.mubr.bf16.mxu0 0
    %7011 = vmatmul.mubr.bf16.gmra.mrb[0].mxu0 %v6976
    %v7012 = vpop.f32.mrb[0].mxu0
    %v7013 = vadd.f32 0.0, %v7012
    %v7014 = vpop.f32.mrb[0].mxu0
    %v7015 = vpop.f32.mrb[0].mxu0
    %v7016 = vadd.f32 0.0, %v7015
    %v7017 = vpop.f32.mrb[0].mxu0
    %7018 = vdwg.mxu0
    %s7019 = scalar_lea.vmem %s57, 112
    %v7020 = vld [vmem:[%s7019] sm:$0xf]
    %v7021 = vld [vmem:[%s7019 + $0x4] sm:$0xf]
    %v7022 = vld [vmem:[%s7019 + $0x8] sm:$0xf]
    %v7023 = vld [vmem:[%s7019 + $0xc] sm:$0xf]
    %s7024 = scalar_lea.vmem %s63, 7
    %v7025 = vld [vmem:[%s7024] sm:$0x1]
    %v7027 = vlaneseq
    %v7028 = vshrl.u32 %v7027, 7
    %v7029 = vsub.s32 0, %v7028
    %v7030 = vrot.slane %v7025, %v7029
    %v7036 = vunpack.c.l.b16 %v7020
    %v7037 = vunpack.c.l.b16 %v7021
    %v7038 = vunpack.c.l.b16 %v7022
    %v7039 = vunpack.c.l.b16 %v7023
    %v7040 = vpack.c.b16 %v7037, %v7036
    %v7041 = vpack.c.b16 %v7039, %v7038
    %7044 = vmatprep.subr.bf16.mxu0 0
    %7045 = vmatpush1.bf16.msra.mxu0 %v7040
    %7046 = vmatprep.subr.bf16.mxu0 0
    %7047 = vmatpush1.bf16.msra.mxu0 %v7041
    %7048 = vmatprep.subr.bf16.mxu0 0
    %7049 = vmatpush1.bf16.msra.mxu0 0
    %7050 = vmatprep.subr.bf16.mxu0 0
    %7051 = vmatpush1.bf16.msra.mxu0 0
    %7052 = vmatprep.subr.bf16.mxu0 0
    %7053 = vmatpush1.bf16.msra.mxu0 0
    %7054 = vmatprep.subr.bf16.mxu0 0
    %7055 = vmatpush1.bf16.msra.mxu0 0
    %7056 = vmatprep.subr.bf16.mxu0 0
    %7057 = vmatpush1.bf16.msra.mxu0 0
    %7058 = vmatprep.subr.bf16.mxu0 0
    %7059 = vmatpush1.bf16.msra.mxu0 0
    %7060 = vmatprep.subr.bf16.mxu0 0
    %7061 = vmatpush1.bf16.msra.mxu0 0
    %7062 = vmatprep.subr.bf16.mxu0 0
    %7063 = vmatpush1.bf16.msra.mxu0 0
    %7064 = vmatprep.subr.bf16.mxu0 0
    %7065 = vmatpush1.bf16.msra.mxu0 0
    %7066 = vmatprep.subr.bf16.mxu0 0
    %7067 = vmatpush1.bf16.msra.mxu0 0
    %7068 = vmatprep.subr.bf16.mxu0 0
    %7069 = vmatpush1.bf16.msra.mxu0 0
    %7070 = vmatprep.subr.bf16.mxu0 0
    %7071 = vmatpush1.bf16.msra.mxu0 0
    %7072 = vmatprep.subr.bf16.mxu0 0
    %7073 = vmatpush1.bf16.msra.mxu0 0
    %7074 = vmatprep.subr.bf16.mxu0 0
    %7075 = vmatpush1.bf16.msra.mxu0 0
    %7076 = vmatprep.mubr.bf16.mxu0 0
    %7077 = vmatmul.mubr.bf16.gmra.mrb[0].mxu0 %v5659
    %v7078 = vpop.f32.mrb[0].mxu0
    %v7079 = vadd.f32 %v7030, %v7078
    %v7080 = vpop.f32.mrb[0].mxu0
    %v7081 = vpop.f32.mrb[0].mxu0
    %v7082 = vadd.f32 %v7030, %v7081
    %v7083 = vpop.f32.mrb[0].mxu0
    %7084 = vmatprep.mubr.bf16.mxu0 0
    %7085 = vmatmul.mubr.bf16.gmra.mrb[0].mxu0 %v5662
    %v7086 = vpop.f32.mrb[0].mxu0
    %v7087 = vadd.f32 %v7030, %v7086
    %v7088 = vpop.f32.mrb[0].mxu0
    %v7089 = vpop.f32.mrb[0].mxu0
    %v7090 = vadd.f32 %v7030, %v7089
    %v7091 = vpop.f32.mrb[0].mxu0
    %7092 = vdwg.mxu0
    %s7093 = scalar_lea.vmem %s59, 112
    %v7094 = vld [vmem:[%s7093] sm:$0xf]
    %v7095 = vld [vmem:[%s7093 + $0x4] sm:$0xf]
    %v7096 = vld [vmem:[%s7093 + $0x8] sm:$0xf]
    %v7097 = vld [vmem:[%s7093 + $0xc] sm:$0xf]
    %s7098 = scalar_lea.vmem %s65, 7
    %v7099 = vld [vmem:[%s7098] sm:$0x1]
    %v7101 = vlaneseq
    %v7102 = vshrl.u32 %v7101, 7
    %v7103 = vsub.s32 0, %v7102
    %v7104 = vrot.slane %v7099, %v7103
    %v7110 = vunpack.c.l.b16 %v7094
    %v7111 = vunpack.c.l.b16 %v7095
    %v7112 = vunpack.c.l.b16 %v7096
    %v7113 = vunpack.c.l.b16 %v7097
    %v7114 = vpack.c.b16 %v7111, %v7110
    %v7115 = vpack.c.b16 %v7113, %v7112
    %7118 = vmatprep.subr.bf16.mxu0 0
    %7119 = vmatpush1.bf16.msra.mxu0 %v7114
    %7120 = vmatprep.subr.bf16.mxu0 0
    %7121 = vmatpush1.bf16.msra.mxu0 %v7115
    %7122 = vmatprep.subr.bf16.mxu0 0
    %7123 = vmatpush1.bf16.msra.mxu0 0
    %7124 = vmatprep.subr.bf16.mxu0 0
    %7125 = vmatpush1.bf16.msra.mxu0 0
    %7126 = vmatprep.subr.bf16.mxu0 0
    %7127 = vmatpush1.bf16.msra.mxu0 0
    %7128 = vmatprep.subr.bf16.mxu0 0
    %7129 = vmatpush1.bf16.msra.mxu0 0
    %7130 = vmatprep.subr.bf16.mxu0 0
    %7131 = vmatpush1.bf16.msra.mxu0 0
    %7132 = vmatprep.subr.bf16.mxu0 0
    %7133 = vmatpush1.bf16.msra.mxu0 0
    %7134 = vmatprep.subr.bf16.mxu0 0
    %7135 = vmatpush1.bf16.msra.mxu0 0
    %7136 = vmatprep.subr.bf16.mxu0 0
    %7137 = vmatpush1.bf16.msra.mxu0 0
    %7138 = vmatprep.subr.bf16.mxu0 0
    %7139 = vmatpush1.bf16.msra.mxu0 0
    %7140 = vmatprep.subr.bf16.mxu0 0
    %7141 = vmatpush1.bf16.msra.mxu0 0
    %7142 = vmatprep.subr.bf16.mxu0 0
    %7143 = vmatpush1.bf16.msra.mxu0 0
    %7144 = vmatprep.subr.bf16.mxu0 0
    %7145 = vmatpush1.bf16.msra.mxu0 0
    %7146 = vmatprep.subr.bf16.mxu0 0
    %7147 = vmatpush1.bf16.msra.mxu0 0
    %7148 = vmatprep.subr.bf16.mxu0 0
    %7149 = vmatpush1.bf16.msra.mxu0 0
    %7150 = vmatprep.mubr.bf16.mxu0 0
    %7151 = vmatmul.mubr.bf16.gmra.mrb[0].mxu0 %v5659
    %v7152 = vpop.f32.mrb[0].mxu0
    %v7153 = vadd.f32 %v7104, %v7152
    %v7154 = vpop.f32.mrb[0].mxu0
    %v7155 = vpop.f32.mrb[0].mxu0
    %v7156 = vadd.f32 %v7104, %v7155
    %v7157 = vpop.f32.mrb[0].mxu0
    %7158 = vmatprep.mubr.bf16.mxu0 0
    %7159 = vmatmul.mubr.bf16.gmra.mrb[0].mxu0 %v5662
    %v7160 = vpop.f32.mrb[0].mxu0
    %v7161 = vadd.f32 %v7104, %v7160
    %v7162 = vpop.f32.mrb[0].mxu0
    %v7163 = vpop.f32.mrb[0].mxu0
    %v7164 = vadd.f32 %v7104, %v7163
    %v7165 = vpop.f32.mrb[0].mxu0
    %7166 = vdwg.mxu0
    %s7167 = scalar_lea.vmem %s61, 112
    %v7168 = vld [vmem:[%s7167] sm:$0xf]
    %v7169 = vld [vmem:[%s7167 + $0x4] sm:$0xf]
    %v7170 = vld [vmem:[%s7167 + $0x8] sm:$0xf]
    %v7171 = vld [vmem:[%s7167 + $0xc] sm:$0xf]
    %s7172 = scalar_lea.vmem %s67, 7
    %v7173 = vld [vmem:[%s7172] sm:$0x1]
    %v7175 = vlaneseq
    %v7176 = vshrl.u32 %v7175, 7
    %v7177 = vsub.s32 0, %v7176
    %v7178 = vrot.slane %v7173, %v7177
    %v7184 = vunpack.c.l.b16 %v7168
    %v7185 = vunpack.c.l.b16 %v7169
    %v7186 = vunpack.c.l.b16 %v7170
    %v7187 = vunpack.c.l.b16 %v7171
    %v7188 = vpack.c.b16 %v7185, %v7184
    %v7189 = vpack.c.b16 %v7187, %v7186
    %7192 = vmatprep.subr.bf16.mxu0 0
    %7193 = vmatpush1.bf16.msra.mxu0 %v7188
    %7194 = vmatprep.subr.bf16.mxu0 0
    %7195 = vmatpush1.bf16.msra.mxu0 %v7189
    %7196 = vmatprep.subr.bf16.mxu0 0
    %7197 = vmatpush1.bf16.msra.mxu0 0
    %7198 = vmatprep.subr.bf16.mxu0 0
    %7199 = vmatpush1.bf16.msra.mxu0 0
    %7200 = vmatprep.subr.bf16.mxu0 0
    %7201 = vmatpush1.bf16.msra.mxu0 0
    %7202 = vmatprep.subr.bf16.mxu0 0
    %7203 = vmatpush1.bf16.msra.mxu0 0
    %7204 = vmatprep.subr.bf16.mxu0 0
    %7205 = vmatpush1.bf16.msra.mxu0 0
    %7206 = vmatprep.subr.bf16.mxu0 0
    %7207 = vmatpush1.bf16.msra.mxu0 0
    %7208 = vmatprep.subr.bf16.mxu0 0
    %7209 = vmatpush1.bf16.msra.mxu0 0
    %7210 = vmatprep.subr.bf16.mxu0 0
    %7211 = vmatpush1.bf16.msra.mxu0 0
    %7212 = vmatprep.subr.bf16.mxu0 0
    %7213 = vmatpush1.bf16.msra.mxu0 0
    %7214 = vmatprep.subr.bf16.mxu0 0
    %7215 = vmatpush1.bf16.msra.mxu0 0
    %7216 = vmatprep.subr.bf16.mxu0 0
    %7217 = vmatpush1.bf16.msra.mxu0 0
    %7218 = vmatprep.subr.bf16.mxu0 0
    %7219 = vmatpush1.bf16.msra.mxu0 0
    %7220 = vmatprep.subr.bf16.mxu0 0
    %7221 = vmatpush1.bf16.msra.mxu0 0
    %7222 = vmatprep.subr.bf16.mxu0 0
    %7223 = vmatpush1.bf16.msra.mxu0 0
    %7224 = vmatprep.mubr.bf16.mxu0 0
    %7225 = vmatmul.mubr.bf16.gmra.mrb[0].mxu0 %v5659
    %v7226 = vpop.f32.mrb[0].mxu0
    %v7227 = vadd.f32 %v7178, %v7226
    %v7228 = vpop.f32.mrb[0].mxu0
    %v7229 = vpop.f32.mrb[0].mxu0
    %v7230 = vadd.f32 %v7178, %v7229
    %v7231 = vpop.f32.mrb[0].mxu0
    %7232 = vmatprep.mubr.bf16.mxu0 0
    %7233 = vmatmul.mubr.bf16.gmra.mrb[0].mxu0 %v5662
    %v7234 = vpop.f32.mrb[0].mxu0
    %v7235 = vadd.f32 %v7178, %v7234
    %v7236 = vpop.f32.mrb[0].mxu0
    %v7237 = vpop.f32.mrb[0].mxu0
    %v7238 = vadd.f32 %v7178, %v7237
    %v7239 = vpop.f32.mrb[0].mxu0
    %7240 = vdwg.mxu0
    %v7241 = vmul.f32 %v7079, 0.35355338
    %v7242 = vmul.f32 %v7082, 0.35355338
    %v7243 = vpack.c.bf16 %v7242, %v7241
    %v7244 = vpack.c.bf16 %v7156, %v7153
    %v7246 = vsel %vm1490, %v7243, 0
    %v7249 = vsel %vm1490, %v7244, 0
    %7251 = vmatprep.subr.bf16.mxu0 0
    %7252 = vmatpush1.bf16.xpose.msra.mxu0 %v7249
    %7253 = vmatprep.subr.bf16.mxu0 0
    %7254 = vmatpush1.bf16.xpose.msra.mxu0 0
    %7255 = vmatprep.subr.bf16.mxu0 0
    %7256 = vmatpush1.bf16.xpose.msra.mxu0 0
    %7257 = vmatprep.subr.bf16.mxu0 0
    %7258 = vmatpush1.bf16.xpose.msra.mxu0 0
    %7259 = vmatprep.subr.bf16.mxu0 0
    %7260 = vmatpush1.bf16.xpose.msra.mxu0 0
    %7261 = vmatprep.subr.bf16.mxu0 0
    %7262 = vmatpush1.bf16.xpose.msra.mxu0 0
    %7263 = vmatprep.subr.bf16.mxu0 0
    %7264 = vmatpush1.bf16.xpose.msra.mxu0 0
    %7265 = vmatprep.subr.bf16.mxu0 0
    %7266 = vmatpush1.bf16.xpose.msra.mxu0 0
    %7267 = vmatprep.subr.bf16.mxu0 0
    %7268 = vmatpush1.bf16.xpose.msra.mxu0 0
    %7269 = vmatprep.subr.bf16.mxu0 0
    %7270 = vmatpush1.bf16.xpose.msra.mxu0 0
    %7271 = vmatprep.subr.bf16.mxu0 0
    %7272 = vmatpush1.bf16.xpose.msra.mxu0 0
    %7273 = vmatprep.subr.bf16.mxu0 0
    %7274 = vmatpush1.bf16.xpose.msra.mxu0 0
    %7275 = vmatprep.subr.bf16.mxu0 0
    %7276 = vmatpush1.bf16.xpose.msra.mxu0 0
    %7277 = vmatprep.subr.bf16.mxu0 0
    %7278 = vmatpush1.bf16.xpose.msra.mxu0 0
    %7279 = vmatprep.subr.bf16.mxu0 0
    %7280 = vmatpush1.bf16.xpose.msra.mxu0 0
    %7281 = vmatprep.subr.bf16.mxu0 0
    %7282 = vmatpush1.bf16.xpose.msra.mxu0 0
    %7283 = vmatprep.mubr.bf16.mxu0 0
    %7284 = vmatmul.mubr.bf16.gmra.mrb[0].mxu0 %v7246
    %v7285 = vpop.f32.mrb[0].mxu0
    %v7286 = vadd.f32 0.0, %v7285
    %v7287 = vpop.f32.mrb[0].mxu0
    %v7288 = vpop.f32.mrb[0].mxu0
    %v7289 = vadd.f32 0.0, %v7288
    %v7290 = vpop.f32.mrb[0].mxu0
    %7291 = vdwg.mxu0
    %v7292 = vsel %vm1538, %v7286, -inf
    %7293 = vmax.xlane.f32.xlu0 %v7292
    %v7294 = vpop.xlane.xlu0 %7293
    %v7295 = vsel %vm1538, %v7289, -inf
    %7296 = vmax.xlane.f32.xlu0 %v7295
    %v7297 = vpop.xlane.xlu0 %7296
    %v7298 = vsub.f32 %v7286, %v7294
    %v7299 = vsub.f32 %v7289, %v7297
    %v7300 = vmul.f32 %v7298, 1.442695
    %v7301 = vpow.pop %v7300
    %v7302 = vmul.f32 %v7299, 1.442695
    %v7303 = vpow.pop %v7302
    %v7304 = vsel %vm1538, %v7301, 0.0
    %7305 = vadd.xlane.f32.xlu0 %v7304
    %v7306 = vpop.xlane.xlu0 %7305
    %v7307 = vsel %vm1538, %v7303, 0.0
    %7308 = vadd.xlane.f32.xlu0 %v7307
    %v7309 = vpop.xlane.xlu0 %7308
    %v7310 = vrcp.pop %v7306
    %v7311 = vmul.f32 %v7301, %v7310
    %v7312 = vrcp.pop %v7309
    %v7313 = vmul.f32 %v7303, %v7312
    %v7314 = vpack.c.bf16 %v7313, %v7311
    %v7315 = vpack.c.bf16 %v7230, %v7227
    %v7317 = vsel %vm1538, %v7314, 0
    %7319 = vmatprep.subr.bf16.mxu0 0
    %7320 = vmatpush1.bf16.msra.mxu0 %v7315
    %7321 = vmatprep.subr.bf16.mxu0 0
    %7322 = vmatpush1.bf16.msra.mxu0 0
    %7323 = vmatprep.subr.bf16.mxu0 0
    %7324 = vmatpush1.bf16.msra.mxu0 0
    %7325 = vmatprep.subr.bf16.mxu0 0
    %7326 = vmatpush1.bf16.msra.mxu0 0
    %7327 = vmatprep.subr.bf16.mxu0 0
    %7328 = vmatpush1.bf16.msra.mxu0 0
    %7329 = vmatprep.subr.bf16.mxu0 0
    %7330 = vmatpush1.bf16.msra.mxu0 0
    %7331 = vmatprep.subr.bf16.mxu0 0
    %7332 = vmatpush1.bf16.msra.mxu0 0
    %7333 = vmatprep.subr.bf16.mxu0 0
    %7334 = vmatpush1.bf16.msra.mxu0 0
    %7335 = vmatprep.subr.bf16.mxu0 0
    %7336 = vmatpush1.bf16.msra.mxu0 0
    %7337 = vmatprep.subr.bf16.mxu0 0
    %7338 = vmatpush1.bf16.msra.mxu0 0
    %7339 = vmatprep.subr.bf16.mxu0 0
    %7340 = vmatpush1.bf16.msra.mxu0 0
    %7341 = vmatprep.subr.bf16.mxu0 0
    %7342 = vmatpush1.bf16.msra.mxu0 0
    %7343 = vmatprep.subr.bf16.mxu0 0
    %7344 = vmatpush1.bf16.msra.mxu0 0
    %7345 = vmatprep.subr.bf16.mxu0 0
    %7346 = vmatpush1.bf16.msra.mxu0 0
    %7347 = vmatprep.subr.bf16.mxu0 0
    %7348 = vmatpush1.bf16.msra.mxu0 0
    %7349 = vmatprep.subr.bf16.mxu0 0
    %7350 = vmatpush1.bf16.msra.mxu0 0
    %7351 = vmatprep.mubr.bf16.mxu0 0
    %7352 = vmatmul.mubr.bf16.gmra.mrb[0].mxu0 %v7317
    %v7353 = vpop.f32.mrb[0].mxu0
    %v7354 = vadd.f32 0.0, %v7353
    %v7355 = vpop.f32.mrb[0].mxu0
    %v7356 = vpop.f32.mrb[0].mxu0
    %v7357 = vadd.f32 0.0, %v7356
    %v7358 = vpop.f32.mrb[0].mxu0
    %7359 = vdwg.mxu0
    %v7360 = vmul.f32 %v7087, 0.35355338
    %v7361 = vmul.f32 %v7090, 0.35355338
    %v7362 = vpack.c.bf16 %v7361, %v7360
    %v7363 = vpack.c.bf16 %v7164, %v7161
    %v7365 = vsel %vm1490, %v7362, 0
    %v7368 = vsel %vm1490, %v7363, 0
    %7370 = vmatprep.subr.bf16.mxu0 0
    %7371 = vmatpush1.bf16.xpose.msra.mxu0 %v7368
    %7372 = vmatprep.subr.bf16.mxu0 0
    %7373 = vmatpush1.bf16.xpose.msra.mxu0 0
    %7374 = vmatprep.subr.bf16.mxu0 0
    %7375 = vmatpush1.bf16.xpose.msra.mxu0 0
    %7376 = vmatprep.subr.bf16.mxu0 0
    %7377 = vmatpush1.bf16.xpose.msra.mxu0 0
    %7378 = vmatprep.subr.bf16.mxu0 0
    %7379 = vmatpush1.bf16.xpose.msra.mxu0 0
    %7380 = vmatprep.subr.bf16.mxu0 0
    %7381 = vmatpush1.bf16.xpose.msra.mxu0 0
    %7382 = vmatprep.subr.bf16.mxu0 0
    %7383 = vmatpush1.bf16.xpose.msra.mxu0 0
    %7384 = vmatprep.subr.bf16.mxu0 0
    %7385 = vmatpush1.bf16.xpose.msra.mxu0 0
    %7386 = vmatprep.subr.bf16.mxu0 0
    %7387 = vmatpush1.bf16.xpose.msra.mxu0 0
    %7388 = vmatprep.subr.bf16.mxu0 0
    %7389 = vmatpush1.bf16.xpose.msra.mxu0 0
    %7390 = vmatprep.subr.bf16.mxu0 0
    %7391 = vmatpush1.bf16.xpose.msra.mxu0 0
    %7392 = vmatprep.subr.bf16.mxu0 0
    %7393 = vmatpush1.bf16.xpose.msra.mxu0 0
    %7394 = vmatprep.subr.bf16.mxu0 0
    %7395 = vmatpush1.bf16.xpose.msra.mxu0 0
    %7396 = vmatprep.subr.bf16.mxu0 0
    %7397 = vmatpush1.bf16.xpose.msra.mxu0 0
    %7398 = vmatprep.subr.bf16.mxu0 0
    %7399 = vmatpush1.bf16.xpose.msra.mxu0 0
    %7400 = vmatprep.subr.bf16.mxu0 0
    %7401 = vmatpush1.bf16.xpose.msra.mxu0 0
    %7402 = vmatprep.mubr.bf16.mxu0 0
    %7403 = vmatmul.mubr.bf16.gmra.mrb[0].mxu0 %v7365
    %v7404 = vpop.f32.mrb[0].mxu0
    %v7405 = vadd.f32 0.0, %v7404
    %v7406 = vpop.f32.mrb[0].mxu0
    %v7407 = vpop.f32.mrb[0].mxu0
    %v7408 = vadd.f32 0.0, %v7407
    %v7409 = vpop.f32.mrb[0].mxu0
    %7410 = vdwg.mxu0
    %v7411 = vsel %vm1538, %v7405, -inf
    %7412 = vmax.xlane.f32.xlu0 %v7411
    %v7413 = vpop.xlane.xlu0 %7412
    %v7414 = vsel %vm1538, %v7408, -inf
    %7415 = vmax.xlane.f32.xlu0 %v7414
    %v7416 = vpop.xlane.xlu0 %7415
    %v7417 = vsub.f32 %v7405, %v7413
    %v7418 = vsub.f32 %v7408, %v7416
    %v7419 = vmul.f32 %v7417, 1.442695
    %v7420 = vpow.pop %v7419
    %v7421 = vmul.f32 %v7418, 1.442695
    %v7422 = vpow.pop %v7421
    %v7423 = vsel %vm1538, %v7420, 0.0
    %7424 = vadd.xlane.f32.xlu0 %v7423
    %v7425 = vpop.xlane.xlu0 %7424
    %v7426 = vsel %vm1538, %v7422, 0.0
    %7427 = vadd.xlane.f32.xlu0 %v7426
    %v7428 = vpop.xlane.xlu0 %7427
    %v7429 = vrcp.pop %v7425
    %v7430 = vmul.f32 %v7420, %v7429
    %v7431 = vrcp.pop %v7428
    %v7432 = vmul.f32 %v7422, %v7431
    %v7433 = vpack.c.bf16 %v7432, %v7430
    %v7434 = vpack.c.bf16 %v7238, %v7235
    %v7436 = vsel %vm1538, %v7433, 0
    %7438 = vmatprep.subr.bf16.mxu0 0
    %7439 = vmatpush1.bf16.msra.mxu0 %v7434
    %7440 = vmatprep.subr.bf16.mxu0 0
    %7441 = vmatpush1.bf16.msra.mxu0 0
    %7442 = vmatprep.subr.bf16.mxu0 0
    %7443 = vmatpush1.bf16.msra.mxu0 0
    %7444 = vmatprep.subr.bf16.mxu0 0
    %7445 = vmatpush1.bf16.msra.mxu0 0
    %7446 = vmatprep.subr.bf16.mxu0 0
    %7447 = vmatpush1.bf16.msra.mxu0 0
    %7448 = vmatprep.subr.bf16.mxu0 0
    %7449 = vmatpush1.bf16.msra.mxu0 0
    %7450 = vmatprep.subr.bf16.mxu0 0
    %7451 = vmatpush1.bf16.msra.mxu0 0
    %7452 = vmatprep.subr.bf16.mxu0 0
    %7453 = vmatpush1.bf16.msra.mxu0 0
    %7454 = vmatprep.subr.bf16.mxu0 0
    %7455 = vmatpush1.bf16.msra.mxu0 0
    %7456 = vmatprep.subr.bf16.mxu0 0
    %7457 = vmatpush1.bf16.msra.mxu0 0
    %7458 = vmatprep.subr.bf16.mxu0 0
    %7459 = vmatpush1.bf16.msra.mxu0 0
    %7460 = vmatprep.subr.bf16.mxu0 0
    %7461 = vmatpush1.bf16.msra.mxu0 0
    %7462 = vmatprep.subr.bf16.mxu0 0
    %7463 = vmatpush1.bf16.msra.mxu0 0
    %7464 = vmatprep.subr.bf16.mxu0 0
    %7465 = vmatpush1.bf16.msra.mxu0 0
    %7466 = vmatprep.subr.bf16.mxu0 0
    %7467 = vmatpush1.bf16.msra.mxu0 0
    %7468 = vmatprep.subr.bf16.mxu0 0
    %7469 = vmatpush1.bf16.msra.mxu0 0
    %7470 = vmatprep.mubr.bf16.mxu0 0
    %7471 = vmatmul.mubr.bf16.gmra.mrb[0].mxu0 %v7436
    %v7472 = vpop.f32.mrb[0].mxu0
    %v7473 = vadd.f32 0.0, %v7472
    %v7474 = vpop.f32.mrb[0].mxu0
    %v7475 = vpop.f32.mrb[0].mxu0
    %v7476 = vadd.f32 0.0, %v7475
    %v7477 = vpop.f32.mrb[0].mxu0
    %7478 = vdwg.mxu0
    %7481 = vrot.lane.b32.xlu0 %v6434, 8
    %v7482 = vpop.permute.xlu0 %7481
    %7483 = vrot.lane.b32.xlu0 %v6437, 8
    %v7484 = vpop.permute.xlu0 %7483
    %7489 = vrot.lane.b32.xlu0 %v6894, 16
    %v7490 = vpop.permute.xlu0 %7489
    %7491 = vrot.lane.b32.xlu0 %v6897, 16
    %v7492 = vpop.permute.xlu0 %7491
    %7497 = vrot.lane.b32.xlu0 %v7354, 24
    %v7498 = vpop.permute.xlu0 %7497
    %7499 = vrot.lane.b32.xlu0 %v7357, 24
    %v7500 = vpop.permute.xlu0 %7499
    %v7503 = vsel %vm1490, %v5974, %v7482
    %v7504 = vsel %vm1490, %v5977, %v7484
    %v7505 = vsel %vm1538, %v7503, %v7490
    %v7506 = vsel %vm1538, %v7504, %v7492
    %v7507 = vsel %vm3134, %v7505, %v7498
    %v7508 = vsel %vm3134, %v7506, %v7500
    %7511 = vrot.lane.b32.xlu0 %v6553, 8
    %v7512 = vpop.permute.xlu0 %7511
    %7513 = vrot.lane.b32.xlu0 %v6556, 8
    %v7514 = vpop.permute.xlu0 %7513
    %7519 = vrot.lane.b32.xlu0 %v7013, 16
    %v7520 = vpop.permute.xlu0 %7519
    %7521 = vrot.lane.b32.xlu0 %v7016, 16
    %v7522 = vpop.permute.xlu0 %7521
    %7527 = vrot.lane.b32.xlu0 %v7473, 24
    %v7528 = vpop.permute.xlu0 %7527
    %7529 = vrot.lane.b32.xlu0 %v7476, 24
    %v7530 = vpop.permute.xlu0 %7529
    %v7533 = vsel %vm1490, %v6093, %v7512
    %v7534 = vsel %vm1490, %v6096, %v7514
    %v7535 = vsel %vm1538, %v7533, %v7520
    %v7536 = vsel %vm1538, %v7534, %v7522
    %v7537 = vsel %vm3134, %v7535, %v7528
    %v7538 = vsel %vm3134, %v7536, %v7530
    %s7539 = scalar_lea.vmem %s69, 16
    %v7540 = vld [vmem:[%s7539] sm:$0xf]
    %v7541 = vld [vmem:[%s7539 + $0x4] sm:$0xf]
    %v7542 = vld [vmem:[%s7539 + $0x8] sm:$0xf]
    %v7543 = vld [vmem:[%s7539 + $0xc] sm:$0xf]
    %s7544 = scalar_lea.vmem %s71, 1
    %v7545 = vld [vmem:[%s7544] sm:$0x1]
    %v7546 = vpack.c.bf16 %v7508, %v7507
    %v7547 = vpack.c.bf16 %v7538, %v7537
    %v7549 = vlaneseq
    %v7550 = vshrl.u32 %v7549, 7
    %v7551 = vsub.s32 0, %v7550
    %v7552 = vrot.slane %v7545, %v7551
    %v7558 = vunpack.c.l.b16 %v7540
    %v7559 = vunpack.c.l.b16 %v7541
    %v7560 = vunpack.c.l.b16 %v7542
    %v7561 = vunpack.c.l.b16 %v7543
    %v7562 = vpack.c.b16 %v7559, %v7558
    %v7563 = vpack.c.b16 %v7561, %v7560
    %v7567 = vsel %vm467, %v7546, 0
    %v7570 = vsel %vm467, %v7547, 0
    %7572 = vmatprep.subr.bf16.mxu0 0
    %7573 = vmatpush1.bf16.msra.mxu0 %v7562
    %7574 = vmatprep.subr.bf16.mxu0 0
    %7575 = vmatpush1.bf16.msra.mxu0 %v7563
    %7576 = vmatprep.subr.bf16.mxu0 0
    %7577 = vmatpush1.bf16.msra.mxu0 0
    %7578 = vmatprep.subr.bf16.mxu0 0
    %7579 = vmatpush1.bf16.msra.mxu0 0
    %7580 = vmatprep.subr.bf16.mxu0 0
    %7581 = vmatpush1.bf16.msra.mxu0 0
    %7582 = vmatprep.subr.bf16.mxu0 0
    %7583 = vmatpush1.bf16.msra.mxu0 0
    %7584 = vmatprep.subr.bf16.mxu0 0
    %7585 = vmatpush1.bf16.msra.mxu0 0
    %7586 = vmatprep.subr.bf16.mxu0 0
    %7587 = vmatpush1.bf16.msra.mxu0 0
    %7588 = vmatprep.subr.bf16.mxu0 0
    %7589 = vmatpush1.bf16.msra.mxu0 0
    %7590 = vmatprep.subr.bf16.mxu0 0
    %7591 = vmatpush1.bf16.msra.mxu0 0
    %7592 = vmatprep.subr.bf16.mxu0 0
    %7593 = vmatpush1.bf16.msra.mxu0 0
    %7594 = vmatprep.subr.bf16.mxu0 0
    %7595 = vmatpush1.bf16.msra.mxu0 0
    %7596 = vmatprep.subr.bf16.mxu0 0
    %7597 = vmatpush1.bf16.msra.mxu0 0
    %7598 = vmatprep.subr.bf16.mxu0 0
    %7599 = vmatpush1.bf16.msra.mxu0 0
    %7600 = vmatprep.subr.bf16.mxu0 0
    %7601 = vmatpush1.bf16.msra.mxu0 0
    %7602 = vmatprep.subr.bf16.mxu0 0
    %7603 = vmatpush1.bf16.msra.mxu0 0
    %7604 = vmatprep.mubr.bf16.mxu0 0
    %7605 = vmatmul.mubr.bf16.gmra.mrb[0].mxu0 %v7567
    %v7606 = vpop.f32.mrb[0].mxu0
    %v7607 = vadd.f32 %v7552, %v7606
    %v7608 = vpop.f32.mrb[0].mxu0
    %v7609 = vpop.f32.mrb[0].mxu0
    %v7610 = vadd.f32 %v7552, %v7609
    %v7611 = vpop.f32.mrb[0].mxu0
    %7612 = vmatprep.mubr.bf16.mxu0 0
    %7613 = vmatmul.mubr.bf16.gmra.mrb[0].mxu0 %v7570
    %v7614 = vpop.f32.mrb[0].mxu0
    %v7615 = vadd.f32 %v7552, %v7614
    %v7616 = vpop.f32.mrb[0].mxu0
    %v7617 = vpop.f32.mrb[0].mxu0
    %v7618 = vadd.f32 %v7552, %v7617
    %v7619 = vpop.f32.mrb[0].mxu0
    %7620 = vdwg.mxu0
    %v7621 = vadd.f32 %v5627, %v7607
    %v7622 = vadd.f32 %v5628, %v7610
    %v7623 = vadd.f32 %v5629, %v7615
    %v7624 = vadd.f32 %v5630, %v7618
    %s7625 = scalar_lea.vmem %s73, 1
    %v7626 = vld [vmem:[%s7625] sm:$0x1]
    %s7627 = scalar_lea.vmem %s75, 1
    %v7628 = vld [vmem:[%s7627] sm:$0x1]
    %v7629 = vsel %vm467, %v7621, 0.0
    %7630 = vadd.xlane.f32.xlu0 %v7629
    %v7631 = vpop.xlane.xlu0 %7630
    %v7632 = vsel %vm467, %v7622, 0.0
    %7633 = vadd.xlane.f32.xlu0 %v7632
    %v7634 = vpop.xlane.xlu0 %7633
    %v7635 = vsel %vm467, %v7623, 0.0
    %7636 = vadd.xlane.f32.xlu0 %v7635
    %v7637 = vpop.xlane.xlu0 %7636
    %v7638 = vsel %vm467, %v7624, 0.0
    %7639 = vadd.xlane.f32.xlu0 %v7638
    %v7640 = vpop.xlane.xlu0 %7639
    %v7641 = vmul.f32 %v7631, %v3265
    %v7642 = vmul.f32 %v7634, %v3265
    %v7643 = vmul.f32 %v7637, %v3265
    %v7644 = vmul.f32 %v7640, %v3265
    %v7645 = vsub.f32 %v7621, %v7641
    %v7646 = vsub.f32 %v7622, %v7642
    %v7647 = vsub.f32 %v7623, %v7643
    %v7648 = vsub.f32 %v7624, %v7644
    %v7649 = vmul.f32 %v7645, %v7645
    %v7650 = vmul.f32 %v7646, %v7646
    %v7651 = vmul.f32 %v7647, %v7647
    %v7652 = vmul.f32 %v7648, %v7648
    %v7653 = vsel %vm467, %v7649, 0.0
    %7654 = vadd.xlane.f32.xlu0 %v7653
    %v7655 = vpop.xlane.xlu0 %7654
    %v7656 = vsel %vm467, %v7650, 0.0
    %7657 = vadd.xlane.f32.xlu0 %v7656
    %v7658 = vpop.xlane.xlu0 %7657
    %v7659 = vsel %vm467, %v7651, 0.0
    %7660 = vadd.xlane.f32.xlu0 %v7659
    %v7661 = vpop.xlane.xlu0 %7660
    %v7662 = vsel %vm467, %v7652, 0.0
    %7663 = vadd.xlane.f32.xlu0 %v7662
    %v7664 = vpop.xlane.xlu0 %7663
    %v7665 = vmul.f32 %v7655, %v3265
    %v7666 = vmul.f32 %v7658, %v3265
    %v7667 = vmul.f32 %v7661, %v3265
    %v7668 = vmul.f32 %v7664, %v3265
    %v7669 = vadd.f32 %v7665, 1e-05
    %v7670 = vadd.f32 %v7666, 1e-05
    %v7671 = vadd.f32 %v7667, 1e-05
    %v7672 = vadd.f32 %v7668, 1e-05
    %v7673 = vrsqrt.pop %v7669
    %v7674 = vrsqrt.pop %v7670
    %v7675 = vrsqrt.pop %v7671
    %v7676 = vrsqrt.pop %v7672
    %v7677 = vmul.f32 %v7645, %v7673
    %v7678 = vmul.f32 %v7646, %v7674
    %v7679 = vmul.f32 %v7647, %v7675
    %v7680 = vmul.f32 %v7648, %v7676
    %v7682 = vlaneseq
    %v7683 = vshrl.u32 %v7682, 7
    %v7684 = vsub.s32 0, %v7683
    %v7685 = vrot.slane %v7626, %v7684
    %v7687 = vmul.f32 %v7677, %v7685
    %v7688 = vmul.f32 %v7678, %v7685
    %v7689 = vmul.f32 %v7679, %v7685
    %v7690 = vmul.f32 %v7680, %v7685
    %v7692 = vlaneseq
    %v7693 = vshrl.u32 %v7692, 7
    %v7694 = vsub.s32 0, %v7693
    %v7695 = vrot.slane %v7628, %v7694
    %v7697 = vadd.f32 %v7687, %v7695
    %v7698 = vadd.f32 %v7688, %v7695
    %v7699 = vadd.f32 %v7689, %v7695
    %v7700 = vadd.f32 %v7690, %v7695
    %s7701 = scalar_lea.vmem %s77, 256
    %v7702 = vld [vmem:[%s7701] sm:$0xff]
    %v7703 = vld [vmem:[%s7701 + $0x8] sm:$0xff]
    %v7704 = vld [vmem:[%s7701 + $0x10] sm:$0xff]
    %v7705 = vld [vmem:[%s7701 + $0x18] sm:$0xff]
    %v7706 = vld [vmem:[%s7701 + $0x20] sm:$0xff]
    %v7707 = vld [vmem:[%s7701 + $0x28] sm:$0xff]
    %v7708 = vld [vmem:[%s7701 + $0x30] sm:$0xff]
    %v7709 = vld [vmem:[%s7701 + $0x38] sm:$0xff]
    %v7710 = vld [vmem:[%s7701 + $0x40] sm:$0xff]
    %v7711 = vld [vmem:[%s7701 + $0x48] sm:$0xff]
    %v7712 = vld [vmem:[%s7701 + $0x50] sm:$0xff]
    %v7713 = vld [vmem:[%s7701 + $0x58] sm:$0xff]
    %v7714 = vld [vmem:[%s7701 + $0x60] sm:$0xff]
    %v7715 = vld [vmem:[%s7701 + $0x68] sm:$0xff]
    %v7716 = vld [vmem:[%s7701 + $0x70] sm:$0xff]
    %v7717 = vld [vmem:[%s7701 + $0x78] sm:$0xff]
    %v7718 = vld [vmem:[%s7701 + $0x80] sm:$0xff]
    %v7719 = vld [vmem:[%s7701 + $0x88] sm:$0xff]
    %v7720 = vld [vmem:[%s7701 + $0x90] sm:$0xff]
    %v7721 = vld [vmem:[%s7701 + $0x98] sm:$0xff]
    %v7722 = vld [vmem:[%s7701 + $0xa0] sm:$0xff]
    %v7723 = vld [vmem:[%s7701 + $0xa8] sm:$0xff]
    %v7724 = vld [vmem:[%s7701 + $0xb0] sm:$0xff]
    %v7725 = vld [vmem:[%s7701 + $0xb8] sm:$0xff]
    %v7726 = vld [vmem:[%s7701 + $0xc0] sm:$0xff]
    %v7727 = vld [vmem:[%s7701 + $0xc8] sm:$0xff]
    %v7728 = vld [vmem:[%s7701 + $0xd0] sm:$0xff]
    %v7729 = vld [vmem:[%s7701 + $0xd8] sm:$0xff]
    %v7730 = vld [vmem:[%s7701 + $0xe0] sm:$0xff]
    %v7731 = vld [vmem:[%s7701 + $0xe8] sm:$0xff]
    %v7732 = vld [vmem:[%s7701 + $0xf0] sm:$0xff]
    %v7733 = vld [vmem:[%s7701 + $0xf8] sm:$0xff]
    %s7734 = scalar_lea.vmem %s79, 16
    %v7735 = vld [vmem:[%s7734] sm:$0xff]
    %v7736 = vld [vmem:[%s7734 + $0x8] sm:$0xff]
    %v7737 = vpack.c.bf16 %v7698, %v7697
    %v7738 = vpack.c.bf16 %v7700, %v7699
    %v7741 = vlaneseq
    %v7742 = vshrl.u32 %v7741, 7
    %v7743 = vsub.s32 0, %v7742
    %v7744 = vrot.slane %v7735, %v7743
    %v7745 = vlaneseq
    %v7746 = vshrl.u32 %v7745, 7
    %v7747 = vsub.s32 1, %v7746
    %v7748 = vrot.slane %v7735, %v7747
    %v7749 = vlaneseq
    %v7750 = vshrl.u32 %v7749, 7
    %v7751 = vsub.s32 2, %v7750
    %v7752 = vrot.slane %v7735, %v7751
    %v7753 = vlaneseq
    %v7754 = vshrl.u32 %v7753, 7
    %v7755 = vsub.s32 3, %v7754
    %v7756 = vrot.slane %v7735, %v7755
    %v7757 = vlaneseq
    %v7758 = vshrl.u32 %v7757, 7
    %v7759 = vsub.s32 4, %v7758
    %v7760 = vrot.slane %v7735, %v7759
    %v7761 = vlaneseq
    %v7762 = vshrl.u32 %v7761, 7
    %v7763 = vsub.s32 5, %v7762
    %v7764 = vrot.slane %v7735, %v7763
    %v7765 = vlaneseq
    %v7766 = vshrl.u32 %v7765, 7
    %v7767 = vsub.s32 6, %v7766
    %v7768 = vrot.slane %v7735, %v7767
    %v7769 = vlaneseq
    %v7770 = vshrl.u32 %v7769, 7
    %v7771 = vsub.s32 7, %v7770
    %v7772 = vrot.slane %v7735, %v7771
    %v7773 = vlaneseq
    %v7774 = vshrl.u32 %v7773, 7
    %v7775 = vsub.s32 0, %v7774
    %v7776 = vrot.slane %v7736, %v7775
    %v7777 = vlaneseq
    %v7778 = vshrl.u32 %v7777, 7
    %v7779 = vsub.s32 1, %v7778
    %v7780 = vrot.slane %v7736, %v7779
    %v7781 = vlaneseq
    %v7782 = vshrl.u32 %v7781, 7
    %v7783 = vsub.s32 2, %v7782
    %v7784 = vrot.slane %v7736, %v7783
    %v7785 = vlaneseq
    %v7786 = vshrl.u32 %v7785, 7
    %v7787 = vsub.s32 3, %v7786
    %v7788 = vrot.slane %v7736, %v7787
    %v7789 = vlaneseq
    %v7790 = vshrl.u32 %v7789, 7
    %v7791 = vsub.s32 4, %v7790
    %v7792 = vrot.slane %v7736, %v7791
    %v7793 = vlaneseq
    %v7794 = vshrl.u32 %v7793, 7
    %v7795 = vsub.s32 5, %v7794
    %v7796 = vrot.slane %v7736, %v7795
    %v7797 = vlaneseq
    %v7798 = vshrl.u32 %v7797, 7
    %v7799 = vsub.s32 6, %v7798
    %v7800 = vrot.slane %v7736, %v7799
    %v7801 = vlaneseq
    %v7802 = vshrl.u32 %v7801, 7
    %v7803 = vsub.s32 7, %v7802
    %v7804 = vrot.slane %v7736, %v7803
    %v7853 = vunpack.c.l.b16 %v7702
    %v7854 = vunpack.c.h.b16 %v7702
    %v7855 = vunpack.c.l.b16 %v7703
    %v7856 = vunpack.c.h.b16 %v7703
    %v7857 = vunpack.c.l.b16 %v7704
    %v7858 = vunpack.c.h.b16 %v7704
    %v7859 = vunpack.c.l.b16 %v7705
    %v7860 = vunpack.c.h.b16 %v7705
    %v7861 = vunpack.c.l.b16 %v7706
    %v7862 = vunpack.c.h.b16 %v7706
    %v7863 = vunpack.c.l.b16 %v7707
    %v7864 = vunpack.c.h.b16 %v7707
    %v7865 = vunpack.c.l.b16 %v7708
    %v7866 = vunpack.c.h.b16 %v7708
    %v7867 = vunpack.c.l.b16 %v7709
    %v7868 = vunpack.c.h.b16 %v7709
    %v7869 = vunpack.c.l.b16 %v7710
    %v7870 = vunpack.c.h.b16 %v7710
    %v7871 = vunpack.c.l.b16 %v7711
    %v7872 = vunpack.c.h.b16 %v7711
    %v7873 = vunpack.c.l.b16 %v7712
    %v7874 = vunpack.c.h.b16 %v7712
    %v7875 = vunpack.c.l.b16 %v7713
    %v7876 = vunpack.c.h.b16 %v7713
    %v7877 = vunpack.c.l.b16 %v7714
    %v7878 = vunpack.c.h.b16 %v7714
    %v7879 = vunpack.c.l.b16 %v7715
    %v7880 = vunpack.c.h.b16 %v7715
    %v7881 = vunpack.c.l.b16 %v7716
    %v7882 = vunpack.c.h.b16 %v7716
    %v7883 = vunpack.c.l.b16 %v7717
    %v7884 = vunpack.c.h.b16 %v7717
    %v7885 = vunpack.c.l.b16 %v7718
    %v7886 = vunpack.c.h.b16 %v7718
    %v7887 = vunpack.c.l.b16 %v7719
    %v7888 = vunpack.c.h.b16 %v7719
    %v7889 = vunpack.c.l.b16 %v7720
    %v7890 = vunpack.c.h.b16 %v7720
    %v7891 = vunpack.c.l.b16 %v7721
    %v7892 = vunpack.c.h.b16 %v7721
    %v7893 = vunpack.c.l.b16 %v7722
    %v7894 = vunpack.c.h.b16 %v7722
    %v7895 = vunpack.c.l.b16 %v7723
    %v7896 = vunpack.c.h.b16 %v7723
    %v7897 = vunpack.c.l.b16 %v7724
    %v7898 = vunpack.c.h.b16 %v7724
    %v7899 = vunpack.c.l.b16 %v7725
    %v7900 = vunpack.c.h.b16 %v7725
    %v7901 = vunpack.c.l.b16 %v7726
    %v7902 = vunpack.c.h.b16 %v7726
    %v7903 = vunpack.c.l.b16 %v7727
    %v7904 = vunpack.c.h.b16 %v7727
    %v7905 = vunpack.c.l.b16 %v7728
    %v7906 = vunpack.c.h.b16 %v7728
    %v7907 = vunpack.c.l.b16 %v7729
    %v7908 = vunpack.c.h.b16 %v7729
    %v7909 = vunpack.c.l.b16 %v7730
    %v7910 = vunpack.c.h.b16 %v7730
    %v7911 = vunpack.c.l.b16 %v7731
    %v7912 = vunpack.c.h.b16 %v7731
    %v7913 = vunpack.c.l.b16 %v7732
    %v7914 = vunpack.c.h.b16 %v7732
    %v7915 = vunpack.c.l.b16 %v7733
    %v7916 = vunpack.c.h.b16 %v7733
    %v7917 = vpack.c.b16 %v7869, %v7853
    %v7918 = vpack.c.b16 %v7870, %v7854
    %v7919 = vpack.c.b16 %v7871, %v7855
    %v7920 = vpack.c.b16 %v7872, %v7856
    %v7921 = vpack.c.b16 %v7873, %v7857
    %v7922 = vpack.c.b16 %v7874, %v7858
    %v7923 = vpack.c.b16 %v7875, %v7859
    %v7924 = vpack.c.b16 %v7876, %v7860
    %v7925 = vpack.c.b16 %v7877, %v7861
    %v7926 = vpack.c.b16 %v7878, %v7862
    %v7927 = vpack.c.b16 %v7879, %v7863
    %v7928 = vpack.c.b16 %v7880, %v7864
    %v7929 = vpack.c.b16 %v7881, %v7865
    %v7930 = vpack.c.b16 %v7882, %v7866
    %v7931 = vpack.c.b16 %v7883, %v7867
    %v7932 = vpack.c.b16 %v7884, %v7868
    %v7933 = vpack.c.b16 %v7901, %v7885
    %v7934 = vpack.c.b16 %v7902, %v7886
    %v7935 = vpack.c.b16 %v7903, %v7887
    %v7936 = vpack.c.b16 %v7904, %v7888
    %v7937 = vpack.c.b16 %v7905, %v7889
    %v7938 = vpack.c.b16 %v7906, %v7890
    %v7939 = vpack.c.b16 %v7907, %v7891
    %v7940 = vpack.c.b16 %v7908, %v7892
    %v7941 = vpack.c.b16 %v7909, %v7893
    %v7942 = vpack.c.b16 %v7910, %v7894
    %v7943 = vpack.c.b16 %v7911, %v7895
    %v7944 = vpack.c.b16 %v7912, %v7896
    %v7945 = vpack.c.b16 %v7913, %v7897
    %v7946 = vpack.c.b16 %v7914, %v7898
    %v7947 = vpack.c.b16 %v7915, %v7899
    %v7948 = vpack.c.b16 %v7916, %v7900
    %v7982 = vsel %vm467, %v7737, 0
    %v7985 = vsel %vm467, %v7738, 0
    %7987 = vmatprep.subr.bf16.mxu0 %v7918
    %7988 = vmatpush1.bf16.msra.mxu0 %v7917
    %7989 = vmatprep.subr.bf16.mxu0 %v7934
    %7990 = vmatpush1.bf16.msra.mxu0 %v7933
    %7991 = vmatprep.subr.bf16.mxu0 0
    %7992 = vmatpush1.bf16.msra.mxu0 0
    %7993 = vmatprep.subr.bf16.mxu0 0
    %7994 = vmatpush1.bf16.msra.mxu0 0
    %7995 = vmatprep.subr.bf16.mxu0 0
    %7996 = vmatpush1.bf16.msra.mxu0 0
    %7997 = vmatprep.subr.bf16.mxu0 0
    %7998 = vmatpush1.bf16.msra.mxu0 0
    %7999 = vmatprep.subr.bf16.mxu0 0
    %8000 = vmatpush1.bf16.msra.mxu0 0
    %8001 = vmatprep.subr.bf16.mxu0 0
    %8002 = vmatpush1.bf16.msra.mxu0 0
    %8003 = vmatprep.subr.bf16.mxu0 0
    %8004 = vmatpush1.bf16.msra.mxu0 0
    %8005 = vmatprep.subr.bf16.mxu0 0
    %8006 = vmatpush1.bf16.msra.mxu0 0
    %8007 = vmatprep.subr.bf16.mxu0 0
    %8008 = vmatpush1.bf16.msra.mxu0 0
    %8009 = vmatprep.subr.bf16.mxu0 0
    %8010 = vmatpush1.bf16.msra.mxu0 0
    %8011 = vmatprep.subr.bf16.mxu0 0
    %8012 = vmatpush1.bf16.msra.mxu0 0
    %8013 = vmatprep.subr.bf16.mxu0 0
    %8014 = vmatpush1.bf16.msra.mxu0 0
    %8015 = vmatprep.subr.bf16.mxu0 0
    %8016 = vmatpush1.bf16.msra.mxu0 0
    %8017 = vmatprep.subr.bf16.mxu0 0
    %8018 = vmatpush1.bf16.msra.mxu0 0
    %8019 = vmatprep.mubr.bf16.mxu0 0
    %8020 = vmatmul.mubr.bf16.gmra.mrb[0].mxu0 %v7982
    %v8021 = vpop.f32.mrb[0].mxu0
    %v8022 = vadd.f32 %v7744, %v8021
    %v8023 = vpop.f32.mrb[0].mxu0
    %v8024 = vadd.f32 %v7748, %v8023
    %v8025 = vpop.f32.mrb[0].mxu0
    %v8026 = vadd.f32 %v7744, %v8025
    %v8027 = vpop.f32.mrb[0].mxu0
    %v8028 = vadd.f32 %v7748, %v8027
    %8029 = vmatprep.mubr.bf16.mxu0 0
    %8030 = vmatmul.mubr.bf16.gmra.mrb[0].mxu0 %v7985
    %v8031 = vpop.f32.mrb[0].mxu0
    %v8032 = vadd.f32 %v7744, %v8031
    %v8033 = vpop.f32.mrb[0].mxu0
    %v8034 = vadd.f32 %v7748, %v8033
    %v8035 = vpop.f32.mrb[0].mxu0
    %v8036 = vadd.f32 %v7744, %v8035
    %v8037 = vpop.f32.mrb[0].mxu0
    %v8038 = vadd.f32 %v7748, %v8037
    %8039 = vdwg.mxu0
    %8040 = vmatprep.subr.bf16.mxu0 %v7920
    %8041 = vmatpush1.bf16.msra.mxu0 %v7919
    %8042 = vmatprep.subr.bf16.mxu0 %v7936
    %8043 = vmatpush1.bf16.msra.mxu0 %v7935
    %8044 = vmatprep.subr.bf16.mxu0 0
    %8045 = vmatpush1.bf16.msra.mxu0 0
    %8046 = vmatprep.subr.bf16.mxu0 0
    %8047 = vmatpush1.bf16.msra.mxu0 0
    %8048 = vmatprep.subr.bf16.mxu0 0
    %8049 = vmatpush1.bf16.msra.mxu0 0
    %8050 = vmatprep.subr.bf16.mxu0 0
    %8051 = vmatpush1.bf16.msra.mxu0 0
    %8052 = vmatprep.subr.bf16.mxu0 0
    %8053 = vmatpush1.bf16.msra.mxu0 0
    %8054 = vmatprep.subr.bf16.mxu0 0
    %8055 = vmatpush1.bf16.msra.mxu0 0
    %8056 = vmatprep.subr.bf16.mxu0 0
    %8057 = vmatpush1.bf16.msra.mxu0 0
    %8058 = vmatprep.subr.bf16.mxu0 0
    %8059 = vmatpush1.bf16.msra.mxu0 0
    %8060 = vmatprep.subr.bf16.mxu0 0
    %8061 = vmatpush1.bf16.msra.mxu0 0
    %8062 = vmatprep.subr.bf16.mxu0 0
    %8063 = vmatpush1.bf16.msra.mxu0 0
    %8064 = vmatprep.subr.bf16.mxu0 0
    %8065 = vmatpush1.bf16.msra.mxu0 0
    %8066 = vmatprep.subr.bf16.mxu0 0
    %8067 = vmatpush1.bf16.msra.mxu0 0
    %8068 = vmatprep.subr.bf16.mxu0 0
    %8069 = vmatpush1.bf16.msra.mxu0 0
    %8070 = vmatprep.subr.bf16.mxu0 0
    %8071 = vmatpush1.bf16.msra.mxu0 0
    %8072 = vmatprep.mubr.bf16.mxu0 0
    %8073 = vmatmul.mubr.bf16.gmra.mrb[0].mxu0 %v7982
    %v8074 = vpop.f32.mrb[0].mxu0
    %v8075 = vadd.f32 %v7752, %v8074
    %v8076 = vpop.f32.mrb[0].mxu0
    %v8077 = vadd.f32 %v7756, %v8076
    %v8078 = vpop.f32.mrb[0].mxu0
    %v8079 = vadd.f32 %v7752, %v8078
    %v8080 = vpop.f32.mrb[0].mxu0
    %v8081 = vadd.f32 %v7756, %v8080
    %8082 = vmatprep.mubr.bf16.mxu0 0
    %8083 = vmatmul.mubr.bf16.gmra.mrb[0].mxu0 %v7985
    %v8084 = vpop.f32.mrb[0].mxu0
    %v8085 = vadd.f32 %v7752, %v8084
    %v8086 = vpop.f32.mrb[0].mxu0
    %v8087 = vadd.f32 %v7756, %v8086
    %v8088 = vpop.f32.mrb[0].mxu0
    %v8089 = vadd.f32 %v7752, %v8088
    %v8090 = vpop.f32.mrb[0].mxu0
    %v8091 = vadd.f32 %v7756, %v8090
    %8092 = vdwg.mxu0
    %8093 = vmatprep.subr.bf16.mxu0 %v7922
    %8094 = vmatpush1.bf16.msra.mxu0 %v7921
    %8095 = vmatprep.subr.bf16.mxu0 %v7938
    %8096 = vmatpush1.bf16.msra.mxu0 %v7937
    %8097 = vmatprep.subr.bf16.mxu0 0
    %8098 = vmatpush1.bf16.msra.mxu0 0
    %8099 = vmatprep.subr.bf16.mxu0 0
    %8100 = vmatpush1.bf16.msra.mxu0 0
    %8101 = vmatprep.subr.bf16.mxu0 0
    %8102 = vmatpush1.bf16.msra.mxu0 0
    %8103 = vmatprep.subr.bf16.mxu0 0
    %8104 = vmatpush1.bf16.msra.mxu0 0
    %8105 = vmatprep.subr.bf16.mxu0 0
    %8106 = vmatpush1.bf16.msra.mxu0 0
    %8107 = vmatprep.subr.bf16.mxu0 0
    %8108 = vmatpush1.bf16.msra.mxu0 0
    %8109 = vmatprep.subr.bf16.mxu0 0
    %8110 = vmatpush1.bf16.msra.mxu0 0
    %8111 = vmatprep.subr.bf16.mxu0 0
    %8112 = vmatpush1.bf16.msra.mxu0 0
    %8113 = vmatprep.subr.bf16.mxu0 0
    %8114 = vmatpush1.bf16.msra.mxu0 0
    %8115 = vmatprep.subr.bf16.mxu0 0
    %8116 = vmatpush1.bf16.msra.mxu0 0
    %8117 = vmatprep.subr.bf16.mxu0 0
    %8118 = vmatpush1.bf16.msra.mxu0 0
    %8119 = vmatprep.subr.bf16.mxu0 0
    %8120 = vmatpush1.bf16.msra.mxu0 0
    %8121 = vmatprep.subr.bf16.mxu0 0
    %8122 = vmatpush1.bf16.msra.mxu0 0
    %8123 = vmatprep.subr.bf16.mxu0 0
    %8124 = vmatpush1.bf16.msra.mxu0 0
    %8125 = vmatprep.mubr.bf16.mxu0 0
    %8126 = vmatmul.mubr.bf16.gmra.mrb[0].mxu0 %v7982
    %v8127 = vpop.f32.mrb[0].mxu0
    %v8128 = vadd.f32 %v7760, %v8127
    %v8129 = vpop.f32.mrb[0].mxu0
    %v8130 = vadd.f32 %v7764, %v8129
    %v8131 = vpop.f32.mrb[0].mxu0
    %v8132 = vadd.f32 %v7760, %v8131
    %v8133 = vpop.f32.mrb[0].mxu0
    %v8134 = vadd.f32 %v7764, %v8133
    %8135 = vmatprep.mubr.bf16.mxu0 0
    %8136 = vmatmul.mubr.bf16.gmra.mrb[0].mxu0 %v7985
    %v8137 = vpop.f32.mrb[0].mxu0
    %v8138 = vadd.f32 %v7760, %v8137
    %v8139 = vpop.f32.mrb[0].mxu0
    %v8140 = vadd.f32 %v7764, %v8139
    %v8141 = vpop.f32.mrb[0].mxu0
    %v8142 = vadd.f32 %v7760, %v8141
    %v8143 = vpop.f32.mrb[0].mxu0
    %v8144 = vadd.f32 %v7764, %v8143
    %8145 = vdwg.mxu0
    %8146 = vmatprep.subr.bf16.mxu0 %v7924
    %8147 = vmatpush1.bf16.msra.mxu0 %v7923
    %8148 = vmatprep.subr.bf16.mxu0 %v7940
    %8149 = vmatpush1.bf16.msra.mxu0 %v7939
    %8150 = vmatprep.subr.bf16.mxu0 0
    %8151 = vmatpush1.bf16.msra.mxu0 0
    %8152 = vmatprep.subr.bf16.mxu0 0
    %8153 = vmatpush1.bf16.msra.mxu0 0
    %8154 = vmatprep.subr.bf16.mxu0 0
    %8155 = vmatpush1.bf16.msra.mxu0 0
    %8156 = vmatprep.subr.bf16.mxu0 0
    %8157 = vmatpush1.bf16.msra.mxu0 0
    %8158 = vmatprep.subr.bf16.mxu0 0
    %8159 = vmatpush1.bf16.msra.mxu0 0
    %8160 = vmatprep.subr.bf16.mxu0 0
    %8161 = vmatpush1.bf16.msra.mxu0 0
    %8162 = vmatprep.subr.bf16.mxu0 0
    %8163 = vmatpush1.bf16.msra.mxu0 0
    %8164 = vmatprep.subr.bf16.mxu0 0
    %8165 = vmatpush1.bf16.msra.mxu0 0
    %8166 = vmatprep.subr.bf16.mxu0 0
    %8167 = vmatpush1.bf16.msra.mxu0 0
    %8168 = vmatprep.subr.bf16.mxu0 0
    %8169 = vmatpush1.bf16.msra.mxu0 0
    %8170 = vmatprep.subr.bf16.mxu0 0
    %8171 = vmatpush1.bf16.msra.mxu0 0
    %8172 = vmatprep.subr.bf16.mxu0 0
    %8173 = vmatpush1.bf16.msra.mxu0 0
    %8174 = vmatprep.subr.bf16.mxu0 0
    %8175 = vmatpush1.bf16.msra.mxu0 0
    %8176 = vmatprep.subr.bf16.mxu0 0
    %8177 = vmatpush1.bf16.msra.mxu0 0
    %8178 = vmatprep.mubr.bf16.mxu0 0
    %8179 = vmatmul.mubr.bf16.gmra.mrb[0].mxu0 %v7982
    %v8180 = vpop.f32.mrb[0].mxu0
    %v8181 = vadd.f32 %v7768, %v8180
    %v8182 = vpop.f32.mrb[0].mxu0
    %v8183 = vadd.f32 %v7772, %v8182
    %v8184 = vpop.f32.mrb[0].mxu0
    %v8185 = vadd.f32 %v7768, %v8184
    %v8186 = vpop.f32.mrb[0].mxu0
    %v8187 = vadd.f32 %v7772, %v8186
    %8188 = vmatprep.mubr.bf16.mxu0 0
    %8189 = vmatmul.mubr.bf16.gmra.mrb[0].mxu0 %v7985
    %v8190 = vpop.f32.mrb[0].mxu0
    %v8191 = vadd.f32 %v7768, %v8190
    %v8192 = vpop.f32.mrb[0].mxu0
    %v8193 = vadd.f32 %v7772, %v8192
    %v8194 = vpop.f32.mrb[0].mxu0
    %v8195 = vadd.f32 %v7768, %v8194
    %v8196 = vpop.f32.mrb[0].mxu0
    %v8197 = vadd.f32 %v7772, %v8196
    %8198 = vdwg.mxu0
    %8199 = vmatprep.subr.bf16.mxu0 %v7926
    %8200 = vmatpush1.bf16.msra.mxu0 %v7925
    %8201 = vmatprep.subr.bf16.mxu0 %v7942
    %8202 = vmatpush1.bf16.msra.mxu0 %v7941
    %8203 = vmatprep.subr.bf16.mxu0 0
    %8204 = vmatpush1.bf16.msra.mxu0 0
    %8205 = vmatprep.subr.bf16.mxu0 0
    %8206 = vmatpush1.bf16.msra.mxu0 0
    %8207 = vmatprep.subr.bf16.mxu0 0
    %8208 = vmatpush1.bf16.msra.mxu0 0
    %8209 = vmatprep.subr.bf16.mxu0 0
    %8210 = vmatpush1.bf16.msra.mxu0 0
    %8211 = vmatprep.subr.bf16.mxu0 0
    %8212 = vmatpush1.bf16.msra.mxu0 0
    %8213 = vmatprep.subr.bf16.mxu0 0
    %8214 = vmatpush1.bf16.msra.mxu0 0
    %8215 = vmatprep.subr.bf16.mxu0 0
    %8216 = vmatpush1.bf16.msra.mxu0 0
    %8217 = vmatprep.subr.bf16.mxu0 0
    %8218 = vmatpush1.bf16.msra.mxu0 0
    %8219 = vmatprep.subr.bf16.mxu0 0
    %8220 = vmatpush1.bf16.msra.mxu0 0
    %8221 = vmatprep.subr.bf16.mxu0 0
    %8222 = vmatpush1.bf16.msra.mxu0 0
    %8223 = vmatprep.subr.bf16.mxu0 0
    %8224 = vmatpush1.bf16.msra.mxu0 0
    %8225 = vmatprep.subr.bf16.mxu0 0
    %8226 = vmatpush1.bf16.msra.mxu0 0
    %8227 = vmatprep.subr.bf16.mxu0 0
    %8228 = vmatpush1.bf16.msra.mxu0 0
    %8229 = vmatprep.subr.bf16.mxu0 0
    %8230 = vmatpush1.bf16.msra.mxu0 0
    %8231 = vmatprep.mubr.bf16.mxu0 0
    %8232 = vmatmul.mubr.bf16.gmra.mrb[0].mxu0 %v7982
    %v8233 = vpop.f32.mrb[0].mxu0
    %v8234 = vadd.f32 %v7776, %v8233
    %v8235 = vpop.f32.mrb[0].mxu0
    %v8236 = vadd.f32 %v7780, %v8235
    %v8237 = vpop.f32.mrb[0].mxu0
    %v8238 = vadd.f32 %v7776, %v8237
    %v8239 = vpop.f32.mrb[0].mxu0
    %v8240 = vadd.f32 %v7780, %v8239
    %8241 = vmatprep.mubr.bf16.mxu0 0
    %8242 = vmatmul.mubr.bf16.gmra.mrb[0].mxu0 %v7985
    %v8243 = vpop.f32.mrb[0].mxu0
    %v8244 = vadd.f32 %v7776, %v8243
    %v8245 = vpop.f32.mrb[0].mxu0
    %v8246 = vadd.f32 %v7780, %v8245
    %v8247 = vpop.f32.mrb[0].mxu0
    %v8248 = vadd.f32 %v7776, %v8247
    %v8249 = vpop.f32.mrb[0].mxu0
    %v8250 = vadd.f32 %v7780, %v8249
    %8251 = vdwg.mxu0
    %8252 = vmatprep.subr.bf16.mxu0 %v7928
    %8253 = vmatpush1.bf16.msra.mxu0 %v7927
    %8254 = vmatprep.subr.bf16.mxu0 %v7944
    %8255 = vmatpush1.bf16.msra.mxu0 %v7943
    %8256 = vmatprep.subr.bf16.mxu0 0
    %8257 = vmatpush1.bf16.msra.mxu0 0
    %8258 = vmatprep.subr.bf16.mxu0 0
    %8259 = vmatpush1.bf16.msra.mxu0 0
    %8260 = vmatprep.subr.bf16.mxu0 0
    %8261 = vmatpush1.bf16.msra.mxu0 0
    %8262 = vmatprep.subr.bf16.mxu0 0
    %8263 = vmatpush1.bf16.msra.mxu0 0
    %8264 = vmatprep.subr.bf16.mxu0 0
    %8265 = vmatpush1.bf16.msra.mxu0 0
    %8266 = vmatprep.subr.bf16.mxu0 0
    %8267 = vmatpush1.bf16.msra.mxu0 0
    %8268 = vmatprep.subr.bf16.mxu0 0
    %8269 = vmatpush1.bf16.msra.mxu0 0
    %8270 = vmatprep.subr.bf16.mxu0 0
    %8271 = vmatpush1.bf16.msra.mxu0 0
    %8272 = vmatprep.subr.bf16.mxu0 0
    %8273 = vmatpush1.bf16.msra.mxu0 0
    %8274 = vmatprep.subr.bf16.mxu0 0
    %8275 = vmatpush1.bf16.msra.mxu0 0
    %8276 = vmatprep.subr.bf16.mxu0 0
    %8277 = vmatpush1.bf16.msra.mxu0 0
    %8278 = vmatprep.subr.bf16.mxu0 0
    %8279 = vmatpush1.bf16.msra.mxu0 0
    %8280 = vmatprep.subr.bf16.mxu0 0
    %8281 = vmatpush1.bf16.msra.mxu0 0
    %8282 = vmatprep.subr.bf16.mxu0 0
    %8283 = vmatpush1.bf16.msra.mxu0 0
    %8284 = vmatprep.mubr.bf16.mxu0 0
    %8285 = vmatmul.mubr.bf16.gmra.mrb[0].mxu0 %v7982
    %v8286 = vpop.f32.mrb[0].mxu0
    %v8287 = vadd.f32 %v7784, %v8286
    %v8288 = vpop.f32.mrb[0].mxu0
    %v8289 = vadd.f32 %v7788, %v8288
    %v8290 = vpop.f32.mrb[0].mxu0
    %v8291 = vadd.f32 %v7784, %v8290
    %v8292 = vpop.f32.mrb[0].mxu0
    %v8293 = vadd.f32 %v7788, %v8292
    %8294 = vmatprep.mubr.bf16.mxu0 0
    %8295 = vmatmul.mubr.bf16.gmra.mrb[0].mxu0 %v7985
    %v8296 = vpop.f32.mrb[0].mxu0
    %v8297 = vadd.f32 %v7784, %v8296
    %v8298 = vpop.f32.mrb[0].mxu0
    %v8299 = vadd.f32 %v7788, %v8298
    %v8300 = vpop.f32.mrb[0].mxu0
    %v8301 = vadd.f32 %v7784, %v8300
    %v8302 = vpop.f32.mrb[0].mxu0
    %v8303 = vadd.f32 %v7788, %v8302
    %8304 = vdwg.mxu0
    %8305 = vmatprep.subr.bf16.mxu0 %v7930
    %8306 = vmatpush1.bf16.msra.mxu0 %v7929
    %8307 = vmatprep.subr.bf16.mxu0 %v7946
    %8308 = vmatpush1.bf16.msra.mxu0 %v7945
    %8309 = vmatprep.subr.bf16.mxu0 0
    %8310 = vmatpush1.bf16.msra.mxu0 0
    %8311 = vmatprep.subr.bf16.mxu0 0
    %8312 = vmatpush1.bf16.msra.mxu0 0
    %8313 = vmatprep.subr.bf16.mxu0 0
    %8314 = vmatpush1.bf16.msra.mxu0 0
    %8315 = vmatprep.subr.bf16.mxu0 0
    %8316 = vmatpush1.bf16.msra.mxu0 0
    %8317 = vmatprep.subr.bf16.mxu0 0
    %8318 = vmatpush1.bf16.msra.mxu0 0
    %8319 = vmatprep.subr.bf16.mxu0 0
    %8320 = vmatpush1.bf16.msra.mxu0 0
    %8321 = vmatprep.subr.bf16.mxu0 0
    %8322 = vmatpush1.bf16.msra.mxu0 0
    %8323 = vmatprep.subr.bf16.mxu0 0
    %8324 = vmatpush1.bf16.msra.mxu0 0
    %8325 = vmatprep.subr.bf16.mxu0 0
    %8326 = vmatpush1.bf16.msra.mxu0 0
    %8327 = vmatprep.subr.bf16.mxu0 0
    %8328 = vmatpush1.bf16.msra.mxu0 0
    %8329 = vmatprep.subr.bf16.mxu0 0
    %8330 = vmatpush1.bf16.msra.mxu0 0
    %8331 = vmatprep.subr.bf16.mxu0 0
    %8332 = vmatpush1.bf16.msra.mxu0 0
    %8333 = vmatprep.subr.bf16.mxu0 0
    %8334 = vmatpush1.bf16.msra.mxu0 0
    %8335 = vmatprep.subr.bf16.mxu0 0
    %8336 = vmatpush1.bf16.msra.mxu0 0
    %8337 = vmatprep.mubr.bf16.mxu0 0
    %8338 = vmatmul.mubr.bf16.gmra.mrb[0].mxu0 %v7982
    %v8339 = vpop.f32.mrb[0].mxu0
    %v8340 = vadd.f32 %v7792, %v8339
    %v8341 = vpop.f32.mrb[0].mxu0
    %v8342 = vadd.f32 %v7796, %v8341
    %v8343 = vpop.f32.mrb[0].mxu0
    %v8344 = vadd.f32 %v7792, %v8343
    %v8345 = vpop.f32.mrb[0].mxu0
    %v8346 = vadd.f32 %v7796, %v8345
    %8347 = vmatprep.mubr.bf16.mxu0 0
    %8348 = vmatmul.mubr.bf16.gmra.mrb[0].mxu0 %v7985
    %v8349 = vpop.f32.mrb[0].mxu0
    %v8350 = vadd.f32 %v7792, %v8349
    %v8351 = vpop.f32.mrb[0].mxu0
    %v8352 = vadd.f32 %v7796, %v8351
    %v8353 = vpop.f32.mrb[0].mxu0
    %v8354 = vadd.f32 %v7792, %v8353
    %v8355 = vpop.f32.mrb[0].mxu0
    %v8356 = vadd.f32 %v7796, %v8355
    %8357 = vdwg.mxu0
    %8358 = vmatprep.subr.bf16.mxu0 %v7932
    %8359 = vmatpush1.bf16.msra.mxu0 %v7931
    %8360 = vmatprep.subr.bf16.mxu0 %v7948
    %8361 = vmatpush1.bf16.msra.mxu0 %v7947
    %8362 = vmatprep.subr.bf16.mxu0 0
    %8363 = vmatpush1.bf16.msra.mxu0 0
    %8364 = vmatprep.subr.bf16.mxu0 0
    %8365 = vmatpush1.bf16.msra.mxu0 0
    %8366 = vmatprep.subr.bf16.mxu0 0
    %8367 = vmatpush1.bf16.msra.mxu0 0
    %8368 = vmatprep.subr.bf16.mxu0 0
    %8369 = vmatpush1.bf16.msra.mxu0 0
    %8370 = vmatprep.subr.bf16.mxu0 0
    %8371 = vmatpush1.bf16.msra.mxu0 0
    %8372 = vmatprep.subr.bf16.mxu0 0
    %8373 = vmatpush1.bf16.msra.mxu0 0
    %8374 = vmatprep.subr.bf16.mxu0 0
    %8375 = vmatpush1.bf16.msra.mxu0 0
    %8376 = vmatprep.subr.bf16.mxu0 0
    %8377 = vmatpush1.bf16.msra.mxu0 0
    %8378 = vmatprep.subr.bf16.mxu0 0
    %8379 = vmatpush1.bf16.msra.mxu0 0
    %8380 = vmatprep.subr.bf16.mxu0 0
    %8381 = vmatpush1.bf16.msra.mxu0 0
    %8382 = vmatprep.subr.bf16.mxu0 0
    %8383 = vmatpush1.bf16.msra.mxu0 0
    %8384 = vmatprep.subr.bf16.mxu0 0
    %8385 = vmatpush1.bf16.msra.mxu0 0
    %8386 = vmatprep.subr.bf16.mxu0 0
    %8387 = vmatpush1.bf16.msra.mxu0 0
    %8388 = vmatprep.subr.bf16.mxu0 0
    %8389 = vmatpush1.bf16.msra.mxu0 0
    %8390 = vmatprep.mubr.bf16.mxu0 0
    %8391 = vmatmul.mubr.bf16.gmra.mrb[0].mxu0 %v7982
    %v8392 = vpop.f32.mrb[0].mxu0
    %v8393 = vadd.f32 %v7800, %v8392
    %v8394 = vpop.f32.mrb[0].mxu0
    %v8395 = vadd.f32 %v7804, %v8394
    %v8396 = vpop.f32.mrb[0].mxu0
    %v8397 = vadd.f32 %v7800, %v8396
    %v8398 = vpop.f32.mrb[0].mxu0
    %v8399 = vadd.f32 %v7804, %v8398
    %8400 = vmatprep.mubr.bf16.mxu0 0
    %8401 = vmatmul.mubr.bf16.gmra.mrb[0].mxu0 %v7985
    %v8402 = vpop.f32.mrb[0].mxu0
    %v8403 = vadd.f32 %v7800, %v8402
    %v8404 = vpop.f32.mrb[0].mxu0
    %v8405 = vadd.f32 %v7804, %v8404
    %v8406 = vpop.f32.mrb[0].mxu0
    %v8407 = vadd.f32 %v7800, %v8406
    %v8408 = vpop.f32.mrb[0].mxu0
    %v8409 = vadd.f32 %v7804, %v8408
    %8410 = vdwg.mxu0
    %v8411 = vmax.f32 %v8022, 0.0
    %v8412 = vmax.f32 %v8024, 0.0
    %v8413 = vmax.f32 %v8075, 0.0
    %v8414 = vmax.f32 %v8077, 0.0
    %v8415 = vmax.f32 %v8128, 0.0
    %v8416 = vmax.f32 %v8130, 0.0
    %v8417 = vmax.f32 %v8181, 0.0
    %v8418 = vmax.f32 %v8183, 0.0
    %v8419 = vmax.f32 %v8234, 0.0
    %v8420 = vmax.f32 %v8236, 0.0
    %v8421 = vmax.f32 %v8287, 0.0
    %v8422 = vmax.f32 %v8289, 0.0
    %v8423 = vmax.f32 %v8340, 0.0
    %v8424 = vmax.f32 %v8342, 0.0
    %v8425 = vmax.f32 %v8393, 0.0
    %v8426 = vmax.f32 %v8395, 0.0
    %v8427 = vmax.f32 %v8026, 0.0
    %v8428 = vmax.f32 %v8028, 0.0
    %v8429 = vmax.f32 %v8079, 0.0
    %v8430 = vmax.f32 %v8081, 0.0
    %v8431 = vmax.f32 %v8132, 0.0
    %v8432 = vmax.f32 %v8134, 0.0
    %v8433 = vmax.f32 %v8185, 0.0
    %v8434 = vmax.f32 %v8187, 0.0
    %v8435 = vmax.f32 %v8238, 0.0
    %v8436 = vmax.f32 %v8240, 0.0
    %v8437 = vmax.f32 %v8291, 0.0
    %v8438 = vmax.f32 %v8293, 0.0
    %v8439 = vmax.f32 %v8344, 0.0
    %v8440 = vmax.f32 %v8346, 0.0
    %v8441 = vmax.f32 %v8397, 0.0
    %v8442 = vmax.f32 %v8399, 0.0
    %v8443 = vmax.f32 %v8032, 0.0
    %v8444 = vmax.f32 %v8034, 0.0
    %v8445 = vmax.f32 %v8085, 0.0
    %v8446 = vmax.f32 %v8087, 0.0
    %v8447 = vmax.f32 %v8138, 0.0
    %v8448 = vmax.f32 %v8140, 0.0
    %v8449 = vmax.f32 %v8191, 0.0
    %v8450 = vmax.f32 %v8193, 0.0
    %v8451 = vmax.f32 %v8244, 0.0
    %v8452 = vmax.f32 %v8246, 0.0
    %v8453 = vmax.f32 %v8297, 0.0
    %v8454 = vmax.f32 %v8299, 0.0
    %v8455 = vmax.f32 %v8350, 0.0
    %v8456 = vmax.f32 %v8352, 0.0
    %v8457 = vmax.f32 %v8403, 0.0
    %v8458 = vmax.f32 %v8405, 0.0
    %v8459 = vmax.f32 %v8036, 0.0
    %v8460 = vmax.f32 %v8038, 0.0
    %v8461 = vmax.f32 %v8089, 0.0
    %v8462 = vmax.f32 %v8091, 0.0
    %v8463 = vmax.f32 %v8142, 0.0
    %v8464 = vmax.f32 %v8144, 0.0
    %v8465 = vmax.f32 %v8195, 0.0
    %v8466 = vmax.f32 %v8197, 0.0
    %v8467 = vmax.f32 %v8248, 0.0
    %v8468 = vmax.f32 %v8250, 0.0
    %v8469 = vmax.f32 %v8301, 0.0
    %v8470 = vmax.f32 %v8303, 0.0
    %v8471 = vmax.f32 %v8354, 0.0
    %v8472 = vmax.f32 %v8356, 0.0
    %v8473 = vmax.f32 %v8407, 0.0
    %v8474 = vmax.f32 %v8409, 0.0
    %s8475 = scalar_lea.vmem %s81, 1024
    %v8476 = vld [vmem:[%s8475] sm:$0xf]
    %v8477 = vld [vmem:[%s8475 + $0x4] sm:$0xf]
    %v8478 = vld [vmem:[%s8475 + $0x8] sm:$0xf]
    %v8479 = vld [vmem:[%s8475 + $0xc] sm:$0xf]
    %v8480 = vld [vmem:[%s8475 + $0x10] sm:$0xf]
    %v8481 = vld [vmem:[%s8475 + $0x14] sm:$0xf]
    %v8482 = vld [vmem:[%s8475 + $0x18] sm:$0xf]
    %v8483 = vld [vmem:[%s8475 + $0x1c] sm:$0xf]
    %v8484 = vld [vmem:[%s8475 + $0x20] sm:$0xf]
    %v8485 = vld [vmem:[%s8475 + $0x24] sm:$0xf]
    %v8486 = vld [vmem:[%s8475 + $0x28] sm:$0xf]
    %v8487 = vld [vmem:[%s8475 + $0x2c] sm:$0xf]
    %v8488 = vld [vmem:[%s8475 + $0x30] sm:$0xf]
    %v8489 = vld [vmem:[%s8475 + $0x34] sm:$0xf]
    %v8490 = vld [vmem:[%s8475 + $0x38] sm:$0xf]
    %v8491 = vld [vmem:[%s8475 + $0x3c] sm:$0xf]
    %v8492 = vld [vmem:[%s8475 + $0x40] sm:$0xf]
    %v8493 = vld [vmem:[%s8475 + $0x44] sm:$0xf]
    %v8494 = vld [vmem:[%s8475 + $0x48] sm:$0xf]
    %v8495 = vld [vmem:[%s8475 + $0x4c] sm:$0xf]
    %v8496 = vld [vmem:[%s8475 + $0x50] sm:$0xf]
    %v8497 = vld [vmem:[%s8475 + $0x54] sm:$0xf]
    %v8498 = vld [vmem:[%s8475 + $0x58] sm:$0xf]
    %v8499 = vld [vmem:[%s8475 + $0x5c] sm:$0xf]
    %v8500 = vld [vmem:[%s8475 + $0x60] sm:$0xf]
    %v8501 = vld [vmem:[%s8475 + $0x64] sm:$0xf]
    %v8502 = vld [vmem:[%s8475 + $0x68] sm:$0xf]
    %v8503 = vld [vmem:[%s8475 + $0x6c] sm:$0xf]
    %v8504 = vld [vmem:[%s8475 + $0x70] sm:$0xf]
    %v8505 = vld [vmem:[%s8475 + $0x74] sm:$0xf]
    %v8506 = vld [vmem:[%s8475 + $0x78] sm:$0xf]
    %v8507 = vld [vmem:[%s8475 + $0x7c] sm:$0xf]
    %v8508 = vld [vmem:[%s8475 + $0x80] sm:$0xf]
    %v8509 = vld [vmem:[%s8475 + $0x84] sm:$0xf]
    %v8510 = vld [vmem:[%s8475 + $0x88] sm:$0xf]
    %v8511 = vld [vmem:[%s8475 + $0x8c] sm:$0xf]
    %v8512 = vld [vmem:[%s8475 + $0x90] sm:$0xf]
    %v8513 = vld [vmem:[%s8475 + $0x94] sm:$0xf]
    %v8514 = vld [vmem:[%s8475 + $0x98] sm:$0xf]
    %v8515 = vld [vmem:[%s8475 + $0x9c] sm:$0xf]
    %v8516 = vld [vmem:[%s8475 + $0xa0] sm:$0xf]
    %v8517 = vld [vmem:[%s8475 + $0xa4] sm:$0xf]
    %v8518 = vld [vmem:[%s8475 + $0xa8] sm:$0xf]
    %v8519 = vld [vmem:[%s8475 + $0xac] sm:$0xf]
    %v8520 = vld [vmem:[%s8475 + $0xb0] sm:$0xf]
    %v8521 = vld [vmem:[%s8475 + $0xb4] sm:$0xf]
    %v8522 = vld [vmem:[%s8475 + $0xb8] sm:$0xf]
    %v8523 = vld [vmem:[%s8475 + $0xbc] sm:$0xf]
    %v8524 = vld [vmem:[%s8475 + $0xc0] sm:$0xf]
    %v8525 = vld [vmem:[%s8475 + $0xc4] sm:$0xf]
    %v8526 = vld [vmem:[%s8475 + $0xc8] sm:$0xf]
    %v8527 = vld [vmem:[%s8475 + $0xcc] sm:$0xf]
    %v8528 = vld [vmem:[%s8475 + $0xd0] sm:$0xf]
    %v8529 = vld [vmem:[%s8475 + $0xd4] sm:$0xf]
    %v8530 = vld [vmem:[%s8475 + $0xd8] sm:$0xf]
    %v8531 = vld [vmem:[%s8475 + $0xdc] sm:$0xf]
    %v8532 = vld [vmem:[%s8475 + $0xe0] sm:$0xf]
    %v8533 = vld [vmem:[%s8475 + $0xe4] sm:$0xf]
    %v8534 = vld [vmem:[%s8475 + $0xe8] sm:$0xf]
    %v8535 = vld [vmem:[%s8475 + $0xec] sm:$0xf]
    %v8536 = vld [vmem:[%s8475 + $0xf0] sm:$0xf]
    %v8537 = vld [vmem:[%s8475 + $0xf4] sm:$0xf]
    %v8538 = vld [vmem:[%s8475 + $0xf8] sm:$0xf]
    %v8539 = vld [vmem:[%s8475 + $0xfc] sm:$0xf]
    %v8540 = vld [vmem:[%s8475 + $0x100] sm:$0xf]
    %v8541 = vld [vmem:[%s8475 + $0x104] sm:$0xf]
    %v8542 = vld [vmem:[%s8475 + $0x108] sm:$0xf]
    %v8543 = vld [vmem:[%s8475 + $0x10c] sm:$0xf]
    %v8544 = vld [vmem:[%s8475 + $0x110] sm:$0xf]
    %v8545 = vld [vmem:[%s8475 + $0x114] sm:$0xf]
    %v8546 = vld [vmem:[%s8475 + $0x118] sm:$0xf]
    %v8547 = vld [vmem:[%s8475 + $0x11c] sm:$0xf]
    %v8548 = vld [vmem:[%s8475 + $0x120] sm:$0xf]
    %v8549 = vld [vmem:[%s8475 + $0x124] sm:$0xf]
    %v8550 = vld [vmem:[%s8475 + $0x128] sm:$0xf]
    %v8551 = vld [vmem:[%s8475 + $0x12c] sm:$0xf]
    %v8552 = vld [vmem:[%s8475 + $0x130] sm:$0xf]
    %v8553 = vld [vmem:[%s8475 + $0x134] sm:$0xf]
    %v8554 = vld [vmem:[%s8475 + $0x138] sm:$0xf]
    %v8555 = vld [vmem:[%s8475 + $0x13c] sm:$0xf]
    %v8556 = vld [vmem:[%s8475 + $0x140] sm:$0xf]
    %v8557 = vld [vmem:[%s8475 + $0x144] sm:$0xf]
    %v8558 = vld [vmem:[%s8475 + $0x148] sm:$0xf]
    %v8559 = vld [vmem:[%s8475 + $0x14c] sm:$0xf]
    %v8560 = vld [vmem:[%s8475 + $0x150] sm:$0xf]
    %v8561 = vld [vmem:[%s8475 + $0x154] sm:$0xf]
    %v8562 = vld [vmem:[%s8475 + $0x158] sm:$0xf]
    %v8563 = vld [vmem:[%s8475 + $0x15c] sm:$0xf]
    %v8564 = vld [vmem:[%s8475 + $0x160] sm:$0xf]
    %v8565 = vld [vmem:[%s8475 + $0x164] sm:$0xf]
    %v8566 = vld [vmem:[%s8475 + $0x168] sm:$0xf]
    %v8567 = vld [vmem:[%s8475 + $0x16c] sm:$0xf]
    %v8568 = vld [vmem:[%s8475 + $0x170] sm:$0xf]
    %v8569 = vld [vmem:[%s8475 + $0x174] sm:$0xf]
    %v8570 = vld [vmem:[%s8475 + $0x178] sm:$0xf]
    %v8571 = vld [vmem:[%s8475 + $0x17c] sm:$0xf]
    %v8572 = vld [vmem:[%s8475 + $0x180] sm:$0xf]
    %v8573 = vld [vmem:[%s8475 + $0x184] sm:$0xf]
    %v8574 = vld [vmem:[%s8475 + $0x188] sm:$0xf]
    %v8575 = vld [vmem:[%s8475 + $0x18c] sm:$0xf]
    %v8576 = vld [vmem:[%s8475 + $0x190] sm:$0xf]
    %v8577 = vld [vmem:[%s8475 + $0x194] sm:$0xf]
    %v8578 = vld [vmem:[%s8475 + $0x198] sm:$0xf]
    %v8579 = vld [vmem:[%s8475 + $0x19c] sm:$0xf]
    %v8580 = vld [vmem:[%s8475 + $0x1a0] sm:$0xf]
    %v8581 = vld [vmem:[%s8475 + $0x1a4] sm:$0xf]
    %v8582 = vld [vmem:[%s8475 + $0x1a8] sm:$0xf]
    %v8583 = vld [vmem:[%s8475 + $0x1ac] sm:$0xf]
    %v8584 = vld [vmem:[%s8475 + $0x1b0] sm:$0xf]
    %v8585 = vld [vmem:[%s8475 + $0x1b4] sm:$0xf]
    %v8586 = vld [vmem:[%s8475 + $0x1b8] sm:$0xf]
    %v8587 = vld [vmem:[%s8475 + $0x1bc] sm:$0xf]
    %v8588 = vld [vmem:[%s8475 + $0x1c0] sm:$0xf]
    %v8589 = vld [vmem:[%s8475 + $0x1c4] sm:$0xf]
    %v8590 = vld [vmem:[%s8475 + $0x1c8] sm:$0xf]
    %v8591 = vld [vmem:[%s8475 + $0x1cc] sm:$0xf]
    %v8592 = vld [vmem:[%s8475 + $0x1d0] sm:$0xf]
    %v8593 = vld [vmem:[%s8475 + $0x1d4] sm:$0xf]
    %v8594 = vld [vmem:[%s8475 + $0x1d8] sm:$0xf]
    %v8595 = vld [vmem:[%s8475 + $0x1dc] sm:$0xf]
    %v8596 = vld [vmem:[%s8475 + $0x1e0] sm:$0xf]
    %v8597 = vld [vmem:[%s8475 + $0x1e4] sm:$0xf]
    %v8598 = vld [vmem:[%s8475 + $0x1e8] sm:$0xf]
    %v8599 = vld [vmem:[%s8475 + $0x1ec] sm:$0xf]
    %v8600 = vld [vmem:[%s8475 + $0x1f0] sm:$0xf]
    %v8601 = vld [vmem:[%s8475 + $0x1f4] sm:$0xf]
    %v8602 = vld [vmem:[%s8475 + $0x1f8] sm:$0xf]
    %v8603 = vld [vmem:[%s8475 + $0x1fc] sm:$0xf]
    %v8604 = vld [vmem:[%s8475 + $0x200] sm:$0xf]
    %v8605 = vld [vmem:[%s8475 + $0x204] sm:$0xf]
    %v8606 = vld [vmem:[%s8475 + $0x208] sm:$0xf]
    %v8607 = vld [vmem:[%s8475 + $0x20c] sm:$0xf]
    %v8608 = vld [vmem:[%s8475 + $0x210] sm:$0xf]
    %v8609 = vld [vmem:[%s8475 + $0x214] sm:$0xf]
    %v8610 = vld [vmem:[%s8475 + $0x218] sm:$0xf]
    %v8611 = vld [vmem:[%s8475 + $0x21c] sm:$0xf]
    %v8612 = vld [vmem:[%s8475 + $0x220] sm:$0xf]
    %v8613 = vld [vmem:[%s8475 + $0x224] sm:$0xf]
    %v8614 = vld [vmem:[%s8475 + $0x228] sm:$0xf]
    %v8615 = vld [vmem:[%s8475 + $0x22c] sm:$0xf]
    %v8616 = vld [vmem:[%s8475 + $0x230] sm:$0xf]
    %v8617 = vld [vmem:[%s8475 + $0x234] sm:$0xf]
    %v8618 = vld [vmem:[%s8475 + $0x238] sm:$0xf]
    %v8619 = vld [vmem:[%s8475 + $0x23c] sm:$0xf]
    %v8620 = vld [vmem:[%s8475 + $0x240] sm:$0xf]
    %v8621 = vld [vmem:[%s8475 + $0x244] sm:$0xf]
    %v8622 = vld [vmem:[%s8475 + $0x248] sm:$0xf]
    %v8623 = vld [vmem:[%s8475 + $0x24c] sm:$0xf]
    %v8624 = vld [vmem:[%s8475 + $0x250] sm:$0xf]
    %v8625 = vld [vmem:[%s8475 + $0x254] sm:$0xf]
    %v8626 = vld [vmem:[%s8475 + $0x258] sm:$0xf]
    %v8627 = vld [vmem:[%s8475 + $0x25c] sm:$0xf]
    %v8628 = vld [vmem:[%s8475 + $0x260] sm:$0xf]
    %v8629 = vld [vmem:[%s8475 + $0x264] sm:$0xf]
    %v8630 = vld [vmem:[%s8475 + $0x268] sm:$0xf]
    %v8631 = vld [vmem:[%s8475 + $0x26c] sm:$0xf]
    %v8632 = vld [vmem:[%s8475 + $0x270] sm:$0xf]
    %v8633 = vld [vmem:[%s8475 + $0x274] sm:$0xf]
    %v8634 = vld [vmem:[%s8475 + $0x278] sm:$0xf]
    %v8635 = vld [vmem:[%s8475 + $0x27c] sm:$0xf]
    %v8636 = vld [vmem:[%s8475 + $0x280] sm:$0xf]
    %v8637 = vld [vmem:[%s8475 + $0x284] sm:$0xf]
    %v8638 = vld [vmem:[%s8475 + $0x288] sm:$0xf]
    %v8639 = vld [vmem:[%s8475 + $0x28c] sm:$0xf]
    %v8640 = vld [vmem:[%s8475 + $0x290] sm:$0xf]
    %v8641 = vld [vmem:[%s8475 + $0x294] sm:$0xf]
    %v8642 = vld [vmem:[%s8475 + $0x298] sm:$0xf]
    %v8643 = vld [vmem:[%s8475 + $0x29c] sm:$0xf]
    %v8644 = vld [vmem:[%s8475 + $0x2a0] sm:$0xf]
    %v8645 = vld [vmem:[%s8475 + $0x2a4] sm:$0xf]
    %v8646 = vld [vmem:[%s8475 + $0x2a8] sm:$0xf]
    %v8647 = vld [vmem:[%s8475 + $0x2ac] sm:$0xf]
    %v8648 = vld [vmem:[%s8475 + $0x2b0] sm:$0xf]
    %v8649 = vld [vmem:[%s8475 + $0x2b4] sm:$0xf]
    %v8650 = vld [vmem:[%s8475 + $0x2b8] sm:$0xf]
    %v8651 = vld [vmem:[%s8475 + $0x2bc] sm:$0xf]
    %v8652 = vld [vmem:[%s8475 + $0x2c0] sm:$0xf]
    %v8653 = vld [vmem:[%s8475 + $0x2c4] sm:$0xf]
    %v8654 = vld [vmem:[%s8475 + $0x2c8] sm:$0xf]
    %v8655 = vld [vmem:[%s8475 + $0x2cc] sm:$0xf]
    %v8656 = vld [vmem:[%s8475 + $0x2d0] sm:$0xf]
    %v8657 = vld [vmem:[%s8475 + $0x2d4] sm:$0xf]
    %v8658 = vld [vmem:[%s8475 + $0x2d8] sm:$0xf]
    %v8659 = vld [vmem:[%s8475 + $0x2dc] sm:$0xf]
    %v8660 = vld [vmem:[%s8475 + $0x2e0] sm:$0xf]
    %v8661 = vld [vmem:[%s8475 + $0x2e4] sm:$0xf]
    %v8662 = vld [vmem:[%s8475 + $0x2e8] sm:$0xf]
    %v8663 = vld [vmem:[%s8475 + $0x2ec] sm:$0xf]
    %v8664 = vld [vmem:[%s8475 + $0x2f0] sm:$0xf]
    %v8665 = vld [vmem:[%s8475 + $0x2f4] sm:$0xf]
    %v8666 = vld [vmem:[%s8475 + $0x2f8] sm:$0xf]
    %v8667 = vld [vmem:[%s8475 + $0x2fc] sm:$0xf]
    %v8668 = vld [vmem:[%s8475 + $0x300] sm:$0xf]
    %v8669 = vld [vmem:[%s8475 + $0x304] sm:$0xf]
    %v8670 = vld [vmem:[%s8475 + $0x308] sm:$0xf]
    %v8671 = vld [vmem:[%s8475 + $0x30c] sm:$0xf]
    %v8672 = vld [vmem:[%s8475 + $0x310] sm:$0xf]
    %v8673 = vld [vmem:[%s8475 + $0x314] sm:$0xf]
    %v8674 = vld [vmem:[%s8475 + $0x318] sm:$0xf]
    %v8675 = vld [vmem:[%s8475 + $0x31c] sm:$0xf]
    %v8676 = vld [vmem:[%s8475 + $0x320] sm:$0xf]
    %v8677 = vld [vmem:[%s8475 + $0x324] sm:$0xf]
    %v8678 = vld [vmem:[%s8475 + $0x328] sm:$0xf]
    %v8679 = vld [vmem:[%s8475 + $0x32c] sm:$0xf]
    %v8680 = vld [vmem:[%s8475 + $0x330] sm:$0xf]
    %v8681 = vld [vmem:[%s8475 + $0x334] sm:$0xf]
    %v8682 = vld [vmem:[%s8475 + $0x338] sm:$0xf]
    %v8683 = vld [vmem:[%s8475 + $0x33c] sm:$0xf]
    %v8684 = vld [vmem:[%s8475 + $0x340] sm:$0xf]
    %v8685 = vld [vmem:[%s8475 + $0x344] sm:$0xf]
    %v8686 = vld [vmem:[%s8475 + $0x348] sm:$0xf]
    %v8687 = vld [vmem:[%s8475 + $0x34c] sm:$0xf]
    %v8688 = vld [vmem:[%s8475 + $0x350] sm:$0xf]
    %v8689 = vld [vmem:[%s8475 + $0x354] sm:$0xf]
    %v8690 = vld [vmem:[%s8475 + $0x358] sm:$0xf]
    %v8691 = vld [vmem:[%s8475 + $0x35c] sm:$0xf]
    %v8692 = vld [vmem:[%s8475 + $0x360] sm:$0xf]
    %v8693 = vld [vmem:[%s8475 + $0x364] sm:$0xf]
    %v8694 = vld [vmem:[%s8475 + $0x368] sm:$0xf]
    %v8695 = vld [vmem:[%s8475 + $0x36c] sm:$0xf]
    %v8696 = vld [vmem:[%s8475 + $0x370] sm:$0xf]
    %v8697 = vld [vmem:[%s8475 + $0x374] sm:$0xf]
    %v8698 = vld [vmem:[%s8475 + $0x378] sm:$0xf]
    %v8699 = vld [vmem:[%s8475 + $0x37c] sm:$0xf]
    %v8700 = vld [vmem:[%s8475 + $0x380] sm:$0xf]
    %v8701 = vld [vmem:[%s8475 + $0x384] sm:$0xf]
    %v8702 = vld [vmem:[%s8475 + $0x388] sm:$0xf]
    %v8703 = vld [vmem:[%s8475 + $0x38c] sm:$0xf]
    %v8704 = vld [vmem:[%s8475 + $0x390] sm:$0xf]
    %v8705 = vld [vmem:[%s8475 + $0x394] sm:$0xf]
    %v8706 = vld [vmem:[%s8475 + $0x398] sm:$0xf]
    %v8707 = vld [vmem:[%s8475 + $0x39c] sm:$0xf]
    %v8708 = vld [vmem:[%s8475 + $0x3a0] sm:$0xf]
    %v8709 = vld [vmem:[%s8475 + $0x3a4] sm:$0xf]
    %v8710 = vld [vmem:[%s8475 + $0x3a8] sm:$0xf]
    %v8711 = vld [vmem:[%s8475 + $0x3ac] sm:$0xf]
    %v8712 = vld [vmem:[%s8475 + $0x3b0] sm:$0xf]
    %v8713 = vld [vmem:[%s8475 + $0x3b4] sm:$0xf]
    %v8714 = vld [vmem:[%s8475 + $0x3b8] sm:$0xf]
    %v8715 = vld [vmem:[%s8475 + $0x3bc] sm:$0xf]
    %v8716 = vld [vmem:[%s8475 + $0x3c0] sm:$0xf]
    %v8717 = vld [vmem:[%s8475 + $0x3c4] sm:$0xf]
    %v8718 = vld [vmem:[%s8475 + $0x3c8] sm:$0xf]
    %v8719 = vld [vmem:[%s8475 + $0x3cc] sm:$0xf]
    %v8720 = vld [vmem:[%s8475 + $0x3d0] sm:$0xf]
    %v8721 = vld [vmem:[%s8475 + $0x3d4] sm:$0xf]
    %v8722 = vld [vmem:[%s8475 + $0x3d8] sm:$0xf]
    %v8723 = vld [vmem:[%s8475 + $0x3dc] sm:$0xf]
    %v8724 = vld [vmem:[%s8475 + $0x3e0] sm:$0xf]
    %v8725 = vld [vmem:[%s8475 + $0x3e4] sm:$0xf]
    %v8726 = vld [vmem:[%s8475 + $0x3e8] sm:$0xf]
    %v8727 = vld [vmem:[%s8475 + $0x3ec] sm:$0xf]
    %v8728 = vld [vmem:[%s8475 + $0x3f0] sm:$0xf]
    %v8729 = vld [vmem:[%s8475 + $0x3f4] sm:$0xf]
    %v8730 = vld [vmem:[%s8475 + $0x3f8] sm:$0xf]
    %v8731 = vld [vmem:[%s8475 + $0x3fc] sm:$0xf]
    %s8732 = scalar_lea.vmem %s83, 1
    %v8733 = vld [vmem:[%s8732] sm:$0x1]
    %v8734 = vpack.c.bf16 %v8427, %v8411
    %v8735 = vpack.c.bf16 %v8428, %v8412
    %v8736 = vpack.c.bf16 %v8429, %v8413
    %v8737 = vpack.c.bf16 %v8430, %v8414
    %v8738 = vpack.c.bf16 %v8431, %v8415
    %v8739 = vpack.c.bf16 %v8432, %v8416
    %v8740 = vpack.c.bf16 %v8433, %v8417
    %v8741 = vpack.c.bf16 %v8434, %v8418
    %v8742 = vpack.c.bf16 %v8435, %v8419
    %v8743 = vpack.c.bf16 %v8436, %v8420
    %v8744 = vpack.c.bf16 %v8437, %v8421
    %v8745 = vpack.c.bf16 %v8438, %v8422
    %v8746 = vpack.c.bf16 %v8439, %v8423
    %v8747 = vpack.c.bf16 %v8440, %v8424
    %v8748 = vpack.c.bf16 %v8441, %v8425
    %v8749 = vpack.c.bf16 %v8442, %v8426
    %v8750 = vpack.c.bf16 %v8459, %v8443
    %v8751 = vpack.c.bf16 %v8460, %v8444
    %v8752 = vpack.c.bf16 %v8461, %v8445
    %v8753 = vpack.c.bf16 %v8462, %v8446
    %v8754 = vpack.c.bf16 %v8463, %v8447
    %v8755 = vpack.c.bf16 %v8464, %v8448
    %v8756 = vpack.c.bf16 %v8465, %v8449
    %v8757 = vpack.c.bf16 %v8466, %v8450
    %v8758 = vpack.c.bf16 %v8467, %v8451
    %v8759 = vpack.c.bf16 %v8468, %v8452
    %v8760 = vpack.c.bf16 %v8469, %v8453
    %v8761 = vpack.c.bf16 %v8470, %v8454
    %v8762 = vpack.c.bf16 %v8471, %v8455
    %v8763 = vpack.c.bf16 %v8472, %v8456
    %v8764 = vpack.c.bf16 %v8473, %v8457
    %v8765 = vpack.c.bf16 %v8474, %v8458
    %v8767 = vlaneseq
    %v8768 = vshrl.u32 %v8767, 7
    %v8769 = vsub.s32 0, %v8768
    %v8770 = vrot.slane %v8733, %v8769
    %v9028 = vunpack.c.l.b16 %v8476
    %v9029 = vunpack.c.l.b16 %v8477
    %v9030 = vunpack.c.l.b16 %v8478
    %v9031 = vunpack.c.l.b16 %v8479
    %v9032 = vunpack.c.l.b16 %v8480
    %v9033 = vunpack.c.l.b16 %v8481
    %v9034 = vunpack.c.l.b16 %v8482
    %v9035 = vunpack.c.l.b16 %v8483
    %v9036 = vunpack.c.l.b16 %v8484
    %v9037 = vunpack.c.l.b16 %v8485
    %v9038 = vunpack.c.l.b16 %v8486
    %v9039 = vunpack.c.l.b16 %v8487
    %v9040 = vunpack.c.l.b16 %v8488
    %v9041 = vunpack.c.l.b16 %v8489
    %v9042 = vunpack.c.l.b16 %v8490
    %v9043 = vunpack.c.l.b16 %v8491
    %v9044 = vunpack.c.l.b16 %v8492
    %v9045 = vunpack.c.l.b16 %v8493
    %v9046 = vunpack.c.l.b16 %v8494
    %v9047 = vunpack.c.l.b16 %v8495
    %v9048 = vunpack.c.l.b16 %v8496
    %v9049 = vunpack.c.l.b16 %v8497
    %v9050 = vunpack.c.l.b16 %v8498
    %v9051 = vunpack.c.l.b16 %v8499
    %v9052 = vunpack.c.l.b16 %v8500
    %v9053 = vunpack.c.l.b16 %v8501
    %v9054 = vunpack.c.l.b16 %v8502
    %v9055 = vunpack.c.l.b16 %v8503
    %v9056 = vunpack.c.l.b16 %v8504
    %v9057 = vunpack.c.l.b16 %v8505
    %v9058 = vunpack.c.l.b16 %v8506
    %v9059 = vunpack.c.l.b16 %v8507
    %v9060 = vunpack.c.l.b16 %v8508
    %v9061 = vunpack.c.l.b16 %v8509
    %v9062 = vunpack.c.l.b16 %v8510
    %v9063 = vunpack.c.l.b16 %v8511
    %v9064 = vunpack.c.l.b16 %v8512
    %v9065 = vunpack.c.l.b16 %v8513
    %v9066 = vunpack.c.l.b16 %v8514
    %v9067 = vunpack.c.l.b16 %v8515
    %v9068 = vunpack.c.l.b16 %v8516
    %v9069 = vunpack.c.l.b16 %v8517
    %v9070 = vunpack.c.l.b16 %v8518
    %v9071 = vunpack.c.l.b16 %v8519
    %v9072 = vunpack.c.l.b16 %v8520
    %v9073 = vunpack.c.l.b16 %v8521
    %v9074 = vunpack.c.l.b16 %v8522
    %v9075 = vunpack.c.l.b16 %v8523
    %v9076 = vunpack.c.l.b16 %v8524
    %v9077 = vunpack.c.l.b16 %v8525
    %v9078 = vunpack.c.l.b16 %v8526
    %v9079 = vunpack.c.l.b16 %v8527
    %v9080 = vunpack.c.l.b16 %v8528
    %v9081 = vunpack.c.l.b16 %v8529
    %v9082 = vunpack.c.l.b16 %v8530
    %v9083 = vunpack.c.l.b16 %v8531
    %v9084 = vunpack.c.l.b16 %v8532
    %v9085 = vunpack.c.l.b16 %v8533
    %v9086 = vunpack.c.l.b16 %v8534
    %v9087 = vunpack.c.l.b16 %v8535
    %v9088 = vunpack.c.l.b16 %v8536
    %v9089 = vunpack.c.l.b16 %v8537
    %v9090 = vunpack.c.l.b16 %v8538
    %v9091 = vunpack.c.l.b16 %v8539
    %v9092 = vunpack.c.l.b16 %v8540
    %v9093 = vunpack.c.l.b16 %v8541
    %v9094 = vunpack.c.l.b16 %v8542
    %v9095 = vunpack.c.l.b16 %v8543
    %v9096 = vunpack.c.l.b16 %v8544
    %v9097 = vunpack.c.l.b16 %v8545
    %v9098 = vunpack.c.l.b16 %v8546
    %v9099 = vunpack.c.l.b16 %v8547
    %v9100 = vunpack.c.l.b16 %v8548
    %v9101 = vunpack.c.l.b16 %v8549
    %v9102 = vunpack.c.l.b16 %v8550
    %v9103 = vunpack.c.l.b16 %v8551
    %v9104 = vunpack.c.l.b16 %v8552
    %v9105 = vunpack.c.l.b16 %v8553
    %v9106 = vunpack.c.l.b16 %v8554
    %v9107 = vunpack.c.l.b16 %v8555
    %v9108 = vunpack.c.l.b16 %v8556
    %v9109 = vunpack.c.l.b16 %v8557
    %v9110 = vunpack.c.l.b16 %v8558
    %v9111 = vunpack.c.l.b16 %v8559
    %v9112 = vunpack.c.l.b16 %v8560
    %v9113 = vunpack.c.l.b16 %v8561
    %v9114 = vunpack.c.l.b16 %v8562
    %v9115 = vunpack.c.l.b16 %v8563
    %v9116 = vunpack.c.l.b16 %v8564
    %v9117 = vunpack.c.l.b16 %v8565
    %v9118 = vunpack.c.l.b16 %v8566
    %v9119 = vunpack.c.l.b16 %v8567
    %v9120 = vunpack.c.l.b16 %v8568
    %v9121 = vunpack.c.l.b16 %v8569
    %v9122 = vunpack.c.l.b16 %v8570
    %v9123 = vunpack.c.l.b16 %v8571
    %v9124 = vunpack.c.l.b16 %v8572
    %v9125 = vunpack.c.l.b16 %v8573
    %v9126 = vunpack.c.l.b16 %v8574
    %v9127 = vunpack.c.l.b16 %v8575
    %v9128 = vunpack.c.l.b16 %v8576
    %v9129 = vunpack.c.l.b16 %v8577
    %v9130 = vunpack.c.l.b16 %v8578
    %v9131 = vunpack.c.l.b16 %v8579
    %v9132 = vunpack.c.l.b16 %v8580
    %v9133 = vunpack.c.l.b16 %v8581
    %v9134 = vunpack.c.l.b16 %v8582
    %v9135 = vunpack.c.l.b16 %v8583
    %v9136 = vunpack.c.l.b16 %v8584
    %v9137 = vunpack.c.l.b16 %v8585
    %v9138 = vunpack.c.l.b16 %v8586
    %v9139 = vunpack.c.l.b16 %v8587
    %v9140 = vunpack.c.l.b16 %v8588
    %v9141 = vunpack.c.l.b16 %v8589
    %v9142 = vunpack.c.l.b16 %v8590
    %v9143 = vunpack.c.l.b16 %v8591
    %v9144 = vunpack.c.l.b16 %v8592
    %v9145 = vunpack.c.l.b16 %v8593
    %v9146 = vunpack.c.l.b16 %v8594
    %v9147 = vunpack.c.l.b16 %v8595
    %v9148 = vunpack.c.l.b16 %v8596
    %v9149 = vunpack.c.l.b16 %v8597
    %v9150 = vunpack.c.l.b16 %v8598
    %v9151 = vunpack.c.l.b16 %v8599
    %v9152 = vunpack.c.l.b16 %v8600
    %v9153 = vunpack.c.l.b16 %v8601
    %v9154 = vunpack.c.l.b16 %v8602
    %v9155 = vunpack.c.l.b16 %v8603
    %v9156 = vunpack.c.l.b16 %v8604
    %v9157 = vunpack.c.l.b16 %v8605
    %v9158 = vunpack.c.l.b16 %v8606
    %v9159 = vunpack.c.l.b16 %v8607
    %v9160 = vunpack.c.l.b16 %v8608
    %v9161 = vunpack.c.l.b16 %v8609
    %v9162 = vunpack.c.l.b16 %v8610
    %v9163 = vunpack.c.l.b16 %v8611
    %v9164 = vunpack.c.l.b16 %v8612
    %v9165 = vunpack.c.l.b16 %v8613
    %v9166 = vunpack.c.l.b16 %v8614
    %v9167 = vunpack.c.l.b16 %v8615
    %v9168 = vunpack.c.l.b16 %v8616
    %v9169 = vunpack.c.l.b16 %v8617
    %v9170 = vunpack.c.l.b16 %v8618
    %v9171 = vunpack.c.l.b16 %v8619
    %v9172 = vunpack.c.l.b16 %v8620
    %v9173 = vunpack.c.l.b16 %v8621
    %v9174 = vunpack.c.l.b16 %v8622
    %v9175 = vunpack.c.l.b16 %v8623
    %v9176 = vunpack.c.l.b16 %v8624
    %v9177 = vunpack.c.l.b16 %v8625
    %v9178 = vunpack.c.l.b16 %v8626
    %v9179 = vunpack.c.l.b16 %v8627
    %v9180 = vunpack.c.l.b16 %v8628
    %v9181 = vunpack.c.l.b16 %v8629
    %v9182 = vunpack.c.l.b16 %v8630
    %v9183 = vunpack.c.l.b16 %v8631
    %v9184 = vunpack.c.l.b16 %v8632
    %v9185 = vunpack.c.l.b16 %v8633
    %v9186 = vunpack.c.l.b16 %v8634
    %v9187 = vunpack.c.l.b16 %v8635
    %v9188 = vunpack.c.l.b16 %v8636
    %v9189 = vunpack.c.l.b16 %v8637
    %v9190 = vunpack.c.l.b16 %v8638
    %v9191 = vunpack.c.l.b16 %v8639
    %v9192 = vunpack.c.l.b16 %v8640
    %v9193 = vunpack.c.l.b16 %v8641
    %v9194 = vunpack.c.l.b16 %v8642
    %v9195 = vunpack.c.l.b16 %v8643
    %v9196 = vunpack.c.l.b16 %v8644
    %v9197 = vunpack.c.l.b16 %v8645
    %v9198 = vunpack.c.l.b16 %v8646
    %v9199 = vunpack.c.l.b16 %v8647
    %v9200 = vunpack.c.l.b16 %v8648
    %v9201 = vunpack.c.l.b16 %v8649
    %v9202 = vunpack.c.l.b16 %v8650
    %v9203 = vunpack.c.l.b16 %v8651
    %v9204 = vunpack.c.l.b16 %v8652
    %v9205 = vunpack.c.l.b16 %v8653
    %v9206 = vunpack.c.l.b16 %v8654
    %v9207 = vunpack.c.l.b16 %v8655
    %v9208 = vunpack.c.l.b16 %v8656
    %v9209 = vunpack.c.l.b16 %v8657
    %v9210 = vunpack.c.l.b16 %v8658
    %v9211 = vunpack.c.l.b16 %v8659
    %v9212 = vunpack.c.l.b16 %v8660
    %v9213 = vunpack.c.l.b16 %v8661
    %v9214 = vunpack.c.l.b16 %v8662
    %v9215 = vunpack.c.l.b16 %v8663
    %v9216 = vunpack.c.l.b16 %v8664
    %v9217 = vunpack.c.l.b16 %v8665
    %v9218 = vunpack.c.l.b16 %v8666
    %v9219 = vunpack.c.l.b16 %v8667
    %v9220 = vunpack.c.l.b16 %v8668
    %v9221 = vunpack.c.l.b16 %v8669
    %v9222 = vunpack.c.l.b16 %v8670
    %v9223 = vunpack.c.l.b16 %v8671
    %v9224 = vunpack.c.l.b16 %v8672
    %v9225 = vunpack.c.l.b16 %v8673
    %v9226 = vunpack.c.l.b16 %v8674
    %v9227 = vunpack.c.l.b16 %v8675
    %v9228 = vunpack.c.l.b16 %v8676
    %v9229 = vunpack.c.l.b16 %v8677
    %v9230 = vunpack.c.l.b16 %v8678
    %v9231 = vunpack.c.l.b16 %v8679
    %v9232 = vunpack.c.l.b16 %v8680
    %v9233 = vunpack.c.l.b16 %v8681
    %v9234 = vunpack.c.l.b16 %v8682
    %v9235 = vunpack.c.l.b16 %v8683
    %v9236 = vunpack.c.l.b16 %v8684
    %v9237 = vunpack.c.l.b16 %v8685
    %v9238 = vunpack.c.l.b16 %v8686
    %v9239 = vunpack.c.l.b16 %v8687
    %v9240 = vunpack.c.l.b16 %v8688
    %v9241 = vunpack.c.l.b16 %v8689
    %v9242 = vunpack.c.l.b16 %v8690
    %v9243 = vunpack.c.l.b16 %v8691
    %v9244 = vunpack.c.l.b16 %v8692
    %v9245 = vunpack.c.l.b16 %v8693
    %v9246 = vunpack.c.l.b16 %v8694
    %v9247 = vunpack.c.l.b16 %v8695
    %v9248 = vunpack.c.l.b16 %v8696
    %v9249 = vunpack.c.l.b16 %v8697
    %v9250 = vunpack.c.l.b16 %v8698
    %v9251 = vunpack.c.l.b16 %v8699
    %v9252 = vunpack.c.l.b16 %v8700
    %v9253 = vunpack.c.l.b16 %v8701
    %v9254 = vunpack.c.l.b16 %v8702
    %v9255 = vunpack.c.l.b16 %v8703
    %v9256 = vunpack.c.l.b16 %v8704
    %v9257 = vunpack.c.l.b16 %v8705
    %v9258 = vunpack.c.l.b16 %v8706
    %v9259 = vunpack.c.l.b16 %v8707
    %v9260 = vunpack.c.l.b16 %v8708
    %v9261 = vunpack.c.l.b16 %v8709
    %v9262 = vunpack.c.l.b16 %v8710
    %v9263 = vunpack.c.l.b16 %v8711
    %v9264 = vunpack.c.l.b16 %v8712
    %v9265 = vunpack.c.l.b16 %v8713
    %v9266 = vunpack.c.l.b16 %v8714
    %v9267 = vunpack.c.l.b16 %v8715
    %v9268 = vunpack.c.l.b16 %v8716
    %v9269 = vunpack.c.l.b16 %v8717
    %v9270 = vunpack.c.l.b16 %v8718
    %v9271 = vunpack.c.l.b16 %v8719
    %v9272 = vunpack.c.l.b16 %v8720
    %v9273 = vunpack.c.l.b16 %v8721
    %v9274 = vunpack.c.l.b16 %v8722
    %v9275 = vunpack.c.l.b16 %v8723
    %v9276 = vunpack.c.l.b16 %v8724
    %v9277 = vunpack.c.l.b16 %v8725
    %v9278 = vunpack.c.l.b16 %v8726
    %v9279 = vunpack.c.l.b16 %v8727
    %v9280 = vunpack.c.l.b16 %v8728
    %v9281 = vunpack.c.l.b16 %v8729
    %v9282 = vunpack.c.l.b16 %v8730
    %v9283 = vunpack.c.l.b16 %v8731
    %v9284 = vpack.c.b16 %v9029, %v9028
    %v9285 = vpack.c.b16 %v9031, %v9030
    %v9286 = vpack.c.b16 %v9033, %v9032
    %v9287 = vpack.c.b16 %v9035, %v9034
    %v9288 = vpack.c.b16 %v9037, %v9036
    %v9289 = vpack.c.b16 %v9039, %v9038
    %v9290 = vpack.c.b16 %v9041, %v9040
    %v9291 = vpack.c.b16 %v9043, %v9042
    %v9292 = vpack.c.b16 %v9045, %v9044
    %v9293 = vpack.c.b16 %v9047, %v9046
    %v9294 = vpack.c.b16 %v9049, %v9048
    %v9295 = vpack.c.b16 %v9051, %v9050
    %v9296 = vpack.c.b16 %v9053, %v9052
    %v9297 = vpack.c.b16 %v9055, %v9054
    %v9298 = vpack.c.b16 %v9057, %v9056
    %v9299 = vpack.c.b16 %v9059, %v9058
    %v9300 = vpack.c.b16 %v9061, %v9060
    %v9301 = vpack.c.b16 %v9063, %v9062
    %v9302 = vpack.c.b16 %v9065, %v9064
    %v9303 = vpack.c.b16 %v9067, %v9066
    %v9304 = vpack.c.b16 %v9069, %v9068
    %v9305 = vpack.c.b16 %v9071, %v9070
    %v9306 = vpack.c.b16 %v9073, %v9072
    %v9307 = vpack.c.b16 %v9075, %v9074
    %v9308 = vpack.c.b16 %v9077, %v9076
    %v9309 = vpack.c.b16 %v9079, %v9078
    %v9310 = vpack.c.b16 %v9081, %v9080
    %v9311 = vpack.c.b16 %v9083, %v9082
    %v9312 = vpack.c.b16 %v9085, %v9084
    %v9313 = vpack.c.b16 %v9087, %v9086
    %v9314 = vpack.c.b16 %v9089, %v9088
    %v9315 = vpack.c.b16 %v9091, %v9090
    %v9316 = vpack.c.b16 %v9093, %v9092
    %v9317 = vpack.c.b16 %v9095, %v9094
    %v9318 = vpack.c.b16 %v9097, %v9096
    %v9319 = vpack.c.b16 %v9099, %v9098
    %v9320 = vpack.c.b16 %v9101, %v9100
    %v9321 = vpack.c.b16 %v9103, %v9102
    %v9322 = vpack.c.b16 %v9105, %v9104
    %v9323 = vpack.c.b16 %v9107, %v9106
    %v9324 = vpack.c.b16 %v9109, %v9108
    %v9325 = vpack.c.b16 %v9111, %v9110
    %v9326 = vpack.c.b16 %v9113, %v9112
    %v9327 = vpack.c.b16 %v9115, %v9114
    %v9328 = vpack.c.b16 %v9117, %v9116
    %v9329 = vpack.c.b16 %v9119, %v9118
    %v9330 = vpack.c.b16 %v9121, %v9120
    %v9331 = vpack.c.b16 %v9123, %v9122
    %v9332 = vpack.c.b16 %v9125, %v9124
    %v9333 = vpack.c.b16 %v9127, %v9126
    %v9334 = vpack.c.b16 %v9129, %v9128
    %v9335 = vpack.c.b16 %v9131, %v9130
    %v9336 = vpack.c.b16 %v9133, %v9132
    %v9337 = vpack.c.b16 %v9135, %v9134
    %v9338 = vpack.c.b16 %v9137, %v9136
    %v9339 = vpack.c.b16 %v9139, %v9138
    %v9340 = vpack.c.b16 %v9141, %v9140
    %v9341 = vpack.c.b16 %v9143, %v9142
    %v9342 = vpack.c.b16 %v9145, %v9144
    %v9343 = vpack.c.b16 %v9147, %v9146
    %v9344 = vpack.c.b16 %v9149, %v9148
    %v9345 = vpack.c.b16 %v9151, %v9150
    %v9346 = vpack.c.b16 %v9153, %v9152
    %v9347 = vpack.c.b16 %v9155, %v9154
    %v9348 = vpack.c.b16 %v9157, %v9156
    %v9349 = vpack.c.b16 %v9159, %v9158
    %v9350 = vpack.c.b16 %v9161, %v9160
    %v9351 = vpack.c.b16 %v9163, %v9162
    %v9352 = vpack.c.b16 %v9165, %v9164
    %v9353 = vpack.c.b16 %v9167, %v9166
    %v9354 = vpack.c.b16 %v9169, %v9168
    %v9355 = vpack.c.b16 %v9171, %v9170
    %v9356 = vpack.c.b16 %v9173, %v9172
    %v9357 = vpack.c.b16 %v9175, %v9174
    %v9358 = vpack.c.b16 %v9177, %v9176
    %v9359 = vpack.c.b16 %v9179, %v9178
    %v9360 = vpack.c.b16 %v9181, %v9180
    %v9361 = vpack.c.b16 %v9183, %v9182
    %v9362 = vpack.c.b16 %v9185, %v9184
    %v9363 = vpack.c.b16 %v9187, %v9186
    %v9364 = vpack.c.b16 %v9189, %v9188
    %v9365 = vpack.c.b16 %v9191, %v9190
    %v9366 = vpack.c.b16 %v9193, %v9192
    %v9367 = vpack.c.b16 %v9195, %v9194
    %v9368 = vpack.c.b16 %v9197, %v9196
    %v9369 = vpack.c.b16 %v9199, %v9198
    %v9370 = vpack.c.b16 %v9201, %v9200
    %v9371 = vpack.c.b16 %v9203, %v9202
    %v9372 = vpack.c.b16 %v9205, %v9204
    %v9373 = vpack.c.b16 %v9207, %v9206
    %v9374 = vpack.c.b16 %v9209, %v9208
    %v9375 = vpack.c.b16 %v9211, %v9210
    %v9376 = vpack.c.b16 %v9213, %v9212
    %v9377 = vpack.c.b16 %v9215, %v9214
    %v9378 = vpack.c.b16 %v9217, %v9216
    %v9379 = vpack.c.b16 %v9219, %v9218
    %v9380 = vpack.c.b16 %v9221, %v9220
    %v9381 = vpack.c.b16 %v9223, %v9222
    %v9382 = vpack.c.b16 %v9225, %v9224
    %v9383 = vpack.c.b16 %v9227, %v9226
    %v9384 = vpack.c.b16 %v9229, %v9228
    %v9385 = vpack.c.b16 %v9231, %v9230
    %v9386 = vpack.c.b16 %v9233, %v9232
    %v9387 = vpack.c.b16 %v9235, %v9234
    %v9388 = vpack.c.b16 %v9237, %v9236
    %v9389 = vpack.c.b16 %v9239, %v9238
    %v9390 = vpack.c.b16 %v9241, %v9240
    %v9391 = vpack.c.b16 %v9243, %v9242
    %v9392 = vpack.c.b16 %v9245, %v9244
    %v9393 = vpack.c.b16 %v9247, %v9246
    %v9394 = vpack.c.b16 %v9249, %v9248
    %v9395 = vpack.c.b16 %v9251, %v9250
    %v9396 = vpack.c.b16 %v9253, %v9252
    %v9397 = vpack.c.b16 %v9255, %v9254
    %v9398 = vpack.c.b16 %v9257, %v9256
    %v9399 = vpack.c.b16 %v9259, %v9258
    %v9400 = vpack.c.b16 %v9261, %v9260
    %v9401 = vpack.c.b16 %v9263, %v9262
    %v9402 = vpack.c.b16 %v9265, %v9264
    %v9403 = vpack.c.b16 %v9267, %v9266
    %v9404 = vpack.c.b16 %v9269, %v9268
    %v9405 = vpack.c.b16 %v9271, %v9270
    %v9406 = vpack.c.b16 %v9273, %v9272
    %v9407 = vpack.c.b16 %v9275, %v9274
    %v9408 = vpack.c.b16 %v9277, %v9276
    %v9409 = vpack.c.b16 %v9279, %v9278
    %v9410 = vpack.c.b16 %v9281, %v9280
    %v9411 = vpack.c.b16 %v9283, %v9282
    %9540 = vmatprep.subr.bf16.mxu0 0
    %9541 = vmatpush1.bf16.msra.mxu0 %v9284
    %9542 = vmatprep.subr.bf16.mxu0 0
    %9543 = vmatpush1.bf16.msra.mxu0 %v9285
    %9544 = vmatprep.subr.bf16.mxu0 0
    %9545 = vmatpush1.bf16.msra.mxu0 %v9286
    %9546 = vmatprep.subr.bf16.mxu0 0
    %9547 = vmatpush1.bf16.msra.mxu0 %v9287
    %9548 = vmatprep.subr.bf16.mxu0 0
    %9549 = vmatpush1.bf16.msra.mxu0 %v9288
    %9550 = vmatprep.subr.bf16.mxu0 0
    %9551 = vmatpush1.bf16.msra.mxu0 %v9289
    %9552 = vmatprep.subr.bf16.mxu0 0
    %9553 = vmatpush1.bf16.msra.mxu0 %v9290
    %9554 = vmatprep.subr.bf16.mxu0 0
    %9555 = vmatpush1.bf16.msra.mxu0 %v9291
    %9556 = vmatprep.subr.bf16.mxu0 0
    %9557 = vmatpush1.bf16.msra.mxu0 %v9292
    %9558 = vmatprep.subr.bf16.mxu0 0
    %9559 = vmatpush1.bf16.msra.mxu0 %v9293
    %9560 = vmatprep.subr.bf16.mxu0 0
    %9561 = vmatpush1.bf16.msra.mxu0 %v9294
    %9562 = vmatprep.subr.bf16.mxu0 0
    %9563 = vmatpush1.bf16.msra.mxu0 %v9295
    %9564 = vmatprep.subr.bf16.mxu0 0
    %9565 = vmatpush1.bf16.msra.mxu0 %v9296
    %9566 = vmatprep.subr.bf16.mxu0 0
    %9567 = vmatpush1.bf16.msra.mxu0 %v9297
    %9568 = vmatprep.subr.bf16.mxu0 0
    %9569 = vmatpush1.bf16.msra.mxu0 %v9298
    %9570 = vmatprep.subr.bf16.mxu0 0
    %9571 = vmatpush1.bf16.msra.mxu0 %v9299
    %9572 = vmatprep.mubr.bf16.mxu0 %v8735
    %9573 = vmatmul.mubr.bf16.gmra.mrb[0].mxu0 %v8734
    %v9574 = vpop.f32.mrb[0].mxu0
    %v9575 = vadd.f32 %v8770, %v9574
    %v9576 = vpop.f32.mrb[0].mxu0
    %v9577 = vpop.f32.mrb[0].mxu0
    %v9578 = vadd.f32 %v8770, %v9577
    %v9579 = vpop.f32.mrb[0].mxu0
    %9580 = vmatprep.mubr.bf16.mxu0 %v8751
    %9581 = vmatmul.mubr.bf16.gmra.mrb[0].mxu0 %v8750
    %v9582 = vpop.f32.mrb[0].mxu0
    %v9583 = vadd.f32 %v8770, %v9582
    %v9584 = vpop.f32.mrb[0].mxu0
    %v9585 = vpop.f32.mrb[0].mxu0
    %v9586 = vadd.f32 %v8770, %v9585
    %v9587 = vpop.f32.mrb[0].mxu0
    %9588 = vdwg.mxu0
    %9589 = vmatprep.subr.bf16.mxu0 0
    %9590 = vmatpush1.bf16.msra.mxu0 %v9300
    %9591 = vmatprep.subr.bf16.mxu0 0
    %9592 = vmatpush1.bf16.msra.mxu0 %v9301
    %9593 = vmatprep.subr.bf16.mxu0 0
    %9594 = vmatpush1.bf16.msra.mxu0 %v9302
    %9595 = vmatprep.subr.bf16.mxu0 0
    %9596 = vmatpush1.bf16.msra.mxu0 %v9303
    %9597 = vmatprep.subr.bf16.mxu0 0
    %9598 = vmatpush1.bf16.msra.mxu0 %v9304
    %9599 = vmatprep.subr.bf16.mxu0 0
    %9600 = vmatpush1.bf16.msra.mxu0 %v9305
    %9601 = vmatprep.subr.bf16.mxu0 0
    %9602 = vmatpush1.bf16.msra.mxu0 %v9306
    %9603 = vmatprep.subr.bf16.mxu0 0
    %9604 = vmatpush1.bf16.msra.mxu0 %v9307
    %9605 = vmatprep.subr.bf16.mxu0 0
    %9606 = vmatpush1.bf16.msra.mxu0 %v9308
    %9607 = vmatprep.subr.bf16.mxu0 0
    %9608 = vmatpush1.bf16.msra.mxu0 %v9309
    %9609 = vmatprep.subr.bf16.mxu0 0
    %9610 = vmatpush1.bf16.msra.mxu0 %v9310
    %9611 = vmatprep.subr.bf16.mxu0 0
    %9612 = vmatpush1.bf16.msra.mxu0 %v9311
    %9613 = vmatprep.subr.bf16.mxu0 0
    %9614 = vmatpush1.bf16.msra.mxu0 %v9312
    %9615 = vmatprep.subr.bf16.mxu0 0
    %9616 = vmatpush1.bf16.msra.mxu0 %v9313
    %9617 = vmatprep.subr.bf16.mxu0 0
    %9618 = vmatpush1.bf16.msra.mxu0 %v9314
    %9619 = vmatprep.subr.bf16.mxu0 0
    %9620 = vmatpush1.bf16.msra.mxu0 %v9315
    %9621 = vmatprep.mubr.bf16.mxu0 %v8737
    %9622 = vmatmul.mubr.bf16.gmra.mrb[0].mxu0 %v8736
    %v9623 = vpop.f32.mrb[0].mxu0
    %v9624 = vadd.f32 %v9575, %v9623
    %v9625 = vpop.f32.mrb[0].mxu0
    %v9626 = vpop.f32.mrb[0].mxu0
    %v9627 = vadd.f32 %v9578, %v9626
    %v9628 = vpop.f32.mrb[0].mxu0
    %9629 = vmatprep.mubr.bf16.mxu0 %v8753
    %9630 = vmatmul.mubr.bf16.gmra.mrb[0].mxu0 %v8752
    %v9631 = vpop.f32.mrb[0].mxu0
    %v9632 = vadd.f32 %v9583, %v9631
    %v9633 = vpop.f32.mrb[0].mxu0
    %v9634 = vpop.f32.mrb[0].mxu0
    %v9635 = vadd.f32 %v9586, %v9634
    %v9636 = vpop.f32.mrb[0].mxu0
    %9637 = vdwg.mxu0
    %9638 = vmatprep.subr.bf16.mxu0 0
    %9639 = vmatpush1.bf16.msra.mxu0 %v9316
    %9640 = vmatprep.subr.bf16.mxu0 0
    %9641 = vmatpush1.bf16.msra.mxu0 %v9317
    %9642 = vmatprep.subr.bf16.mxu0 0
    %9643 = vmatpush1.bf16.msra.mxu0 %v9318
    %9644 = vmatprep.subr.bf16.mxu0 0
    %9645 = vmatpush1.bf16.msra.mxu0 %v9319
    %9646 = vmatprep.subr.bf16.mxu0 0
    %9647 = vmatpush1.bf16.msra.mxu0 %v9320
    %9648 = vmatprep.subr.bf16.mxu0 0
    %9649 = vmatpush1.bf16.msra.mxu0 %v9321
    %9650 = vmatprep.subr.bf16.mxu0 0
    %9651 = vmatpush1.bf16.msra.mxu0 %v9322
    %9652 = vmatprep.subr.bf16.mxu0 0
    %9653 = vmatpush1.bf16.msra.mxu0 %v9323
    %9654 = vmatprep.subr.bf16.mxu0 0
    %9655 = vmatpush1.bf16.msra.mxu0 %v9324
    %9656 = vmatprep.subr.bf16.mxu0 0
    %9657 = vmatpush1.bf16.msra.mxu0 %v9325
    %9658 = vmatprep.subr.bf16.mxu0 0
    %9659 = vmatpush1.bf16.msra.mxu0 %v9326
    %9660 = vmatprep.subr.bf16.mxu0 0
    %9661 = vmatpush1.bf16.msra.mxu0 %v9327
    %9662 = vmatprep.subr.bf16.mxu0 0
    %9663 = vmatpush1.bf16.msra.mxu0 %v9328
    %9664 = vmatprep.subr.bf16.mxu0 0
    %9665 = vmatpush1.bf16.msra.mxu0 %v9329
    %9666 = vmatprep.subr.bf16.mxu0 0
    %9667 = vmatpush1.bf16.msra.mxu0 %v9330
    %9668 = vmatprep.subr.bf16.mxu0 0
    %9669 = vmatpush1.bf16.msra.mxu0 %v9331
    %9670 = vmatprep.mubr.bf16.mxu0 %v8739
    %9671 = vmatmul.mubr.bf16.gmra.mrb[0].mxu0 %v8738
    %v9672 = vpop.f32.mrb[0].mxu0
    %v9673 = vadd.f32 %v9624, %v9672
    %v9674 = vpop.f32.mrb[0].mxu0
    %v9675 = vpop.f32.mrb[0].mxu0
    %v9676 = vadd.f32 %v9627, %v9675
    %v9677 = vpop.f32.mrb[0].mxu0
    %9678 = vmatprep.mubr.bf16.mxu0 %v8755
    %9679 = vmatmul.mubr.bf16.gmra.mrb[0].mxu0 %v8754
    %v9680 = vpop.f32.mrb[0].mxu0
    %v9681 = vadd.f32 %v9632, %v9680
    %v9682 = vpop.f32.mrb[0].mxu0
    %v9683 = vpop.f32.mrb[0].mxu0
    %v9684 = vadd.f32 %v9635, %v9683
    %v9685 = vpop.f32.mrb[0].mxu0
    %9686 = vdwg.mxu0
    %9687 = vmatprep.subr.bf16.mxu0 0
    %9688 = vmatpush1.bf16.msra.mxu0 %v9332
    %9689 = vmatprep.subr.bf16.mxu0 0
    %9690 = vmatpush1.bf16.msra.mxu0 %v9333
    %9691 = vmatprep.subr.bf16.mxu0 0
    %9692 = vmatpush1.bf16.msra.mxu0 %v9334
    %9693 = vmatprep.subr.bf16.mxu0 0
    %9694 = vmatpush1.bf16.msra.mxu0 %v9335
    %9695 = vmatprep.subr.bf16.mxu0 0
    %9696 = vmatpush1.bf16.msra.mxu0 %v9336
    %9697 = vmatprep.subr.bf16.mxu0 0
    %9698 = vmatpush1.bf16.msra.mxu0 %v9337
    %9699 = vmatprep.subr.bf16.mxu0 0
    %9700 = vmatpush1.bf16.msra.mxu0 %v9338
    %9701 = vmatprep.subr.bf16.mxu0 0
    %9702 = vmatpush1.bf16.msra.mxu0 %v9339
    %9703 = vmatprep.subr.bf16.mxu0 0
    %9704 = vmatpush1.bf16.msra.mxu0 %v9340
    %9705 = vmatprep.subr.bf16.mxu0 0
    %9706 = vmatpush1.bf16.msra.mxu0 %v9341
    %9707 = vmatprep.subr.bf16.mxu0 0
    %9708 = vmatpush1.bf16.msra.mxu0 %v9342
    %9709 = vmatprep.subr.bf16.mxu0 0
    %9710 = vmatpush1.bf16.msra.mxu0 %v9343
    %9711 = vmatprep.subr.bf16.mxu0 0
    %9712 = vmatpush1.bf16.msra.mxu0 %v9344
    %9713 = vmatprep.subr.bf16.mxu0 0
    %9714 = vmatpush1.bf16.msra.mxu0 %v9345
    %9715 = vmatprep.subr.bf16.mxu0 0
    %9716 = vmatpush1.bf16.msra.mxu0 %v9346
    %9717 = vmatprep.subr.bf16.mxu0 0
    %9718 = vmatpush1.bf16.msra.mxu0 %v9347
    %9719 = vmatprep.mubr.bf16.mxu0 %v8741
    %9720 = vmatmul.mubr.bf16.gmra.mrb[0].mxu0 %v8740
    %v9721 = vpop.f32.mrb[0].mxu0
    %v9722 = vadd.f32 %v9673, %v9721
    %v9723 = vpop.f32.mrb[0].mxu0
    %v9724 = vpop.f32.mrb[0].mxu0
    %v9725 = vadd.f32 %v9676, %v9724
    %v9726 = vpop.f32.mrb[0].mxu0
    %9727 = vmatprep.mubr.bf16.mxu0 %v8757
    %9728 = vmatmul.mubr.bf16.gmra.mrb[0].mxu0 %v8756
    %v9729 = vpop.f32.mrb[0].mxu0
    %v9730 = vadd.f32 %v9681, %v9729
    %v9731 = vpop.f32.mrb[0].mxu0
    %v9732 = vpop.f32.mrb[0].mxu0
    %v9733 = vadd.f32 %v9684, %v9732
    %v9734 = vpop.f32.mrb[0].mxu0
    %9735 = vdwg.mxu0
    %9736 = vmatprep.subr.bf16.mxu0 0
    %9737 = vmatpush1.bf16.msra.mxu0 %v9348
    %9738 = vmatprep.subr.bf16.mxu0 0
    %9739 = vmatpush1.bf16.msra.mxu0 %v9349
    %9740 = vmatprep.subr.bf16.mxu0 0
    %9741 = vmatpush1.bf16.msra.mxu0 %v9350
    %9742 = vmatprep.subr.bf16.mxu0 0
    %9743 = vmatpush1.bf16.msra.mxu0 %v9351
    %9744 = vmatprep.subr.bf16.mxu0 0
    %9745 = vmatpush1.bf16.msra.mxu0 %v9352
    %9746 = vmatprep.subr.bf16.mxu0 0
    %9747 = vmatpush1.bf16.msra.mxu0 %v9353
    %9748 = vmatprep.subr.bf16.mxu0 0
    %9749 = vmatpush1.bf16.msra.mxu0 %v9354
    %9750 = vmatprep.subr.bf16.mxu0 0
    %9751 = vmatpush1.bf16.msra.mxu0 %v9355
    %9752 = vmatprep.subr.bf16.mxu0 0
    %9753 = vmatpush1.bf16.msra.mxu0 %v9356
    %9754 = vmatprep.subr.bf16.mxu0 0
    %9755 = vmatpush1.bf16.msra.mxu0 %v9357
    %9756 = vmatprep.subr.bf16.mxu0 0
    %9757 = vmatpush1.bf16.msra.mxu0 %v9358
    %9758 = vmatprep.subr.bf16.mxu0 0
    %9759 = vmatpush1.bf16.msra.mxu0 %v9359
    %9760 = vmatprep.subr.bf16.mxu0 0
    %9761 = vmatpush1.bf16.msra.mxu0 %v9360
    %9762 = vmatprep.subr.bf16.mxu0 0
    %9763 = vmatpush1.bf16.msra.mxu0 %v9361
    %9764 = vmatprep.subr.bf16.mxu0 0
    %9765 = vmatpush1.bf16.msra.mxu0 %v9362
    %9766 = vmatprep.subr.bf16.mxu0 0
    %9767 = vmatpush1.bf16.msra.mxu0 %v9363
    %9768 = vmatprep.mubr.bf16.mxu0 %v8743
    %9769 = vmatmul.mubr.bf16.gmra.mrb[0].mxu0 %v8742
    %v9770 = vpop.f32.mrb[0].mxu0
    %v9771 = vadd.f32 %v9722, %v9770
    %v9772 = vpop.f32.mrb[0].mxu0
    %v9773 = vpop.f32.mrb[0].mxu0
    %v9774 = vadd.f32 %v9725, %v9773
    %v9775 = vpop.f32.mrb[0].mxu0
    %9776 = vmatprep.mubr.bf16.mxu0 %v8759
    %9777 = vmatmul.mubr.bf16.gmra.mrb[0].mxu0 %v8758
    %v9778 = vpop.f32.mrb[0].mxu0
    %v9779 = vadd.f32 %v9730, %v9778
    %v9780 = vpop.f32.mrb[0].mxu0
    %v9781 = vpop.f32.mrb[0].mxu0
    %v9782 = vadd.f32 %v9733, %v9781
    %v9783 = vpop.f32.mrb[0].mxu0
    %9784 = vdwg.mxu0
    %9785 = vmatprep.subr.bf16.mxu0 0
    %9786 = vmatpush1.bf16.msra.mxu0 %v9364
    %9787 = vmatprep.subr.bf16.mxu0 0
    %9788 = vmatpush1.bf16.msra.mxu0 %v9365
    %9789 = vmatprep.subr.bf16.mxu0 0
    %9790 = vmatpush1.bf16.msra.mxu0 %v9366
    %9791 = vmatprep.subr.bf16.mxu0 0
    %9792 = vmatpush1.bf16.msra.mxu0 %v9367
    %9793 = vmatprep.subr.bf16.mxu0 0
    %9794 = vmatpush1.bf16.msra.mxu0 %v9368
    %9795 = vmatprep.subr.bf16.mxu0 0
    %9796 = vmatpush1.bf16.msra.mxu0 %v9369
    %9797 = vmatprep.subr.bf16.mxu0 0
    %9798 = vmatpush1.bf16.msra.mxu0 %v9370
    %9799 = vmatprep.subr.bf16.mxu0 0
    %9800 = vmatpush1.bf16.msra.mxu0 %v9371
    %9801 = vmatprep.subr.bf16.mxu0 0
    %9802 = vmatpush1.bf16.msra.mxu0 %v9372
    %9803 = vmatprep.subr.bf16.mxu0 0
    %9804 = vmatpush1.bf16.msra.mxu0 %v9373
    %9805 = vmatprep.subr.bf16.mxu0 0
    %9806 = vmatpush1.bf16.msra.mxu0 %v9374
    %9807 = vmatprep.subr.bf16.mxu0 0
    %9808 = vmatpush1.bf16.msra.mxu0 %v9375
    %9809 = vmatprep.subr.bf16.mxu0 0
    %9810 = vmatpush1.bf16.msra.mxu0 %v9376
    %9811 = vmatprep.subr.bf16.mxu0 0
    %9812 = vmatpush1.bf16.msra.mxu0 %v9377
    %9813 = vmatprep.subr.bf16.mxu0 0
    %9814 = vmatpush1.bf16.msra.mxu0 %v9378
    %9815 = vmatprep.subr.bf16.mxu0 0
    %9816 = vmatpush1.bf16.msra.mxu0 %v9379
    %9817 = vmatprep.mubr.bf16.mxu0 %v8745
    %9818 = vmatmul.mubr.bf16.gmra.mrb[0].mxu0 %v8744
    %v9819 = vpop.f32.mrb[0].mxu0
    %v9820 = vadd.f32 %v9771, %v9819
    %v9821 = vpop.f32.mrb[0].mxu0
    %v9822 = vpop.f32.mrb[0].mxu0
    %v9823 = vadd.f32 %v9774, %v9822
    %v9824 = vpop.f32.mrb[0].mxu0
    %9825 = vmatprep.mubr.bf16.mxu0 %v8761
    %9826 = vmatmul.mubr.bf16.gmra.mrb[0].mxu0 %v8760
    %v9827 = vpop.f32.mrb[0].mxu0
    %v9828 = vadd.f32 %v9779, %v9827
    %v9829 = vpop.f32.mrb[0].mxu0
    %v9830 = vpop.f32.mrb[0].mxu0
    %v9831 = vadd.f32 %v9782, %v9830
    %v9832 = vpop.f32.mrb[0].mxu0
    %9833 = vdwg.mxu0
    %9834 = vmatprep.subr.bf16.mxu0 0
    %9835 = vmatpush1.bf16.msra.mxu0 %v9380
    %9836 = vmatprep.subr.bf16.mxu0 0
    %9837 = vmatpush1.bf16.msra.mxu0 %v9381
    %9838 = vmatprep.subr.bf16.mxu0 0
    %9839 = vmatpush1.bf16.msra.mxu0 %v9382
    %9840 = vmatprep.subr.bf16.mxu0 0
    %9841 = vmatpush1.bf16.msra.mxu0 %v9383
    %9842 = vmatprep.subr.bf16.mxu0 0
    %9843 = vmatpush1.bf16.msra.mxu0 %v9384
    %9844 = vmatprep.subr.bf16.mxu0 0
    %9845 = vmatpush1.bf16.msra.mxu0 %v9385
    %9846 = vmatprep.subr.bf16.mxu0 0
    %9847 = vmatpush1.bf16.msra.mxu0 %v9386
    %9848 = vmatprep.subr.bf16.mxu0 0
    %9849 = vmatpush1.bf16.msra.mxu0 %v9387
    %9850 = vmatprep.subr.bf16.mxu0 0
    %9851 = vmatpush1.bf16.msra.mxu0 %v9388
    %9852 = vmatprep.subr.bf16.mxu0 0
    %9853 = vmatpush1.bf16.msra.mxu0 %v9389
    %9854 = vmatprep.subr.bf16.mxu0 0
    %9855 = vmatpush1.bf16.msra.mxu0 %v9390
    %9856 = vmatprep.subr.bf16.mxu0 0
    %9857 = vmatpush1.bf16.msra.mxu0 %v9391
    %9858 = vmatprep.subr.bf16.mxu0 0
    %9859 = vmatpush1.bf16.msra.mxu0 %v9392
    %9860 = vmatprep.subr.bf16.mxu0 0
    %9861 = vmatpush1.bf16.msra.mxu0 %v9393
    %9862 = vmatprep.subr.bf16.mxu0 0
    %9863 = vmatpush1.bf16.msra.mxu0 %v9394
    %9864 = vmatprep.subr.bf16.mxu0 0
    %9865 = vmatpush1.bf16.msra.mxu0 %v9395
    %9866 = vmatprep.mubr.bf16.mxu0 %v8747
    %9867 = vmatmul.mubr.bf16.gmra.mrb[0].mxu0 %v8746
    %v9868 = vpop.f32.mrb[0].mxu0
    %v9869 = vadd.f32 %v9820, %v9868
    %v9870 = vpop.f32.mrb[0].mxu0
    %v9871 = vpop.f32.mrb[0].mxu0
    %v9872 = vadd.f32 %v9823, %v9871
    %v9873 = vpop.f32.mrb[0].mxu0
    %9874 = vmatprep.mubr.bf16.mxu0 %v8763
    %9875 = vmatmul.mubr.bf16.gmra.mrb[0].mxu0 %v8762
    %v9876 = vpop.f32.mrb[0].mxu0
    %v9877 = vadd.f32 %v9828, %v9876
    %v9878 = vpop.f32.mrb[0].mxu0
    %v9879 = vpop.f32.mrb[0].mxu0
    %v9880 = vadd.f32 %v9831, %v9879
    %v9881 = vpop.f32.mrb[0].mxu0
    %9882 = vdwg.mxu0
    %9883 = vmatprep.subr.bf16.mxu0 0
    %9884 = vmatpush1.bf16.msra.mxu0 %v9396
    %9885 = vmatprep.subr.bf16.mxu0 0
    %9886 = vmatpush1.bf16.msra.mxu0 %v9397
    %9887 = vmatprep.subr.bf16.mxu0 0
    %9888 = vmatpush1.bf16.msra.mxu0 %v9398
    %9889 = vmatprep.subr.bf16.mxu0 0
    %9890 = vmatpush1.bf16.msra.mxu0 %v9399
    %9891 = vmatprep.subr.bf16.mxu0 0
    %9892 = vmatpush1.bf16.msra.mxu0 %v9400
    %9893 = vmatprep.subr.bf16.mxu0 0
    %9894 = vmatpush1.bf16.msra.mxu0 %v9401
    %9895 = vmatprep.subr.bf16.mxu0 0
    %9896 = vmatpush1.bf16.msra.mxu0 %v9402
    %9897 = vmatprep.subr.bf16.mxu0 0
    %9898 = vmatpush1.bf16.msra.mxu0 %v9403
    %9899 = vmatprep.subr.bf16.mxu0 0
    %9900 = vmatpush1.bf16.msra.mxu0 %v9404
    %9901 = vmatprep.subr.bf16.mxu0 0
    %9902 = vmatpush1.bf16.msra.mxu0 %v9405
    %9903 = vmatprep.subr.bf16.mxu0 0
    %9904 = vmatpush1.bf16.msra.mxu0 %v9406
    %9905 = vmatprep.subr.bf16.mxu0 0
    %9906 = vmatpush1.bf16.msra.mxu0 %v9407
    %9907 = vmatprep.subr.bf16.mxu0 0
    %9908 = vmatpush1.bf16.msra.mxu0 %v9408
    %9909 = vmatprep.subr.bf16.mxu0 0
    %9910 = vmatpush1.bf16.msra.mxu0 %v9409
    %9911 = vmatprep.subr.bf16.mxu0 0
    %9912 = vmatpush1.bf16.msra.mxu0 %v9410
    %9913 = vmatprep.subr.bf16.mxu0 0
    %9914 = vmatpush1.bf16.msra.mxu0 %v9411
    %9915 = vmatprep.mubr.bf16.mxu0 %v8749
    %9916 = vmatmul.mubr.bf16.gmra.mrb[0].mxu0 %v8748
    %v9917 = vpop.f32.mrb[0].mxu0
    %v9918 = vadd.f32 %v9869, %v9917
    %v9919 = vpop.f32.mrb[0].mxu0
    %v9920 = vpop.f32.mrb[0].mxu0
    %v9921 = vadd.f32 %v9872, %v9920
    %v9922 = vpop.f32.mrb[0].mxu0
    %9923 = vmatprep.mubr.bf16.mxu0 %v8765
    %9924 = vmatmul.mubr.bf16.gmra.mrb[0].mxu0 %v8764
    %v9925 = vpop.f32.mrb[0].mxu0
    %v9926 = vadd.f32 %v9877, %v9925
    %v9927 = vpop.f32.mrb[0].mxu0
    %v9928 = vpop.f32.mrb[0].mxu0
    %v9929 = vadd.f32 %v9880, %v9928
    %v9930 = vpop.f32.mrb[0].mxu0
    %9931 = vdwg.mxu0
    %v9932 = vadd.f32 %v7697, %v9918
    %v9933 = vadd.f32 %v7698, %v9921
    %v9934 = vadd.f32 %v7699, %v9926
    %v9935 = vadd.f32 %v7700, %v9929
    %s9936 = scalar_lea.vmem %s85, 1
    %v9937 = vld [vmem:[%s9936] sm:$0x1]
    %s9938 = scalar_lea.vmem %s87, 1
    %v9939 = vld [vmem:[%s9938] sm:$0x1]
    %v9940 = vsel %vm467, %v9932, 0.0
    %9941 = vadd.xlane.f32.xlu0 %v9940
    %v9942 = vpop.xlane.xlu0 %9941
    %v9943 = vsel %vm467, %v9933, 0.0
    %9944 = vadd.xlane.f32.xlu0 %v9943
    %v9945 = vpop.xlane.xlu0 %9944
    %v9946 = vsel %vm467, %v9934, 0.0
    %9947 = vadd.xlane.f32.xlu0 %v9946
    %v9948 = vpop.xlane.xlu0 %9947
    %v9949 = vsel %vm467, %v9935, 0.0
    %9950 = vadd.xlane.f32.xlu0 %v9949
    %v9951 = vpop.xlane.xlu0 %9950
    %v9952 = vmul.f32 %v9942, %v3265
    %v9953 = vmul.f32 %v9945, %v3265
    %v9954 = vmul.f32 %v9948, %v3265
    %v9955 = vmul.f32 %v9951, %v3265
    %v9956 = vsub.f32 %v9932, %v9952
    %v9957 = vsub.f32 %v9933, %v9953
    %v9958 = vsub.f32 %v9934, %v9954
    %v9959 = vsub.f32 %v9935, %v9955
    %v9960 = vmul.f32 %v9956, %v9956
    %v9961 = vmul.f32 %v9957, %v9957
    %v9962 = vmul.f32 %v9958, %v9958
    %v9963 = vmul.f32 %v9959, %v9959
    %v9964 = vsel %vm467, %v9960, 0.0
    %9965 = vadd.xlane.f32.xlu0 %v9964
    %v9966 = vpop.xlane.xlu0 %9965
    %v9967 = vsel %vm467, %v9961, 0.0
    %9968 = vadd.xlane.f32.xlu0 %v9967
    %v9969 = vpop.xlane.xlu0 %9968
    %v9970 = vsel %vm467, %v9962, 0.0
    %9971 = vadd.xlane.f32.xlu0 %v9970
    %v9972 = vpop.xlane.xlu0 %9971
    %v9973 = vsel %vm467, %v9963, 0.0
    %9974 = vadd.xlane.f32.xlu0 %v9973
    %v9975 = vpop.xlane.xlu0 %9974
    %v9976 = vmul.f32 %v9966, %v3265
    %v9977 = vmul.f32 %v9969, %v3265
    %v9978 = vmul.f32 %v9972, %v3265
    %v9979 = vmul.f32 %v9975, %v3265
    %v9980 = vadd.f32 %v9976, 1e-05
    %v9981 = vadd.f32 %v9977, 1e-05
    %v9982 = vadd.f32 %v9978, 1e-05
    %v9983 = vadd.f32 %v9979, 1e-05
    %v9984 = vrsqrt.pop %v9980
    %v9985 = vrsqrt.pop %v9981
    %v9986 = vrsqrt.pop %v9982
    %v9987 = vrsqrt.pop %v9983
    %v9988 = vmul.f32 %v9956, %v9984
    %v9989 = vmul.f32 %v9957, %v9985
    %v9990 = vmul.f32 %v9958, %v9986
    %v9991 = vmul.f32 %v9959, %v9987
    %v9993 = vlaneseq
    %v9994 = vshrl.u32 %v9993, 7
    %v9995 = vsub.s32 0, %v9994
    %v9996 = vrot.slane %v9937, %v9995
    %v9998 = vmul.f32 %v9988, %v9996
    %v9999 = vmul.f32 %v9989, %v9996
    %v10000 = vmul.f32 %v9990, %v9996
    %v10001 = vmul.f32 %v9991, %v9996
    %v10003 = vlaneseq
    %v10004 = vshrl.u32 %v10003, 7
    %v10005 = vsub.s32 0, %v10004
    %v10006 = vrot.slane %v9939, %v10005
    %v10008 = vadd.f32 %v9998, %v10006
    %v10009 = vadd.f32 %v9999, %v10006
    %v10010 = vadd.f32 %v10000, %v10006
    %v10011 = vadd.f32 %v10001, %v10006
    %v10012 = vlaneseq
    %v10013 = vshrl.u32 %v10012, 7
    %v10014 = vsub.s32 0, %v10013
    %v10015 = vrot.slane %v1140, %v10014
    %v10016 = vlaneseq
    %v10017 = vshrl.u32 %v10016, 7
    %v10018 = vsub.s32 1, %v10017
    %v10019 = vrot.slane %v1140, %v10018
    %v10020 = vadd.f32 %v10008, %v10015
    %v10021 = vadd.f32 %v10009, %v10015
    %v10022 = vadd.f32 %v10010, %v10019
    %v10023 = vadd.f32 %v10011, %v10019
    %v10024 = vld [vmem:[%s89] sm:$0xf]
    %v10025 = vld [vmem:[%s89 + $0x4] sm:$0xf]
    %v10026 = vld [vmem:[%s89 + $0x8] sm:$0xf]
    %v10027 = vld [vmem:[%s89 + $0xc] sm:$0xf]
    %v10028 = vld [vmem:[#allocation7] sm:$0x1]
    %v10029 = vpack.c.bf16 %v10021, %v10020
    %v10030 = vpack.c.bf16 %v10023, %v10022
    %v10032 = vlaneseq
    %v10033 = vshrl.u32 %v10032, 7
    %v10034 = vsub.s32 0, %v10033
    %v10035 = vrot.slane %v10028, %v10034
    %v10041 = vunpack.c.l.b16 %v10024
    %v10042 = vunpack.c.l.b16 %v10025
    %v10043 = vunpack.c.l.b16 %v10026
    %v10044 = vunpack.c.l.b16 %v10027
    %v10045 = vpack.c.b16 %v10042, %v10041
    %v10046 = vpack.c.b16 %v10044, %v10043
    %v10050 = vsel %vm467, %v10029, 0
    %v10053 = vsel %vm467, %v10030, 0
    %10055 = vmatprep.subr.bf16.mxu0 0
    %10056 = vmatpush1.bf16.msra.mxu0 %v10045
    %10057 = vmatprep.subr.bf16.mxu0 0
    %10058 = vmatpush1.bf16.msra.mxu0 %v10046
    %10059 = vmatprep.subr.bf16.mxu0 0
    %10060 = vmatpush1.bf16.msra.mxu0 0
    %10061 = vmatprep.subr.bf16.mxu0 0
    %10062 = vmatpush1.bf16.msra.mxu0 0
    %10063 = vmatprep.subr.bf16.mxu0 0
    %10064 = vmatpush1.bf16.msra.mxu0 0
    %10065 = vmatprep.subr.bf16.mxu0 0
    %10066 = vmatpush1.bf16.msra.mxu0 0
    %10067 = vmatprep.subr.bf16.mxu0 0
    %10068 = vmatpush1.bf16.msra.mxu0 0
    %10069 = vmatprep.subr.bf16.mxu0 0
    %10070 = vmatpush1.bf16.msra.mxu0 0
    %10071 = vmatprep.subr.bf16.mxu0 0
    %10072 = vmatpush1.bf16.msra.mxu0 0
    %10073 = vmatprep.subr.bf16.mxu0 0
    %10074 = vmatpush1.bf16.msra.mxu0 0
    %10075 = vmatprep.subr.bf16.mxu0 0
    %10076 = vmatpush1.bf16.msra.mxu0 0
    %10077 = vmatprep.subr.bf16.mxu0 0
    %10078 = vmatpush1.bf16.msra.mxu0 0
    %10079 = vmatprep.subr.bf16.mxu0 0
    %10080 = vmatpush1.bf16.msra.mxu0 0
    %10081 = vmatprep.subr.bf16.mxu0 0
    %10082 = vmatpush1.bf16.msra.mxu0 0
    %10083 = vmatprep.subr.bf16.mxu0 0
    %10084 = vmatpush1.bf16.msra.mxu0 0
    %10085 = vmatprep.subr.bf16.mxu0 0
    %10086 = vmatpush1.bf16.msra.mxu0 0
    %10087 = vmatprep.mubr.bf16.mxu0 0
    %10088 = vmatmul.mubr.bf16.gmra.mrb[0].mxu0 %v10050
    %v10089 = vpop.f32.mrb[0].mxu0
    %v10090 = vadd.f32 %v10035, %v10089
    %v10091 = vpop.f32.mrb[0].mxu0
    %v10092 = vpop.f32.mrb[0].mxu0
    %v10093 = vadd.f32 %v10035, %v10092
    %v10094 = vpop.f32.mrb[0].mxu0
    %10095 = vmatprep.mubr.bf16.mxu0 0
    %10096 = vmatmul.mubr.bf16.gmra.mrb[0].mxu0 %v10053
    %v10097 = vpop.f32.mrb[0].mxu0
    %v10098 = vadd.f32 %v10035, %v10097
    %v10099 = vpop.f32.mrb[0].mxu0
    %v10100 = vpop.f32.mrb[0].mxu0
    %v10101 = vadd.f32 %v10035, %v10100
    %v10102 = vpop.f32.mrb[0].mxu0
    %10103 = vdwg.mxu0
    %v10104 = vmul.f32 %v10090, 0.5
    %v10105 = vmul.f32 %v10093, 0.5
    %v10106 = vmul.f32 %v10098, 0.5
    %v10107 = vmul.f32 %v10101, 0.5
    %v10108 = vmul.f32 %v10090, 0.044715
    %v10109 = vmul.f32 %v10093, 0.044715
    %v10110 = vmul.f32 %v10098, 0.044715
    %v10111 = vmul.f32 %v10101, 0.044715
    %v10112 = vmul.f32 %v10108, %v10090
    %v10113 = vmul.f32 %v10109, %v10093
    %v10114 = vmul.f32 %v10110, %v10098
    %v10115 = vmul.f32 %v10111, %v10101
    %v10116 = vmul.f32 %v10112, %v10090
    %v10117 = vmul.f32 %v10113, %v10093
    %v10118 = vmul.f32 %v10114, %v10098
    %v10119 = vmul.f32 %v10115, %v10101
    %v10120 = vadd.f32 %v10090, %v10116
    %v10121 = vadd.f32 %v10093, %v10117
    %v10122 = vadd.f32 %v10098, %v10118
    %v10123 = vadd.f32 %v10101, %v10119
    %v10124 = vmul.f32 %v10120, 0.7978846
    %v10125 = vmul.f32 %v10121, 0.7978846
    %v10126 = vmul.f32 %v10122, 0.7978846
    %v10127 = vmul.f32 %v10123, 0.7978846
    %v10128 = vtanh.pop %v10124
    %v10129 = vtanh.pop %v10125
    %v10130 = vtanh.pop %v10126
    %v10131 = vtanh.pop %v10127
    %v10132 = vadd.f32 %v10128, 1.0
    %v10133 = vadd.f32 %v10129, 1.0
    %v10134 = vadd.f32 %v10130, 1.0
    %v10135 = vadd.f32 %v10131, 1.0
    %v10136 = vmul.f32 %v10104, %v10132
    %v10137 = vmul.f32 %v10105, %v10133
    %v10138 = vmul.f32 %v10106, %v10134
    %v10139 = vmul.f32 %v10107, %v10135
    %v10140 = vld [vmem:[%s93] sm:$0xf]
    %v10141 = vld [vmem:[%s93 + $0x4] sm:$0xf]
    %v10142 = vld [vmem:[%s93 + $0x8] sm:$0xf]
    %v10143 = vld [vmem:[%s93 + $0xc] sm:$0xf]
    %v10144 = vld [vmem:[#allocation8] sm:$0x1]
    %v10145 = vpack.c.bf16 %v10137, %v10136
    %v10146 = vpack.c.bf16 %v10139, %v10138
    %v10148 = vlaneseq
    %v10149 = vshrl.u32 %v10148, 7
    %v10150 = vsub.s32 0, %v10149
    %v10151 = vrot.slane %v10144, %v10150
    %v10157 = vunpack.c.l.b16 %v10140
    %v10158 = vunpack.c.l.b16 %v10141
    %v10159 = vunpack.c.l.b16 %v10142
    %v10160 = vunpack.c.l.b16 %v10143
    %v10161 = vpack.c.b16 %v10158, %v10157
    %v10162 = vpack.c.b16 %v10160, %v10159
    %v10166 = vsel %vm467, %v10145, 0
    %v10169 = vsel %vm467, %v10146, 0
    %10171 = vmatprep.subr.bf16.mxu0 0
    %10172 = vmatpush1.bf16.msra.mxu0 %v10161
    %10173 = vmatprep.subr.bf16.mxu0 0
    %10174 = vmatpush1.bf16.msra.mxu0 %v10162
    %10175 = vmatprep.subr.bf16.mxu0 0
    %10176 = vmatpush1.bf16.msra.mxu0 0
    %10177 = vmatprep.subr.bf16.mxu0 0
    %10178 = vmatpush1.bf16.msra.mxu0 0
    %10179 = vmatprep.subr.bf16.mxu0 0
    %10180 = vmatpush1.bf16.msra.mxu0 0
    %10181 = vmatprep.subr.bf16.mxu0 0
    %10182 = vmatpush1.bf16.msra.mxu0 0
    %10183 = vmatprep.subr.bf16.mxu0 0
    %10184 = vmatpush1.bf16.msra.mxu0 0
    %10185 = vmatprep.subr.bf16.mxu0 0
    %10186 = vmatpush1.bf16.msra.mxu0 0
    %10187 = vmatprep.subr.bf16.mxu0 0
    %10188 = vmatpush1.bf16.msra.mxu0 0
    %10189 = vmatprep.subr.bf16.mxu0 0
    %10190 = vmatpush1.bf16.msra.mxu0 0
    %10191 = vmatprep.subr.bf16.mxu0 0
    %10192 = vmatpush1.bf16.msra.mxu0 0
    %10193 = vmatprep.subr.bf16.mxu0 0
    %10194 = vmatpush1.bf16.msra.mxu0 0
    %10195 = vmatprep.subr.bf16.mxu0 0
    %10196 = vmatpush1.bf16.msra.mxu0 0
    %10197 = vmatprep.subr.bf16.mxu0 0
    %10198 = vmatpush1.bf16.msra.mxu0 0
    %10199 = vmatprep.subr.bf16.mxu0 0
    %10200 = vmatpush1.bf16.msra.mxu0 0
    %10201 = vmatprep.subr.bf16.mxu0 0
    %10202 = vmatpush1.bf16.msra.mxu0 0
    %10203 = vmatprep.mubr.bf16.mxu0 0
    %10204 = vmatmul.mubr.bf16.gmra.mrb[0].mxu0 %v10166
    %v10205 = vpop.f32.mrb[0].mxu0
    %v10206 = vadd.f32 %v10151, %v10205
    %v10207 = vpop.f32.mrb[0].mxu0
    %v10208 = vpop.f32.mrb[0].mxu0
    %v10209 = vadd.f32 %v10151, %v10208
    %v10210 = vpop.f32.mrb[0].mxu0
    %10211 = vmatprep.mubr.bf16.mxu0 0
    %10212 = vmatmul.mubr.bf16.gmra.mrb[0].mxu0 %v10169
    %v10213 = vpop.f32.mrb[0].mxu0
    %v10214 = vadd.f32 %v10151, %v10213
    %v10215 = vpop.f32.mrb[0].mxu0
    %v10216 = vpop.f32.mrb[0].mxu0
    %v10217 = vadd.f32 %v10151, %v10216
    %v10218 = vpop.f32.mrb[0].mxu0
    %10219 = vdwg.mxu0
    %10220 = vst.msk [vmem:[#allocation10] sm:$0xff] %vm1186, %v10206
    %10221 = vst.msk [vmem:[#allocation10 + $0x8] sm:$0xff] %vm1186, %v10209
    %10222 = vst.msk [vmem:[#allocation10 + $0x10] sm:$0xff] %vm1186, %v10214
    %10223 = vst.msk [vmem:[#allocation10 + $0x18] sm:$0xff] %vm1186, %v10217
    // Predicated region
    $region210: #{tpu_custom_call.1} parent=1 // pred_check
      _
    $region211: #{tpu_custom_call.1} parent=1 // pred_check_branch
      %10225 = sbr.rel (0) target = $region213
    $region212: #{tpu_custom_call.1} parent=1 // pred_region
      %s10227 = ssub.s32 512, 512
      %10228 = vsyncadd [#allocation4], %s10227
      %s10229 = sshll.u32 [#allocation10], 4
      %s10230 = int_to_ptr.vmem [resolvable:$true] %s10229
      %10235 = dma.vmem_to_hbm [thread:$0]  %s10230, 512, %s97, [#allocation4], 128, 128, 8
    $region213: #{tpu_custom_call.1} parent=1 // pred_fallthru
      _
    // Predicated region
    $region214: #{tpu_custom_call.1} parent=1 // pred_check
      _
    $region215: #{tpu_custom_call.1} parent=1 // pred_check_branch
      %10237 = sbr.rel (0) target = $region217
    $region216: #{tpu_custom_call.1} parent=1 // pred_region
      %10238 = dma.done [#allocation4], 512
    $region217: #{tpu_custom_call.1} parent=1 // pred_fallthru
      _
    %10239 = vsyncpa [#allocation3], 1
    %10240 = vsyncpa [#allocation6], 1
    %10241 = vsyncpa [#allocation9], 1
    %10242 = vsyncpa [#allocation4], 1

</llo_original>
